<compile_context>
chip_gen: v6e
topology: v6e:2x2x1
jax: 0.10.0
libtpu: 0.0.40
codegen_flags: <defaults>
</compile_context>

<pallas_src>
import jax
import jax.numpy as jnp
from jax import lax
from jax.experimental import pallas as pl
from jax.experimental.pallas import tpu as pltpu

VOCAB = 1400
HIDDEN = 64
VOCAB_PAD = ((VOCAB + 127) // 128) * 128        # 1408: lane-aligned contracting dim
MAX_TILE_B = 512


def critic_kernel(idx_ref,                      # VMEM (1, TILE_B) int32
                  embT_ref,                     # VMEM (64, VOCAB_PAD) f32 -- resident
                  w1_ref, b1_ref,               # VMEM (64, 64), (64, 1)
                  w2_ref, b2_ref,               # VMEM (64, 64), (64, 1)
                  w3_ref,                       # VMEM (1, 64)
                  b3_ref,                       # SMEM (1,) f32
                  out_ref):                     # VMEM (1, TILE_B) -- lane-dense
    idx = idx_ref[...]                          # (1, TILE_B) int32
    vocab_pad = embT_ref.shape[1]
    tile_b = idx.shape[1]

    # 1) One-hot gather on the MXU: onehot[v, b] = (v == idx[b]).
    row_ids = lax.broadcasted_iota(jnp.int32, (vocab_pad, tile_b), 0)
    onehot = (row_ids == idx).astype(embT_ref.dtype)            # (VOCAB_PAD, TILE_B)
    e_t = jnp.dot(embT_ref[...], onehot,
                  preferred_element_type=jnp.float32)            # (64, TILE_B)

    # 2) MLP in transposed (feature, batch) layout -- batch stays on lanes.
    h1 = jnp.maximum(
        jnp.dot(w1_ref[...], e_t, preferred_element_type=jnp.float32) + b1_ref[...],
        0.0)                                                     # (64, TILE_B)
    h2 = jnp.maximum(
        jnp.dot(w2_ref[...], h1, preferred_element_type=jnp.float32) + b2_ref[...],
        0.0)                                                     # (64, TILE_B)

    # 3) Final projection lands directly in the lane-dense (1, TILE_B) output.
    v = jnp.dot(w3_ref[...], h2, preferred_element_type=jnp.float32)  # (1, TILE_B)
    out_ref[...] = v + b3_ref[0]


def critic_forward(x, params, tile_b=None):
    """x: (B, F) float32; returns (B, 1) float32 state value."""
    emb, w1, b1, w2, b2, w3, b3 = params
    B = x.shape[0]

    if tile_b is None:
        # Lane-dense tiles (multiple of 128), capped at 512; large batches then
        # split into >=2 parallel tiles (keeps v7x's second TC busy).
        tile_b = min(MAX_TILE_B, ((B + 127) // 128) * 128)

    # glue: x[:, 0].long(), clamped so OOB positions never select garbage.
    idx = jnp.clip(x[:, 0].astype(jnp.int32), 0, VOCAB - 1)

    num_tiles = pl.cdiv(B, tile_b)
    b_pad = num_tiles * tile_b
    if b_pad != B:
        idx = jnp.pad(idx, (0, b_pad - B))        # pad rows select row 0; sliced off below
    idx2d = idx.reshape(num_tiles, tile_b)

    # Pre-transpose + pad the embedding table once (wrapper-side layout plumbing).
    emb_t = jnp.zeros((HIDDEN, VOCAB_PAD), emb.dtype).at[:, :VOCAB].set(emb.T)
    b1c = b1.reshape(HIDDEN, 1)
    b2c = b2.reshape(HIDDEN, 1)

    const = lambda i: (0, 0)

    grid_spec = pltpu.PrefetchScalarGridSpec(
        num_scalar_prefetch=0,
        grid=(num_tiles,),
        in_specs=[
            pl.BlockSpec((1, tile_b), lambda i: (i, 0)),          # per-tile indices
            pl.BlockSpec(emb_t.shape, const),                     # table resident in VMEM
            pl.BlockSpec(w1.shape, const), pl.BlockSpec((HIDDEN, 1), const),
            pl.BlockSpec(w2.shape, const), pl.BlockSpec((HIDDEN, 1), const),
            pl.BlockSpec(w3.shape, const),
            pl.BlockSpec(memory_space=pltpu.MemorySpace.SMEM),    # b3 scalar
        ],
        out_specs=pl.BlockSpec((1, tile_b), lambda i: (0, i)),    # lane-dense output
    )

    out = pl.pallas_call(
        critic_kernel,
        out_shape=jax.ShapeDtypeStruct((1, b_pad), jnp.float32),
        grid_spec=grid_spec,
        compiler_params=pltpu.CompilerParams(
            dimension_semantics=("parallel",)),   # tiles independent -> both TCs on v7x
    )(idx2d, emb_t, w1, b1c, w2, b2c, w3, b3)

    return out[0, :B].reshape(B, 1)


def init_params(key):
    """Deterministic parameter init mirroring nn.Linear / nn.Embedding shapes."""
    ks = jax.random.split(key, 7)
    bound = 1.0 / jnp.sqrt(jnp.float32(HIDDEN))
    emb = jax.random.normal(ks[0], (VOCAB, HIDDEN), jnp.float32)          # nn.Embedding(1400, 64)
    # fc1/fc2 in PyTorch layout (out, in); biases (out,).
    w1 = jax.random.uniform(ks[1], (HIDDEN, HIDDEN), jnp.float32, -bound, bound)
    b1 = jax.random.uniform(ks[2], (HIDDEN,), jnp.float32, -bound, bound)
    w2 = jax.random.uniform(ks[3], (HIDDEN, HIDDEN), jnp.float32, -bound, bound)
    b2 = jax.random.uniform(ks[4], (HIDDEN,), jnp.float32, -bound, bound)
    # state_value: weight (1, 64), bias (1,).
    w3 = jax.random.uniform(ks[5], (1, HIDDEN), jnp.float32, -bound, bound)
    b3 = jax.random.uniform(ks[6], (1,), jnp.float32, -bound, bound)
    return emb, w1, b1, w2, b2, w3, b3


def ref_forward(x, params):
    emb, w1, b1, w2, b2, w3, b3 = params
    idx = jnp.clip(x[:, 0].astype(jnp.int32), 0, VOCAB - 1)
    e = emb[idx]
    h1 = jnp.maximum(e @ w1.T + b1, 0.0)
    h2 = jnp.maximum(h1 @ w2.T + b2, 0.0)
    return h2 @ w3.T + b3


if __name__ == "__main__":
    # Full-f32 matmuls in both kernel and reference for a tight comparison.
    jax.config.update("jax_default_matmul_precision", "highest")

    key = jax.random.PRNGKey(0)
    k_param, k_idx, k_rest = jax.random.split(key, 3)

    B, F = 8, 2
    params = init_params(k_param)

    # x: (B, F) float32 -- column 0 holds integer-valued positions in [0, 1400).
    pos = jax.random.randint(k_idx, (B,), 0, VOCAB).astype(jnp.float32)
    rest = jax.random.normal(k_rest, (B, F - 1), jnp.float32)
    x = jnp.concatenate([pos[:, None], rest], axis=1)

    out = jax.block_until_ready(critic_forward(x, params))
    ref = jax.block_until_ready(ref_forward(x, params))

    assert out.shape == (B, 1), out.shape
    assert jnp.allclose(out, ref, atol=1e-4, rtol=1e-4), (out, ref)
    print("KERNEL_OK")
</pallas_src>

<mosaic_0001>
module attributes {stable_mosaic.version = 11 : i64} {
  func.func @critic_kernel(%arg0: i32, %arg1: memref<1x128xi32, #tpu.memory_space<vmem>>, %arg2: memref<64x1408xf32, #tpu.memory_space<vmem>>, %arg3: memref<64x64xf32, #tpu.memory_space<vmem>>, %arg4: memref<64x1xf32, #tpu.memory_space<vmem>>, %arg5: memref<64x64xf32, #tpu.memory_space<vmem>>, %arg6: memref<64x1xf32, #tpu.memory_space<vmem>>, %arg7: memref<1x64xf32, #tpu.memory_space<vmem>>, %arg8: memref<1xf32, #tpu.memory_space<smem>>, %arg9: memref<1x128xf32, #tpu.memory_space<vmem>>) attributes {dimension_semantics = [#tpu.dimension_semantics<parallel>], iteration_bounds = array<i64: 1>, scalar_prefetch = 0 : i64, scratch_operands = 0 : i64, tpu.core_type = #tpu.core_type<tc>, window_params = [{transform_indices = @transform_0, window_bounds = array<i64: 1, 128>}, {pipeline_mode = #tpu.pipeline_mode<synchronous>, transform_indices = @transform_1, window_bounds = array<i64: 64, 1408>}, {pipeline_mode = #tpu.pipeline_mode<synchronous>, transform_indices = @transform_2, window_bounds = array<i64: 64, 64>}, {pipeline_mode = #tpu.pipeline_mode<synchronous>, transform_indices = @transform_3, window_bounds = array<i64: 64, 1>}, {pipeline_mode = #tpu.pipeline_mode<synchronous>, transform_indices = @transform_4, window_bounds = array<i64: 64, 64>}, {pipeline_mode = #tpu.pipeline_mode<synchronous>, transform_indices = @transform_5, window_bounds = array<i64: 64, 1>}, {pipeline_mode = #tpu.pipeline_mode<synchronous>, transform_indices = @transform_6, window_bounds = array<i64: 1, 64>}, {transform_indices = @transform_7, window_bounds = array<i64: 1>}, {transform_indices = @transform_8, window_bounds = array<i64: 1, 128>}]} {
    %c0 = arith.constant 0 : index
    %c0_0 = arith.constant 0 : index
    %0 = vector.load %arg1[%c0, %c0_0] : memref<1x128xi32, #tpu.memory_space<vmem>>, vector<1x128xi32>
    %1 = tpu.iota {dimensions = array<i32: 0>} : vector<1408x128xi32>
    %2 = vector.broadcast %0 : vector<1x128xi32> to vector<1408x128xi32>
    %3 = arith.cmpi eq, %1, %2 : vector<1408x128xi32>
    %4 = arith.extui %3 : vector<1408x128xi1> to vector<1408x128xi32>
    %5 = arith.sitofp %4 : vector<1408x128xi32> to vector<1408x128xf32>
    %c0_1 = arith.constant 0 : index
    %c0_2 = arith.constant 0 : index
    %6 = vector.load %arg2[%c0_1, %c0_2] : memref<64x1408xf32, #tpu.memory_space<vmem>>, vector<64x1408xf32>
    %cst = arith.constant dense<0.000000e+00> : vector<64x128xf32>
    %7 = tpu.matmul %6, %5, %cst {dimension_numbers = #tpu.dot_dimension_numbers<[1], [0], [0], [1], [0, 0, 1, 1], [], []>, precision = #tpu.contract_precision<fp32>} : vector<64x1408xf32>, vector<1408x128xf32>, vector<64x128xf32> -> vector<64x128xf32>
    %c0_3 = arith.constant 0 : index
    %c0_4 = arith.constant 0 : index
    %8 = vector.load %arg3[%c0_3, %c0_4] : memref<64x64xf32, #tpu.memory_space<vmem>>, vector<64x64xf32>
    %cst_5 = arith.constant dense<0.000000e+00> : vector<64x128xf32>
    %9 = tpu.matmul %8, %7, %cst_5 {dimension_numbers = #tpu.dot_dimension_numbers<[1], [0], [0], [1], [0, 0, 1, 1], [], []>, precision = #tpu.contract_precision<fp32>} : vector<64x64xf32>, vector<64x128xf32>, vector<64x128xf32> -> vector<64x128xf32>
    %c0_6 = arith.constant 0 : index
    %c0_7 = arith.constant 0 : index
    %10 = vector.load %arg4[%c0_6, %c0_7] : memref<64x1xf32, #tpu.memory_space<vmem>>, vector<64x1xf32>
    %11 = vector.broadcast %10 : vector<64x1xf32> to vector<64x128xf32>
    %12 = arith.addf %9, %11 : vector<64x128xf32>
    %cst_8 = arith.constant 0.000000e+00 : f32
    %13 = vector.broadcast %cst_8 : f32 to vector<64x128xf32>
    %14 = arith.maximumf %12, %13 : vector<64x128xf32>
    %c0_9 = arith.constant 0 : index
    %c0_10 = arith.constant 0 : index
    %15 = vector.load %arg5[%c0_9, %c0_10] : memref<64x64xf32, #tpu.memory_space<vmem>>, vector<64x64xf32>
    %cst_11 = arith.constant dense<0.000000e+00> : vector<64x128xf32>
    %16 = tpu.matmul %15, %14, %cst_11 {dimension_numbers = #tpu.dot_dimension_numbers<[1], [0], [0], [1], [0, 0, 1, 1], [], []>, precision = #tpu.contract_precision<fp32>} : vector<64x64xf32>, vector<64x128xf32>, vector<64x128xf32> -> vector<64x128xf32>
    %c0_12 = arith.constant 0 : index
    %c0_13 = arith.constant 0 : index
    %17 = vector.load %arg6[%c0_12, %c0_13] : memref<64x1xf32, #tpu.memory_space<vmem>>, vector<64x1xf32>
    %18 = vector.broadcast %17 : vector<64x1xf32> to vector<64x128xf32>
    %19 = arith.addf %16, %18 : vector<64x128xf32>
    %cst_14 = arith.constant 0.000000e+00 : f32
    %20 = vector.broadcast %cst_14 : f32 to vector<64x128xf32>
    %21 = arith.maximumf %19, %20 : vector<64x128xf32>
    %c0_15 = arith.constant 0 : index
    %c0_16 = arith.constant 0 : index
    %22 = vector.load %arg7[%c0_15, %c0_16] : memref<1x64xf32, #tpu.memory_space<vmem>>, vector<1x64xf32>
    %cst_17 = arith.constant dense<0.000000e+00> : vector<1x128xf32>
    %23 = tpu.matmul %22, %21, %cst_17 {dimension_numbers = #tpu.dot_dimension_numbers<[1], [0], [0], [1], [0, 0, 1, 1], [], []>, precision = #tpu.contract_precision<fp32>} : vector<1x64xf32>, vector<64x128xf32>, vector<1x128xf32> -> vector<1x128xf32>
    %c0_18 = arith.constant 0 : index
    %24 = memref.load %arg8[%c0_18] : memref<1xf32, #tpu.memory_space<smem>>
    %25 = vector.broadcast %24 : f32 to vector<1x128xf32>
    %26 = arith.addf %23, %25 : vector<1x128xf32>
    %c0_19 = arith.constant 0 : index
    %c0_20 = arith.constant 0 : index
    %27 = vector.load %arg9[%c0_19, %c0_20] : memref<1x128xf32, #tpu.memory_space<vmem>>, vector<1x128xf32>
    tpu.vector_store %arg9[%c0_19, %c0_20], %26 {strides = array<i32>} : memref<1x128xf32, #tpu.memory_space<vmem>>, vector<1x128xf32>,
    return
  }
  func.func @transform_0(%arg0: i32) -> (i32, i32) {
    %c0_i32 = arith.constant 0 : i32
    %c0_i32_0 = arith.constant 0 : i32
    return %arg0, %c0_i32 : i32, i32
  }
  func.func @transform_1(%arg0: i32) -> (i32, i32) {
    %c0_i32 = arith.constant 0 : i32
    %c0_i32_0 = arith.constant 0 : i32
    %c0_i32_1 = arith.constant 0 : i32
    return %c0_i32, %c0_i32_0 : i32, i32
  }
  func.func @transform_2(%arg0: i32) -> (i32, i32) {
    %c0_i32 = arith.constant 0 : i32
    %c0_i32_0 = arith.constant 0 : i32
    %c0_i32_1 = arith.constant 0 : i32
    return %c0_i32, %c0_i32_0 : i32, i32
  }
  func.func @transform_3(%arg0: i32) -> (i32, i32) {
    %c0_i32 = arith.constant 0 : i32
    %c0_i32_0 = arith.constant 0 : i32
    %c0_i32_1 = arith.constant 0 : i32
    return %c0_i32, %c0_i32_0 : i32, i32
  }
  func.func @transform_4(%arg0: i32) -> (i32, i32) {
    %c0_i32 = arith.constant 0 : i32
    %c0_i32_0 = arith.constant 0 : i32
    %c0_i32_1 = arith.constant 0 : i32
    return %c0_i32, %c0_i32_0 : i32, i32
  }
  func.func @transform_5(%arg0: i32) -> (i32, i32) {
    %c0_i32 = arith.constant 0 : i32
    %c0_i32_0 = arith.constant 0 : i32
    %c0_i32_1 = arith.constant 0 : i32
    return %c0_i32, %c0_i32_0 : i32, i32
  }
  func.func @transform_6(%arg0: i32) -> (i32, i32) {
    %c0_i32 = arith.constant 0 : i32
    %c0_i32_0 = arith.constant 0 : i32
    %c0_i32_1 = arith.constant 0 : i32
    return %c0_i32, %c0_i32_0 : i32, i32
  }
  func.func @transform_7(%arg0: i32) -> i32 {
    %c0_i32 = arith.constant 0 : i32
    %c0_i32_0 = arith.constant 0 : i32
    return %c0_i32 : i32
  }
  func.func @transform_8(%arg0: i32) -> (i32, i32) {
    %c0_i32 = arith.constant 0 : i32
    %c0_i32_0 = arith.constant 0 : i32
    return %c0_i32, %arg0 : i32, i32
  }
}

</mosaic_0001>

<llo_original>
// kernel: tpu_custom_call.1
$region0: #{tpu_custom_call.1}
  #allocation0 [shape = 'u32[]', space=smem, size = 0x4, offset = 0x4, fixed_abs, tag = 'smem constant byte address 0x4 - core index']
  #allocation1 [shape = 'u32[144,128]{1,0:T(1,128)}', space=vmem, size = 0x12000, scoped, tag = 'internal scratch']
  #allocation2 [shape = 'f32[1]{0:T(128)S(6)}', space=smem, size = 0x200, scoped, tag = 'scoped memory for tpu_custom_call.1']
  %s0 = inlined_call_operand.vmem [shape: s32[1,128], index: 0, kind: input, shape index: {}]
  %s1 = inlined_call_operand.hbm [shape: f32[64,1408], index: 1, kind: input, shape index: {}]
  %s2 = inlined_call_operand.vmem [shape: f32[64,64], index: 2, kind: input, shape index: {}]
  %s3 = inlined_call_operand.vmem [shape: f32[64,1], index: 3, kind: input, shape index: {}]
  %s4 = inlined_call_operand.vmem [shape: f32[64,64], index: 4, kind: input, shape index: {}]
  %s5 = inlined_call_operand.vmem [shape: f32[64,1], index: 5, kind: input, shape index: {}]
  %s6 = inlined_call_operand.vmem [shape: f32[1,64], index: 6, kind: input, shape index: {}]
  %s7 = inlined_call_operand.<no memory space> [shape: f32[1], index: 7, kind: input, shape index: {}]
  %s8 = inlined_call_operand.hbm [shape: f32[1,128], index: 8, kind: output, shape index: {}]
  %s9 = sld [smem:[#allocation0]]
  $region46: #{tpu_custom_call.1} parent=0
    _
  %s11 = ssub.s32 1, %s9
  %s12 = scalar_select 0, %s11, %s9
  %13 = sst [smem:[#allocation2]] %s7
  $region1: #{tpu_custom_call.1} parent=0
    #allocation3 [shape = 'u8[360448]{0}', space=vmem, size = 0x58000, scoped, tag = 'input window, operand 1, single buffered']
    #allocation4 [shape = 's32[1]{0}', space=sflag, size = 0x4, scoped, tag = 'scoped memory for tpu_custom_call.1']
    #allocation5 [shape = 's32[1]{0}', space=sflag, size = 0x4, scoped, tag = 'scoped memory for tpu_custom_call.1']
    #allocation6 [shape = 'u8[512]{0}', space=vmem, size = 0x400, scoped, tag = 'output window, operand 0, single buffered']
    %14 = vsyncpa [#allocation4], 0
    %15 = vsyncpa [#allocation5], 0
    // Predicated region
    $region2: #{tpu_custom_call.1} parent=1 // pred_check
      _
    $region3: #{tpu_custom_call.1} parent=1 // pred_check_branch
      %17 = sbr.rel (0) target = $region5
    $region4: #{tpu_custom_call.1} parent=1 // pred_region
      _
    $region5: #{tpu_custom_call.1} parent=1 // pred_fallthru
      _
    // Predicated region
    $region6: #{tpu_custom_call.1} parent=1 // pred_check
      _
    $region7: #{tpu_custom_call.1} parent=1 // pred_check_branch
      %19 = sbr.rel (0) target = $region9
    $region8: #{tpu_custom_call.1} parent=1 // pred_region
      %s21 = ssub.s32 11264, 11264
      %22 = vsyncadd [#allocation4], %s21
      %s23 = sshll.u32 [#allocation3], 4
      %s24 = int_to_ptr.vmem [resolvable:$true] %s23
      %29 = dma.hbm_to_vmem [thread:$0]  %s1, 11264, %s24, [#allocation4], 1408, 1408, 88
    $region9: #{tpu_custom_call.1} parent=1 // pred_fallthru
      _
    // Predicated region
    $region10: #{tpu_custom_call.1} parent=1 // pred_check
      _
    $region11: #{tpu_custom_call.1} parent=1 // pred_check_branch
      %31 = sbr.rel (0) target = $region13
    $region12: #{tpu_custom_call.1} parent=1 // pred_region
      _
    $region13: #{tpu_custom_call.1} parent=1 // pred_fallthru
      _
    // Predicated region
    $region14: #{tpu_custom_call.1} parent=1 // pred_check
      _
    $region15: #{tpu_custom_call.1} parent=1 // pred_check_branch
      %33 = sbr.rel (0) target = $region17
    $region16: #{tpu_custom_call.1} parent=1 // pred_region
      _
    $region17: #{tpu_custom_call.1} parent=1 // pred_fallthru
      _
    // Predicated region
    $region18: #{tpu_custom_call.1} parent=1 // pred_check
      _
    $region19: #{tpu_custom_call.1} parent=1 // pred_check_branch
      %35 = sbr.rel (0) target = $region21
    $region20: #{tpu_custom_call.1} parent=1 // pred_region
      _
    $region21: #{tpu_custom_call.1} parent=1 // pred_fallthru
      _
    // Predicated region
    $region22: #{tpu_custom_call.1} parent=1 // pred_check
      _
    $region23: #{tpu_custom_call.1} parent=1 // pred_check_branch
      %37 = sbr.rel (0) target = $region25
    $region24: #{tpu_custom_call.1} parent=1 // pred_region
      _
    $region25: #{tpu_custom_call.1} parent=1 // pred_fallthru
      _
    // Predicated region
    $region26: #{tpu_custom_call.1} parent=1 // pred_check
      _
    $region27: #{tpu_custom_call.1} parent=1 // pred_check_branch
      %39 = sbr.rel (0) target = $region29
    $region28: #{tpu_custom_call.1} parent=1 // pred_region
      _
    $region29: #{tpu_custom_call.1} parent=1 // pred_fallthru
      _
    // Predicated region
    $region30: #{tpu_custom_call.1} parent=1 // pred_check
      _
    $region31: #{tpu_custom_call.1} parent=1 // pred_check_branch
      %41 = sbr.rel (0) target = $region33
    $region32: #{tpu_custom_call.1} parent=1 // pred_region
      _
    $region33: #{tpu_custom_call.1} parent=1 // pred_fallthru
      _
    // Predicated region
    $region34: #{tpu_custom_call.1} parent=1 // pred_check
      _
    $region35: #{tpu_custom_call.1} parent=1 // pred_check_branch
      %43 = sbr.rel (0) target = $region37
    $region36: #{tpu_custom_call.1} parent=1 // pred_region
      %44 = dma.done [#allocation4], 11264
    $region37: #{tpu_custom_call.1} parent=1 // pred_fallthru
      _
    %v45 = vld [vmem:[%s0] sm:$0x1]
    %v46 = vlaneseq
    %v47 = vshrl.u32 %v46, 7
    %v48 = vadd.s32 %v47, 8
    %v49 = vadd.s32 %v47, 16
    %v50 = vadd.s32 %v47, 24
    %v51 = vadd.s32 %v47, 32
    %v52 = vadd.s32 %v47, 40
    %v53 = vadd.s32 %v47, 48
    %v54 = vadd.s32 %v47, 56
    %v55 = vadd.s32 %v47, 64
    %v56 = vadd.s32 %v47, 72
    %v57 = vadd.s32 %v47, 80
    %v58 = vadd.s32 %v47, 88
    %v59 = vadd.s32 %v47, 96
    %v60 = vadd.s32 %v47, 104
    %v61 = vadd.s32 %v47, 112
    %v62 = vadd.s32 %v47, 120
    %v63 = vadd.s32 %v47, 128
    %v64 = vadd.s32 %v47, 136
    %v65 = vadd.s32 %v47, 144
    %v66 = vadd.s32 %v47, 152
    %v67 = vadd.s32 %v47, 160
    %v68 = vadd.s32 %v47, 168
    %v69 = vadd.s32 %v47, 176
    %v70 = vadd.s32 %v47, 184
    %v71 = vadd.s32 %v47, 192
    %v72 = vadd.s32 %v47, 200
    %v73 = vadd.s32 %v47, 208
    %v74 = vadd.s32 %v47, 216
    %v75 = vadd.s32 %v47, 224
    %v76 = vadd.s32 %v47, 232
    %v77 = vadd.s32 %v47, 240
    %v78 = vadd.s32 %v47, 248
    %v79 = vadd.s32 %v47, 256
    %v80 = vadd.s32 %v47, 264
    %v81 = vadd.s32 %v47, 272
    %v82 = vadd.s32 %v47, 280
    %v83 = vadd.s32 %v47, 288
    %v84 = vadd.s32 %v47, 296
    %v85 = vadd.s32 %v47, 304
    %v86 = vadd.s32 %v47, 312
    %v87 = vadd.s32 %v47, 320
    %v88 = vadd.s32 %v47, 328
    %v89 = vadd.s32 %v47, 336
    %v90 = vadd.s32 %v47, 344
    %v91 = vadd.s32 %v47, 352
    %v92 = vadd.s32 %v47, 360
    %v93 = vadd.s32 %v47, 368
    %v94 = vadd.s32 %v47, 376
    %v95 = vadd.s32 %v47, 384
    %v96 = vadd.s32 %v47, 392
    %v97 = vadd.s32 %v47, 400
    %v98 = vadd.s32 %v47, 408
    %v99 = vadd.s32 %v47, 416
    %v100 = vadd.s32 %v47, 424
    %v101 = vadd.s32 %v47, 432
    %v102 = vadd.s32 %v47, 440
    %v103 = vadd.s32 %v47, 448
    %v104 = vadd.s32 %v47, 456
    %v105 = vadd.s32 %v47, 464
    %v106 = vadd.s32 %v47, 472
    %v107 = vadd.s32 %v47, 480
    %v108 = vadd.s32 %v47, 488
    %v109 = vadd.s32 %v47, 496
    %v110 = vadd.s32 %v47, 504
    %v111 = vadd.s32 %v47, 512
    %v112 = vadd.s32 %v47, 520
    %v113 = vadd.s32 %v47, 528
    %v114 = vadd.s32 %v47, 536
    %v115 = vadd.s32 %v47, 544
    %v116 = vadd.s32 %v47, 552
    %v117 = vadd.s32 %v47, 560
    %v118 = vadd.s32 %v47, 568
    %v119 = vadd.s32 %v47, 576
    %v120 = vadd.s32 %v47, 584
    %v121 = vadd.s32 %v47, 592
    %v122 = vadd.s32 %v47, 600
    %v123 = vadd.s32 %v47, 608
    %v124 = vadd.s32 %v47, 616
    %v125 = vadd.s32 %v47, 624
    %v126 = vadd.s32 %v47, 632
    %v127 = vadd.s32 %v47, 640
    %v128 = vadd.s32 %v47, 648
    %v129 = vadd.s32 %v47, 656
    %v130 = vadd.s32 %v47, 664
    %v131 = vadd.s32 %v47, 672
    %v132 = vadd.s32 %v47, 680
    %v133 = vadd.s32 %v47, 688
    %v134 = vadd.s32 %v47, 696
    %v135 = vadd.s32 %v47, 704
    %v136 = vadd.s32 %v47, 712
    %v137 = vadd.s32 %v47, 720
    %v138 = vadd.s32 %v47, 728
    %v139 = vadd.s32 %v47, 736
    %v140 = vadd.s32 %v47, 744
    %v141 = vadd.s32 %v47, 752
    %v142 = vadd.s32 %v47, 760
    %v143 = vadd.s32 %v47, 768
    %v144 = vadd.s32 %v47, 776
    %v145 = vadd.s32 %v47, 784
    %v146 = vadd.s32 %v47, 792
    %v147 = vadd.s32 %v47, 800
    %v148 = vadd.s32 %v47, 808
    %v149 = vadd.s32 %v47, 816
    %v150 = vadd.s32 %v47, 824
    %v151 = vadd.s32 %v47, 832
    %v152 = vadd.s32 %v47, 840
    %v153 = vadd.s32 %v47, 848
    %v154 = vadd.s32 %v47, 856
    %v155 = vadd.s32 %v47, 864
    %v156 = vadd.s32 %v47, 872
    %v157 = vadd.s32 %v47, 880
    %v158 = vadd.s32 %v47, 888
    %v159 = vadd.s32 %v47, 896
    %v160 = vadd.s32 %v47, 904
    %v161 = vadd.s32 %v47, 912
    %v162 = vadd.s32 %v47, 920
    %v163 = vadd.s32 %v47, 928
    %v164 = vadd.s32 %v47, 936
    %v165 = vadd.s32 %v47, 944
    %v166 = vadd.s32 %v47, 952
    %v167 = vadd.s32 %v47, 960
    %v168 = vadd.s32 %v47, 968
    %v169 = vadd.s32 %v47, 976
    %v170 = vadd.s32 %v47, 984
    %v171 = vadd.s32 %v47, 992
    %v172 = vadd.s32 %v47, 1000
    %v173 = vadd.s32 %v47, 1008
    %v174 = vadd.s32 %v47, 1016
    %v175 = vadd.s32 %v47, 1024
    %v176 = vadd.s32 %v47, 1032
    %v177 = vadd.s32 %v47, 1040
    %v178 = vadd.s32 %v47, 1048
    %v179 = vadd.s32 %v47, 1056
    %v180 = vadd.s32 %v47, 1064
    %v181 = vadd.s32 %v47, 1072
    %v182 = vadd.s32 %v47, 1080
    %v183 = vadd.s32 %v47, 1088
    %v184 = vadd.s32 %v47, 1096
    %v185 = vadd.s32 %v47, 1104
    %v186 = vadd.s32 %v47, 1112
    %v187 = vadd.s32 %v47, 1120
    %v188 = vadd.s32 %v47, 1128
    %v189 = vadd.s32 %v47, 1136
    %v190 = vadd.s32 %v47, 1144
    %v191 = vadd.s32 %v47, 1152
    %v192 = vadd.s32 %v47, 1160
    %v193 = vadd.s32 %v47, 1168
    %v194 = vadd.s32 %v47, 1176
    %v195 = vadd.s32 %v47, 1184
    %v196 = vadd.s32 %v47, 1192
    %v197 = vadd.s32 %v47, 1200
    %v198 = vadd.s32 %v47, 1208
    %v199 = vadd.s32 %v47, 1216
    %v200 = vadd.s32 %v47, 1224
    %v201 = vadd.s32 %v47, 1232
    %v202 = vadd.s32 %v47, 1240
    %v203 = vadd.s32 %v47, 1248
    %v204 = vadd.s32 %v47, 1256
    %v205 = vadd.s32 %v47, 1264
    %v206 = vadd.s32 %v47, 1272
    %v207 = vadd.s32 %v47, 1280
    %v208 = vadd.s32 %v47, 1288
    %v209 = vadd.s32 %v47, 1296
    %v210 = vadd.s32 %v47, 1304
    %v211 = vadd.s32 %v47, 1312
    %v212 = vadd.s32 %v47, 1320
    %v213 = vadd.s32 %v47, 1328
    %v214 = vadd.s32 %v47, 1336
    %v215 = vadd.s32 %v47, 1344
    %v216 = vadd.s32 %v47, 1352
    %v217 = vadd.s32 %v47, 1360
    %v218 = vadd.s32 %v47, 1368
    %v219 = vadd.s32 %v47, 1376
    %v220 = vadd.s32 %v47, 1384
    %v221 = vadd.s32 %v47, 1392
    %v222 = vadd.s32 %v47, 1400
    %v223 = vlaneseq
    %v224 = vshrl.u32 %v223, 7
    %v225 = vsub.s32 0, %v224
    %v226 = vrot.slane %v45, %v225
    %vm227 = vcmp.eq.s32.totalorder %v47, %v226
    %vm228 = vcmp.eq.s32.totalorder %v48, %v226
    %vm229 = vcmp.eq.s32.totalorder %v49, %v226
    %vm230 = vcmp.eq.s32.totalorder %v50, %v226
    %vm231 = vcmp.eq.s32.totalorder %v51, %v226
    %vm232 = vcmp.eq.s32.totalorder %v52, %v226
    %vm233 = vcmp.eq.s32.totalorder %v53, %v226
    %vm234 = vcmp.eq.s32.totalorder %v54, %v226
    %vm235 = vcmp.eq.s32.totalorder %v55, %v226
    %vm236 = vcmp.eq.s32.totalorder %v56, %v226
    %vm237 = vcmp.eq.s32.totalorder %v57, %v226
    %vm238 = vcmp.eq.s32.totalorder %v58, %v226
    %vm239 = vcmp.eq.s32.totalorder %v59, %v226
    %vm240 = vcmp.eq.s32.totalorder %v60, %v226
    %vm241 = vcmp.eq.s32.totalorder %v61, %v226
    %vm242 = vcmp.eq.s32.totalorder %v62, %v226
    %vm243 = vcmp.eq.s32.totalorder %v63, %v226
    %vm244 = vcmp.eq.s32.totalorder %v64, %v226
    %vm245 = vcmp.eq.s32.totalorder %v65, %v226
    %vm246 = vcmp.eq.s32.totalorder %v66, %v226
    %vm247 = vcmp.eq.s32.totalorder %v67, %v226
    %vm248 = vcmp.eq.s32.totalorder %v68, %v226
    %vm249 = vcmp.eq.s32.totalorder %v69, %v226
    %vm250 = vcmp.eq.s32.totalorder %v70, %v226
    %vm251 = vcmp.eq.s32.totalorder %v71, %v226
    %vm252 = vcmp.eq.s32.totalorder %v72, %v226
    %vm253 = vcmp.eq.s32.totalorder %v73, %v226
    %vm254 = vcmp.eq.s32.totalorder %v74, %v226
    %vm255 = vcmp.eq.s32.totalorder %v75, %v226
    %vm256 = vcmp.eq.s32.totalorder %v76, %v226
    %vm257 = vcmp.eq.s32.totalorder %v77, %v226
    %vm258 = vcmp.eq.s32.totalorder %v78, %v226
    %vm259 = vcmp.eq.s32.totalorder %v79, %v226
    %vm260 = vcmp.eq.s32.totalorder %v80, %v226
    %vm261 = vcmp.eq.s32.totalorder %v81, %v226
    %vm262 = vcmp.eq.s32.totalorder %v82, %v226
    %vm263 = vcmp.eq.s32.totalorder %v83, %v226
    %vm264 = vcmp.eq.s32.totalorder %v84, %v226
    %vm265 = vcmp.eq.s32.totalorder %v85, %v226
    %vm266 = vcmp.eq.s32.totalorder %v86, %v226
    %vm267 = vcmp.eq.s32.totalorder %v87, %v226
    %vm268 = vcmp.eq.s32.totalorder %v88, %v226
    %vm269 = vcmp.eq.s32.totalorder %v89, %v226
    %vm270 = vcmp.eq.s32.totalorder %v90, %v226
    %vm271 = vcmp.eq.s32.totalorder %v91, %v226
    %vm272 = vcmp.eq.s32.totalorder %v92, %v226
    %vm273 = vcmp.eq.s32.totalorder %v93, %v226
    %vm274 = vcmp.eq.s32.totalorder %v94, %v226
    %vm275 = vcmp.eq.s32.totalorder %v95, %v226
    %vm276 = vcmp.eq.s32.totalorder %v96, %v226
    %vm277 = vcmp.eq.s32.totalorder %v97, %v226
    %vm278 = vcmp.eq.s32.totalorder %v98, %v226
    %vm279 = vcmp.eq.s32.totalorder %v99, %v226
    %vm280 = vcmp.eq.s32.totalorder %v100, %v226
    %vm281 = vcmp.eq.s32.totalorder %v101, %v226
    %vm282 = vcmp.eq.s32.totalorder %v102, %v226
    %vm283 = vcmp.eq.s32.totalorder %v103, %v226
    %vm284 = vcmp.eq.s32.totalorder %v104, %v226
    %vm285 = vcmp.eq.s32.totalorder %v105, %v226
    %vm286 = vcmp.eq.s32.totalorder %v106, %v226
    %vm287 = vcmp.eq.s32.totalorder %v107, %v226
    %vm288 = vcmp.eq.s32.totalorder %v108, %v226
    %vm289 = vcmp.eq.s32.totalorder %v109, %v226
    %vm290 = vcmp.eq.s32.totalorder %v110, %v226
    %vm291 = vcmp.eq.s32.totalorder %v111, %v226
    %vm292 = vcmp.eq.s32.totalorder %v112, %v226
    %vm293 = vcmp.eq.s32.totalorder %v113, %v226
    %vm294 = vcmp.eq.s32.totalorder %v114, %v226
    %vm295 = vcmp.eq.s32.totalorder %v115, %v226
    %vm296 = vcmp.eq.s32.totalorder %v116, %v226
    %vm297 = vcmp.eq.s32.totalorder %v117, %v226
    %vm298 = vcmp.eq.s32.totalorder %v118, %v226
    %vm299 = vcmp.eq.s32.totalorder %v119, %v226
    %vm300 = vcmp.eq.s32.totalorder %v120, %v226
    %vm301 = vcmp.eq.s32.totalorder %v121, %v226
    %vm302 = vcmp.eq.s32.totalorder %v122, %v226
    %vm303 = vcmp.eq.s32.totalorder %v123, %v226
    %vm304 = vcmp.eq.s32.totalorder %v124, %v226
    %vm305 = vcmp.eq.s32.totalorder %v125, %v226
    %vm306 = vcmp.eq.s32.totalorder %v126, %v226
    %vm307 = vcmp.eq.s32.totalorder %v127, %v226
    %vm308 = vcmp.eq.s32.totalorder %v128, %v226
    %vm309 = vcmp.eq.s32.totalorder %v129, %v226
    %vm310 = vcmp.eq.s32.totalorder %v130, %v226
    %vm311 = vcmp.eq.s32.totalorder %v131, %v226
    %vm312 = vcmp.eq.s32.totalorder %v132, %v226
    %vm313 = vcmp.eq.s32.totalorder %v133, %v226
    %vm314 = vcmp.eq.s32.totalorder %v134, %v226
    %vm315 = vcmp.eq.s32.totalorder %v135, %v226
    %vm316 = vcmp.eq.s32.totalorder %v136, %v226
    %vm317 = vcmp.eq.s32.totalorder %v137, %v226
    %vm318 = vcmp.eq.s32.totalorder %v138, %v226
    %vm319 = vcmp.eq.s32.totalorder %v139, %v226
    %vm320 = vcmp.eq.s32.totalorder %v140, %v226
    %vm321 = vcmp.eq.s32.totalorder %v141, %v226
    %vm322 = vcmp.eq.s32.totalorder %v142, %v226
    %vm323 = vcmp.eq.s32.totalorder %v143, %v226
    %vm324 = vcmp.eq.s32.totalorder %v144, %v226
    %vm325 = vcmp.eq.s32.totalorder %v145, %v226
    %vm326 = vcmp.eq.s32.totalorder %v146, %v226
    %vm327 = vcmp.eq.s32.totalorder %v147, %v226
    %vm328 = vcmp.eq.s32.totalorder %v148, %v226
    %vm329 = vcmp.eq.s32.totalorder %v149, %v226
    %vm330 = vcmp.eq.s32.totalorder %v150, %v226
    %vm331 = vcmp.eq.s32.totalorder %v151, %v226
    %vm332 = vcmp.eq.s32.totalorder %v152, %v226
    %vm333 = vcmp.eq.s32.totalorder %v153, %v226
    %vm334 = vcmp.eq.s32.totalorder %v154, %v226
    %vm335 = vcmp.eq.s32.totalorder %v155, %v226
    %vm336 = vcmp.eq.s32.totalorder %v156, %v226
    %vm337 = vcmp.eq.s32.totalorder %v157, %v226
    %vm338 = vcmp.eq.s32.totalorder %v158, %v226
    %vm339 = vcmp.eq.s32.totalorder %v159, %v226
    %vm340 = vcmp.eq.s32.totalorder %v160, %v226
    %vm341 = vcmp.eq.s32.totalorder %v161, %v226
    %vm342 = vcmp.eq.s32.totalorder %v162, %v226
    %vm343 = vcmp.eq.s32.totalorder %v163, %v226
    %vm344 = vcmp.eq.s32.totalorder %v164, %v226
    %vm345 = vcmp.eq.s32.totalorder %v165, %v226
    %vm346 = vcmp.eq.s32.totalorder %v166, %v226
    %vm347 = vcmp.eq.s32.totalorder %v167, %v226
    %vm348 = vcmp.eq.s32.totalorder %v168, %v226
    %vm349 = vcmp.eq.s32.totalorder %v169, %v226
    %vm350 = vcmp.eq.s32.totalorder %v170, %v226
    %vm351 = vcmp.eq.s32.totalorder %v171, %v226
    %vm352 = vcmp.eq.s32.totalorder %v172, %v226
    %vm353 = vcmp.eq.s32.totalorder %v173, %v226
    %vm354 = vcmp.eq.s32.totalorder %v174, %v226
    %vm355 = vcmp.eq.s32.totalorder %v175, %v226
    %vm356 = vcmp.eq.s32.totalorder %v176, %v226
    %vm357 = vcmp.eq.s32.totalorder %v177, %v226
    %vm358 = vcmp.eq.s32.totalorder %v178, %v226
    %vm359 = vcmp.eq.s32.totalorder %v179, %v226
    %vm360 = vcmp.eq.s32.totalorder %v180, %v226
    %vm361 = vcmp.eq.s32.totalorder %v181, %v226
    %vm362 = vcmp.eq.s32.totalorder %v182, %v226
    %vm363 = vcmp.eq.s32.totalorder %v183, %v226
    %vm364 = vcmp.eq.s32.totalorder %v184, %v226
    %vm365 = vcmp.eq.s32.totalorder %v185, %v226
    %vm366 = vcmp.eq.s32.totalorder %v186, %v226
    %vm367 = vcmp.eq.s32.totalorder %v187, %v226
    %vm368 = vcmp.eq.s32.totalorder %v188, %v226
    %vm369 = vcmp.eq.s32.totalorder %v189, %v226
    %vm370 = vcmp.eq.s32.totalorder %v190, %v226
    %vm371 = vcmp.eq.s32.totalorder %v191, %v226
    %vm372 = vcmp.eq.s32.totalorder %v192, %v226
    %vm373 = vcmp.eq.s32.totalorder %v193, %v226
    %vm374 = vcmp.eq.s32.totalorder %v194, %v226
    %vm375 = vcmp.eq.s32.totalorder %v195, %v226
    %vm376 = vcmp.eq.s32.totalorder %v196, %v226
    %vm377 = vcmp.eq.s32.totalorder %v197, %v226
    %vm378 = vcmp.eq.s32.totalorder %v198, %v226
    %vm379 = vcmp.eq.s32.totalorder %v199, %v226
    %vm380 = vcmp.eq.s32.totalorder %v200, %v226
    %vm381 = vcmp.eq.s32.totalorder %v201, %v226
    %vm382 = vcmp.eq.s32.totalorder %v202, %v226
    %vm383 = vcmp.eq.s32.totalorder %v203, %v226
    %vm384 = vcmp.eq.s32.totalorder %v204, %v226
    %vm385 = vcmp.eq.s32.totalorder %v205, %v226
    %vm386 = vcmp.eq.s32.totalorder %v206, %v226
    %vm387 = vcmp.eq.s32.totalorder %v207, %v226
    %vm388 = vcmp.eq.s32.totalorder %v208, %v226
    %vm389 = vcmp.eq.s32.totalorder %v209, %v226
    %vm390 = vcmp.eq.s32.totalorder %v210, %v226
    %vm391 = vcmp.eq.s32.totalorder %v211, %v226
    %vm392 = vcmp.eq.s32.totalorder %v212, %v226
    %vm393 = vcmp.eq.s32.totalorder %v213, %v226
    %vm394 = vcmp.eq.s32.totalorder %v214, %v226
    %vm395 = vcmp.eq.s32.totalorder %v215, %v226
    %vm396 = vcmp.eq.s32.totalorder %v216, %v226
    %vm397 = vcmp.eq.s32.totalorder %v217, %v226
    %vm398 = vcmp.eq.s32.totalorder %v218, %v226
    %vm399 = vcmp.eq.s32.totalorder %v219, %v226
    %vm400 = vcmp.eq.s32.totalorder %v220, %v226
    %vm401 = vcmp.eq.s32.totalorder %v221, %v226
    %vm402 = vcmp.eq.s32.totalorder %v222, %v226
    %v403 = vsel %vm227, 1, 0
    %v404 = vsel %vm228, 1, 0
    %v405 = vsel %vm229, 1, 0
    %v406 = vsel %vm230, 1, 0
    %v407 = vsel %vm231, 1, 0
    %v408 = vsel %vm232, 1, 0
    %v409 = vsel %vm233, 1, 0
    %v410 = vsel %vm234, 1, 0
    %v411 = vsel %vm235, 1, 0
    %v412 = vsel %vm236, 1, 0
    %v413 = vsel %vm237, 1, 0
    %v414 = vsel %vm238, 1, 0
    %v415 = vsel %vm239, 1, 0
    %v416 = vsel %vm240, 1, 0
    %v417 = vsel %vm241, 1, 0
    %v418 = vsel %vm242, 1, 0
    %v419 = vsel %vm243, 1, 0
    %v420 = vsel %vm244, 1, 0
    %v421 = vsel %vm245, 1, 0
    %v422 = vsel %vm246, 1, 0
    %v423 = vsel %vm247, 1, 0
    %v424 = vsel %vm248, 1, 0
    %v425 = vsel %vm249, 1, 0
    %v426 = vsel %vm250, 1, 0
    %v427 = vsel %vm251, 1, 0
    %v428 = vsel %vm252, 1, 0
    %v429 = vsel %vm253, 1, 0
    %v430 = vsel %vm254, 1, 0
    %v431 = vsel %vm255, 1, 0
    %v432 = vsel %vm256, 1, 0
    %v433 = vsel %vm257, 1, 0
    %v434 = vsel %vm258, 1, 0
    %v435 = vsel %vm259, 1, 0
    %v436 = vsel %vm260, 1, 0
    %v437 = vsel %vm261, 1, 0
    %v438 = vsel %vm262, 1, 0
    %v439 = vsel %vm263, 1, 0
    %v440 = vsel %vm264, 1, 0
    %v441 = vsel %vm265, 1, 0
    %v442 = vsel %vm266, 1, 0
    %v443 = vsel %vm267, 1, 0
    %v444 = vsel %vm268, 1, 0
    %v445 = vsel %vm269, 1, 0
    %v446 = vsel %vm270, 1, 0
    %v447 = vsel %vm271, 1, 0
    %v448 = vsel %vm272, 1, 0
    %v449 = vsel %vm273, 1, 0
    %v450 = vsel %vm274, 1, 0
    %v451 = vsel %vm275, 1, 0
    %v452 = vsel %vm276, 1, 0
    %v453 = vsel %vm277, 1, 0
    %v454 = vsel %vm278, 1, 0
    %v455 = vsel %vm279, 1, 0
    %v456 = vsel %vm280, 1, 0
    %v457 = vsel %vm281, 1, 0
    %v458 = vsel %vm282, 1, 0
    %v459 = vsel %vm283, 1, 0
    %v460 = vsel %vm284, 1, 0
    %v461 = vsel %vm285, 1, 0
    %v462 = vsel %vm286, 1, 0
    %v463 = vsel %vm287, 1, 0
    %v464 = vsel %vm288, 1, 0
    %v465 = vsel %vm289, 1, 0
    %v466 = vsel %vm290, 1, 0
    %v467 = vsel %vm291, 1, 0
    %v468 = vsel %vm292, 1, 0
    %v469 = vsel %vm293, 1, 0
    %v470 = vsel %vm294, 1, 0
    %v471 = vsel %vm295, 1, 0
    %v472 = vsel %vm296, 1, 0
    %v473 = vsel %vm297, 1, 0
    %v474 = vsel %vm298, 1, 0
    %v475 = vsel %vm299, 1, 0
    %v476 = vsel %vm300, 1, 0
    %v477 = vsel %vm301, 1, 0
    %v478 = vsel %vm302, 1, 0
    %v479 = vsel %vm303, 1, 0
    %v480 = vsel %vm304, 1, 0
    %v481 = vsel %vm305, 1, 0
    %v482 = vsel %vm306, 1, 0
    %v483 = vsel %vm307, 1, 0
    %v484 = vsel %vm308, 1, 0
    %v485 = vsel %vm309, 1, 0
    %v486 = vsel %vm310, 1, 0
    %v487 = vsel %vm311, 1, 0
    %v488 = vsel %vm312, 1, 0
    %v489 = vsel %vm313, 1, 0
    %v490 = vsel %vm314, 1, 0
    %v491 = vsel %vm315, 1, 0
    %v492 = vsel %vm316, 1, 0
    %v493 = vsel %vm317, 1, 0
    %v494 = vsel %vm318, 1, 0
    %v495 = vsel %vm319, 1, 0
    %v496 = vsel %vm320, 1, 0
    %v497 = vsel %vm321, 1, 0
    %v498 = vsel %vm322, 1, 0
    %v499 = vsel %vm323, 1, 0
    %v500 = vsel %vm324, 1, 0
    %v501 = vsel %vm325, 1, 0
    %v502 = vsel %vm326, 1, 0
    %v503 = vsel %vm327, 1, 0
    %v504 = vsel %vm328, 1, 0
    %v505 = vsel %vm329, 1, 0
    %v506 = vsel %vm330, 1, 0
    %v507 = vsel %vm331, 1, 0
    %v508 = vsel %vm332, 1, 0
    %v509 = vsel %vm333, 1, 0
    %v510 = vsel %vm334, 1, 0
    %v511 = vsel %vm335, 1, 0
    %v512 = vsel %vm336, 1, 0
    %v513 = vsel %vm337, 1, 0
    %v514 = vsel %vm338, 1, 0
    %v515 = vsel %vm339, 1, 0
    %v516 = vsel %vm340, 1, 0
    %v517 = vsel %vm341, 1, 0
    %v518 = vsel %vm342, 1, 0
    %v519 = vsel %vm343, 1, 0
    %v520 = vsel %vm344, 1, 0
    %v521 = vsel %vm345, 1, 0
    %v522 = vsel %vm346, 1, 0
    %v523 = vsel %vm347, 1, 0
    %v524 = vsel %vm348, 1, 0
    %v525 = vsel %vm349, 1, 0
    %v526 = vsel %vm350, 1, 0
    %v527 = vsel %vm351, 1, 0
    %v528 = vsel %vm352, 1, 0
    %v529 = vsel %vm353, 1, 0
    %v530 = vsel %vm354, 1, 0
    %v531 = vsel %vm355, 1, 0
    %v532 = vsel %vm356, 1, 0
    %v533 = vsel %vm357, 1, 0
    %v534 = vsel %vm358, 1, 0
    %v535 = vsel %vm359, 1, 0
    %v536 = vsel %vm360, 1, 0
    %v537 = vsel %vm361, 1, 0
    %v538 = vsel %vm362, 1, 0
    %v539 = vsel %vm363, 1, 0
    %v540 = vsel %vm364, 1, 0
    %v541 = vsel %vm365, 1, 0
    %v542 = vsel %vm366, 1, 0
    %v543 = vsel %vm367, 1, 0
    %v544 = vsel %vm368, 1, 0
    %v545 = vsel %vm369, 1, 0
    %v546 = vsel %vm370, 1, 0
    %v547 = vsel %vm371, 1, 0
    %v548 = vsel %vm372, 1, 0
    %v549 = vsel %vm373, 1, 0
    %v550 = vsel %vm374, 1, 0
    %v551 = vsel %vm375, 1, 0
    %v552 = vsel %vm376, 1, 0
    %v553 = vsel %vm377, 1, 0
    %v554 = vsel %vm378, 1, 0
    %v555 = vsel %vm379, 1, 0
    %v556 = vsel %vm380, 1, 0
    %v557 = vsel %vm381, 1, 0
    %v558 = vsel %vm382, 1, 0
    %v559 = vsel %vm383, 1, 0
    %v560 = vsel %vm384, 1, 0
    %v561 = vsel %vm385, 1, 0
    %v562 = vsel %vm386, 1, 0
    %v563 = vsel %vm387, 1, 0
    %v564 = vsel %vm388, 1, 0
    %v565 = vsel %vm389, 1, 0
    %v566 = vsel %vm390, 1, 0
    %v567 = vsel %vm391, 1, 0
    %v568 = vsel %vm392, 1, 0
    %v569 = vsel %vm393, 1, 0
    %v570 = vsel %vm394, 1, 0
    %v571 = vsel %vm395, 1, 0
    %v572 = vsel %vm396, 1, 0
    %v573 = vsel %vm397, 1, 0
    %v574 = vsel %vm398, 1, 0
    %v575 = vsel %vm399, 1, 0
    %v576 = vsel %vm400, 1, 0
    %v577 = vsel %vm401, 1, 0
    %v578 = vsel %vm402, 1, 0
    %v579 = vcvt.s32.f32 %v403
    %v580 = vcvt.s32.f32 %v404
    %v581 = vcvt.s32.f32 %v405
    %v582 = vcvt.s32.f32 %v406
    %v583 = vcvt.s32.f32 %v407
    %v584 = vcvt.s32.f32 %v408
    %v585 = vcvt.s32.f32 %v409
    %v586 = vcvt.s32.f32 %v410
    %v587 = vcvt.s32.f32 %v411
    %v588 = vcvt.s32.f32 %v412
    %v589 = vcvt.s32.f32 %v413
    %v590 = vcvt.s32.f32 %v414
    %v591 = vcvt.s32.f32 %v415
    %v592 = vcvt.s32.f32 %v416
    %v593 = vcvt.s32.f32 %v417
    %v594 = vcvt.s32.f32 %v418
    %v595 = vcvt.s32.f32 %v419
    %v596 = vcvt.s32.f32 %v420
    %v597 = vcvt.s32.f32 %v421
    %v598 = vcvt.s32.f32 %v422
    %v599 = vcvt.s32.f32 %v423
    %v600 = vcvt.s32.f32 %v424
    %v601 = vcvt.s32.f32 %v425
    %v602 = vcvt.s32.f32 %v426
    %v603 = vcvt.s32.f32 %v427
    %v604 = vcvt.s32.f32 %v428
    %v605 = vcvt.s32.f32 %v429
    %v606 = vcvt.s32.f32 %v430
    %v607 = vcvt.s32.f32 %v431
    %v608 = vcvt.s32.f32 %v432
    %v609 = vcvt.s32.f32 %v433
    %v610 = vcvt.s32.f32 %v434
    %v611 = vcvt.s32.f32 %v435
    %v612 = vcvt.s32.f32 %v436
    %v613 = vcvt.s32.f32 %v437
    %v614 = vcvt.s32.f32 %v438
    %v615 = vcvt.s32.f32 %v439
    %v616 = vcvt.s32.f32 %v440
    %v617 = vcvt.s32.f32 %v441
    %v618 = vcvt.s32.f32 %v442
    %v619 = vcvt.s32.f32 %v443
    %v620 = vcvt.s32.f32 %v444
    %v621 = vcvt.s32.f32 %v445
    %v622 = vcvt.s32.f32 %v446
    %v623 = vcvt.s32.f32 %v447
    %v624 = vcvt.s32.f32 %v448
    %v625 = vcvt.s32.f32 %v449
    %v626 = vcvt.s32.f32 %v450
    %v627 = vcvt.s32.f32 %v451
    %v628 = vcvt.s32.f32 %v452
    %v629 = vcvt.s32.f32 %v453
    %v630 = vcvt.s32.f32 %v454
    %v631 = vcvt.s32.f32 %v455
    %v632 = vcvt.s32.f32 %v456
    %v633 = vcvt.s32.f32 %v457
    %v634 = vcvt.s32.f32 %v458
    %v635 = vcvt.s32.f32 %v459
    %v636 = vcvt.s32.f32 %v460
    %v637 = vcvt.s32.f32 %v461
    %v638 = vcvt.s32.f32 %v462
    %v639 = vcvt.s32.f32 %v463
    %v640 = vcvt.s32.f32 %v464
    %v641 = vcvt.s32.f32 %v465
    %v642 = vcvt.s32.f32 %v466
    %v643 = vcvt.s32.f32 %v467
    %v644 = vcvt.s32.f32 %v468
    %v645 = vcvt.s32.f32 %v469
    %v646 = vcvt.s32.f32 %v470
    %v647 = vcvt.s32.f32 %v471
    %v648 = vcvt.s32.f32 %v472
    %v649 = vcvt.s32.f32 %v473
    %v650 = vcvt.s32.f32 %v474
    %v651 = vcvt.s32.f32 %v475
    %v652 = vcvt.s32.f32 %v476
    %v653 = vcvt.s32.f32 %v477
    %v654 = vcvt.s32.f32 %v478
    %v655 = vcvt.s32.f32 %v479
    %v656 = vcvt.s32.f32 %v480
    %v657 = vcvt.s32.f32 %v481
    %v658 = vcvt.s32.f32 %v482
    %v659 = vcvt.s32.f32 %v483
    %v660 = vcvt.s32.f32 %v484
    %v661 = vcvt.s32.f32 %v485
    %v662 = vcvt.s32.f32 %v486
    %v663 = vcvt.s32.f32 %v487
    %v664 = vcvt.s32.f32 %v488
    %v665 = vcvt.s32.f32 %v489
    %v666 = vcvt.s32.f32 %v490
    %v667 = vcvt.s32.f32 %v491
    %v668 = vcvt.s32.f32 %v492
    %v669 = vcvt.s32.f32 %v493
    %v670 = vcvt.s32.f32 %v494
    %v671 = vcvt.s32.f32 %v495
    %v672 = vcvt.s32.f32 %v496
    %v673 = vcvt.s32.f32 %v497
    %v674 = vcvt.s32.f32 %v498
    %v675 = vcvt.s32.f32 %v499
    %v676 = vcvt.s32.f32 %v500
    %v677 = vcvt.s32.f32 %v501
    %v678 = vcvt.s32.f32 %v502
    %v679 = vcvt.s32.f32 %v503
    %v680 = vcvt.s32.f32 %v504
    %v681 = vcvt.s32.f32 %v505
    %v682 = vcvt.s32.f32 %v506
    %v683 = vcvt.s32.f32 %v507
    %v684 = vcvt.s32.f32 %v508
    %v685 = vcvt.s32.f32 %v509
    %v686 = vcvt.s32.f32 %v510
    %v687 = vcvt.s32.f32 %v511
    %v688 = vcvt.s32.f32 %v512
    %v689 = vcvt.s32.f32 %v513
    %v690 = vcvt.s32.f32 %v514
    %v691 = vcvt.s32.f32 %v515
    %v692 = vcvt.s32.f32 %v516
    %v693 = vcvt.s32.f32 %v517
    %v694 = vcvt.s32.f32 %v518
    %v695 = vcvt.s32.f32 %v519
    %v696 = vcvt.s32.f32 %v520
    %v697 = vcvt.s32.f32 %v521
    %v698 = vcvt.s32.f32 %v522
    %v699 = vcvt.s32.f32 %v523
    %v700 = vcvt.s32.f32 %v524
    %v701 = vcvt.s32.f32 %v525
    %v702 = vcvt.s32.f32 %v526
    %v703 = vcvt.s32.f32 %v527
    %v704 = vcvt.s32.f32 %v528
    %v705 = vcvt.s32.f32 %v529
    %v706 = vcvt.s32.f32 %v530
    %v707 = vcvt.s32.f32 %v531
    %v708 = vcvt.s32.f32 %v532
    %v709 = vcvt.s32.f32 %v533
    %v710 = vcvt.s32.f32 %v534
    %v711 = vcvt.s32.f32 %v535
    %v712 = vcvt.s32.f32 %v536
    %v713 = vcvt.s32.f32 %v537
    %v714 = vcvt.s32.f32 %v538
    %v715 = vcvt.s32.f32 %v539
    %v716 = vcvt.s32.f32 %v540
    %v717 = vcvt.s32.f32 %v541
    %v718 = vcvt.s32.f32 %v542
    %v719 = vcvt.s32.f32 %v543
    %v720 = vcvt.s32.f32 %v544
    %v721 = vcvt.s32.f32 %v545
    %v722 = vcvt.s32.f32 %v546
    %v723 = vcvt.s32.f32 %v547
    %v724 = vcvt.s32.f32 %v548
    %v725 = vcvt.s32.f32 %v549
    %v726 = vcvt.s32.f32 %v550
    %v727 = vcvt.s32.f32 %v551
    %v728 = vcvt.s32.f32 %v552
    %v729 = vcvt.s32.f32 %v553
    %v730 = vcvt.s32.f32 %v554
    %v731 = vcvt.s32.f32 %v555
    %v732 = vcvt.s32.f32 %v556
    %v733 = vcvt.s32.f32 %v557
    %v734 = vcvt.s32.f32 %v558
    %v735 = vcvt.s32.f32 %v559
    %v736 = vcvt.s32.f32 %v560
    %v737 = vcvt.s32.f32 %v561
    %v738 = vcvt.s32.f32 %v562
    %v739 = vcvt.s32.f32 %v563
    %v740 = vcvt.s32.f32 %v564
    %v741 = vcvt.s32.f32 %v565
    %v742 = vcvt.s32.f32 %v566
    %v743 = vcvt.s32.f32 %v567
    %v744 = vcvt.s32.f32 %v568
    %v745 = vcvt.s32.f32 %v569
    %v746 = vcvt.s32.f32 %v570
    %v747 = vcvt.s32.f32 %v571
    %v748 = vcvt.s32.f32 %v572
    %v749 = vcvt.s32.f32 %v573
    %v750 = vcvt.s32.f32 %v574
    %v751 = vcvt.s32.f32 %v575
    %v752 = vcvt.s32.f32 %v576
    %v753 = vcvt.s32.f32 %v577
    %v754 = vcvt.s32.f32 %v578
    %v755 = vld [vmem:[#allocation3] sm:$0xff]
    %v756 = vld [vmem:[#allocation3 + $0x8] sm:$0xff]
    %v757 = vld [vmem:[#allocation3 + $0x10] sm:$0xff]
    %v758 = vld [vmem:[#allocation3 + $0x18] sm:$0xff]
    %v759 = vld [vmem:[#allocation3 + $0x20] sm:$0xff]
    %v760 = vld [vmem:[#allocation3 + $0x28] sm:$0xff]
    %v761 = vld [vmem:[#allocation3 + $0x30] sm:$0xff]
    %v762 = vld [vmem:[#allocation3 + $0x38] sm:$0xff]
    %v763 = vld [vmem:[#allocation3 + $0x40] sm:$0xff]
    %v764 = vld [vmem:[#allocation3 + $0x48] sm:$0xff]
    %v765 = vld [vmem:[#allocation3 + $0x50] sm:$0xff]
    %v766 = vld [vmem:[#allocation3 + $0x58] sm:$0xff]
    %v767 = vld [vmem:[#allocation3 + $0x60] sm:$0xff]
    %v768 = vld [vmem:[#allocation3 + $0x68] sm:$0xff]
    %v769 = vld [vmem:[#allocation3 + $0x70] sm:$0xff]
    %v770 = vld [vmem:[#allocation3 + $0x78] sm:$0xff]
    %v771 = vld [vmem:[#allocation3 + $0x80] sm:$0xff]
    %v772 = vld [vmem:[#allocation3 + $0x88] sm:$0xff]
    %v773 = vld [vmem:[#allocation3 + $0x90] sm:$0xff]
    %v774 = vld [vmem:[#allocation3 + $0x98] sm:$0xff]
    %v775 = vld [vmem:[#allocation3 + $0xa0] sm:$0xff]
    %v776 = vld [vmem:[#allocation3 + $0xa8] sm:$0xff]
    %v777 = vld [vmem:[#allocation3 + $0xb0] sm:$0xff]
    %v778 = vld [vmem:[#allocation3 + $0xb8] sm:$0xff]
    %v779 = vld [vmem:[#allocation3 + $0xc0] sm:$0xff]
    %v780 = vld [vmem:[#allocation3 + $0xc8] sm:$0xff]
    %v781 = vld [vmem:[#allocation3 + $0xd0] sm:$0xff]
    %v782 = vld [vmem:[#allocation3 + $0xd8] sm:$0xff]
    %v783 = vld [vmem:[#allocation3 + $0xe0] sm:$0xff]
    %v784 = vld [vmem:[#allocation3 + $0xe8] sm:$0xff]
    %v785 = vld [vmem:[#allocation3 + $0xf0] sm:$0xff]
    %v786 = vld [vmem:[#allocation3 + $0xf8] sm:$0xff]
    %v787 = vld [vmem:[#allocation3 + $0x100] sm:$0xff]
    %v788 = vld [vmem:[#allocation3 + $0x108] sm:$0xff]
    %v789 = vld [vmem:[#allocation3 + $0x110] sm:$0xff]
    %v790 = vld [vmem:[#allocation3 + $0x118] sm:$0xff]
    %v791 = vld [vmem:[#allocation3 + $0x120] sm:$0xff]
    %v792 = vld [vmem:[#allocation3 + $0x128] sm:$0xff]
    %v793 = vld [vmem:[#allocation3 + $0x130] sm:$0xff]
    %v794 = vld [vmem:[#allocation3 + $0x138] sm:$0xff]
    %v795 = vld [vmem:[#allocation3 + $0x140] sm:$0xff]
    %v796 = vld [vmem:[#allocation3 + $0x148] sm:$0xff]
    %v797 = vld [vmem:[#allocation3 + $0x150] sm:$0xff]
    %v798 = vld [vmem:[#allocation3 + $0x158] sm:$0xff]
    %v799 = vld [vmem:[#allocation3 + $0x160] sm:$0xff]
    %v800 = vld [vmem:[#allocation3 + $0x168] sm:$0xff]
    %v801 = vld [vmem:[#allocation3 + $0x170] sm:$0xff]
    %v802 = vld [vmem:[#allocation3 + $0x178] sm:$0xff]
    %v803 = vld [vmem:[#allocation3 + $0x180] sm:$0xff]
    %v804 = vld [vmem:[#allocation3 + $0x188] sm:$0xff]
    %v805 = vld [vmem:[#allocation3 + $0x190] sm:$0xff]
    %v806 = vld [vmem:[#allocation3 + $0x198] sm:$0xff]
    %v807 = vld [vmem:[#allocation3 + $0x1a0] sm:$0xff]
    %v808 = vld [vmem:[#allocation3 + $0x1a8] sm:$0xff]
    %v809 = vld [vmem:[#allocation3 + $0x1b0] sm:$0xff]
    %v810 = vld [vmem:[#allocation3 + $0x1b8] sm:$0xff]
    %v811 = vld [vmem:[#allocation3 + $0x1c0] sm:$0xff]
    %v812 = vld [vmem:[#allocation3 + $0x1c8] sm:$0xff]
    %v813 = vld [vmem:[#allocation3 + $0x1d0] sm:$0xff]
    %v814 = vld [vmem:[#allocation3 + $0x1d8] sm:$0xff]
    %v815 = vld [vmem:[#allocation3 + $0x1e0] sm:$0xff]
    %v816 = vld [vmem:[#allocation3 + $0x1e8] sm:$0xff]
    %v817 = vld [vmem:[#allocation3 + $0x1f0] sm:$0xff]
    %v818 = vld [vmem:[#allocation3 + $0x1f8] sm:$0xff]
    %v819 = vld [vmem:[#allocation3 + $0x200] sm:$0xff]
    %v820 = vld [vmem:[#allocation3 + $0x208] sm:$0xff]
    %v821 = vld [vmem:[#allocation3 + $0x210] sm:$0xff]
    %v822 = vld [vmem:[#allocation3 + $0x218] sm:$0xff]
    %v823 = vld [vmem:[#allocation3 + $0x220] sm:$0xff]
    %v824 = vld [vmem:[#allocation3 + $0x228] sm:$0xff]
    %v825 = vld [vmem:[#allocation3 + $0x230] sm:$0xff]
    %v826 = vld [vmem:[#allocation3 + $0x238] sm:$0xff]
    %v827 = vld [vmem:[#allocation3 + $0x240] sm:$0xff]
    %v828 = vld [vmem:[#allocation3 + $0x248] sm:$0xff]
    %v829 = vld [vmem:[#allocation3 + $0x250] sm:$0xff]
    %v830 = vld [vmem:[#allocation3 + $0x258] sm:$0xff]
    %v831 = vld [vmem:[#allocation3 + $0x260] sm:$0xff]
    %v832 = vld [vmem:[#allocation3 + $0x268] sm:$0xff]
    %v833 = vld [vmem:[#allocation3 + $0x270] sm:$0xff]
    %v834 = vld [vmem:[#allocation3 + $0x278] sm:$0xff]
    %v835 = vld [vmem:[#allocation3 + $0x280] sm:$0xff]
    %v836 = vld [vmem:[#allocation3 + $0x288] sm:$0xff]
    %v837 = vld [vmem:[#allocation3 + $0x290] sm:$0xff]
    %v838 = vld [vmem:[#allocation3 + $0x298] sm:$0xff]
    %v839 = vld [vmem:[#allocation3 + $0x2a0] sm:$0xff]
    %v840 = vld [vmem:[#allocation3 + $0x2a8] sm:$0xff]
    %v841 = vld [vmem:[#allocation3 + $0x2b0] sm:$0xff]
    %v842 = vld [vmem:[#allocation3 + $0x2b8] sm:$0xff]
    %843 = vmatprep.subr.mxu0 0.0
    %v844 = vand.u32 %v594, 4294901760
    %845 = vmatpush1.msra.mxu0 %v844
    %846 = vmatprep.subr.mxu0 0.0
    %v847 = vand.u32 %v593, 4294901760
    %848 = vmatpush1.msra.mxu0 %v847
    %849 = vmatprep.subr.mxu0 0.0
    %v850 = vand.u32 %v592, 4294901760
    %851 = vmatpush1.msra.mxu0 %v850
    %852 = vmatprep.subr.mxu0 0.0
    %v853 = vand.u32 %v591, 4294901760
    %854 = vmatpush1.msra.mxu0 %v853
    %855 = vmatprep.subr.mxu0 0.0
    %v856 = vand.u32 %v590, 4294901760
    %857 = vmatpush1.msra.mxu0 %v856
    %858 = vmatprep.subr.mxu0 0.0
    %v859 = vand.u32 %v589, 4294901760
    %860 = vmatpush1.msra.mxu0 %v859
    %861 = vmatprep.subr.mxu0 0.0
    %v862 = vand.u32 %v588, 4294901760
    %863 = vmatpush1.msra.mxu0 %v862
    %864 = vmatprep.subr.mxu0 0.0
    %v865 = vand.u32 %v587, 4294901760
    %866 = vmatpush1.msra.mxu0 %v865
    %867 = vmatprep.subr.mxu0 0.0
    %v868 = vand.u32 %v586, 4294901760
    %869 = vmatpush1.msra.mxu0 %v868
    %870 = vmatprep.subr.mxu0 0.0
    %v871 = vand.u32 %v585, 4294901760
    %872 = vmatpush1.msra.mxu0 %v871
    %873 = vmatprep.subr.mxu0 0.0
    %v874 = vand.u32 %v584, 4294901760
    %875 = vmatpush1.msra.mxu0 %v874
    %876 = vmatprep.subr.mxu0 0.0
    %v877 = vand.u32 %v583, 4294901760
    %878 = vmatpush1.msra.mxu0 %v877
    %879 = vmatprep.subr.mxu0 0.0
    %v880 = vand.u32 %v582, 4294901760
    %881 = vmatpush1.msra.mxu0 %v880
    %882 = vmatprep.subr.mxu0 0.0
    %v883 = vand.u32 %v581, 4294901760
    %884 = vmatpush1.msra.mxu0 %v883
    %885 = vmatprep.subr.mxu0 0.0
    %v886 = vand.u32 %v580, 4294901760
    %887 = vmatpush1.msra.mxu0 %v886
    %888 = vmatprep.subr.mxu0 0.0
    %v889 = vand.u32 %v579, 4294901760
    %890 = vmatpush1.msra.mxu0 %v889
    %891 = vmatprep.subr.mxu0 0.0
    %v892 = vand.u32 %v610, 4294901760
    %893 = vmatpush2.msra.mxu0 %v892
    %894 = vmatprep.subr.mxu0 0.0
    %v895 = vand.u32 %v609, 4294901760
    %896 = vmatpush2.msra.mxu0 %v895
    %897 = vmatprep.subr.mxu0 0.0
    %v898 = vand.u32 %v608, 4294901760
    %899 = vmatpush2.msra.mxu0 %v898
    %900 = vmatprep.subr.mxu0 0.0
    %v901 = vand.u32 %v607, 4294901760
    %902 = vmatpush2.msra.mxu0 %v901
    %903 = vmatprep.subr.mxu0 0.0
    %v904 = vand.u32 %v606, 4294901760
    %905 = vmatpush2.msra.mxu0 %v904
    %906 = vmatprep.subr.mxu0 0.0
    %v907 = vand.u32 %v605, 4294901760
    %908 = vmatpush2.msra.mxu0 %v907
    %909 = vmatprep.subr.mxu0 0.0
    %v910 = vand.u32 %v604, 4294901760
    %911 = vmatpush2.msra.mxu0 %v910
    %912 = vmatprep.subr.mxu0 0.0
    %v913 = vand.u32 %v603, 4294901760
    %914 = vmatpush2.msra.mxu0 %v913
    %915 = vmatprep.subr.mxu0 0.0
    %v916 = vand.u32 %v602, 4294901760
    %917 = vmatpush2.msra.mxu0 %v916
    %918 = vmatprep.subr.mxu0 0.0
    %v919 = vand.u32 %v601, 4294901760
    %920 = vmatpush2.msra.mxu0 %v919
    %921 = vmatprep.subr.mxu0 0.0
    %v922 = vand.u32 %v600, 4294901760
    %923 = vmatpush2.msra.mxu0 %v922
    %924 = vmatprep.subr.mxu0 0.0
    %v925 = vand.u32 %v599, 4294901760
    %926 = vmatpush2.msra.mxu0 %v925
    %927 = vmatprep.subr.mxu0 0.0
    %v928 = vand.u32 %v598, 4294901760
    %929 = vmatpush2.msra.mxu0 %v928
    %930 = vmatprep.subr.mxu0 0.0
    %v931 = vand.u32 %v597, 4294901760
    %932 = vmatpush2.msra.mxu0 %v931
    %933 = vmatprep.subr.mxu0 0.0
    %v934 = vand.u32 %v596, 4294901760
    %935 = vmatpush2.msra.mxu0 %v934
    %936 = vmatprep.subr.mxu0 0.0
    %v937 = vand.u32 %v595, 4294901760
    %938 = vmatpush2.msra.mxu0 %v937
    %v939 = vand.u32 %v756, 4294901760
    %v940 = vsub.f32 %v756, %v939
    %v941 = vand.u32 %v940, 4294901760
    %v942 = vsub.f32 %v940, %v941
    %v943 = vand.u32 %v942, 4294901760
    %944 = vmatprep.mubr.f32.mxu0 %v943
    %v945 = vand.u32 %v755, 4294901760
    %v946 = vsub.f32 %v755, %v945
    %v947 = vand.u32 %v946, 4294901760
    %v948 = vsub.f32 %v946, %v947
    %v949 = vand.u32 %v948, 4294901760
    %950 = vmatmul.mubr.f32.gmra.mxu0 %v949
    %v951 = vpop.f32.mrf.mxu0
    %v952 = vadd.f32 0.0, %v951
    %v953 = vpop.f32.mrf.mxu0
    %v954 = vand.u32 %v767, 4294901760
    %v955 = vsub.f32 %v767, %v954
    %v956 = vand.u32 %v955, 4294901760
    %v957 = vsub.f32 %v955, %v956
    %v958 = vand.u32 %v957, 4294901760
    %959 = vmatprep.mubr.f32.mxu0 %v958
    %v960 = vand.u32 %v766, 4294901760
    %v961 = vsub.f32 %v766, %v960
    %v962 = vand.u32 %v961, 4294901760
    %v963 = vsub.f32 %v961, %v962
    %v964 = vand.u32 %v963, 4294901760
    %965 = vmatmul.mubr.f32.gmra.mxu0 %v964
    %v966 = vpop.f32.mrf.mxu0
    %v967 = vadd.f32 0.0, %v966
    %v968 = vpop.f32.mrf.mxu0
    %v969 = vand.u32 %v778, 4294901760
    %v970 = vsub.f32 %v778, %v969
    %v971 = vand.u32 %v970, 4294901760
    %v972 = vsub.f32 %v970, %v971
    %v973 = vand.u32 %v972, 4294901760
    %974 = vmatprep.mubr.f32.mxu0 %v973
    %v975 = vand.u32 %v777, 4294901760
    %v976 = vsub.f32 %v777, %v975
    %v977 = vand.u32 %v976, 4294901760
    %v978 = vsub.f32 %v976, %v977
    %v979 = vand.u32 %v978, 4294901760
    %980 = vmatmul.mubr.f32.gmra.mxu0 %v979
    %v981 = vpop.f32.mrf.mxu0
    %v982 = vadd.f32 0.0, %v981
    %v983 = vpop.f32.mrf.mxu0
    %v984 = vand.u32 %v789, 4294901760
    %v985 = vsub.f32 %v789, %v984
    %v986 = vand.u32 %v985, 4294901760
    %v987 = vsub.f32 %v985, %v986
    %v988 = vand.u32 %v987, 4294901760
    %989 = vmatprep.mubr.f32.mxu0 %v988
    %v990 = vand.u32 %v788, 4294901760
    %v991 = vsub.f32 %v788, %v990
    %v992 = vand.u32 %v991, 4294901760
    %v993 = vsub.f32 %v991, %v992
    %v994 = vand.u32 %v993, 4294901760
    %995 = vmatmul.mubr.f32.gmra.mxu0 %v994
    %v996 = vpop.f32.mrf.mxu0
    %v997 = vadd.f32 0.0, %v996
    %v998 = vpop.f32.mrf.mxu0
    %v999 = vand.u32 %v800, 4294901760
    %v1000 = vsub.f32 %v800, %v999
    %v1001 = vand.u32 %v1000, 4294901760
    %v1002 = vsub.f32 %v1000, %v1001
    %v1003 = vand.u32 %v1002, 4294901760
    %1004 = vmatprep.mubr.f32.mxu0 %v1003
    %v1005 = vand.u32 %v799, 4294901760
    %v1006 = vsub.f32 %v799, %v1005
    %v1007 = vand.u32 %v1006, 4294901760
    %v1008 = vsub.f32 %v1006, %v1007
    %v1009 = vand.u32 %v1008, 4294901760
    %1010 = vmatmul.mubr.f32.gmra.mxu0 %v1009
    %v1011 = vpop.f32.mrf.mxu0
    %v1012 = vadd.f32 0.0, %v1011
    %v1013 = vpop.f32.mrf.mxu0
    %v1014 = vand.u32 %v811, 4294901760
    %v1015 = vsub.f32 %v811, %v1014
    %v1016 = vand.u32 %v1015, 4294901760
    %v1017 = vsub.f32 %v1015, %v1016
    %v1018 = vand.u32 %v1017, 4294901760
    %1019 = vmatprep.mubr.f32.mxu0 %v1018
    %v1020 = vand.u32 %v810, 4294901760
    %v1021 = vsub.f32 %v810, %v1020
    %v1022 = vand.u32 %v1021, 4294901760
    %v1023 = vsub.f32 %v1021, %v1022
    %v1024 = vand.u32 %v1023, 4294901760
    %1025 = vmatmul.mubr.f32.gmra.mxu0 %v1024
    %v1026 = vpop.f32.mrf.mxu0
    %v1027 = vadd.f32 0.0, %v1026
    %v1028 = vpop.f32.mrf.mxu0
    %v1029 = vand.u32 %v822, 4294901760
    %v1030 = vsub.f32 %v822, %v1029
    %v1031 = vand.u32 %v1030, 4294901760
    %v1032 = vsub.f32 %v1030, %v1031
    %v1033 = vand.u32 %v1032, 4294901760
    %1034 = vmatprep.mubr.f32.mxu0 %v1033
    %v1035 = vand.u32 %v821, 4294901760
    %v1036 = vsub.f32 %v821, %v1035
    %v1037 = vand.u32 %v1036, 4294901760
    %v1038 = vsub.f32 %v1036, %v1037
    %v1039 = vand.u32 %v1038, 4294901760
    %1040 = vmatmul.mubr.f32.gmra.mxu0 %v1039
    %v1041 = vpop.f32.mrf.mxu0
    %v1042 = vadd.f32 0.0, %v1041
    %v1043 = vpop.f32.mrf.mxu0
    %v1044 = vand.u32 %v833, 4294901760
    %v1045 = vsub.f32 %v833, %v1044
    %v1046 = vand.u32 %v1045, 4294901760
    %v1047 = vsub.f32 %v1045, %v1046
    %v1048 = vand.u32 %v1047, 4294901760
    %1049 = vmatprep.mubr.f32.mxu0 %v1048
    %v1050 = vand.u32 %v832, 4294901760
    %v1051 = vsub.f32 %v832, %v1050
    %v1052 = vand.u32 %v1051, 4294901760
    %v1053 = vsub.f32 %v1051, %v1052
    %v1054 = vand.u32 %v1053, 4294901760
    %1055 = vmatmul.mubr.f32.gmra.mxu0 %v1054
    %v1056 = vpop.f32.mrf.mxu0
    %v1057 = vadd.f32 0.0, %v1056
    %v1058 = vpop.f32.mrf.mxu0
    %1059 = vdwg.mxu0
    %1060 = vmatprep.subr.mxu0 0.0
    %v1061 = vand.u32 %v594, 4294901760
    %v1062 = vsub.f32 %v594, %v1061
    %v1063 = vand.u32 %v1062, 4294901760
    %v1064 = vsub.f32 %v1062, %v1063
    %v1065 = vand.u32 %v1064, 4294901760
    %1066 = vmatpush1.msra.mxu0 %v1065
    %1067 = vmatprep.subr.mxu0 0.0
    %v1068 = vand.u32 %v593, 4294901760
    %v1069 = vsub.f32 %v593, %v1068
    %v1070 = vand.u32 %v1069, 4294901760
    %v1071 = vsub.f32 %v1069, %v1070
    %v1072 = vand.u32 %v1071, 4294901760
    %1073 = vmatpush1.msra.mxu0 %v1072
    %1074 = vmatprep.subr.mxu0 0.0
    %v1075 = vand.u32 %v592, 4294901760
    %v1076 = vsub.f32 %v592, %v1075
    %v1077 = vand.u32 %v1076, 4294901760
    %v1078 = vsub.f32 %v1076, %v1077
    %v1079 = vand.u32 %v1078, 4294901760
    %1080 = vmatpush1.msra.mxu0 %v1079
    %1081 = vmatprep.subr.mxu0 0.0
    %v1082 = vand.u32 %v591, 4294901760
    %v1083 = vsub.f32 %v591, %v1082
    %v1084 = vand.u32 %v1083, 4294901760
    %v1085 = vsub.f32 %v1083, %v1084
    %v1086 = vand.u32 %v1085, 4294901760
    %1087 = vmatpush1.msra.mxu0 %v1086
    %1088 = vmatprep.subr.mxu0 0.0
    %v1089 = vand.u32 %v590, 4294901760
    %v1090 = vsub.f32 %v590, %v1089
    %v1091 = vand.u32 %v1090, 4294901760
    %v1092 = vsub.f32 %v1090, %v1091
    %v1093 = vand.u32 %v1092, 4294901760
    %1094 = vmatpush1.msra.mxu0 %v1093
    %1095 = vmatprep.subr.mxu0 0.0
    %v1096 = vand.u32 %v589, 4294901760
    %v1097 = vsub.f32 %v589, %v1096
    %v1098 = vand.u32 %v1097, 4294901760
    %v1099 = vsub.f32 %v1097, %v1098
    %v1100 = vand.u32 %v1099, 4294901760
    %1101 = vmatpush1.msra.mxu0 %v1100
    %1102 = vmatprep.subr.mxu0 0.0
    %v1103 = vand.u32 %v588, 4294901760
    %v1104 = vsub.f32 %v588, %v1103
    %v1105 = vand.u32 %v1104, 4294901760
    %v1106 = vsub.f32 %v1104, %v1105
    %v1107 = vand.u32 %v1106, 4294901760
    %1108 = vmatpush1.msra.mxu0 %v1107
    %1109 = vmatprep.subr.mxu0 0.0
    %v1110 = vand.u32 %v587, 4294901760
    %v1111 = vsub.f32 %v587, %v1110
    %v1112 = vand.u32 %v1111, 4294901760
    %v1113 = vsub.f32 %v1111, %v1112
    %v1114 = vand.u32 %v1113, 4294901760
    %1115 = vmatpush1.msra.mxu0 %v1114
    %1116 = vmatprep.subr.mxu0 0.0
    %v1117 = vand.u32 %v586, 4294901760
    %v1118 = vsub.f32 %v586, %v1117
    %v1119 = vand.u32 %v1118, 4294901760
    %v1120 = vsub.f32 %v1118, %v1119
    %v1121 = vand.u32 %v1120, 4294901760
    %1122 = vmatpush1.msra.mxu0 %v1121
    %1123 = vmatprep.subr.mxu0 0.0
    %v1124 = vand.u32 %v585, 4294901760
    %v1125 = vsub.f32 %v585, %v1124
    %v1126 = vand.u32 %v1125, 4294901760
    %v1127 = vsub.f32 %v1125, %v1126
    %v1128 = vand.u32 %v1127, 4294901760
    %1129 = vmatpush1.msra.mxu0 %v1128
    %1130 = vmatprep.subr.mxu0 0.0
    %v1131 = vand.u32 %v584, 4294901760
    %v1132 = vsub.f32 %v584, %v1131
    %v1133 = vand.u32 %v1132, 4294901760
    %v1134 = vsub.f32 %v1132, %v1133
    %v1135 = vand.u32 %v1134, 4294901760
    %1136 = vmatpush1.msra.mxu0 %v1135
    %1137 = vmatprep.subr.mxu0 0.0
    %v1138 = vand.u32 %v583, 4294901760
    %v1139 = vsub.f32 %v583, %v1138
    %v1140 = vand.u32 %v1139, 4294901760
    %v1141 = vsub.f32 %v1139, %v1140
    %v1142 = vand.u32 %v1141, 4294901760
    %1143 = vmatpush1.msra.mxu0 %v1142
    %1144 = vmatprep.subr.mxu0 0.0
    %v1145 = vand.u32 %v582, 4294901760
    %v1146 = vsub.f32 %v582, %v1145
    %v1147 = vand.u32 %v1146, 4294901760
    %v1148 = vsub.f32 %v1146, %v1147
    %v1149 = vand.u32 %v1148, 4294901760
    %1150 = vmatpush1.msra.mxu0 %v1149
    %1151 = vmatprep.subr.mxu0 0.0
    %v1152 = vand.u32 %v581, 4294901760
    %v1153 = vsub.f32 %v581, %v1152
    %v1154 = vand.u32 %v1153, 4294901760
    %v1155 = vsub.f32 %v1153, %v1154
    %v1156 = vand.u32 %v1155, 4294901760
    %1157 = vmatpush1.msra.mxu0 %v1156
    %1158 = vmatprep.subr.mxu0 0.0
    %v1159 = vand.u32 %v580, 4294901760
    %v1160 = vsub.f32 %v580, %v1159
    %v1161 = vand.u32 %v1160, 4294901760
    %v1162 = vsub.f32 %v1160, %v1161
    %v1163 = vand.u32 %v1162, 4294901760
    %1164 = vmatpush1.msra.mxu0 %v1163
    %1165 = vmatprep.subr.mxu0 0.0
    %v1166 = vand.u32 %v579, 4294901760
    %v1167 = vsub.f32 %v579, %v1166
    %v1168 = vand.u32 %v1167, 4294901760
    %v1169 = vsub.f32 %v1167, %v1168
    %v1170 = vand.u32 %v1169, 4294901760
    %1171 = vmatpush1.msra.mxu0 %v1170
    %1172 = vmatprep.subr.mxu0 0.0
    %v1173 = vand.u32 %v610, 4294901760
    %v1174 = vsub.f32 %v610, %v1173
    %v1175 = vand.u32 %v1174, 4294901760
    %v1176 = vsub.f32 %v1174, %v1175
    %v1177 = vand.u32 %v1176, 4294901760
    %1178 = vmatpush2.msra.mxu0 %v1177
    %1179 = vmatprep.subr.mxu0 0.0
    %v1180 = vand.u32 %v609, 4294901760
    %v1181 = vsub.f32 %v609, %v1180
    %v1182 = vand.u32 %v1181, 4294901760
    %v1183 = vsub.f32 %v1181, %v1182
    %v1184 = vand.u32 %v1183, 4294901760
    %1185 = vmatpush2.msra.mxu0 %v1184
    %1186 = vmatprep.subr.mxu0 0.0
    %v1187 = vand.u32 %v608, 4294901760
    %v1188 = vsub.f32 %v608, %v1187
    %v1189 = vand.u32 %v1188, 4294901760
    %v1190 = vsub.f32 %v1188, %v1189
    %v1191 = vand.u32 %v1190, 4294901760
    %1192 = vmatpush2.msra.mxu0 %v1191
    %1193 = vmatprep.subr.mxu0 0.0
    %v1194 = vand.u32 %v607, 4294901760
    %v1195 = vsub.f32 %v607, %v1194
    %v1196 = vand.u32 %v1195, 4294901760
    %v1197 = vsub.f32 %v1195, %v1196
    %v1198 = vand.u32 %v1197, 4294901760
    %1199 = vmatpush2.msra.mxu0 %v1198
    %1200 = vmatprep.subr.mxu0 0.0
    %v1201 = vand.u32 %v606, 4294901760
    %v1202 = vsub.f32 %v606, %v1201
    %v1203 = vand.u32 %v1202, 4294901760
    %v1204 = vsub.f32 %v1202, %v1203
    %v1205 = vand.u32 %v1204, 4294901760
    %1206 = vmatpush2.msra.mxu0 %v1205
    %1207 = vmatprep.subr.mxu0 0.0
    %v1208 = vand.u32 %v605, 4294901760
    %v1209 = vsub.f32 %v605, %v1208
    %v1210 = vand.u32 %v1209, 4294901760
    %v1211 = vsub.f32 %v1209, %v1210
    %v1212 = vand.u32 %v1211, 4294901760
    %1213 = vmatpush2.msra.mxu0 %v1212
    %1214 = vmatprep.subr.mxu0 0.0
    %v1215 = vand.u32 %v604, 4294901760
    %v1216 = vsub.f32 %v604, %v1215
    %v1217 = vand.u32 %v1216, 4294901760
    %v1218 = vsub.f32 %v1216, %v1217
    %v1219 = vand.u32 %v1218, 4294901760
    %1220 = vmatpush2.msra.mxu0 %v1219
    %1221 = vmatprep.subr.mxu0 0.0
    %v1222 = vand.u32 %v603, 4294901760
    %v1223 = vsub.f32 %v603, %v1222
    %v1224 = vand.u32 %v1223, 4294901760
    %v1225 = vsub.f32 %v1223, %v1224
    %v1226 = vand.u32 %v1225, 4294901760
    %1227 = vmatpush2.msra.mxu0 %v1226
    %1228 = vmatprep.subr.mxu0 0.0
    %v1229 = vand.u32 %v602, 4294901760
    %v1230 = vsub.f32 %v602, %v1229
    %v1231 = vand.u32 %v1230, 4294901760
    %v1232 = vsub.f32 %v1230, %v1231
    %v1233 = vand.u32 %v1232, 4294901760
    %1234 = vmatpush2.msra.mxu0 %v1233
    %1235 = vmatprep.subr.mxu0 0.0
    %v1236 = vand.u32 %v601, 4294901760
    %v1237 = vsub.f32 %v601, %v1236
    %v1238 = vand.u32 %v1237, 4294901760
    %v1239 = vsub.f32 %v1237, %v1238
    %v1240 = vand.u32 %v1239, 4294901760
    %1241 = vmatpush2.msra.mxu0 %v1240
    %1242 = vmatprep.subr.mxu0 0.0
    %v1243 = vand.u32 %v600, 4294901760
    %v1244 = vsub.f32 %v600, %v1243
    %v1245 = vand.u32 %v1244, 4294901760
    %v1246 = vsub.f32 %v1244, %v1245
    %v1247 = vand.u32 %v1246, 4294901760
    %1248 = vmatpush2.msra.mxu0 %v1247
    %1249 = vmatprep.subr.mxu0 0.0
    %v1250 = vand.u32 %v599, 4294901760
    %v1251 = vsub.f32 %v599, %v1250
    %v1252 = vand.u32 %v1251, 4294901760
    %v1253 = vsub.f32 %v1251, %v1252
    %v1254 = vand.u32 %v1253, 4294901760
    %1255 = vmatpush2.msra.mxu0 %v1254
    %1256 = vmatprep.subr.mxu0 0.0
    %v1257 = vand.u32 %v598, 4294901760
    %v1258 = vsub.f32 %v598, %v1257
    %v1259 = vand.u32 %v1258, 4294901760
    %v1260 = vsub.f32 %v1258, %v1259
    %v1261 = vand.u32 %v1260, 4294901760
    %1262 = vmatpush2.msra.mxu0 %v1261
    %1263 = vmatprep.subr.mxu0 0.0
    %v1264 = vand.u32 %v597, 4294901760
    %v1265 = vsub.f32 %v597, %v1264
    %v1266 = vand.u32 %v1265, 4294901760
    %v1267 = vsub.f32 %v1265, %v1266
    %v1268 = vand.u32 %v1267, 4294901760
    %1269 = vmatpush2.msra.mxu0 %v1268
    %1270 = vmatprep.subr.mxu0 0.0
    %v1271 = vand.u32 %v596, 4294901760
    %v1272 = vsub.f32 %v596, %v1271
    %v1273 = vand.u32 %v1272, 4294901760
    %v1274 = vsub.f32 %v1272, %v1273
    %v1275 = vand.u32 %v1274, 4294901760
    %1276 = vmatpush2.msra.mxu0 %v1275
    %1277 = vmatprep.subr.mxu0 0.0
    %v1278 = vand.u32 %v595, 4294901760
    %v1279 = vsub.f32 %v595, %v1278
    %v1280 = vand.u32 %v1279, 4294901760
    %v1281 = vsub.f32 %v1279, %v1280
    %v1282 = vand.u32 %v1281, 4294901760
    %1283 = vmatpush2.msra.mxu0 %v1282
    %v1284 = vand.u32 %v756, 4294901760
    %1285 = vmatprep.mubr.f32.mxu0 %v1284
    %v1286 = vand.u32 %v755, 4294901760
    %1287 = vmatmul.mubr.f32.gmra.mxu0 %v1286
    %v1288 = vpop.f32.mrf.mxu0
    %v1289 = vadd.f32 %v952, %v1288
    %v1290 = vpop.f32.mrf.mxu0
    %v1291 = vand.u32 %v767, 4294901760
    %1292 = vmatprep.mubr.f32.mxu0 %v1291
    %v1293 = vand.u32 %v766, 4294901760
    %1294 = vmatmul.mubr.f32.gmra.mxu0 %v1293
    %v1295 = vpop.f32.mrf.mxu0
    %v1296 = vadd.f32 %v967, %v1295
    %v1297 = vpop.f32.mrf.mxu0
    %v1298 = vand.u32 %v778, 4294901760
    %1299 = vmatprep.mubr.f32.mxu0 %v1298
    %v1300 = vand.u32 %v777, 4294901760
    %1301 = vmatmul.mubr.f32.gmra.mxu0 %v1300
    %v1302 = vpop.f32.mrf.mxu0
    %v1303 = vadd.f32 %v982, %v1302
    %v1304 = vpop.f32.mrf.mxu0
    %v1305 = vand.u32 %v789, 4294901760
    %1306 = vmatprep.mubr.f32.mxu0 %v1305
    %v1307 = vand.u32 %v788, 4294901760
    %1308 = vmatmul.mubr.f32.gmra.mxu0 %v1307
    %v1309 = vpop.f32.mrf.mxu0
    %v1310 = vadd.f32 %v997, %v1309
    %v1311 = vpop.f32.mrf.mxu0
    %v1312 = vand.u32 %v800, 4294901760
    %1313 = vmatprep.mubr.f32.mxu0 %v1312
    %v1314 = vand.u32 %v799, 4294901760
    %1315 = vmatmul.mubr.f32.gmra.mxu0 %v1314
    %v1316 = vpop.f32.mrf.mxu0
    %v1317 = vadd.f32 %v1012, %v1316
    %v1318 = vpop.f32.mrf.mxu0
    %v1319 = vand.u32 %v811, 4294901760
    %1320 = vmatprep.mubr.f32.mxu0 %v1319
    %v1321 = vand.u32 %v810, 4294901760
    %1322 = vmatmul.mubr.f32.gmra.mxu0 %v1321
    %v1323 = vpop.f32.mrf.mxu0
    %v1324 = vadd.f32 %v1027, %v1323
    %v1325 = vpop.f32.mrf.mxu0
    %v1326 = vand.u32 %v822, 4294901760
    %1327 = vmatprep.mubr.f32.mxu0 %v1326
    %v1328 = vand.u32 %v821, 4294901760
    %1329 = vmatmul.mubr.f32.gmra.mxu0 %v1328
    %v1330 = vpop.f32.mrf.mxu0
    %v1331 = vadd.f32 %v1042, %v1330
    %v1332 = vpop.f32.mrf.mxu0
    %v1333 = vand.u32 %v833, 4294901760
    %1334 = vmatprep.mubr.f32.mxu0 %v1333
    %v1335 = vand.u32 %v832, 4294901760
    %1336 = vmatmul.mubr.f32.gmra.mxu0 %v1335
    %v1337 = vpop.f32.mrf.mxu0
    %v1338 = vadd.f32 %v1057, %v1337
    %v1339 = vpop.f32.mrf.mxu0
    %1340 = vdwg.mxu0
    %1341 = vmatprep.subr.mxu0 0.0
    %v1342 = vand.u32 %v594, 4294901760
    %v1343 = vsub.f32 %v594, %v1342
    %1344 = vmatpush1.msra.mxu0 %v1343
    %1345 = vmatprep.subr.mxu0 0.0
    %v1346 = vand.u32 %v593, 4294901760
    %v1347 = vsub.f32 %v593, %v1346
    %1348 = vmatpush1.msra.mxu0 %v1347
    %1349 = vmatprep.subr.mxu0 0.0
    %v1350 = vand.u32 %v592, 4294901760
    %v1351 = vsub.f32 %v592, %v1350
    %1352 = vmatpush1.msra.mxu0 %v1351
    %1353 = vmatprep.subr.mxu0 0.0
    %v1354 = vand.u32 %v591, 4294901760
    %v1355 = vsub.f32 %v591, %v1354
    %1356 = vmatpush1.msra.mxu0 %v1355
    %1357 = vmatprep.subr.mxu0 0.0
    %v1358 = vand.u32 %v590, 4294901760
    %v1359 = vsub.f32 %v590, %v1358
    %1360 = vmatpush1.msra.mxu0 %v1359
    %1361 = vmatprep.subr.mxu0 0.0
    %v1362 = vand.u32 %v589, 4294901760
    %v1363 = vsub.f32 %v589, %v1362
    %1364 = vmatpush1.msra.mxu0 %v1363
    %1365 = vmatprep.subr.mxu0 0.0
    %v1366 = vand.u32 %v588, 4294901760
    %v1367 = vsub.f32 %v588, %v1366
    %1368 = vmatpush1.msra.mxu0 %v1367
    %1369 = vmatprep.subr.mxu0 0.0
    %v1370 = vand.u32 %v587, 4294901760
    %v1371 = vsub.f32 %v587, %v1370
    %1372 = vmatpush1.msra.mxu0 %v1371
    %1373 = vmatprep.subr.mxu0 0.0
    %v1374 = vand.u32 %v586, 4294901760
    %v1375 = vsub.f32 %v586, %v1374
    %1376 = vmatpush1.msra.mxu0 %v1375
    %1377 = vmatprep.subr.mxu0 0.0
    %v1378 = vand.u32 %v585, 4294901760
    %v1379 = vsub.f32 %v585, %v1378
    %1380 = vmatpush1.msra.mxu0 %v1379
    %1381 = vmatprep.subr.mxu0 0.0
    %v1382 = vand.u32 %v584, 4294901760
    %v1383 = vsub.f32 %v584, %v1382
    %1384 = vmatpush1.msra.mxu0 %v1383
    %1385 = vmatprep.subr.mxu0 0.0
    %v1386 = vand.u32 %v583, 4294901760
    %v1387 = vsub.f32 %v583, %v1386
    %1388 = vmatpush1.msra.mxu0 %v1387
    %1389 = vmatprep.subr.mxu0 0.0
    %v1390 = vand.u32 %v582, 4294901760
    %v1391 = vsub.f32 %v582, %v1390
    %1392 = vmatpush1.msra.mxu0 %v1391
    %1393 = vmatprep.subr.mxu0 0.0
    %v1394 = vand.u32 %v581, 4294901760
    %v1395 = vsub.f32 %v581, %v1394
    %1396 = vmatpush1.msra.mxu0 %v1395
    %1397 = vmatprep.subr.mxu0 0.0
    %v1398 = vand.u32 %v580, 4294901760
    %v1399 = vsub.f32 %v580, %v1398
    %1400 = vmatpush1.msra.mxu0 %v1399
    %1401 = vmatprep.subr.mxu0 0.0
    %v1402 = vand.u32 %v579, 4294901760
    %v1403 = vsub.f32 %v579, %v1402
    %1404 = vmatpush1.msra.mxu0 %v1403
    %1405 = vmatprep.subr.mxu0 0.0
    %v1406 = vand.u32 %v610, 4294901760
    %v1407 = vsub.f32 %v610, %v1406
    %1408 = vmatpush2.msra.mxu0 %v1407
    %1409 = vmatprep.subr.mxu0 0.0
    %v1410 = vand.u32 %v609, 4294901760
    %v1411 = vsub.f32 %v609, %v1410
    %1412 = vmatpush2.msra.mxu0 %v1411
    %1413 = vmatprep.subr.mxu0 0.0
    %v1414 = vand.u32 %v608, 4294901760
    %v1415 = vsub.f32 %v608, %v1414
    %1416 = vmatpush2.msra.mxu0 %v1415
    %1417 = vmatprep.subr.mxu0 0.0
    %v1418 = vand.u32 %v607, 4294901760
    %v1419 = vsub.f32 %v607, %v1418
    %1420 = vmatpush2.msra.mxu0 %v1419
    %1421 = vmatprep.subr.mxu0 0.0
    %v1422 = vand.u32 %v606, 4294901760
    %v1423 = vsub.f32 %v606, %v1422
    %1424 = vmatpush2.msra.mxu0 %v1423
    %1425 = vmatprep.subr.mxu0 0.0
    %v1426 = vand.u32 %v605, 4294901760
    %v1427 = vsub.f32 %v605, %v1426
    %1428 = vmatpush2.msra.mxu0 %v1427
    %1429 = vmatprep.subr.mxu0 0.0
    %v1430 = vand.u32 %v604, 4294901760
    %v1431 = vsub.f32 %v604, %v1430
    %1432 = vmatpush2.msra.mxu0 %v1431
    %1433 = vmatprep.subr.mxu0 0.0
    %v1434 = vand.u32 %v603, 4294901760
    %v1435 = vsub.f32 %v603, %v1434
    %1436 = vmatpush2.msra.mxu0 %v1435
    %1437 = vmatprep.subr.mxu0 0.0
    %v1438 = vand.u32 %v602, 4294901760
    %v1439 = vsub.f32 %v602, %v1438
    %1440 = vmatpush2.msra.mxu0 %v1439
    %1441 = vmatprep.subr.mxu0 0.0
    %v1442 = vand.u32 %v601, 4294901760
    %v1443 = vsub.f32 %v601, %v1442
    %1444 = vmatpush2.msra.mxu0 %v1443
    %1445 = vmatprep.subr.mxu0 0.0
    %v1446 = vand.u32 %v600, 4294901760
    %v1447 = vsub.f32 %v600, %v1446
    %1448 = vmatpush2.msra.mxu0 %v1447
    %1449 = vmatprep.subr.mxu0 0.0
    %v1450 = vand.u32 %v599, 4294901760
    %v1451 = vsub.f32 %v599, %v1450
    %1452 = vmatpush2.msra.mxu0 %v1451
    %1453 = vmatprep.subr.mxu0 0.0
    %v1454 = vand.u32 %v598, 4294901760
    %v1455 = vsub.f32 %v598, %v1454
    %1456 = vmatpush2.msra.mxu0 %v1455
    %1457 = vmatprep.subr.mxu0 0.0
    %v1458 = vand.u32 %v597, 4294901760
    %v1459 = vsub.f32 %v597, %v1458
    %1460 = vmatpush2.msra.mxu0 %v1459
    %1461 = vmatprep.subr.mxu0 0.0
    %v1462 = vand.u32 %v596, 4294901760
    %v1463 = vsub.f32 %v596, %v1462
    %1464 = vmatpush2.msra.mxu0 %v1463
    %1465 = vmatprep.subr.mxu0 0.0
    %v1466 = vand.u32 %v595, 4294901760
    %v1467 = vsub.f32 %v595, %v1466
    %1468 = vmatpush2.msra.mxu0 %v1467
    %v1469 = vand.u32 %v756, 4294901760
    %v1470 = vsub.f32 %v756, %v1469
    %1471 = vmatprep.mubr.f32.mxu0 %v1470
    %v1472 = vand.u32 %v755, 4294901760
    %v1473 = vsub.f32 %v755, %v1472
    %1474 = vmatmul.mubr.f32.gmra.mxu0 %v1473
    %v1475 = vpop.f32.mrf.mxu0
    %v1476 = vadd.f32 %v1289, %v1475
    %v1477 = vpop.f32.mrf.mxu0
    %v1478 = vand.u32 %v767, 4294901760
    %v1479 = vsub.f32 %v767, %v1478
    %1480 = vmatprep.mubr.f32.mxu0 %v1479
    %v1481 = vand.u32 %v766, 4294901760
    %v1482 = vsub.f32 %v766, %v1481
    %1483 = vmatmul.mubr.f32.gmra.mxu0 %v1482
    %v1484 = vpop.f32.mrf.mxu0
    %v1485 = vadd.f32 %v1296, %v1484
    %v1486 = vpop.f32.mrf.mxu0
    %v1487 = vand.u32 %v778, 4294901760
    %v1488 = vsub.f32 %v778, %v1487
    %1489 = vmatprep.mubr.f32.mxu0 %v1488
    %v1490 = vand.u32 %v777, 4294901760
    %v1491 = vsub.f32 %v777, %v1490
    %1492 = vmatmul.mubr.f32.gmra.mxu0 %v1491
    %v1493 = vpop.f32.mrf.mxu0
    %v1494 = vadd.f32 %v1303, %v1493
    %v1495 = vpop.f32.mrf.mxu0
    %v1496 = vand.u32 %v789, 4294901760
    %v1497 = vsub.f32 %v789, %v1496
    %1498 = vmatprep.mubr.f32.mxu0 %v1497
    %v1499 = vand.u32 %v788, 4294901760
    %v1500 = vsub.f32 %v788, %v1499
    %1501 = vmatmul.mubr.f32.gmra.mxu0 %v1500
    %v1502 = vpop.f32.mrf.mxu0
    %v1503 = vadd.f32 %v1310, %v1502
    %v1504 = vpop.f32.mrf.mxu0
    %v1505 = vand.u32 %v800, 4294901760
    %v1506 = vsub.f32 %v800, %v1505
    %1507 = vmatprep.mubr.f32.mxu0 %v1506
    %v1508 = vand.u32 %v799, 4294901760
    %v1509 = vsub.f32 %v799, %v1508
    %1510 = vmatmul.mubr.f32.gmra.mxu0 %v1509
    %v1511 = vpop.f32.mrf.mxu0
    %v1512 = vadd.f32 %v1317, %v1511
    %v1513 = vpop.f32.mrf.mxu0
    %v1514 = vand.u32 %v811, 4294901760
    %v1515 = vsub.f32 %v811, %v1514
    %1516 = vmatprep.mubr.f32.mxu0 %v1515
    %v1517 = vand.u32 %v810, 4294901760
    %v1518 = vsub.f32 %v810, %v1517
    %1519 = vmatmul.mubr.f32.gmra.mxu0 %v1518
    %v1520 = vpop.f32.mrf.mxu0
    %v1521 = vadd.f32 %v1324, %v1520
    %v1522 = vpop.f32.mrf.mxu0
    %v1523 = vand.u32 %v822, 4294901760
    %v1524 = vsub.f32 %v822, %v1523
    %1525 = vmatprep.mubr.f32.mxu0 %v1524
    %v1526 = vand.u32 %v821, 4294901760
    %v1527 = vsub.f32 %v821, %v1526
    %1528 = vmatmul.mubr.f32.gmra.mxu0 %v1527
    %v1529 = vpop.f32.mrf.mxu0
    %v1530 = vadd.f32 %v1331, %v1529
    %v1531 = vpop.f32.mrf.mxu0
    %v1532 = vand.u32 %v833, 4294901760
    %v1533 = vsub.f32 %v833, %v1532
    %1534 = vmatprep.mubr.f32.mxu0 %v1533
    %v1535 = vand.u32 %v832, 4294901760
    %v1536 = vsub.f32 %v832, %v1535
    %1537 = vmatmul.mubr.f32.gmra.mxu0 %v1536
    %v1538 = vpop.f32.mrf.mxu0
    %v1539 = vadd.f32 %v1338, %v1538
    %v1540 = vpop.f32.mrf.mxu0
    %1541 = vdwg.mxu0
    %1542 = vmatprep.subr.mxu0 0.0
    %v1543 = vand.u32 %v594, 4294901760
    %1544 = vmatpush1.msra.mxu0 %v1543
    %1545 = vmatprep.subr.mxu0 0.0
    %v1546 = vand.u32 %v593, 4294901760
    %1547 = vmatpush1.msra.mxu0 %v1546
    %1548 = vmatprep.subr.mxu0 0.0
    %v1549 = vand.u32 %v592, 4294901760
    %1550 = vmatpush1.msra.mxu0 %v1549
    %1551 = vmatprep.subr.mxu0 0.0
    %v1552 = vand.u32 %v591, 4294901760
    %1553 = vmatpush1.msra.mxu0 %v1552
    %1554 = vmatprep.subr.mxu0 0.0
    %v1555 = vand.u32 %v590, 4294901760
    %1556 = vmatpush1.msra.mxu0 %v1555
    %1557 = vmatprep.subr.mxu0 0.0
    %v1558 = vand.u32 %v589, 4294901760
    %1559 = vmatpush1.msra.mxu0 %v1558
    %1560 = vmatprep.subr.mxu0 0.0
    %v1561 = vand.u32 %v588, 4294901760
    %1562 = vmatpush1.msra.mxu0 %v1561
    %1563 = vmatprep.subr.mxu0 0.0
    %v1564 = vand.u32 %v587, 4294901760
    %1565 = vmatpush1.msra.mxu0 %v1564
    %1566 = vmatprep.subr.mxu0 0.0
    %v1567 = vand.u32 %v586, 4294901760
    %1568 = vmatpush1.msra.mxu0 %v1567
    %1569 = vmatprep.subr.mxu0 0.0
    %v1570 = vand.u32 %v585, 4294901760
    %1571 = vmatpush1.msra.mxu0 %v1570
    %1572 = vmatprep.subr.mxu0 0.0
    %v1573 = vand.u32 %v584, 4294901760
    %1574 = vmatpush1.msra.mxu0 %v1573
    %1575 = vmatprep.subr.mxu0 0.0
    %v1576 = vand.u32 %v583, 4294901760
    %1577 = vmatpush1.msra.mxu0 %v1576
    %1578 = vmatprep.subr.mxu0 0.0
    %v1579 = vand.u32 %v582, 4294901760
    %1580 = vmatpush1.msra.mxu0 %v1579
    %1581 = vmatprep.subr.mxu0 0.0
    %v1582 = vand.u32 %v581, 4294901760
    %1583 = vmatpush1.msra.mxu0 %v1582
    %1584 = vmatprep.subr.mxu0 0.0
    %v1585 = vand.u32 %v580, 4294901760
    %1586 = vmatpush1.msra.mxu0 %v1585
    %1587 = vmatprep.subr.mxu0 0.0
    %v1588 = vand.u32 %v579, 4294901760
    %1589 = vmatpush1.msra.mxu0 %v1588
    %1590 = vmatprep.subr.mxu0 0.0
    %v1591 = vand.u32 %v610, 4294901760
    %1592 = vmatpush2.msra.mxu0 %v1591
    %1593 = vmatprep.subr.mxu0 0.0
    %v1594 = vand.u32 %v609, 4294901760
    %1595 = vmatpush2.msra.mxu0 %v1594
    %1596 = vmatprep.subr.mxu0 0.0
    %v1597 = vand.u32 %v608, 4294901760
    %1598 = vmatpush2.msra.mxu0 %v1597
    %1599 = vmatprep.subr.mxu0 0.0
    %v1600 = vand.u32 %v607, 4294901760
    %1601 = vmatpush2.msra.mxu0 %v1600
    %1602 = vmatprep.subr.mxu0 0.0
    %v1603 = vand.u32 %v606, 4294901760
    %1604 = vmatpush2.msra.mxu0 %v1603
    %1605 = vmatprep.subr.mxu0 0.0
    %v1606 = vand.u32 %v605, 4294901760
    %1607 = vmatpush2.msra.mxu0 %v1606
    %1608 = vmatprep.subr.mxu0 0.0
    %v1609 = vand.u32 %v604, 4294901760
    %1610 = vmatpush2.msra.mxu0 %v1609
    %1611 = vmatprep.subr.mxu0 0.0
    %v1612 = vand.u32 %v603, 4294901760
    %1613 = vmatpush2.msra.mxu0 %v1612
    %1614 = vmatprep.subr.mxu0 0.0
    %v1615 = vand.u32 %v602, 4294901760
    %1616 = vmatpush2.msra.mxu0 %v1615
    %1617 = vmatprep.subr.mxu0 0.0
    %v1618 = vand.u32 %v601, 4294901760
    %1619 = vmatpush2.msra.mxu0 %v1618
    %1620 = vmatprep.subr.mxu0 0.0
    %v1621 = vand.u32 %v600, 4294901760
    %1622 = vmatpush2.msra.mxu0 %v1621
    %1623 = vmatprep.subr.mxu0 0.0
    %v1624 = vand.u32 %v599, 4294901760
    %1625 = vmatpush2.msra.mxu0 %v1624
    %1626 = vmatprep.subr.mxu0 0.0
    %v1627 = vand.u32 %v598, 4294901760
    %1628 = vmatpush2.msra.mxu0 %v1627
    %1629 = vmatprep.subr.mxu0 0.0
    %v1630 = vand.u32 %v597, 4294901760
    %1631 = vmatpush2.msra.mxu0 %v1630
    %1632 = vmatprep.subr.mxu0 0.0
    %v1633 = vand.u32 %v596, 4294901760
    %1634 = vmatpush2.msra.mxu0 %v1633
    %1635 = vmatprep.subr.mxu0 0.0
    %v1636 = vand.u32 %v595, 4294901760
    %1637 = vmatpush2.msra.mxu0 %v1636
    %v1638 = vand.u32 %v756, 4294901760
    %v1639 = vsub.f32 %v756, %v1638
    %v1640 = vand.u32 %v1639, 4294901760
    %1641 = vmatprep.mubr.f32.mxu0 %v1640
    %v1642 = vand.u32 %v755, 4294901760
    %v1643 = vsub.f32 %v755, %v1642
    %v1644 = vand.u32 %v1643, 4294901760
    %1645 = vmatmul.mubr.f32.gmra.mxu0 %v1644
    %v1646 = vpop.f32.mrf.mxu0
    %v1647 = vadd.f32 %v1476, %v1646
    %v1648 = vpop.f32.mrf.mxu0
    %v1649 = vand.u32 %v767, 4294901760
    %v1650 = vsub.f32 %v767, %v1649
    %v1651 = vand.u32 %v1650, 4294901760
    %1652 = vmatprep.mubr.f32.mxu0 %v1651
    %v1653 = vand.u32 %v766, 4294901760
    %v1654 = vsub.f32 %v766, %v1653
    %v1655 = vand.u32 %v1654, 4294901760
    %1656 = vmatmul.mubr.f32.gmra.mxu0 %v1655
    %v1657 = vpop.f32.mrf.mxu0
    %v1658 = vadd.f32 %v1485, %v1657
    %v1659 = vpop.f32.mrf.mxu0
    %v1660 = vand.u32 %v778, 4294901760
    %v1661 = vsub.f32 %v778, %v1660
    %v1662 = vand.u32 %v1661, 4294901760
    %1663 = vmatprep.mubr.f32.mxu0 %v1662
    %v1664 = vand.u32 %v777, 4294901760
    %v1665 = vsub.f32 %v777, %v1664
    %v1666 = vand.u32 %v1665, 4294901760
    %1667 = vmatmul.mubr.f32.gmra.mxu0 %v1666
    %v1668 = vpop.f32.mrf.mxu0
    %v1669 = vadd.f32 %v1494, %v1668
    %v1670 = vpop.f32.mrf.mxu0
    %v1671 = vand.u32 %v789, 4294901760
    %v1672 = vsub.f32 %v789, %v1671
    %v1673 = vand.u32 %v1672, 4294901760
    %1674 = vmatprep.mubr.f32.mxu0 %v1673
    %v1675 = vand.u32 %v788, 4294901760
    %v1676 = vsub.f32 %v788, %v1675
    %v1677 = vand.u32 %v1676, 4294901760
    %1678 = vmatmul.mubr.f32.gmra.mxu0 %v1677
    %v1679 = vpop.f32.mrf.mxu0
    %v1680 = vadd.f32 %v1503, %v1679
    %v1681 = vpop.f32.mrf.mxu0
    %v1682 = vand.u32 %v800, 4294901760
    %v1683 = vsub.f32 %v800, %v1682
    %v1684 = vand.u32 %v1683, 4294901760
    %1685 = vmatprep.mubr.f32.mxu0 %v1684
    %v1686 = vand.u32 %v799, 4294901760
    %v1687 = vsub.f32 %v799, %v1686
    %v1688 = vand.u32 %v1687, 4294901760
    %1689 = vmatmul.mubr.f32.gmra.mxu0 %v1688
    %v1690 = vpop.f32.mrf.mxu0
    %v1691 = vadd.f32 %v1512, %v1690
    %v1692 = vpop.f32.mrf.mxu0
    %v1693 = vand.u32 %v811, 4294901760
    %v1694 = vsub.f32 %v811, %v1693
    %v1695 = vand.u32 %v1694, 4294901760
    %1696 = vmatprep.mubr.f32.mxu0 %v1695
    %v1697 = vand.u32 %v810, 4294901760
    %v1698 = vsub.f32 %v810, %v1697
    %v1699 = vand.u32 %v1698, 4294901760
    %1700 = vmatmul.mubr.f32.gmra.mxu0 %v1699
    %v1701 = vpop.f32.mrf.mxu0
    %v1702 = vadd.f32 %v1521, %v1701
    %v1703 = vpop.f32.mrf.mxu0
    %v1704 = vand.u32 %v822, 4294901760
    %v1705 = vsub.f32 %v822, %v1704
    %v1706 = vand.u32 %v1705, 4294901760
    %1707 = vmatprep.mubr.f32.mxu0 %v1706
    %v1708 = vand.u32 %v821, 4294901760
    %v1709 = vsub.f32 %v821, %v1708
    %v1710 = vand.u32 %v1709, 4294901760
    %1711 = vmatmul.mubr.f32.gmra.mxu0 %v1710
    %v1712 = vpop.f32.mrf.mxu0
    %v1713 = vadd.f32 %v1530, %v1712
    %v1714 = vpop.f32.mrf.mxu0
    %v1715 = vand.u32 %v833, 4294901760
    %v1716 = vsub.f32 %v833, %v1715
    %v1717 = vand.u32 %v1716, 4294901760
    %1718 = vmatprep.mubr.f32.mxu0 %v1717
    %v1719 = vand.u32 %v832, 4294901760
    %v1720 = vsub.f32 %v832, %v1719
    %v1721 = vand.u32 %v1720, 4294901760
    %1722 = vmatmul.mubr.f32.gmra.mxu0 %v1721
    %v1723 = vpop.f32.mrf.mxu0
    %v1724 = vadd.f32 %v1539, %v1723
    %v1725 = vpop.f32.mrf.mxu0
    %1726 = vdwg.mxu0
    %1727 = vmatprep.subr.mxu0 0.0
    %v1728 = vand.u32 %v594, 4294901760
    %v1729 = vsub.f32 %v594, %v1728
    %v1730 = vand.u32 %v1729, 4294901760
    %1731 = vmatpush1.msra.mxu0 %v1730
    %1732 = vmatprep.subr.mxu0 0.0
    %v1733 = vand.u32 %v593, 4294901760
    %v1734 = vsub.f32 %v593, %v1733
    %v1735 = vand.u32 %v1734, 4294901760
    %1736 = vmatpush1.msra.mxu0 %v1735
    %1737 = vmatprep.subr.mxu0 0.0
    %v1738 = vand.u32 %v592, 4294901760
    %v1739 = vsub.f32 %v592, %v1738
    %v1740 = vand.u32 %v1739, 4294901760
    %1741 = vmatpush1.msra.mxu0 %v1740
    %1742 = vmatprep.subr.mxu0 0.0
    %v1743 = vand.u32 %v591, 4294901760
    %v1744 = vsub.f32 %v591, %v1743
    %v1745 = vand.u32 %v1744, 4294901760
    %1746 = vmatpush1.msra.mxu0 %v1745
    %1747 = vmatprep.subr.mxu0 0.0
    %v1748 = vand.u32 %v590, 4294901760
    %v1749 = vsub.f32 %v590, %v1748
    %v1750 = vand.u32 %v1749, 4294901760
    %1751 = vmatpush1.msra.mxu0 %v1750
    %1752 = vmatprep.subr.mxu0 0.0
    %v1753 = vand.u32 %v589, 4294901760
    %v1754 = vsub.f32 %v589, %v1753
    %v1755 = vand.u32 %v1754, 4294901760
    %1756 = vmatpush1.msra.mxu0 %v1755
    %1757 = vmatprep.subr.mxu0 0.0
    %v1758 = vand.u32 %v588, 4294901760
    %v1759 = vsub.f32 %v588, %v1758
    %v1760 = vand.u32 %v1759, 4294901760
    %1761 = vmatpush1.msra.mxu0 %v1760
    %1762 = vmatprep.subr.mxu0 0.0
    %v1763 = vand.u32 %v587, 4294901760
    %v1764 = vsub.f32 %v587, %v1763
    %v1765 = vand.u32 %v1764, 4294901760
    %1766 = vmatpush1.msra.mxu0 %v1765
    %1767 = vmatprep.subr.mxu0 0.0
    %v1768 = vand.u32 %v586, 4294901760
    %v1769 = vsub.f32 %v586, %v1768
    %v1770 = vand.u32 %v1769, 4294901760
    %1771 = vmatpush1.msra.mxu0 %v1770
    %1772 = vmatprep.subr.mxu0 0.0
    %v1773 = vand.u32 %v585, 4294901760
    %v1774 = vsub.f32 %v585, %v1773
    %v1775 = vand.u32 %v1774, 4294901760
    %1776 = vmatpush1.msra.mxu0 %v1775
    %1777 = vmatprep.subr.mxu0 0.0
    %v1778 = vand.u32 %v584, 4294901760
    %v1779 = vsub.f32 %v584, %v1778
    %v1780 = vand.u32 %v1779, 4294901760
    %1781 = vmatpush1.msra.mxu0 %v1780
    %1782 = vmatprep.subr.mxu0 0.0
    %v1783 = vand.u32 %v583, 4294901760
    %v1784 = vsub.f32 %v583, %v1783
    %v1785 = vand.u32 %v1784, 4294901760
    %1786 = vmatpush1.msra.mxu0 %v1785
    %1787 = vmatprep.subr.mxu0 0.0
    %v1788 = vand.u32 %v582, 4294901760
    %v1789 = vsub.f32 %v582, %v1788
    %v1790 = vand.u32 %v1789, 4294901760
    %1791 = vmatpush1.msra.mxu0 %v1790
    %1792 = vmatprep.subr.mxu0 0.0
    %v1793 = vand.u32 %v581, 4294901760
    %v1794 = vsub.f32 %v581, %v1793
    %v1795 = vand.u32 %v1794, 4294901760
    %1796 = vmatpush1.msra.mxu0 %v1795
    %1797 = vmatprep.subr.mxu0 0.0
    %v1798 = vand.u32 %v580, 4294901760
    %v1799 = vsub.f32 %v580, %v1798
    %v1800 = vand.u32 %v1799, 4294901760
    %1801 = vmatpush1.msra.mxu0 %v1800
    %1802 = vmatprep.subr.mxu0 0.0
    %v1803 = vand.u32 %v579, 4294901760
    %v1804 = vsub.f32 %v579, %v1803
    %v1805 = vand.u32 %v1804, 4294901760
    %1806 = vmatpush1.msra.mxu0 %v1805
    %1807 = vmatprep.subr.mxu0 0.0
    %v1808 = vand.u32 %v610, 4294901760
    %v1809 = vsub.f32 %v610, %v1808
    %v1810 = vand.u32 %v1809, 4294901760
    %1811 = vmatpush2.msra.mxu0 %v1810
    %1812 = vmatprep.subr.mxu0 0.0
    %v1813 = vand.u32 %v609, 4294901760
    %v1814 = vsub.f32 %v609, %v1813
    %v1815 = vand.u32 %v1814, 4294901760
    %1816 = vmatpush2.msra.mxu0 %v1815
    %1817 = vmatprep.subr.mxu0 0.0
    %v1818 = vand.u32 %v608, 4294901760
    %v1819 = vsub.f32 %v608, %v1818
    %v1820 = vand.u32 %v1819, 4294901760
    %1821 = vmatpush2.msra.mxu0 %v1820
    %1822 = vmatprep.subr.mxu0 0.0
    %v1823 = vand.u32 %v607, 4294901760
    %v1824 = vsub.f32 %v607, %v1823
    %v1825 = vand.u32 %v1824, 4294901760
    %1826 = vmatpush2.msra.mxu0 %v1825
    %1827 = vmatprep.subr.mxu0 0.0
    %v1828 = vand.u32 %v606, 4294901760
    %v1829 = vsub.f32 %v606, %v1828
    %v1830 = vand.u32 %v1829, 4294901760
    %1831 = vmatpush2.msra.mxu0 %v1830
    %1832 = vmatprep.subr.mxu0 0.0
    %v1833 = vand.u32 %v605, 4294901760
    %v1834 = vsub.f32 %v605, %v1833
    %v1835 = vand.u32 %v1834, 4294901760
    %1836 = vmatpush2.msra.mxu0 %v1835
    %1837 = vmatprep.subr.mxu0 0.0
    %v1838 = vand.u32 %v604, 4294901760
    %v1839 = vsub.f32 %v604, %v1838
    %v1840 = vand.u32 %v1839, 4294901760
    %1841 = vmatpush2.msra.mxu0 %v1840
    %1842 = vmatprep.subr.mxu0 0.0
    %v1843 = vand.u32 %v603, 4294901760
    %v1844 = vsub.f32 %v603, %v1843
    %v1845 = vand.u32 %v1844, 4294901760
    %1846 = vmatpush2.msra.mxu0 %v1845
    %1847 = vmatprep.subr.mxu0 0.0
    %v1848 = vand.u32 %v602, 4294901760
    %v1849 = vsub.f32 %v602, %v1848
    %v1850 = vand.u32 %v1849, 4294901760
    %1851 = vmatpush2.msra.mxu0 %v1850
    %1852 = vmatprep.subr.mxu0 0.0
    %v1853 = vand.u32 %v601, 4294901760
    %v1854 = vsub.f32 %v601, %v1853
    %v1855 = vand.u32 %v1854, 4294901760
    %1856 = vmatpush2.msra.mxu0 %v1855
    %1857 = vmatprep.subr.mxu0 0.0
    %v1858 = vand.u32 %v600, 4294901760
    %v1859 = vsub.f32 %v600, %v1858
    %v1860 = vand.u32 %v1859, 4294901760
    %1861 = vmatpush2.msra.mxu0 %v1860
    %1862 = vmatprep.subr.mxu0 0.0
    %v1863 = vand.u32 %v599, 4294901760
    %v1864 = vsub.f32 %v599, %v1863
    %v1865 = vand.u32 %v1864, 4294901760
    %1866 = vmatpush2.msra.mxu0 %v1865
    %1867 = vmatprep.subr.mxu0 0.0
    %v1868 = vand.u32 %v598, 4294901760
    %v1869 = vsub.f32 %v598, %v1868
    %v1870 = vand.u32 %v1869, 4294901760
    %1871 = vmatpush2.msra.mxu0 %v1870
    %1872 = vmatprep.subr.mxu0 0.0
    %v1873 = vand.u32 %v597, 4294901760
    %v1874 = vsub.f32 %v597, %v1873
    %v1875 = vand.u32 %v1874, 4294901760
    %1876 = vmatpush2.msra.mxu0 %v1875
    %1877 = vmatprep.subr.mxu0 0.0
    %v1878 = vand.u32 %v596, 4294901760
    %v1879 = vsub.f32 %v596, %v1878
    %v1880 = vand.u32 %v1879, 4294901760
    %1881 = vmatpush2.msra.mxu0 %v1880
    %1882 = vmatprep.subr.mxu0 0.0
    %v1883 = vand.u32 %v595, 4294901760
    %v1884 = vsub.f32 %v595, %v1883
    %v1885 = vand.u32 %v1884, 4294901760
    %1886 = vmatpush2.msra.mxu0 %v1885
    %v1887 = vand.u32 %v756, 4294901760
    %1888 = vmatprep.mubr.f32.mxu0 %v1887
    %v1889 = vand.u32 %v755, 4294901760
    %1890 = vmatmul.mubr.f32.gmra.mxu0 %v1889
    %v1891 = vpop.f32.mrf.mxu0
    %v1892 = vadd.f32 %v1647, %v1891
    %v1893 = vpop.f32.mrf.mxu0
    %v1894 = vand.u32 %v767, 4294901760
    %1895 = vmatprep.mubr.f32.mxu0 %v1894
    %v1896 = vand.u32 %v766, 4294901760
    %1897 = vmatmul.mubr.f32.gmra.mxu0 %v1896
    %v1898 = vpop.f32.mrf.mxu0
    %v1899 = vadd.f32 %v1658, %v1898
    %v1900 = vpop.f32.mrf.mxu0
    %v1901 = vand.u32 %v778, 4294901760
    %1902 = vmatprep.mubr.f32.mxu0 %v1901
    %v1903 = vand.u32 %v777, 4294901760
    %1904 = vmatmul.mubr.f32.gmra.mxu0 %v1903
    %v1905 = vpop.f32.mrf.mxu0
    %v1906 = vadd.f32 %v1669, %v1905
    %v1907 = vpop.f32.mrf.mxu0
    %v1908 = vand.u32 %v789, 4294901760
    %1909 = vmatprep.mubr.f32.mxu0 %v1908
    %v1910 = vand.u32 %v788, 4294901760
    %1911 = vmatmul.mubr.f32.gmra.mxu0 %v1910
    %v1912 = vpop.f32.mrf.mxu0
    %v1913 = vadd.f32 %v1680, %v1912
    %v1914 = vpop.f32.mrf.mxu0
    %v1915 = vand.u32 %v800, 4294901760
    %1916 = vmatprep.mubr.f32.mxu0 %v1915
    %v1917 = vand.u32 %v799, 4294901760
    %1918 = vmatmul.mubr.f32.gmra.mxu0 %v1917
    %v1919 = vpop.f32.mrf.mxu0
    %v1920 = vadd.f32 %v1691, %v1919
    %v1921 = vpop.f32.mrf.mxu0
    %v1922 = vand.u32 %v811, 4294901760
    %1923 = vmatprep.mubr.f32.mxu0 %v1922
    %v1924 = vand.u32 %v810, 4294901760
    %1925 = vmatmul.mubr.f32.gmra.mxu0 %v1924
    %v1926 = vpop.f32.mrf.mxu0
    %v1927 = vadd.f32 %v1702, %v1926
    %v1928 = vpop.f32.mrf.mxu0
    %v1929 = vand.u32 %v822, 4294901760
    %1930 = vmatprep.mubr.f32.mxu0 %v1929
    %v1931 = vand.u32 %v821, 4294901760
    %1932 = vmatmul.mubr.f32.gmra.mxu0 %v1931
    %v1933 = vpop.f32.mrf.mxu0
    %v1934 = vadd.f32 %v1713, %v1933
    %v1935 = vpop.f32.mrf.mxu0
    %v1936 = vand.u32 %v833, 4294901760
    %1937 = vmatprep.mubr.f32.mxu0 %v1936
    %v1938 = vand.u32 %v832, 4294901760
    %1939 = vmatmul.mubr.f32.gmra.mxu0 %v1938
    %v1940 = vpop.f32.mrf.mxu0
    %v1941 = vadd.f32 %v1724, %v1940
    %v1942 = vpop.f32.mrf.mxu0
    %1943 = vdwg.mxu0
    %1944 = vmatprep.subr.mxu0 0.0
    %v1945 = vand.u32 %v594, 4294901760
    %1946 = vmatpush1.msra.mxu0 %v1945
    %1947 = vmatprep.subr.mxu0 0.0
    %v1948 = vand.u32 %v593, 4294901760
    %1949 = vmatpush1.msra.mxu0 %v1948
    %1950 = vmatprep.subr.mxu0 0.0
    %v1951 = vand.u32 %v592, 4294901760
    %1952 = vmatpush1.msra.mxu0 %v1951
    %1953 = vmatprep.subr.mxu0 0.0
    %v1954 = vand.u32 %v591, 4294901760
    %1955 = vmatpush1.msra.mxu0 %v1954
    %1956 = vmatprep.subr.mxu0 0.0
    %v1957 = vand.u32 %v590, 4294901760
    %1958 = vmatpush1.msra.mxu0 %v1957
    %1959 = vmatprep.subr.mxu0 0.0
    %v1960 = vand.u32 %v589, 4294901760
    %1961 = vmatpush1.msra.mxu0 %v1960
    %1962 = vmatprep.subr.mxu0 0.0
    %v1963 = vand.u32 %v588, 4294901760
    %1964 = vmatpush1.msra.mxu0 %v1963
    %1965 = vmatprep.subr.mxu0 0.0
    %v1966 = vand.u32 %v587, 4294901760
    %1967 = vmatpush1.msra.mxu0 %v1966
    %1968 = vmatprep.subr.mxu0 0.0
    %v1969 = vand.u32 %v586, 4294901760
    %1970 = vmatpush1.msra.mxu0 %v1969
    %1971 = vmatprep.subr.mxu0 0.0
    %v1972 = vand.u32 %v585, 4294901760
    %1973 = vmatpush1.msra.mxu0 %v1972
    %1974 = vmatprep.subr.mxu0 0.0
    %v1975 = vand.u32 %v584, 4294901760
    %1976 = vmatpush1.msra.mxu0 %v1975
    %1977 = vmatprep.subr.mxu0 0.0
    %v1978 = vand.u32 %v583, 4294901760
    %1979 = vmatpush1.msra.mxu0 %v1978
    %1980 = vmatprep.subr.mxu0 0.0
    %v1981 = vand.u32 %v582, 4294901760
    %1982 = vmatpush1.msra.mxu0 %v1981
    %1983 = vmatprep.subr.mxu0 0.0
    %v1984 = vand.u32 %v581, 4294901760
    %1985 = vmatpush1.msra.mxu0 %v1984
    %1986 = vmatprep.subr.mxu0 0.0
    %v1987 = vand.u32 %v580, 4294901760
    %1988 = vmatpush1.msra.mxu0 %v1987
    %1989 = vmatprep.subr.mxu0 0.0
    %v1990 = vand.u32 %v579, 4294901760
    %1991 = vmatpush1.msra.mxu0 %v1990
    %1992 = vmatprep.subr.mxu0 0.0
    %v1993 = vand.u32 %v610, 4294901760
    %1994 = vmatpush2.msra.mxu0 %v1993
    %1995 = vmatprep.subr.mxu0 0.0
    %v1996 = vand.u32 %v609, 4294901760
    %1997 = vmatpush2.msra.mxu0 %v1996
    %1998 = vmatprep.subr.mxu0 0.0
    %v1999 = vand.u32 %v608, 4294901760
    %2000 = vmatpush2.msra.mxu0 %v1999
    %2001 = vmatprep.subr.mxu0 0.0
    %v2002 = vand.u32 %v607, 4294901760
    %2003 = vmatpush2.msra.mxu0 %v2002
    %2004 = vmatprep.subr.mxu0 0.0
    %v2005 = vand.u32 %v606, 4294901760
    %2006 = vmatpush2.msra.mxu0 %v2005
    %2007 = vmatprep.subr.mxu0 0.0
    %v2008 = vand.u32 %v605, 4294901760
    %2009 = vmatpush2.msra.mxu0 %v2008
    %2010 = vmatprep.subr.mxu0 0.0
    %v2011 = vand.u32 %v604, 4294901760
    %2012 = vmatpush2.msra.mxu0 %v2011
    %2013 = vmatprep.subr.mxu0 0.0
    %v2014 = vand.u32 %v603, 4294901760
    %2015 = vmatpush2.msra.mxu0 %v2014
    %2016 = vmatprep.subr.mxu0 0.0
    %v2017 = vand.u32 %v602, 4294901760
    %2018 = vmatpush2.msra.mxu0 %v2017
    %2019 = vmatprep.subr.mxu0 0.0
    %v2020 = vand.u32 %v601, 4294901760
    %2021 = vmatpush2.msra.mxu0 %v2020
    %2022 = vmatprep.subr.mxu0 0.0
    %v2023 = vand.u32 %v600, 4294901760
    %2024 = vmatpush2.msra.mxu0 %v2023
    %2025 = vmatprep.subr.mxu0 0.0
    %v2026 = vand.u32 %v599, 4294901760
    %2027 = vmatpush2.msra.mxu0 %v2026
    %2028 = vmatprep.subr.mxu0 0.0
    %v2029 = vand.u32 %v598, 4294901760
    %2030 = vmatpush2.msra.mxu0 %v2029
    %2031 = vmatprep.subr.mxu0 0.0
    %v2032 = vand.u32 %v597, 4294901760
    %2033 = vmatpush2.msra.mxu0 %v2032
    %2034 = vmatprep.subr.mxu0 0.0
    %v2035 = vand.u32 %v596, 4294901760
    %2036 = vmatpush2.msra.mxu0 %v2035
    %2037 = vmatprep.subr.mxu0 0.0
    %v2038 = vand.u32 %v595, 4294901760
    %2039 = vmatpush2.msra.mxu0 %v2038
    %v2040 = vand.u32 %v756, 4294901760
    %2041 = vmatprep.mubr.f32.mxu0 %v2040
    %v2042 = vand.u32 %v755, 4294901760
    %2043 = vmatmul.mubr.f32.gmra.mxu0 %v2042
    %v2044 = vpop.f32.mrf.mxu0
    %v2045 = vadd.f32 %v1892, %v2044
    %v2046 = vpop.f32.mrf.mxu0
    %v2047 = vand.u32 %v767, 4294901760
    %2048 = vmatprep.mubr.f32.mxu0 %v2047
    %v2049 = vand.u32 %v766, 4294901760
    %2050 = vmatmul.mubr.f32.gmra.mxu0 %v2049
    %v2051 = vpop.f32.mrf.mxu0
    %v2052 = vadd.f32 %v1899, %v2051
    %v2053 = vpop.f32.mrf.mxu0
    %v2054 = vand.u32 %v778, 4294901760
    %2055 = vmatprep.mubr.f32.mxu0 %v2054
    %v2056 = vand.u32 %v777, 4294901760
    %2057 = vmatmul.mubr.f32.gmra.mxu0 %v2056
    %v2058 = vpop.f32.mrf.mxu0
    %v2059 = vadd.f32 %v1906, %v2058
    %v2060 = vpop.f32.mrf.mxu0
    %v2061 = vand.u32 %v789, 4294901760
    %2062 = vmatprep.mubr.f32.mxu0 %v2061
    %v2063 = vand.u32 %v788, 4294901760
    %2064 = vmatmul.mubr.f32.gmra.mxu0 %v2063
    %v2065 = vpop.f32.mrf.mxu0
    %v2066 = vadd.f32 %v1913, %v2065
    %v2067 = vpop.f32.mrf.mxu0
    %v2068 = vand.u32 %v800, 4294901760
    %2069 = vmatprep.mubr.f32.mxu0 %v2068
    %v2070 = vand.u32 %v799, 4294901760
    %2071 = vmatmul.mubr.f32.gmra.mxu0 %v2070
    %v2072 = vpop.f32.mrf.mxu0
    %v2073 = vadd.f32 %v1920, %v2072
    %v2074 = vpop.f32.mrf.mxu0
    %v2075 = vand.u32 %v811, 4294901760
    %2076 = vmatprep.mubr.f32.mxu0 %v2075
    %v2077 = vand.u32 %v810, 4294901760
    %2078 = vmatmul.mubr.f32.gmra.mxu0 %v2077
    %v2079 = vpop.f32.mrf.mxu0
    %v2080 = vadd.f32 %v1927, %v2079
    %v2081 = vpop.f32.mrf.mxu0
    %v2082 = vand.u32 %v822, 4294901760
    %2083 = vmatprep.mubr.f32.mxu0 %v2082
    %v2084 = vand.u32 %v821, 4294901760
    %2085 = vmatmul.mubr.f32.gmra.mxu0 %v2084
    %v2086 = vpop.f32.mrf.mxu0
    %v2087 = vadd.f32 %v1934, %v2086
    %v2088 = vpop.f32.mrf.mxu0
    %v2089 = vand.u32 %v833, 4294901760
    %2090 = vmatprep.mubr.f32.mxu0 %v2089
    %v2091 = vand.u32 %v832, 4294901760
    %2092 = vmatmul.mubr.f32.gmra.mxu0 %v2091
    %v2093 = vpop.f32.mrf.mxu0
    %v2094 = vadd.f32 %v1941, %v2093
    %v2095 = vpop.f32.mrf.mxu0
    %2096 = vdwg.mxu0
    %2097 = vmatprep.subr.mxu0 0.0
    %v2098 = vand.u32 %v626, 4294901760
    %2099 = vmatpush1.msra.mxu0 %v2098
    %2100 = vmatprep.subr.mxu0 0.0
    %v2101 = vand.u32 %v625, 4294901760
    %2102 = vmatpush1.msra.mxu0 %v2101
    %2103 = vmatprep.subr.mxu0 0.0
    %v2104 = vand.u32 %v624, 4294901760
    %2105 = vmatpush1.msra.mxu0 %v2104
    %2106 = vmatprep.subr.mxu0 0.0
    %v2107 = vand.u32 %v623, 4294901760
    %2108 = vmatpush1.msra.mxu0 %v2107
    %2109 = vmatprep.subr.mxu0 0.0
    %v2110 = vand.u32 %v622, 4294901760
    %2111 = vmatpush1.msra.mxu0 %v2110
    %2112 = vmatprep.subr.mxu0 0.0
    %v2113 = vand.u32 %v621, 4294901760
    %2114 = vmatpush1.msra.mxu0 %v2113
    %2115 = vmatprep.subr.mxu0 0.0
    %v2116 = vand.u32 %v620, 4294901760
    %2117 = vmatpush1.msra.mxu0 %v2116
    %2118 = vmatprep.subr.mxu0 0.0
    %v2119 = vand.u32 %v619, 4294901760
    %2120 = vmatpush1.msra.mxu0 %v2119
    %2121 = vmatprep.subr.mxu0 0.0
    %v2122 = vand.u32 %v618, 4294901760
    %2123 = vmatpush1.msra.mxu0 %v2122
    %2124 = vmatprep.subr.mxu0 0.0
    %v2125 = vand.u32 %v617, 4294901760
    %2126 = vmatpush1.msra.mxu0 %v2125
    %2127 = vmatprep.subr.mxu0 0.0
    %v2128 = vand.u32 %v616, 4294901760
    %2129 = vmatpush1.msra.mxu0 %v2128
    %2130 = vmatprep.subr.mxu0 0.0
    %v2131 = vand.u32 %v615, 4294901760
    %2132 = vmatpush1.msra.mxu0 %v2131
    %2133 = vmatprep.subr.mxu0 0.0
    %v2134 = vand.u32 %v614, 4294901760
    %2135 = vmatpush1.msra.mxu0 %v2134
    %2136 = vmatprep.subr.mxu0 0.0
    %v2137 = vand.u32 %v613, 4294901760
    %2138 = vmatpush1.msra.mxu0 %v2137
    %2139 = vmatprep.subr.mxu0 0.0
    %v2140 = vand.u32 %v612, 4294901760
    %2141 = vmatpush1.msra.mxu0 %v2140
    %2142 = vmatprep.subr.mxu0 0.0
    %v2143 = vand.u32 %v611, 4294901760
    %2144 = vmatpush1.msra.mxu0 %v2143
    %2145 = vmatprep.subr.mxu0 0.0
    %v2146 = vand.u32 %v642, 4294901760
    %2147 = vmatpush2.msra.mxu0 %v2146
    %2148 = vmatprep.subr.mxu0 0.0
    %v2149 = vand.u32 %v641, 4294901760
    %2150 = vmatpush2.msra.mxu0 %v2149
    %2151 = vmatprep.subr.mxu0 0.0
    %v2152 = vand.u32 %v640, 4294901760
    %2153 = vmatpush2.msra.mxu0 %v2152
    %2154 = vmatprep.subr.mxu0 0.0
    %v2155 = vand.u32 %v639, 4294901760
    %2156 = vmatpush2.msra.mxu0 %v2155
    %2157 = vmatprep.subr.mxu0 0.0
    %v2158 = vand.u32 %v638, 4294901760
    %2159 = vmatpush2.msra.mxu0 %v2158
    %2160 = vmatprep.subr.mxu0 0.0
    %v2161 = vand.u32 %v637, 4294901760
    %2162 = vmatpush2.msra.mxu0 %v2161
    %2163 = vmatprep.subr.mxu0 0.0
    %v2164 = vand.u32 %v636, 4294901760
    %2165 = vmatpush2.msra.mxu0 %v2164
    %2166 = vmatprep.subr.mxu0 0.0
    %v2167 = vand.u32 %v635, 4294901760
    %2168 = vmatpush2.msra.mxu0 %v2167
    %2169 = vmatprep.subr.mxu0 0.0
    %v2170 = vand.u32 %v634, 4294901760
    %2171 = vmatpush2.msra.mxu0 %v2170
    %2172 = vmatprep.subr.mxu0 0.0
    %v2173 = vand.u32 %v633, 4294901760
    %2174 = vmatpush2.msra.mxu0 %v2173
    %2175 = vmatprep.subr.mxu0 0.0
    %v2176 = vand.u32 %v632, 4294901760
    %2177 = vmatpush2.msra.mxu0 %v2176
    %2178 = vmatprep.subr.mxu0 0.0
    %v2179 = vand.u32 %v631, 4294901760
    %2180 = vmatpush2.msra.mxu0 %v2179
    %2181 = vmatprep.subr.mxu0 0.0
    %v2182 = vand.u32 %v630, 4294901760
    %2183 = vmatpush2.msra.mxu0 %v2182
    %2184 = vmatprep.subr.mxu0 0.0
    %v2185 = vand.u32 %v629, 4294901760
    %2186 = vmatpush2.msra.mxu0 %v2185
    %2187 = vmatprep.subr.mxu0 0.0
    %v2188 = vand.u32 %v628, 4294901760
    %2189 = vmatpush2.msra.mxu0 %v2188
    %2190 = vmatprep.subr.mxu0 0.0
    %v2191 = vand.u32 %v627, 4294901760
    %2192 = vmatpush2.msra.mxu0 %v2191
    %v2193 = vand.u32 %v758, 4294901760
    %v2194 = vsub.f32 %v758, %v2193
    %v2195 = vand.u32 %v2194, 4294901760
    %v2196 = vsub.f32 %v2194, %v2195
    %v2197 = vand.u32 %v2196, 4294901760
    %2198 = vmatprep.mubr.f32.mxu0 %v2197
    %v2199 = vand.u32 %v757, 4294901760
    %v2200 = vsub.f32 %v757, %v2199
    %v2201 = vand.u32 %v2200, 4294901760
    %v2202 = vsub.f32 %v2200, %v2201
    %v2203 = vand.u32 %v2202, 4294901760
    %2204 = vmatmul.mubr.f32.gmra.mxu0 %v2203
    %v2205 = vpop.f32.mrf.mxu0
    %v2206 = vadd.f32 %v2045, %v2205
    %v2207 = vpop.f32.mrf.mxu0
    %v2208 = vand.u32 %v769, 4294901760
    %v2209 = vsub.f32 %v769, %v2208
    %v2210 = vand.u32 %v2209, 4294901760
    %v2211 = vsub.f32 %v2209, %v2210
    %v2212 = vand.u32 %v2211, 4294901760
    %2213 = vmatprep.mubr.f32.mxu0 %v2212
    %v2214 = vand.u32 %v768, 4294901760
    %v2215 = vsub.f32 %v768, %v2214
    %v2216 = vand.u32 %v2215, 4294901760
    %v2217 = vsub.f32 %v2215, %v2216
    %v2218 = vand.u32 %v2217, 4294901760
    %2219 = vmatmul.mubr.f32.gmra.mxu0 %v2218
    %v2220 = vpop.f32.mrf.mxu0
    %v2221 = vadd.f32 %v2052, %v2220
    %v2222 = vpop.f32.mrf.mxu0
    %v2223 = vand.u32 %v780, 4294901760
    %v2224 = vsub.f32 %v780, %v2223
    %v2225 = vand.u32 %v2224, 4294901760
    %v2226 = vsub.f32 %v2224, %v2225
    %v2227 = vand.u32 %v2226, 4294901760
    %2228 = vmatprep.mubr.f32.mxu0 %v2227
    %v2229 = vand.u32 %v779, 4294901760
    %v2230 = vsub.f32 %v779, %v2229
    %v2231 = vand.u32 %v2230, 4294901760
    %v2232 = vsub.f32 %v2230, %v2231
    %v2233 = vand.u32 %v2232, 4294901760
    %2234 = vmatmul.mubr.f32.gmra.mxu0 %v2233
    %v2235 = vpop.f32.mrf.mxu0
    %v2236 = vadd.f32 %v2059, %v2235
    %v2237 = vpop.f32.mrf.mxu0
    %v2238 = vand.u32 %v791, 4294901760
    %v2239 = vsub.f32 %v791, %v2238
    %v2240 = vand.u32 %v2239, 4294901760
    %v2241 = vsub.f32 %v2239, %v2240
    %v2242 = vand.u32 %v2241, 4294901760
    %2243 = vmatprep.mubr.f32.mxu0 %v2242
    %v2244 = vand.u32 %v790, 4294901760
    %v2245 = vsub.f32 %v790, %v2244
    %v2246 = vand.u32 %v2245, 4294901760
    %v2247 = vsub.f32 %v2245, %v2246
    %v2248 = vand.u32 %v2247, 4294901760
    %2249 = vmatmul.mubr.f32.gmra.mxu0 %v2248
    %v2250 = vpop.f32.mrf.mxu0
    %v2251 = vadd.f32 %v2066, %v2250
    %v2252 = vpop.f32.mrf.mxu0
    %v2253 = vand.u32 %v802, 4294901760
    %v2254 = vsub.f32 %v802, %v2253
    %v2255 = vand.u32 %v2254, 4294901760
    %v2256 = vsub.f32 %v2254, %v2255
    %v2257 = vand.u32 %v2256, 4294901760
    %2258 = vmatprep.mubr.f32.mxu0 %v2257
    %v2259 = vand.u32 %v801, 4294901760
    %v2260 = vsub.f32 %v801, %v2259
    %v2261 = vand.u32 %v2260, 4294901760
    %v2262 = vsub.f32 %v2260, %v2261
    %v2263 = vand.u32 %v2262, 4294901760
    %2264 = vmatmul.mubr.f32.gmra.mxu0 %v2263
    %v2265 = vpop.f32.mrf.mxu0
    %v2266 = vadd.f32 %v2073, %v2265
    %v2267 = vpop.f32.mrf.mxu0
    %v2268 = vand.u32 %v813, 4294901760
    %v2269 = vsub.f32 %v813, %v2268
    %v2270 = vand.u32 %v2269, 4294901760
    %v2271 = vsub.f32 %v2269, %v2270
    %v2272 = vand.u32 %v2271, 4294901760
    %2273 = vmatprep.mubr.f32.mxu0 %v2272
    %v2274 = vand.u32 %v812, 4294901760
    %v2275 = vsub.f32 %v812, %v2274
    %v2276 = vand.u32 %v2275, 4294901760
    %v2277 = vsub.f32 %v2275, %v2276
    %v2278 = vand.u32 %v2277, 4294901760
    %2279 = vmatmul.mubr.f32.gmra.mxu0 %v2278
    %v2280 = vpop.f32.mrf.mxu0
    %v2281 = vadd.f32 %v2080, %v2280
    %v2282 = vpop.f32.mrf.mxu0
    %v2283 = vand.u32 %v824, 4294901760
    %v2284 = vsub.f32 %v824, %v2283
    %v2285 = vand.u32 %v2284, 4294901760
    %v2286 = vsub.f32 %v2284, %v2285
    %v2287 = vand.u32 %v2286, 4294901760
    %2288 = vmatprep.mubr.f32.mxu0 %v2287
    %v2289 = vand.u32 %v823, 4294901760
    %v2290 = vsub.f32 %v823, %v2289
    %v2291 = vand.u32 %v2290, 4294901760
    %v2292 = vsub.f32 %v2290, %v2291
    %v2293 = vand.u32 %v2292, 4294901760
    %2294 = vmatmul.mubr.f32.gmra.mxu0 %v2293
    %v2295 = vpop.f32.mrf.mxu0
    %v2296 = vadd.f32 %v2087, %v2295
    %v2297 = vpop.f32.mrf.mxu0
    %v2298 = vand.u32 %v835, 4294901760
    %v2299 = vsub.f32 %v835, %v2298
    %v2300 = vand.u32 %v2299, 4294901760
    %v2301 = vsub.f32 %v2299, %v2300
    %v2302 = vand.u32 %v2301, 4294901760
    %2303 = vmatprep.mubr.f32.mxu0 %v2302
    %v2304 = vand.u32 %v834, 4294901760
    %v2305 = vsub.f32 %v834, %v2304
    %v2306 = vand.u32 %v2305, 4294901760
    %v2307 = vsub.f32 %v2305, %v2306
    %v2308 = vand.u32 %v2307, 4294901760
    %2309 = vmatmul.mubr.f32.gmra.mxu0 %v2308
    %v2310 = vpop.f32.mrf.mxu0
    %v2311 = vadd.f32 %v2094, %v2310
    %v2312 = vpop.f32.mrf.mxu0
    %2313 = vdwg.mxu0
    %2314 = vmatprep.subr.mxu0 0.0
    %v2315 = vand.u32 %v626, 4294901760
    %v2316 = vsub.f32 %v626, %v2315
    %v2317 = vand.u32 %v2316, 4294901760
    %v2318 = vsub.f32 %v2316, %v2317
    %v2319 = vand.u32 %v2318, 4294901760
    %2320 = vmatpush1.msra.mxu0 %v2319
    %2321 = vmatprep.subr.mxu0 0.0
    %v2322 = vand.u32 %v625, 4294901760
    %v2323 = vsub.f32 %v625, %v2322
    %v2324 = vand.u32 %v2323, 4294901760
    %v2325 = vsub.f32 %v2323, %v2324
    %v2326 = vand.u32 %v2325, 4294901760
    %2327 = vmatpush1.msra.mxu0 %v2326
    %2328 = vmatprep.subr.mxu0 0.0
    %v2329 = vand.u32 %v624, 4294901760
    %v2330 = vsub.f32 %v624, %v2329
    %v2331 = vand.u32 %v2330, 4294901760
    %v2332 = vsub.f32 %v2330, %v2331
    %v2333 = vand.u32 %v2332, 4294901760
    %2334 = vmatpush1.msra.mxu0 %v2333
    %2335 = vmatprep.subr.mxu0 0.0
    %v2336 = vand.u32 %v623, 4294901760
    %v2337 = vsub.f32 %v623, %v2336
    %v2338 = vand.u32 %v2337, 4294901760
    %v2339 = vsub.f32 %v2337, %v2338
    %v2340 = vand.u32 %v2339, 4294901760
    %2341 = vmatpush1.msra.mxu0 %v2340
    %2342 = vmatprep.subr.mxu0 0.0
    %v2343 = vand.u32 %v622, 4294901760
    %v2344 = vsub.f32 %v622, %v2343
    %v2345 = vand.u32 %v2344, 4294901760
    %v2346 = vsub.f32 %v2344, %v2345
    %v2347 = vand.u32 %v2346, 4294901760
    %2348 = vmatpush1.msra.mxu0 %v2347
    %2349 = vmatprep.subr.mxu0 0.0
    %v2350 = vand.u32 %v621, 4294901760
    %v2351 = vsub.f32 %v621, %v2350
    %v2352 = vand.u32 %v2351, 4294901760
    %v2353 = vsub.f32 %v2351, %v2352
    %v2354 = vand.u32 %v2353, 4294901760
    %2355 = vmatpush1.msra.mxu0 %v2354
    %2356 = vmatprep.subr.mxu0 0.0
    %v2357 = vand.u32 %v620, 4294901760
    %v2358 = vsub.f32 %v620, %v2357
    %v2359 = vand.u32 %v2358, 4294901760
    %v2360 = vsub.f32 %v2358, %v2359
    %v2361 = vand.u32 %v2360, 4294901760
    %2362 = vmatpush1.msra.mxu0 %v2361
    %2363 = vmatprep.subr.mxu0 0.0
    %v2364 = vand.u32 %v619, 4294901760
    %v2365 = vsub.f32 %v619, %v2364
    %v2366 = vand.u32 %v2365, 4294901760
    %v2367 = vsub.f32 %v2365, %v2366
    %v2368 = vand.u32 %v2367, 4294901760
    %2369 = vmatpush1.msra.mxu0 %v2368
    %2370 = vmatprep.subr.mxu0 0.0
    %v2371 = vand.u32 %v618, 4294901760
    %v2372 = vsub.f32 %v618, %v2371
    %v2373 = vand.u32 %v2372, 4294901760
    %v2374 = vsub.f32 %v2372, %v2373
    %v2375 = vand.u32 %v2374, 4294901760
    %2376 = vmatpush1.msra.mxu0 %v2375
    %2377 = vmatprep.subr.mxu0 0.0
    %v2378 = vand.u32 %v617, 4294901760
    %v2379 = vsub.f32 %v617, %v2378
    %v2380 = vand.u32 %v2379, 4294901760
    %v2381 = vsub.f32 %v2379, %v2380
    %v2382 = vand.u32 %v2381, 4294901760
    %2383 = vmatpush1.msra.mxu0 %v2382
    %2384 = vmatprep.subr.mxu0 0.0
    %v2385 = vand.u32 %v616, 4294901760
    %v2386 = vsub.f32 %v616, %v2385
    %v2387 = vand.u32 %v2386, 4294901760
    %v2388 = vsub.f32 %v2386, %v2387
    %v2389 = vand.u32 %v2388, 4294901760
    %2390 = vmatpush1.msra.mxu0 %v2389
    %2391 = vmatprep.subr.mxu0 0.0
    %v2392 = vand.u32 %v615, 4294901760
    %v2393 = vsub.f32 %v615, %v2392
    %v2394 = vand.u32 %v2393, 4294901760
    %v2395 = vsub.f32 %v2393, %v2394
    %v2396 = vand.u32 %v2395, 4294901760
    %2397 = vmatpush1.msra.mxu0 %v2396
    %2398 = vmatprep.subr.mxu0 0.0
    %v2399 = vand.u32 %v614, 4294901760
    %v2400 = vsub.f32 %v614, %v2399
    %v2401 = vand.u32 %v2400, 4294901760
    %v2402 = vsub.f32 %v2400, %v2401
    %v2403 = vand.u32 %v2402, 4294901760
    %2404 = vmatpush1.msra.mxu0 %v2403
    %2405 = vmatprep.subr.mxu0 0.0
    %v2406 = vand.u32 %v613, 4294901760
    %v2407 = vsub.f32 %v613, %v2406
    %v2408 = vand.u32 %v2407, 4294901760
    %v2409 = vsub.f32 %v2407, %v2408
    %v2410 = vand.u32 %v2409, 4294901760
    %2411 = vmatpush1.msra.mxu0 %v2410
    %2412 = vmatprep.subr.mxu0 0.0
    %v2413 = vand.u32 %v612, 4294901760
    %v2414 = vsub.f32 %v612, %v2413
    %v2415 = vand.u32 %v2414, 4294901760
    %v2416 = vsub.f32 %v2414, %v2415
    %v2417 = vand.u32 %v2416, 4294901760
    %2418 = vmatpush1.msra.mxu0 %v2417
    %2419 = vmatprep.subr.mxu0 0.0
    %v2420 = vand.u32 %v611, 4294901760
    %v2421 = vsub.f32 %v611, %v2420
    %v2422 = vand.u32 %v2421, 4294901760
    %v2423 = vsub.f32 %v2421, %v2422
    %v2424 = vand.u32 %v2423, 4294901760
    %2425 = vmatpush1.msra.mxu0 %v2424
    %2426 = vmatprep.subr.mxu0 0.0
    %v2427 = vand.u32 %v642, 4294901760
    %v2428 = vsub.f32 %v642, %v2427
    %v2429 = vand.u32 %v2428, 4294901760
    %v2430 = vsub.f32 %v2428, %v2429
    %v2431 = vand.u32 %v2430, 4294901760
    %2432 = vmatpush2.msra.mxu0 %v2431
    %2433 = vmatprep.subr.mxu0 0.0
    %v2434 = vand.u32 %v641, 4294901760
    %v2435 = vsub.f32 %v641, %v2434
    %v2436 = vand.u32 %v2435, 4294901760
    %v2437 = vsub.f32 %v2435, %v2436
    %v2438 = vand.u32 %v2437, 4294901760
    %2439 = vmatpush2.msra.mxu0 %v2438
    %2440 = vmatprep.subr.mxu0 0.0
    %v2441 = vand.u32 %v640, 4294901760
    %v2442 = vsub.f32 %v640, %v2441
    %v2443 = vand.u32 %v2442, 4294901760
    %v2444 = vsub.f32 %v2442, %v2443
    %v2445 = vand.u32 %v2444, 4294901760
    %2446 = vmatpush2.msra.mxu0 %v2445
    %2447 = vmatprep.subr.mxu0 0.0
    %v2448 = vand.u32 %v639, 4294901760
    %v2449 = vsub.f32 %v639, %v2448
    %v2450 = vand.u32 %v2449, 4294901760
    %v2451 = vsub.f32 %v2449, %v2450
    %v2452 = vand.u32 %v2451, 4294901760
    %2453 = vmatpush2.msra.mxu0 %v2452
    %2454 = vmatprep.subr.mxu0 0.0
    %v2455 = vand.u32 %v638, 4294901760
    %v2456 = vsub.f32 %v638, %v2455
    %v2457 = vand.u32 %v2456, 4294901760
    %v2458 = vsub.f32 %v2456, %v2457
    %v2459 = vand.u32 %v2458, 4294901760
    %2460 = vmatpush2.msra.mxu0 %v2459
    %2461 = vmatprep.subr.mxu0 0.0
    %v2462 = vand.u32 %v637, 4294901760
    %v2463 = vsub.f32 %v637, %v2462
    %v2464 = vand.u32 %v2463, 4294901760
    %v2465 = vsub.f32 %v2463, %v2464
    %v2466 = vand.u32 %v2465, 4294901760
    %2467 = vmatpush2.msra.mxu0 %v2466
    %2468 = vmatprep.subr.mxu0 0.0
    %v2469 = vand.u32 %v636, 4294901760
    %v2470 = vsub.f32 %v636, %v2469
    %v2471 = vand.u32 %v2470, 4294901760
    %v2472 = vsub.f32 %v2470, %v2471
    %v2473 = vand.u32 %v2472, 4294901760
    %2474 = vmatpush2.msra.mxu0 %v2473
    %2475 = vmatprep.subr.mxu0 0.0
    %v2476 = vand.u32 %v635, 4294901760
    %v2477 = vsub.f32 %v635, %v2476
    %v2478 = vand.u32 %v2477, 4294901760
    %v2479 = vsub.f32 %v2477, %v2478
    %v2480 = vand.u32 %v2479, 4294901760
    %2481 = vmatpush2.msra.mxu0 %v2480
    %2482 = vmatprep.subr.mxu0 0.0
    %v2483 = vand.u32 %v634, 4294901760
    %v2484 = vsub.f32 %v634, %v2483
    %v2485 = vand.u32 %v2484, 4294901760
    %v2486 = vsub.f32 %v2484, %v2485
    %v2487 = vand.u32 %v2486, 4294901760
    %2488 = vmatpush2.msra.mxu0 %v2487
    %2489 = vmatprep.subr.mxu0 0.0
    %v2490 = vand.u32 %v633, 4294901760
    %v2491 = vsub.f32 %v633, %v2490
    %v2492 = vand.u32 %v2491, 4294901760
    %v2493 = vsub.f32 %v2491, %v2492
    %v2494 = vand.u32 %v2493, 4294901760
    %2495 = vmatpush2.msra.mxu0 %v2494
    %2496 = vmatprep.subr.mxu0 0.0
    %v2497 = vand.u32 %v632, 4294901760
    %v2498 = vsub.f32 %v632, %v2497
    %v2499 = vand.u32 %v2498, 4294901760
    %v2500 = vsub.f32 %v2498, %v2499
    %v2501 = vand.u32 %v2500, 4294901760
    %2502 = vmatpush2.msra.mxu0 %v2501
    %2503 = vmatprep.subr.mxu0 0.0
    %v2504 = vand.u32 %v631, 4294901760
    %v2505 = vsub.f32 %v631, %v2504
    %v2506 = vand.u32 %v2505, 4294901760
    %v2507 = vsub.f32 %v2505, %v2506
    %v2508 = vand.u32 %v2507, 4294901760
    %2509 = vmatpush2.msra.mxu0 %v2508
    %2510 = vmatprep.subr.mxu0 0.0
    %v2511 = vand.u32 %v630, 4294901760
    %v2512 = vsub.f32 %v630, %v2511
    %v2513 = vand.u32 %v2512, 4294901760
    %v2514 = vsub.f32 %v2512, %v2513
    %v2515 = vand.u32 %v2514, 4294901760
    %2516 = vmatpush2.msra.mxu0 %v2515
    %2517 = vmatprep.subr.mxu0 0.0
    %v2518 = vand.u32 %v629, 4294901760
    %v2519 = vsub.f32 %v629, %v2518
    %v2520 = vand.u32 %v2519, 4294901760
    %v2521 = vsub.f32 %v2519, %v2520
    %v2522 = vand.u32 %v2521, 4294901760
    %2523 = vmatpush2.msra.mxu0 %v2522
    %2524 = vmatprep.subr.mxu0 0.0
    %v2525 = vand.u32 %v628, 4294901760
    %v2526 = vsub.f32 %v628, %v2525
    %v2527 = vand.u32 %v2526, 4294901760
    %v2528 = vsub.f32 %v2526, %v2527
    %v2529 = vand.u32 %v2528, 4294901760
    %2530 = vmatpush2.msra.mxu0 %v2529
    %2531 = vmatprep.subr.mxu0 0.0
    %v2532 = vand.u32 %v627, 4294901760
    %v2533 = vsub.f32 %v627, %v2532
    %v2534 = vand.u32 %v2533, 4294901760
    %v2535 = vsub.f32 %v2533, %v2534
    %v2536 = vand.u32 %v2535, 4294901760
    %2537 = vmatpush2.msra.mxu0 %v2536
    %v2538 = vand.u32 %v758, 4294901760
    %2539 = vmatprep.mubr.f32.mxu0 %v2538
    %v2540 = vand.u32 %v757, 4294901760
    %2541 = vmatmul.mubr.f32.gmra.mxu0 %v2540
    %v2542 = vpop.f32.mrf.mxu0
    %v2543 = vadd.f32 %v2206, %v2542
    %v2544 = vpop.f32.mrf.mxu0
    %v2545 = vand.u32 %v769, 4294901760
    %2546 = vmatprep.mubr.f32.mxu0 %v2545
    %v2547 = vand.u32 %v768, 4294901760
    %2548 = vmatmul.mubr.f32.gmra.mxu0 %v2547
    %v2549 = vpop.f32.mrf.mxu0
    %v2550 = vadd.f32 %v2221, %v2549
    %v2551 = vpop.f32.mrf.mxu0
    %v2552 = vand.u32 %v780, 4294901760
    %2553 = vmatprep.mubr.f32.mxu0 %v2552
    %v2554 = vand.u32 %v779, 4294901760
    %2555 = vmatmul.mubr.f32.gmra.mxu0 %v2554
    %v2556 = vpop.f32.mrf.mxu0
    %v2557 = vadd.f32 %v2236, %v2556
    %v2558 = vpop.f32.mrf.mxu0
    %v2559 = vand.u32 %v791, 4294901760
    %2560 = vmatprep.mubr.f32.mxu0 %v2559
    %v2561 = vand.u32 %v790, 4294901760
    %2562 = vmatmul.mubr.f32.gmra.mxu0 %v2561
    %v2563 = vpop.f32.mrf.mxu0
    %v2564 = vadd.f32 %v2251, %v2563
    %v2565 = vpop.f32.mrf.mxu0
    %v2566 = vand.u32 %v802, 4294901760
    %2567 = vmatprep.mubr.f32.mxu0 %v2566
    %v2568 = vand.u32 %v801, 4294901760
    %2569 = vmatmul.mubr.f32.gmra.mxu0 %v2568
    %v2570 = vpop.f32.mrf.mxu0
    %v2571 = vadd.f32 %v2266, %v2570
    %v2572 = vpop.f32.mrf.mxu0
    %v2573 = vand.u32 %v813, 4294901760
    %2574 = vmatprep.mubr.f32.mxu0 %v2573
    %v2575 = vand.u32 %v812, 4294901760
    %2576 = vmatmul.mubr.f32.gmra.mxu0 %v2575
    %v2577 = vpop.f32.mrf.mxu0
    %v2578 = vadd.f32 %v2281, %v2577
    %v2579 = vpop.f32.mrf.mxu0
    %v2580 = vand.u32 %v824, 4294901760
    %2581 = vmatprep.mubr.f32.mxu0 %v2580
    %v2582 = vand.u32 %v823, 4294901760
    %2583 = vmatmul.mubr.f32.gmra.mxu0 %v2582
    %v2584 = vpop.f32.mrf.mxu0
    %v2585 = vadd.f32 %v2296, %v2584
    %v2586 = vpop.f32.mrf.mxu0
    %v2587 = vand.u32 %v835, 4294901760
    %2588 = vmatprep.mubr.f32.mxu0 %v2587
    %v2589 = vand.u32 %v834, 4294901760
    %2590 = vmatmul.mubr.f32.gmra.mxu0 %v2589
    %v2591 = vpop.f32.mrf.mxu0
    %v2592 = vadd.f32 %v2311, %v2591
    %v2593 = vpop.f32.mrf.mxu0
    %2594 = vdwg.mxu0
    %2595 = vmatprep.subr.mxu0 0.0
    %v2596 = vand.u32 %v626, 4294901760
    %v2597 = vsub.f32 %v626, %v2596
    %2598 = vmatpush1.msra.mxu0 %v2597
    %2599 = vmatprep.subr.mxu0 0.0
    %v2600 = vand.u32 %v625, 4294901760
    %v2601 = vsub.f32 %v625, %v2600
    %2602 = vmatpush1.msra.mxu0 %v2601
    %2603 = vmatprep.subr.mxu0 0.0
    %v2604 = vand.u32 %v624, 4294901760
    %v2605 = vsub.f32 %v624, %v2604
    %2606 = vmatpush1.msra.mxu0 %v2605
    %2607 = vmatprep.subr.mxu0 0.0
    %v2608 = vand.u32 %v623, 4294901760
    %v2609 = vsub.f32 %v623, %v2608
    %2610 = vmatpush1.msra.mxu0 %v2609
    %2611 = vmatprep.subr.mxu0 0.0
    %v2612 = vand.u32 %v622, 4294901760
    %v2613 = vsub.f32 %v622, %v2612
    %2614 = vmatpush1.msra.mxu0 %v2613
    %2615 = vmatprep.subr.mxu0 0.0
    %v2616 = vand.u32 %v621, 4294901760
    %v2617 = vsub.f32 %v621, %v2616
    %2618 = vmatpush1.msra.mxu0 %v2617
    %2619 = vmatprep.subr.mxu0 0.0
    %v2620 = vand.u32 %v620, 4294901760
    %v2621 = vsub.f32 %v620, %v2620
    %2622 = vmatpush1.msra.mxu0 %v2621
    %2623 = vmatprep.subr.mxu0 0.0
    %v2624 = vand.u32 %v619, 4294901760
    %v2625 = vsub.f32 %v619, %v2624
    %2626 = vmatpush1.msra.mxu0 %v2625
    %2627 = vmatprep.subr.mxu0 0.0
    %v2628 = vand.u32 %v618, 4294901760
    %v2629 = vsub.f32 %v618, %v2628
    %2630 = vmatpush1.msra.mxu0 %v2629
    %2631 = vmatprep.subr.mxu0 0.0
    %v2632 = vand.u32 %v617, 4294901760
    %v2633 = vsub.f32 %v617, %v2632
    %2634 = vmatpush1.msra.mxu0 %v2633
    %2635 = vmatprep.subr.mxu0 0.0
    %v2636 = vand.u32 %v616, 4294901760
    %v2637 = vsub.f32 %v616, %v2636
    %2638 = vmatpush1.msra.mxu0 %v2637
    %2639 = vmatprep.subr.mxu0 0.0
    %v2640 = vand.u32 %v615, 4294901760
    %v2641 = vsub.f32 %v615, %v2640
    %2642 = vmatpush1.msra.mxu0 %v2641
    %2643 = vmatprep.subr.mxu0 0.0
    %v2644 = vand.u32 %v614, 4294901760
    %v2645 = vsub.f32 %v614, %v2644
    %2646 = vmatpush1.msra.mxu0 %v2645
    %2647 = vmatprep.subr.mxu0 0.0
    %v2648 = vand.u32 %v613, 4294901760
    %v2649 = vsub.f32 %v613, %v2648
    %2650 = vmatpush1.msra.mxu0 %v2649
    %2651 = vmatprep.subr.mxu0 0.0
    %v2652 = vand.u32 %v612, 4294901760
    %v2653 = vsub.f32 %v612, %v2652
    %2654 = vmatpush1.msra.mxu0 %v2653
    %2655 = vmatprep.subr.mxu0 0.0
    %v2656 = vand.u32 %v611, 4294901760
    %v2657 = vsub.f32 %v611, %v2656
    %2658 = vmatpush1.msra.mxu0 %v2657
    %2659 = vmatprep.subr.mxu0 0.0
    %v2660 = vand.u32 %v642, 4294901760
    %v2661 = vsub.f32 %v642, %v2660
    %2662 = vmatpush2.msra.mxu0 %v2661
    %2663 = vmatprep.subr.mxu0 0.0
    %v2664 = vand.u32 %v641, 4294901760
    %v2665 = vsub.f32 %v641, %v2664
    %2666 = vmatpush2.msra.mxu0 %v2665
    %2667 = vmatprep.subr.mxu0 0.0
    %v2668 = vand.u32 %v640, 4294901760
    %v2669 = vsub.f32 %v640, %v2668
    %2670 = vmatpush2.msra.mxu0 %v2669
    %2671 = vmatprep.subr.mxu0 0.0
    %v2672 = vand.u32 %v639, 4294901760
    %v2673 = vsub.f32 %v639, %v2672
    %2674 = vmatpush2.msra.mxu0 %v2673
    %2675 = vmatprep.subr.mxu0 0.0
    %v2676 = vand.u32 %v638, 4294901760
    %v2677 = vsub.f32 %v638, %v2676
    %2678 = vmatpush2.msra.mxu0 %v2677
    %2679 = vmatprep.subr.mxu0 0.0
    %v2680 = vand.u32 %v637, 4294901760
    %v2681 = vsub.f32 %v637, %v2680
    %2682 = vmatpush2.msra.mxu0 %v2681
    %2683 = vmatprep.subr.mxu0 0.0
    %v2684 = vand.u32 %v636, 4294901760
    %v2685 = vsub.f32 %v636, %v2684
    %2686 = vmatpush2.msra.mxu0 %v2685
    %2687 = vmatprep.subr.mxu0 0.0
    %v2688 = vand.u32 %v635, 4294901760
    %v2689 = vsub.f32 %v635, %v2688
    %2690 = vmatpush2.msra.mxu0 %v2689
    %2691 = vmatprep.subr.mxu0 0.0
    %v2692 = vand.u32 %v634, 4294901760
    %v2693 = vsub.f32 %v634, %v2692
    %2694 = vmatpush2.msra.mxu0 %v2693
    %2695 = vmatprep.subr.mxu0 0.0
    %v2696 = vand.u32 %v633, 4294901760
    %v2697 = vsub.f32 %v633, %v2696
    %2698 = vmatpush2.msra.mxu0 %v2697
    %2699 = vmatprep.subr.mxu0 0.0
    %v2700 = vand.u32 %v632, 4294901760
    %v2701 = vsub.f32 %v632, %v2700
    %2702 = vmatpush2.msra.mxu0 %v2701
    %2703 = vmatprep.subr.mxu0 0.0
    %v2704 = vand.u32 %v631, 4294901760
    %v2705 = vsub.f32 %v631, %v2704
    %2706 = vmatpush2.msra.mxu0 %v2705
    %2707 = vmatprep.subr.mxu0 0.0
    %v2708 = vand.u32 %v630, 4294901760
    %v2709 = vsub.f32 %v630, %v2708
    %2710 = vmatpush2.msra.mxu0 %v2709
    %2711 = vmatprep.subr.mxu0 0.0
    %v2712 = vand.u32 %v629, 4294901760
    %v2713 = vsub.f32 %v629, %v2712
    %2714 = vmatpush2.msra.mxu0 %v2713
    %2715 = vmatprep.subr.mxu0 0.0
    %v2716 = vand.u32 %v628, 4294901760
    %v2717 = vsub.f32 %v628, %v2716
    %2718 = vmatpush2.msra.mxu0 %v2717
    %2719 = vmatprep.subr.mxu0 0.0
    %v2720 = vand.u32 %v627, 4294901760
    %v2721 = vsub.f32 %v627, %v2720
    %2722 = vmatpush2.msra.mxu0 %v2721
    %v2723 = vand.u32 %v758, 4294901760
    %v2724 = vsub.f32 %v758, %v2723
    %2725 = vmatprep.mubr.f32.mxu0 %v2724
    %v2726 = vand.u32 %v757, 4294901760
    %v2727 = vsub.f32 %v757, %v2726
    %2728 = vmatmul.mubr.f32.gmra.mxu0 %v2727
    %v2729 = vpop.f32.mrf.mxu0
    %v2730 = vadd.f32 %v2543, %v2729
    %v2731 = vpop.f32.mrf.mxu0
    %v2732 = vand.u32 %v769, 4294901760
    %v2733 = vsub.f32 %v769, %v2732
    %2734 = vmatprep.mubr.f32.mxu0 %v2733
    %v2735 = vand.u32 %v768, 4294901760
    %v2736 = vsub.f32 %v768, %v2735
    %2737 = vmatmul.mubr.f32.gmra.mxu0 %v2736
    %v2738 = vpop.f32.mrf.mxu0
    %v2739 = vadd.f32 %v2550, %v2738
    %v2740 = vpop.f32.mrf.mxu0
    %v2741 = vand.u32 %v780, 4294901760
    %v2742 = vsub.f32 %v780, %v2741
    %2743 = vmatprep.mubr.f32.mxu0 %v2742
    %v2744 = vand.u32 %v779, 4294901760
    %v2745 = vsub.f32 %v779, %v2744
    %2746 = vmatmul.mubr.f32.gmra.mxu0 %v2745
    %v2747 = vpop.f32.mrf.mxu0
    %v2748 = vadd.f32 %v2557, %v2747
    %v2749 = vpop.f32.mrf.mxu0
    %v2750 = vand.u32 %v791, 4294901760
    %v2751 = vsub.f32 %v791, %v2750
    %2752 = vmatprep.mubr.f32.mxu0 %v2751
    %v2753 = vand.u32 %v790, 4294901760
    %v2754 = vsub.f32 %v790, %v2753
    %2755 = vmatmul.mubr.f32.gmra.mxu0 %v2754
    %v2756 = vpop.f32.mrf.mxu0
    %v2757 = vadd.f32 %v2564, %v2756
    %v2758 = vpop.f32.mrf.mxu0
    %v2759 = vand.u32 %v802, 4294901760
    %v2760 = vsub.f32 %v802, %v2759
    %2761 = vmatprep.mubr.f32.mxu0 %v2760
    %v2762 = vand.u32 %v801, 4294901760
    %v2763 = vsub.f32 %v801, %v2762
    %2764 = vmatmul.mubr.f32.gmra.mxu0 %v2763
    %v2765 = vpop.f32.mrf.mxu0
    %v2766 = vadd.f32 %v2571, %v2765
    %v2767 = vpop.f32.mrf.mxu0
    %v2768 = vand.u32 %v813, 4294901760
    %v2769 = vsub.f32 %v813, %v2768
    %2770 = vmatprep.mubr.f32.mxu0 %v2769
    %v2771 = vand.u32 %v812, 4294901760
    %v2772 = vsub.f32 %v812, %v2771
    %2773 = vmatmul.mubr.f32.gmra.mxu0 %v2772
    %v2774 = vpop.f32.mrf.mxu0
    %v2775 = vadd.f32 %v2578, %v2774
    %v2776 = vpop.f32.mrf.mxu0
    %v2777 = vand.u32 %v824, 4294901760
    %v2778 = vsub.f32 %v824, %v2777
    %2779 = vmatprep.mubr.f32.mxu0 %v2778
    %v2780 = vand.u32 %v823, 4294901760
    %v2781 = vsub.f32 %v823, %v2780
    %2782 = vmatmul.mubr.f32.gmra.mxu0 %v2781
    %v2783 = vpop.f32.mrf.mxu0
    %v2784 = vadd.f32 %v2585, %v2783
    %v2785 = vpop.f32.mrf.mxu0
    %v2786 = vand.u32 %v835, 4294901760
    %v2787 = vsub.f32 %v835, %v2786
    %2788 = vmatprep.mubr.f32.mxu0 %v2787
    %v2789 = vand.u32 %v834, 4294901760
    %v2790 = vsub.f32 %v834, %v2789
    %2791 = vmatmul.mubr.f32.gmra.mxu0 %v2790
    %v2792 = vpop.f32.mrf.mxu0
    %v2793 = vadd.f32 %v2592, %v2792
    %v2794 = vpop.f32.mrf.mxu0
    %2795 = vdwg.mxu0
    %2796 = vmatprep.subr.mxu0 0.0
    %v2797 = vand.u32 %v626, 4294901760
    %2798 = vmatpush1.msra.mxu0 %v2797
    %2799 = vmatprep.subr.mxu0 0.0
    %v2800 = vand.u32 %v625, 4294901760
    %2801 = vmatpush1.msra.mxu0 %v2800
    %2802 = vmatprep.subr.mxu0 0.0
    %v2803 = vand.u32 %v624, 4294901760
    %2804 = vmatpush1.msra.mxu0 %v2803
    %2805 = vmatprep.subr.mxu0 0.0
    %v2806 = vand.u32 %v623, 4294901760
    %2807 = vmatpush1.msra.mxu0 %v2806
    %2808 = vmatprep.subr.mxu0 0.0
    %v2809 = vand.u32 %v622, 4294901760
    %2810 = vmatpush1.msra.mxu0 %v2809
    %2811 = vmatprep.subr.mxu0 0.0
    %v2812 = vand.u32 %v621, 4294901760
    %2813 = vmatpush1.msra.mxu0 %v2812
    %2814 = vmatprep.subr.mxu0 0.0
    %v2815 = vand.u32 %v620, 4294901760
    %2816 = vmatpush1.msra.mxu0 %v2815
    %2817 = vmatprep.subr.mxu0 0.0
    %v2818 = vand.u32 %v619, 4294901760
    %2819 = vmatpush1.msra.mxu0 %v2818
    %2820 = vmatprep.subr.mxu0 0.0
    %v2821 = vand.u32 %v618, 4294901760
    %2822 = vmatpush1.msra.mxu0 %v2821
    %2823 = vmatprep.subr.mxu0 0.0
    %v2824 = vand.u32 %v617, 4294901760
    %2825 = vmatpush1.msra.mxu0 %v2824
    %2826 = vmatprep.subr.mxu0 0.0
    %v2827 = vand.u32 %v616, 4294901760
    %2828 = vmatpush1.msra.mxu0 %v2827
    %2829 = vmatprep.subr.mxu0 0.0
    %v2830 = vand.u32 %v615, 4294901760
    %2831 = vmatpush1.msra.mxu0 %v2830
    %2832 = vmatprep.subr.mxu0 0.0
    %v2833 = vand.u32 %v614, 4294901760
    %2834 = vmatpush1.msra.mxu0 %v2833
    %2835 = vmatprep.subr.mxu0 0.0
    %v2836 = vand.u32 %v613, 4294901760
    %2837 = vmatpush1.msra.mxu0 %v2836
    %2838 = vmatprep.subr.mxu0 0.0
    %v2839 = vand.u32 %v612, 4294901760
    %2840 = vmatpush1.msra.mxu0 %v2839
    %2841 = vmatprep.subr.mxu0 0.0
    %v2842 = vand.u32 %v611, 4294901760
    %2843 = vmatpush1.msra.mxu0 %v2842
    %2844 = vmatprep.subr.mxu0 0.0
    %v2845 = vand.u32 %v642, 4294901760
    %2846 = vmatpush2.msra.mxu0 %v2845
    %2847 = vmatprep.subr.mxu0 0.0
    %v2848 = vand.u32 %v641, 4294901760
    %2849 = vmatpush2.msra.mxu0 %v2848
    %2850 = vmatprep.subr.mxu0 0.0
    %v2851 = vand.u32 %v640, 4294901760
    %2852 = vmatpush2.msra.mxu0 %v2851
    %2853 = vmatprep.subr.mxu0 0.0
    %v2854 = vand.u32 %v639, 4294901760
    %2855 = vmatpush2.msra.mxu0 %v2854
    %2856 = vmatprep.subr.mxu0 0.0
    %v2857 = vand.u32 %v638, 4294901760
    %2858 = vmatpush2.msra.mxu0 %v2857
    %2859 = vmatprep.subr.mxu0 0.0
    %v2860 = vand.u32 %v637, 4294901760
    %2861 = vmatpush2.msra.mxu0 %v2860
    %2862 = vmatprep.subr.mxu0 0.0
    %v2863 = vand.u32 %v636, 4294901760
    %2864 = vmatpush2.msra.mxu0 %v2863
    %2865 = vmatprep.subr.mxu0 0.0
    %v2866 = vand.u32 %v635, 4294901760
    %2867 = vmatpush2.msra.mxu0 %v2866
    %2868 = vmatprep.subr.mxu0 0.0
    %v2869 = vand.u32 %v634, 4294901760
    %2870 = vmatpush2.msra.mxu0 %v2869
    %2871 = vmatprep.subr.mxu0 0.0
    %v2872 = vand.u32 %v633, 4294901760
    %2873 = vmatpush2.msra.mxu0 %v2872
    %2874 = vmatprep.subr.mxu0 0.0
    %v2875 = vand.u32 %v632, 4294901760
    %2876 = vmatpush2.msra.mxu0 %v2875
    %2877 = vmatprep.subr.mxu0 0.0
    %v2878 = vand.u32 %v631, 4294901760
    %2879 = vmatpush2.msra.mxu0 %v2878
    %2880 = vmatprep.subr.mxu0 0.0
    %v2881 = vand.u32 %v630, 4294901760
    %2882 = vmatpush2.msra.mxu0 %v2881
    %2883 = vmatprep.subr.mxu0 0.0
    %v2884 = vand.u32 %v629, 4294901760
    %2885 = vmatpush2.msra.mxu0 %v2884
    %2886 = vmatprep.subr.mxu0 0.0
    %v2887 = vand.u32 %v628, 4294901760
    %2888 = vmatpush2.msra.mxu0 %v2887
    %2889 = vmatprep.subr.mxu0 0.0
    %v2890 = vand.u32 %v627, 4294901760
    %2891 = vmatpush2.msra.mxu0 %v2890
    %v2892 = vand.u32 %v758, 4294901760
    %v2893 = vsub.f32 %v758, %v2892
    %v2894 = vand.u32 %v2893, 4294901760
    %2895 = vmatprep.mubr.f32.mxu0 %v2894
    %v2896 = vand.u32 %v757, 4294901760
    %v2897 = vsub.f32 %v757, %v2896
    %v2898 = vand.u32 %v2897, 4294901760
    %2899 = vmatmul.mubr.f32.gmra.mxu0 %v2898
    %v2900 = vpop.f32.mrf.mxu0
    %v2901 = vadd.f32 %v2730, %v2900
    %v2902 = vpop.f32.mrf.mxu0
    %v2903 = vand.u32 %v769, 4294901760
    %v2904 = vsub.f32 %v769, %v2903
    %v2905 = vand.u32 %v2904, 4294901760
    %2906 = vmatprep.mubr.f32.mxu0 %v2905
    %v2907 = vand.u32 %v768, 4294901760
    %v2908 = vsub.f32 %v768, %v2907
    %v2909 = vand.u32 %v2908, 4294901760
    %2910 = vmatmul.mubr.f32.gmra.mxu0 %v2909
    %v2911 = vpop.f32.mrf.mxu0
    %v2912 = vadd.f32 %v2739, %v2911
    %v2913 = vpop.f32.mrf.mxu0
    %v2914 = vand.u32 %v780, 4294901760
    %v2915 = vsub.f32 %v780, %v2914
    %v2916 = vand.u32 %v2915, 4294901760
    %2917 = vmatprep.mubr.f32.mxu0 %v2916
    %v2918 = vand.u32 %v779, 4294901760
    %v2919 = vsub.f32 %v779, %v2918
    %v2920 = vand.u32 %v2919, 4294901760
    %2921 = vmatmul.mubr.f32.gmra.mxu0 %v2920
    %v2922 = vpop.f32.mrf.mxu0
    %v2923 = vadd.f32 %v2748, %v2922
    %v2924 = vpop.f32.mrf.mxu0
    %v2925 = vand.u32 %v791, 4294901760
    %v2926 = vsub.f32 %v791, %v2925
    %v2927 = vand.u32 %v2926, 4294901760
    %2928 = vmatprep.mubr.f32.mxu0 %v2927
    %v2929 = vand.u32 %v790, 4294901760
    %v2930 = vsub.f32 %v790, %v2929
    %v2931 = vand.u32 %v2930, 4294901760
    %2932 = vmatmul.mubr.f32.gmra.mxu0 %v2931
    %v2933 = vpop.f32.mrf.mxu0
    %v2934 = vadd.f32 %v2757, %v2933
    %v2935 = vpop.f32.mrf.mxu0
    %v2936 = vand.u32 %v802, 4294901760
    %v2937 = vsub.f32 %v802, %v2936
    %v2938 = vand.u32 %v2937, 4294901760
    %2939 = vmatprep.mubr.f32.mxu0 %v2938
    %v2940 = vand.u32 %v801, 4294901760
    %v2941 = vsub.f32 %v801, %v2940
    %v2942 = vand.u32 %v2941, 4294901760
    %2943 = vmatmul.mubr.f32.gmra.mxu0 %v2942
    %v2944 = vpop.f32.mrf.mxu0
    %v2945 = vadd.f32 %v2766, %v2944
    %v2946 = vpop.f32.mrf.mxu0
    %v2947 = vand.u32 %v813, 4294901760
    %v2948 = vsub.f32 %v813, %v2947
    %v2949 = vand.u32 %v2948, 4294901760
    %2950 = vmatprep.mubr.f32.mxu0 %v2949
    %v2951 = vand.u32 %v812, 4294901760
    %v2952 = vsub.f32 %v812, %v2951
    %v2953 = vand.u32 %v2952, 4294901760
    %2954 = vmatmul.mubr.f32.gmra.mxu0 %v2953
    %v2955 = vpop.f32.mrf.mxu0
    %v2956 = vadd.f32 %v2775, %v2955
    %v2957 = vpop.f32.mrf.mxu0
    %v2958 = vand.u32 %v824, 4294901760
    %v2959 = vsub.f32 %v824, %v2958
    %v2960 = vand.u32 %v2959, 4294901760
    %2961 = vmatprep.mubr.f32.mxu0 %v2960
    %v2962 = vand.u32 %v823, 4294901760
    %v2963 = vsub.f32 %v823, %v2962
    %v2964 = vand.u32 %v2963, 4294901760
    %2965 = vmatmul.mubr.f32.gmra.mxu0 %v2964
    %v2966 = vpop.f32.mrf.mxu0
    %v2967 = vadd.f32 %v2784, %v2966
    %v2968 = vpop.f32.mrf.mxu0
    %v2969 = vand.u32 %v835, 4294901760
    %v2970 = vsub.f32 %v835, %v2969
    %v2971 = vand.u32 %v2970, 4294901760
    %2972 = vmatprep.mubr.f32.mxu0 %v2971
    %v2973 = vand.u32 %v834, 4294901760
    %v2974 = vsub.f32 %v834, %v2973
    %v2975 = vand.u32 %v2974, 4294901760
    %2976 = vmatmul.mubr.f32.gmra.mxu0 %v2975
    %v2977 = vpop.f32.mrf.mxu0
    %v2978 = vadd.f32 %v2793, %v2977
    %v2979 = vpop.f32.mrf.mxu0
    %2980 = vdwg.mxu0
    %2981 = vmatprep.subr.mxu0 0.0
    %v2982 = vand.u32 %v626, 4294901760
    %v2983 = vsub.f32 %v626, %v2982
    %v2984 = vand.u32 %v2983, 4294901760
    %2985 = vmatpush1.msra.mxu0 %v2984
    %2986 = vmatprep.subr.mxu0 0.0
    %v2987 = vand.u32 %v625, 4294901760
    %v2988 = vsub.f32 %v625, %v2987
    %v2989 = vand.u32 %v2988, 4294901760
    %2990 = vmatpush1.msra.mxu0 %v2989
    %2991 = vmatprep.subr.mxu0 0.0
    %v2992 = vand.u32 %v624, 4294901760
    %v2993 = vsub.f32 %v624, %v2992
    %v2994 = vand.u32 %v2993, 4294901760
    %2995 = vmatpush1.msra.mxu0 %v2994
    %2996 = vmatprep.subr.mxu0 0.0
    %v2997 = vand.u32 %v623, 4294901760
    %v2998 = vsub.f32 %v623, %v2997
    %v2999 = vand.u32 %v2998, 4294901760
    %3000 = vmatpush1.msra.mxu0 %v2999
    %3001 = vmatprep.subr.mxu0 0.0
    %v3002 = vand.u32 %v622, 4294901760
    %v3003 = vsub.f32 %v622, %v3002
    %v3004 = vand.u32 %v3003, 4294901760
    %3005 = vmatpush1.msra.mxu0 %v3004
    %3006 = vmatprep.subr.mxu0 0.0
    %v3007 = vand.u32 %v621, 4294901760
    %v3008 = vsub.f32 %v621, %v3007
    %v3009 = vand.u32 %v3008, 4294901760
    %3010 = vmatpush1.msra.mxu0 %v3009
    %3011 = vmatprep.subr.mxu0 0.0
    %v3012 = vand.u32 %v620, 4294901760
    %v3013 = vsub.f32 %v620, %v3012
    %v3014 = vand.u32 %v3013, 4294901760
    %3015 = vmatpush1.msra.mxu0 %v3014
    %3016 = vmatprep.subr.mxu0 0.0
    %v3017 = vand.u32 %v619, 4294901760
    %v3018 = vsub.f32 %v619, %v3017
    %v3019 = vand.u32 %v3018, 4294901760
    %3020 = vmatpush1.msra.mxu0 %v3019
    %3021 = vmatprep.subr.mxu0 0.0
    %v3022 = vand.u32 %v618, 4294901760
    %v3023 = vsub.f32 %v618, %v3022
    %v3024 = vand.u32 %v3023, 4294901760
    %3025 = vmatpush1.msra.mxu0 %v3024
    %3026 = vmatprep.subr.mxu0 0.0
    %v3027 = vand.u32 %v617, 4294901760
    %v3028 = vsub.f32 %v617, %v3027
    %v3029 = vand.u32 %v3028, 4294901760
    %3030 = vmatpush1.msra.mxu0 %v3029
    %3031 = vmatprep.subr.mxu0 0.0
    %v3032 = vand.u32 %v616, 4294901760
    %v3033 = vsub.f32 %v616, %v3032
    %v3034 = vand.u32 %v3033, 4294901760
    %3035 = vmatpush1.msra.mxu0 %v3034
    %3036 = vmatprep.subr.mxu0 0.0
    %v3037 = vand.u32 %v615, 4294901760
    %v3038 = vsub.f32 %v615, %v3037
    %v3039 = vand.u32 %v3038, 4294901760
    %3040 = vmatpush1.msra.mxu0 %v3039
    %3041 = vmatprep.subr.mxu0 0.0
    %v3042 = vand.u32 %v614, 4294901760
    %v3043 = vsub.f32 %v614, %v3042
    %v3044 = vand.u32 %v3043, 4294901760
    %3045 = vmatpush1.msra.mxu0 %v3044
    %3046 = vmatprep.subr.mxu0 0.0
    %v3047 = vand.u32 %v613, 4294901760
    %v3048 = vsub.f32 %v613, %v3047
    %v3049 = vand.u32 %v3048, 4294901760
    %3050 = vmatpush1.msra.mxu0 %v3049
    %3051 = vmatprep.subr.mxu0 0.0
    %v3052 = vand.u32 %v612, 4294901760
    %v3053 = vsub.f32 %v612, %v3052
    %v3054 = vand.u32 %v3053, 4294901760
    %3055 = vmatpush1.msra.mxu0 %v3054
    %3056 = vmatprep.subr.mxu0 0.0
    %v3057 = vand.u32 %v611, 4294901760
    %v3058 = vsub.f32 %v611, %v3057
    %v3059 = vand.u32 %v3058, 4294901760
    %3060 = vmatpush1.msra.mxu0 %v3059
    %3061 = vmatprep.subr.mxu0 0.0
    %v3062 = vand.u32 %v642, 4294901760
    %v3063 = vsub.f32 %v642, %v3062
    %v3064 = vand.u32 %v3063, 4294901760
    %3065 = vmatpush2.msra.mxu0 %v3064
    %3066 = vmatprep.subr.mxu0 0.0
    %v3067 = vand.u32 %v641, 4294901760
    %v3068 = vsub.f32 %v641, %v3067
    %v3069 = vand.u32 %v3068, 4294901760
    %3070 = vmatpush2.msra.mxu0 %v3069
    %3071 = vmatprep.subr.mxu0 0.0
    %v3072 = vand.u32 %v640, 4294901760
    %v3073 = vsub.f32 %v640, %v3072
    %v3074 = vand.u32 %v3073, 4294901760
    %3075 = vmatpush2.msra.mxu0 %v3074
    %3076 = vmatprep.subr.mxu0 0.0
    %v3077 = vand.u32 %v639, 4294901760
    %v3078 = vsub.f32 %v639, %v3077
    %v3079 = vand.u32 %v3078, 4294901760
    %3080 = vmatpush2.msra.mxu0 %v3079
    %3081 = vmatprep.subr.mxu0 0.0
    %v3082 = vand.u32 %v638, 4294901760
    %v3083 = vsub.f32 %v638, %v3082
    %v3084 = vand.u32 %v3083, 4294901760
    %3085 = vmatpush2.msra.mxu0 %v3084
    %3086 = vmatprep.subr.mxu0 0.0
    %v3087 = vand.u32 %v637, 4294901760
    %v3088 = vsub.f32 %v637, %v3087
    %v3089 = vand.u32 %v3088, 4294901760
    %3090 = vmatpush2.msra.mxu0 %v3089
    %3091 = vmatprep.subr.mxu0 0.0
    %v3092 = vand.u32 %v636, 4294901760
    %v3093 = vsub.f32 %v636, %v3092
    %v3094 = vand.u32 %v3093, 4294901760
    %3095 = vmatpush2.msra.mxu0 %v3094
    %3096 = vmatprep.subr.mxu0 0.0
    %v3097 = vand.u32 %v635, 4294901760
    %v3098 = vsub.f32 %v635, %v3097
    %v3099 = vand.u32 %v3098, 4294901760
    %3100 = vmatpush2.msra.mxu0 %v3099
    %3101 = vmatprep.subr.mxu0 0.0
    %v3102 = vand.u32 %v634, 4294901760
    %v3103 = vsub.f32 %v634, %v3102
    %v3104 = vand.u32 %v3103, 4294901760
    %3105 = vmatpush2.msra.mxu0 %v3104
    %3106 = vmatprep.subr.mxu0 0.0
    %v3107 = vand.u32 %v633, 4294901760
    %v3108 = vsub.f32 %v633, %v3107
    %v3109 = vand.u32 %v3108, 4294901760
    %3110 = vmatpush2.msra.mxu0 %v3109
    %3111 = vmatprep.subr.mxu0 0.0
    %v3112 = vand.u32 %v632, 4294901760
    %v3113 = vsub.f32 %v632, %v3112
    %v3114 = vand.u32 %v3113, 4294901760
    %3115 = vmatpush2.msra.mxu0 %v3114
    %3116 = vmatprep.subr.mxu0 0.0
    %v3117 = vand.u32 %v631, 4294901760
    %v3118 = vsub.f32 %v631, %v3117
    %v3119 = vand.u32 %v3118, 4294901760
    %3120 = vmatpush2.msra.mxu0 %v3119
    %3121 = vmatprep.subr.mxu0 0.0
    %v3122 = vand.u32 %v630, 4294901760
    %v3123 = vsub.f32 %v630, %v3122
    %v3124 = vand.u32 %v3123, 4294901760
    %3125 = vmatpush2.msra.mxu0 %v3124
    %3126 = vmatprep.subr.mxu0 0.0
    %v3127 = vand.u32 %v629, 4294901760
    %v3128 = vsub.f32 %v629, %v3127
    %v3129 = vand.u32 %v3128, 4294901760
    %3130 = vmatpush2.msra.mxu0 %v3129
    %3131 = vmatprep.subr.mxu0 0.0
    %v3132 = vand.u32 %v628, 4294901760
    %v3133 = vsub.f32 %v628, %v3132
    %v3134 = vand.u32 %v3133, 4294901760
    %3135 = vmatpush2.msra.mxu0 %v3134
    %3136 = vmatprep.subr.mxu0 0.0
    %v3137 = vand.u32 %v627, 4294901760
    %v3138 = vsub.f32 %v627, %v3137
    %v3139 = vand.u32 %v3138, 4294901760
    %3140 = vmatpush2.msra.mxu0 %v3139
    %v3141 = vand.u32 %v758, 4294901760
    %3142 = vmatprep.mubr.f32.mxu0 %v3141
    %v3143 = vand.u32 %v757, 4294901760
    %3144 = vmatmul.mubr.f32.gmra.mxu0 %v3143
    %v3145 = vpop.f32.mrf.mxu0
    %v3146 = vadd.f32 %v2901, %v3145
    %v3147 = vpop.f32.mrf.mxu0
    %v3148 = vand.u32 %v769, 4294901760
    %3149 = vmatprep.mubr.f32.mxu0 %v3148
    %v3150 = vand.u32 %v768, 4294901760
    %3151 = vmatmul.mubr.f32.gmra.mxu0 %v3150
    %v3152 = vpop.f32.mrf.mxu0
    %v3153 = vadd.f32 %v2912, %v3152
    %v3154 = vpop.f32.mrf.mxu0
    %v3155 = vand.u32 %v780, 4294901760
    %3156 = vmatprep.mubr.f32.mxu0 %v3155
    %v3157 = vand.u32 %v779, 4294901760
    %3158 = vmatmul.mubr.f32.gmra.mxu0 %v3157
    %v3159 = vpop.f32.mrf.mxu0
    %v3160 = vadd.f32 %v2923, %v3159
    %v3161 = vpop.f32.mrf.mxu0
    %v3162 = vand.u32 %v791, 4294901760
    %3163 = vmatprep.mubr.f32.mxu0 %v3162
    %v3164 = vand.u32 %v790, 4294901760
    %3165 = vmatmul.mubr.f32.gmra.mxu0 %v3164
    %v3166 = vpop.f32.mrf.mxu0
    %v3167 = vadd.f32 %v2934, %v3166
    %v3168 = vpop.f32.mrf.mxu0
    %v3169 = vand.u32 %v802, 4294901760
    %3170 = vmatprep.mubr.f32.mxu0 %v3169
    %v3171 = vand.u32 %v801, 4294901760
    %3172 = vmatmul.mubr.f32.gmra.mxu0 %v3171
    %v3173 = vpop.f32.mrf.mxu0
    %v3174 = vadd.f32 %v2945, %v3173
    %v3175 = vpop.f32.mrf.mxu0
    %v3176 = vand.u32 %v813, 4294901760
    %3177 = vmatprep.mubr.f32.mxu0 %v3176
    %v3178 = vand.u32 %v812, 4294901760
    %3179 = vmatmul.mubr.f32.gmra.mxu0 %v3178
    %v3180 = vpop.f32.mrf.mxu0
    %v3181 = vadd.f32 %v2956, %v3180
    %v3182 = vpop.f32.mrf.mxu0
    %v3183 = vand.u32 %v824, 4294901760
    %3184 = vmatprep.mubr.f32.mxu0 %v3183
    %v3185 = vand.u32 %v823, 4294901760
    %3186 = vmatmul.mubr.f32.gmra.mxu0 %v3185
    %v3187 = vpop.f32.mrf.mxu0
    %v3188 = vadd.f32 %v2967, %v3187
    %v3189 = vpop.f32.mrf.mxu0
    %v3190 = vand.u32 %v835, 4294901760
    %3191 = vmatprep.mubr.f32.mxu0 %v3190
    %v3192 = vand.u32 %v834, 4294901760
    %3193 = vmatmul.mubr.f32.gmra.mxu0 %v3192
    %v3194 = vpop.f32.mrf.mxu0
    %v3195 = vadd.f32 %v2978, %v3194
    %v3196 = vpop.f32.mrf.mxu0
    %3197 = vdwg.mxu0
    %3198 = vmatprep.subr.mxu0 0.0
    %v3199 = vand.u32 %v626, 4294901760
    %3200 = vmatpush1.msra.mxu0 %v3199
    %3201 = vmatprep.subr.mxu0 0.0
    %v3202 = vand.u32 %v625, 4294901760
    %3203 = vmatpush1.msra.mxu0 %v3202
    %3204 = vmatprep.subr.mxu0 0.0
    %v3205 = vand.u32 %v624, 4294901760
    %3206 = vmatpush1.msra.mxu0 %v3205
    %3207 = vmatprep.subr.mxu0 0.0
    %v3208 = vand.u32 %v623, 4294901760
    %3209 = vmatpush1.msra.mxu0 %v3208
    %3210 = vmatprep.subr.mxu0 0.0
    %v3211 = vand.u32 %v622, 4294901760
    %3212 = vmatpush1.msra.mxu0 %v3211
    %3213 = vmatprep.subr.mxu0 0.0
    %v3214 = vand.u32 %v621, 4294901760
    %3215 = vmatpush1.msra.mxu0 %v3214
    %3216 = vmatprep.subr.mxu0 0.0
    %v3217 = vand.u32 %v620, 4294901760
    %3218 = vmatpush1.msra.mxu0 %v3217
    %3219 = vmatprep.subr.mxu0 0.0
    %v3220 = vand.u32 %v619, 4294901760
    %3221 = vmatpush1.msra.mxu0 %v3220
    %3222 = vmatprep.subr.mxu0 0.0
    %v3223 = vand.u32 %v618, 4294901760
    %3224 = vmatpush1.msra.mxu0 %v3223
    %3225 = vmatprep.subr.mxu0 0.0
    %v3226 = vand.u32 %v617, 4294901760
    %3227 = vmatpush1.msra.mxu0 %v3226
    %3228 = vmatprep.subr.mxu0 0.0
    %v3229 = vand.u32 %v616, 4294901760
    %3230 = vmatpush1.msra.mxu0 %v3229
    %3231 = vmatprep.subr.mxu0 0.0
    %v3232 = vand.u32 %v615, 4294901760
    %3233 = vmatpush1.msra.mxu0 %v3232
    %3234 = vmatprep.subr.mxu0 0.0
    %v3235 = vand.u32 %v614, 4294901760
    %3236 = vmatpush1.msra.mxu0 %v3235
    %3237 = vmatprep.subr.mxu0 0.0
    %v3238 = vand.u32 %v613, 4294901760
    %3239 = vmatpush1.msra.mxu0 %v3238
    %3240 = vmatprep.subr.mxu0 0.0
    %v3241 = vand.u32 %v612, 4294901760
    %3242 = vmatpush1.msra.mxu0 %v3241
    %3243 = vmatprep.subr.mxu0 0.0
    %v3244 = vand.u32 %v611, 4294901760
    %3245 = vmatpush1.msra.mxu0 %v3244
    %3246 = vmatprep.subr.mxu0 0.0
    %v3247 = vand.u32 %v642, 4294901760
    %3248 = vmatpush2.msra.mxu0 %v3247
    %3249 = vmatprep.subr.mxu0 0.0
    %v3250 = vand.u32 %v641, 4294901760
    %3251 = vmatpush2.msra.mxu0 %v3250
    %3252 = vmatprep.subr.mxu0 0.0
    %v3253 = vand.u32 %v640, 4294901760
    %3254 = vmatpush2.msra.mxu0 %v3253
    %3255 = vmatprep.subr.mxu0 0.0
    %v3256 = vand.u32 %v639, 4294901760
    %3257 = vmatpush2.msra.mxu0 %v3256
    %3258 = vmatprep.subr.mxu0 0.0
    %v3259 = vand.u32 %v638, 4294901760
    %3260 = vmatpush2.msra.mxu0 %v3259
    %3261 = vmatprep.subr.mxu0 0.0
    %v3262 = vand.u32 %v637, 4294901760
    %3263 = vmatpush2.msra.mxu0 %v3262
    %3264 = vmatprep.subr.mxu0 0.0
    %v3265 = vand.u32 %v636, 4294901760
    %3266 = vmatpush2.msra.mxu0 %v3265
    %3267 = vmatprep.subr.mxu0 0.0
    %v3268 = vand.u32 %v635, 4294901760
    %3269 = vmatpush2.msra.mxu0 %v3268
    %3270 = vmatprep.subr.mxu0 0.0
    %v3271 = vand.u32 %v634, 4294901760
    %3272 = vmatpush2.msra.mxu0 %v3271
    %3273 = vmatprep.subr.mxu0 0.0
    %v3274 = vand.u32 %v633, 4294901760
    %3275 = vmatpush2.msra.mxu0 %v3274
    %3276 = vmatprep.subr.mxu0 0.0
    %v3277 = vand.u32 %v632, 4294901760
    %3278 = vmatpush2.msra.mxu0 %v3277
    %3279 = vmatprep.subr.mxu0 0.0
    %v3280 = vand.u32 %v631, 4294901760
    %3281 = vmatpush2.msra.mxu0 %v3280
    %3282 = vmatprep.subr.mxu0 0.0
    %v3283 = vand.u32 %v630, 4294901760
    %3284 = vmatpush2.msra.mxu0 %v3283
    %3285 = vmatprep.subr.mxu0 0.0
    %v3286 = vand.u32 %v629, 4294901760
    %3287 = vmatpush2.msra.mxu0 %v3286
    %3288 = vmatprep.subr.mxu0 0.0
    %v3289 = vand.u32 %v628, 4294901760
    %3290 = vmatpush2.msra.mxu0 %v3289
    %3291 = vmatprep.subr.mxu0 0.0
    %v3292 = vand.u32 %v627, 4294901760
    %3293 = vmatpush2.msra.mxu0 %v3292
    %v3294 = vand.u32 %v758, 4294901760
    %3295 = vmatprep.mubr.f32.mxu0 %v3294
    %v3296 = vand.u32 %v757, 4294901760
    %3297 = vmatmul.mubr.f32.gmra.mxu0 %v3296
    %v3298 = vpop.f32.mrf.mxu0
    %v3299 = vadd.f32 %v3146, %v3298
    %v3300 = vpop.f32.mrf.mxu0
    %v3301 = vand.u32 %v769, 4294901760
    %3302 = vmatprep.mubr.f32.mxu0 %v3301
    %v3303 = vand.u32 %v768, 4294901760
    %3304 = vmatmul.mubr.f32.gmra.mxu0 %v3303
    %v3305 = vpop.f32.mrf.mxu0
    %v3306 = vadd.f32 %v3153, %v3305
    %v3307 = vpop.f32.mrf.mxu0
    %v3308 = vand.u32 %v780, 4294901760
    %3309 = vmatprep.mubr.f32.mxu0 %v3308
    %v3310 = vand.u32 %v779, 4294901760
    %3311 = vmatmul.mubr.f32.gmra.mxu0 %v3310
    %v3312 = vpop.f32.mrf.mxu0
    %v3313 = vadd.f32 %v3160, %v3312
    %v3314 = vpop.f32.mrf.mxu0
    %v3315 = vand.u32 %v791, 4294901760
    %3316 = vmatprep.mubr.f32.mxu0 %v3315
    %v3317 = vand.u32 %v790, 4294901760
    %3318 = vmatmul.mubr.f32.gmra.mxu0 %v3317
    %v3319 = vpop.f32.mrf.mxu0
    %v3320 = vadd.f32 %v3167, %v3319
    %v3321 = vpop.f32.mrf.mxu0
    %v3322 = vand.u32 %v802, 4294901760
    %3323 = vmatprep.mubr.f32.mxu0 %v3322
    %v3324 = vand.u32 %v801, 4294901760
    %3325 = vmatmul.mubr.f32.gmra.mxu0 %v3324
    %v3326 = vpop.f32.mrf.mxu0
    %v3327 = vadd.f32 %v3174, %v3326
    %v3328 = vpop.f32.mrf.mxu0
    %v3329 = vand.u32 %v813, 4294901760
    %3330 = vmatprep.mubr.f32.mxu0 %v3329
    %v3331 = vand.u32 %v812, 4294901760
    %3332 = vmatmul.mubr.f32.gmra.mxu0 %v3331
    %v3333 = vpop.f32.mrf.mxu0
    %v3334 = vadd.f32 %v3181, %v3333
    %v3335 = vpop.f32.mrf.mxu0
    %v3336 = vand.u32 %v824, 4294901760
    %3337 = vmatprep.mubr.f32.mxu0 %v3336
    %v3338 = vand.u32 %v823, 4294901760
    %3339 = vmatmul.mubr.f32.gmra.mxu0 %v3338
    %v3340 = vpop.f32.mrf.mxu0
    %v3341 = vadd.f32 %v3188, %v3340
    %v3342 = vpop.f32.mrf.mxu0
    %v3343 = vand.u32 %v835, 4294901760
    %3344 = vmatprep.mubr.f32.mxu0 %v3343
    %v3345 = vand.u32 %v834, 4294901760
    %3346 = vmatmul.mubr.f32.gmra.mxu0 %v3345
    %v3347 = vpop.f32.mrf.mxu0
    %v3348 = vadd.f32 %v3195, %v3347
    %v3349 = vpop.f32.mrf.mxu0
    %3350 = vdwg.mxu0
    %3351 = vmatprep.subr.mxu0 0.0
    %v3352 = vand.u32 %v658, 4294901760
    %3353 = vmatpush1.msra.mxu0 %v3352
    %3354 = vmatprep.subr.mxu0 0.0
    %v3355 = vand.u32 %v657, 4294901760
    %3356 = vmatpush1.msra.mxu0 %v3355
    %3357 = vmatprep.subr.mxu0 0.0
    %v3358 = vand.u32 %v656, 4294901760
    %3359 = vmatpush1.msra.mxu0 %v3358
    %3360 = vmatprep.subr.mxu0 0.0
    %v3361 = vand.u32 %v655, 4294901760
    %3362 = vmatpush1.msra.mxu0 %v3361
    %3363 = vmatprep.subr.mxu0 0.0
    %v3364 = vand.u32 %v654, 4294901760
    %3365 = vmatpush1.msra.mxu0 %v3364
    %3366 = vmatprep.subr.mxu0 0.0
    %v3367 = vand.u32 %v653, 4294901760
    %3368 = vmatpush1.msra.mxu0 %v3367
    %3369 = vmatprep.subr.mxu0 0.0
    %v3370 = vand.u32 %v652, 4294901760
    %3371 = vmatpush1.msra.mxu0 %v3370
    %3372 = vmatprep.subr.mxu0 0.0
    %v3373 = vand.u32 %v651, 4294901760
    %3374 = vmatpush1.msra.mxu0 %v3373
    %3375 = vmatprep.subr.mxu0 0.0
    %v3376 = vand.u32 %v650, 4294901760
    %3377 = vmatpush1.msra.mxu0 %v3376
    %3378 = vmatprep.subr.mxu0 0.0
    %v3379 = vand.u32 %v649, 4294901760
    %3380 = vmatpush1.msra.mxu0 %v3379
    %3381 = vmatprep.subr.mxu0 0.0
    %v3382 = vand.u32 %v648, 4294901760
    %3383 = vmatpush1.msra.mxu0 %v3382
    %3384 = vmatprep.subr.mxu0 0.0
    %v3385 = vand.u32 %v647, 4294901760
    %3386 = vmatpush1.msra.mxu0 %v3385
    %3387 = vmatprep.subr.mxu0 0.0
    %v3388 = vand.u32 %v646, 4294901760
    %3389 = vmatpush1.msra.mxu0 %v3388
    %3390 = vmatprep.subr.mxu0 0.0
    %v3391 = vand.u32 %v645, 4294901760
    %3392 = vmatpush1.msra.mxu0 %v3391
    %3393 = vmatprep.subr.mxu0 0.0
    %v3394 = vand.u32 %v644, 4294901760
    %3395 = vmatpush1.msra.mxu0 %v3394
    %3396 = vmatprep.subr.mxu0 0.0
    %v3397 = vand.u32 %v643, 4294901760
    %3398 = vmatpush1.msra.mxu0 %v3397
    %3399 = vmatprep.subr.mxu0 0.0
    %v3400 = vand.u32 %v674, 4294901760
    %3401 = vmatpush2.msra.mxu0 %v3400
    %3402 = vmatprep.subr.mxu0 0.0
    %v3403 = vand.u32 %v673, 4294901760
    %3404 = vmatpush2.msra.mxu0 %v3403
    %3405 = vmatprep.subr.mxu0 0.0
    %v3406 = vand.u32 %v672, 4294901760
    %3407 = vmatpush2.msra.mxu0 %v3406
    %3408 = vmatprep.subr.mxu0 0.0
    %v3409 = vand.u32 %v671, 4294901760
    %3410 = vmatpush2.msra.mxu0 %v3409
    %3411 = vmatprep.subr.mxu0 0.0
    %v3412 = vand.u32 %v670, 4294901760
    %3413 = vmatpush2.msra.mxu0 %v3412
    %3414 = vmatprep.subr.mxu0 0.0
    %v3415 = vand.u32 %v669, 4294901760
    %3416 = vmatpush2.msra.mxu0 %v3415
    %3417 = vmatprep.subr.mxu0 0.0
    %v3418 = vand.u32 %v668, 4294901760
    %3419 = vmatpush2.msra.mxu0 %v3418
    %3420 = vmatprep.subr.mxu0 0.0
    %v3421 = vand.u32 %v667, 4294901760
    %3422 = vmatpush2.msra.mxu0 %v3421
    %3423 = vmatprep.subr.mxu0 0.0
    %v3424 = vand.u32 %v666, 4294901760
    %3425 = vmatpush2.msra.mxu0 %v3424
    %3426 = vmatprep.subr.mxu0 0.0
    %v3427 = vand.u32 %v665, 4294901760
    %3428 = vmatpush2.msra.mxu0 %v3427
    %3429 = vmatprep.subr.mxu0 0.0
    %v3430 = vand.u32 %v664, 4294901760
    %3431 = vmatpush2.msra.mxu0 %v3430
    %3432 = vmatprep.subr.mxu0 0.0
    %v3433 = vand.u32 %v663, 4294901760
    %3434 = vmatpush2.msra.mxu0 %v3433
    %3435 = vmatprep.subr.mxu0 0.0
    %v3436 = vand.u32 %v662, 4294901760
    %3437 = vmatpush2.msra.mxu0 %v3436
    %3438 = vmatprep.subr.mxu0 0.0
    %v3439 = vand.u32 %v661, 4294901760
    %3440 = vmatpush2.msra.mxu0 %v3439
    %3441 = vmatprep.subr.mxu0 0.0
    %v3442 = vand.u32 %v660, 4294901760
    %3443 = vmatpush2.msra.mxu0 %v3442
    %3444 = vmatprep.subr.mxu0 0.0
    %v3445 = vand.u32 %v659, 4294901760
    %3446 = vmatpush2.msra.mxu0 %v3445
    %v3447 = vand.u32 %v760, 4294901760
    %v3448 = vsub.f32 %v760, %v3447
    %v3449 = vand.u32 %v3448, 4294901760
    %v3450 = vsub.f32 %v3448, %v3449
    %v3451 = vand.u32 %v3450, 4294901760
    %3452 = vmatprep.mubr.f32.mxu0 %v3451
    %v3453 = vand.u32 %v759, 4294901760
    %v3454 = vsub.f32 %v759, %v3453
    %v3455 = vand.u32 %v3454, 4294901760
    %v3456 = vsub.f32 %v3454, %v3455
    %v3457 = vand.u32 %v3456, 4294901760
    %3458 = vmatmul.mubr.f32.gmra.mxu0 %v3457
    %v3459 = vpop.f32.mrf.mxu0
    %v3460 = vadd.f32 %v3299, %v3459
    %v3461 = vpop.f32.mrf.mxu0
    %v3462 = vand.u32 %v771, 4294901760
    %v3463 = vsub.f32 %v771, %v3462
    %v3464 = vand.u32 %v3463, 4294901760
    %v3465 = vsub.f32 %v3463, %v3464
    %v3466 = vand.u32 %v3465, 4294901760
    %3467 = vmatprep.mubr.f32.mxu0 %v3466
    %v3468 = vand.u32 %v770, 4294901760
    %v3469 = vsub.f32 %v770, %v3468
    %v3470 = vand.u32 %v3469, 4294901760
    %v3471 = vsub.f32 %v3469, %v3470
    %v3472 = vand.u32 %v3471, 4294901760
    %3473 = vmatmul.mubr.f32.gmra.mxu0 %v3472
    %v3474 = vpop.f32.mrf.mxu0
    %v3475 = vadd.f32 %v3306, %v3474
    %v3476 = vpop.f32.mrf.mxu0
    %v3477 = vand.u32 %v782, 4294901760
    %v3478 = vsub.f32 %v782, %v3477
    %v3479 = vand.u32 %v3478, 4294901760
    %v3480 = vsub.f32 %v3478, %v3479
    %v3481 = vand.u32 %v3480, 4294901760
    %3482 = vmatprep.mubr.f32.mxu0 %v3481
    %v3483 = vand.u32 %v781, 4294901760
    %v3484 = vsub.f32 %v781, %v3483
    %v3485 = vand.u32 %v3484, 4294901760
    %v3486 = vsub.f32 %v3484, %v3485
    %v3487 = vand.u32 %v3486, 4294901760
    %3488 = vmatmul.mubr.f32.gmra.mxu0 %v3487
    %v3489 = vpop.f32.mrf.mxu0
    %v3490 = vadd.f32 %v3313, %v3489
    %v3491 = vpop.f32.mrf.mxu0
    %v3492 = vand.u32 %v793, 4294901760
    %v3493 = vsub.f32 %v793, %v3492
    %v3494 = vand.u32 %v3493, 4294901760
    %v3495 = vsub.f32 %v3493, %v3494
    %v3496 = vand.u32 %v3495, 4294901760
    %3497 = vmatprep.mubr.f32.mxu0 %v3496
    %v3498 = vand.u32 %v792, 4294901760
    %v3499 = vsub.f32 %v792, %v3498
    %v3500 = vand.u32 %v3499, 4294901760
    %v3501 = vsub.f32 %v3499, %v3500
    %v3502 = vand.u32 %v3501, 4294901760
    %3503 = vmatmul.mubr.f32.gmra.mxu0 %v3502
    %v3504 = vpop.f32.mrf.mxu0
    %v3505 = vadd.f32 %v3320, %v3504
    %v3506 = vpop.f32.mrf.mxu0
    %v3507 = vand.u32 %v804, 4294901760
    %v3508 = vsub.f32 %v804, %v3507
    %v3509 = vand.u32 %v3508, 4294901760
    %v3510 = vsub.f32 %v3508, %v3509
    %v3511 = vand.u32 %v3510, 4294901760
    %3512 = vmatprep.mubr.f32.mxu0 %v3511
    %v3513 = vand.u32 %v803, 4294901760
    %v3514 = vsub.f32 %v803, %v3513
    %v3515 = vand.u32 %v3514, 4294901760
    %v3516 = vsub.f32 %v3514, %v3515
    %v3517 = vand.u32 %v3516, 4294901760
    %3518 = vmatmul.mubr.f32.gmra.mxu0 %v3517
    %v3519 = vpop.f32.mrf.mxu0
    %v3520 = vadd.f32 %v3327, %v3519
    %v3521 = vpop.f32.mrf.mxu0
    %v3522 = vand.u32 %v815, 4294901760
    %v3523 = vsub.f32 %v815, %v3522
    %v3524 = vand.u32 %v3523, 4294901760
    %v3525 = vsub.f32 %v3523, %v3524
    %v3526 = vand.u32 %v3525, 4294901760
    %3527 = vmatprep.mubr.f32.mxu0 %v3526
    %v3528 = vand.u32 %v814, 4294901760
    %v3529 = vsub.f32 %v814, %v3528
    %v3530 = vand.u32 %v3529, 4294901760
    %v3531 = vsub.f32 %v3529, %v3530
    %v3532 = vand.u32 %v3531, 4294901760
    %3533 = vmatmul.mubr.f32.gmra.mxu0 %v3532
    %v3534 = vpop.f32.mrf.mxu0
    %v3535 = vadd.f32 %v3334, %v3534
    %v3536 = vpop.f32.mrf.mxu0
    %v3537 = vand.u32 %v826, 4294901760
    %v3538 = vsub.f32 %v826, %v3537
    %v3539 = vand.u32 %v3538, 4294901760
    %v3540 = vsub.f32 %v3538, %v3539
    %v3541 = vand.u32 %v3540, 4294901760
    %3542 = vmatprep.mubr.f32.mxu0 %v3541
    %v3543 = vand.u32 %v825, 4294901760
    %v3544 = vsub.f32 %v825, %v3543
    %v3545 = vand.u32 %v3544, 4294901760
    %v3546 = vsub.f32 %v3544, %v3545
    %v3547 = vand.u32 %v3546, 4294901760
    %3548 = vmatmul.mubr.f32.gmra.mxu0 %v3547
    %v3549 = vpop.f32.mrf.mxu0
    %v3550 = vadd.f32 %v3341, %v3549
    %v3551 = vpop.f32.mrf.mxu0
    %v3552 = vand.u32 %v837, 4294901760
    %v3553 = vsub.f32 %v837, %v3552
    %v3554 = vand.u32 %v3553, 4294901760
    %v3555 = vsub.f32 %v3553, %v3554
    %v3556 = vand.u32 %v3555, 4294901760
    %3557 = vmatprep.mubr.f32.mxu0 %v3556
    %v3558 = vand.u32 %v836, 4294901760
    %v3559 = vsub.f32 %v836, %v3558
    %v3560 = vand.u32 %v3559, 4294901760
    %v3561 = vsub.f32 %v3559, %v3560
    %v3562 = vand.u32 %v3561, 4294901760
    %3563 = vmatmul.mubr.f32.gmra.mxu0 %v3562
    %v3564 = vpop.f32.mrf.mxu0
    %v3565 = vadd.f32 %v3348, %v3564
    %v3566 = vpop.f32.mrf.mxu0
    %3567 = vdwg.mxu0
    %3568 = vmatprep.subr.mxu0 0.0
    %v3569 = vand.u32 %v658, 4294901760
    %v3570 = vsub.f32 %v658, %v3569
    %v3571 = vand.u32 %v3570, 4294901760
    %v3572 = vsub.f32 %v3570, %v3571
    %v3573 = vand.u32 %v3572, 4294901760
    %3574 = vmatpush1.msra.mxu0 %v3573
    %3575 = vmatprep.subr.mxu0 0.0
    %v3576 = vand.u32 %v657, 4294901760
    %v3577 = vsub.f32 %v657, %v3576
    %v3578 = vand.u32 %v3577, 4294901760
    %v3579 = vsub.f32 %v3577, %v3578
    %v3580 = vand.u32 %v3579, 4294901760
    %3581 = vmatpush1.msra.mxu0 %v3580
    %3582 = vmatprep.subr.mxu0 0.0
    %v3583 = vand.u32 %v656, 4294901760
    %v3584 = vsub.f32 %v656, %v3583
    %v3585 = vand.u32 %v3584, 4294901760
    %v3586 = vsub.f32 %v3584, %v3585
    %v3587 = vand.u32 %v3586, 4294901760
    %3588 = vmatpush1.msra.mxu0 %v3587
    %3589 = vmatprep.subr.mxu0 0.0
    %v3590 = vand.u32 %v655, 4294901760
    %v3591 = vsub.f32 %v655, %v3590
    %v3592 = vand.u32 %v3591, 4294901760
    %v3593 = vsub.f32 %v3591, %v3592
    %v3594 = vand.u32 %v3593, 4294901760
    %3595 = vmatpush1.msra.mxu0 %v3594
    %3596 = vmatprep.subr.mxu0 0.0
    %v3597 = vand.u32 %v654, 4294901760
    %v3598 = vsub.f32 %v654, %v3597
    %v3599 = vand.u32 %v3598, 4294901760
    %v3600 = vsub.f32 %v3598, %v3599
    %v3601 = vand.u32 %v3600, 4294901760
    %3602 = vmatpush1.msra.mxu0 %v3601
    %3603 = vmatprep.subr.mxu0 0.0
    %v3604 = vand.u32 %v653, 4294901760
    %v3605 = vsub.f32 %v653, %v3604
    %v3606 = vand.u32 %v3605, 4294901760
    %v3607 = vsub.f32 %v3605, %v3606
    %v3608 = vand.u32 %v3607, 4294901760
    %3609 = vmatpush1.msra.mxu0 %v3608
    %3610 = vmatprep.subr.mxu0 0.0
    %v3611 = vand.u32 %v652, 4294901760
    %v3612 = vsub.f32 %v652, %v3611
    %v3613 = vand.u32 %v3612, 4294901760
    %v3614 = vsub.f32 %v3612, %v3613
    %v3615 = vand.u32 %v3614, 4294901760
    %3616 = vmatpush1.msra.mxu0 %v3615
    %3617 = vmatprep.subr.mxu0 0.0
    %v3618 = vand.u32 %v651, 4294901760
    %v3619 = vsub.f32 %v651, %v3618
    %v3620 = vand.u32 %v3619, 4294901760
    %v3621 = vsub.f32 %v3619, %v3620
    %v3622 = vand.u32 %v3621, 4294901760
    %3623 = vmatpush1.msra.mxu0 %v3622
    %3624 = vmatprep.subr.mxu0 0.0
    %v3625 = vand.u32 %v650, 4294901760
    %v3626 = vsub.f32 %v650, %v3625
    %v3627 = vand.u32 %v3626, 4294901760
    %v3628 = vsub.f32 %v3626, %v3627
    %v3629 = vand.u32 %v3628, 4294901760
    %3630 = vmatpush1.msra.mxu0 %v3629
    %3631 = vmatprep.subr.mxu0 0.0
    %v3632 = vand.u32 %v649, 4294901760
    %v3633 = vsub.f32 %v649, %v3632
    %v3634 = vand.u32 %v3633, 4294901760
    %v3635 = vsub.f32 %v3633, %v3634
    %v3636 = vand.u32 %v3635, 4294901760
    %3637 = vmatpush1.msra.mxu0 %v3636
    %3638 = vmatprep.subr.mxu0 0.0
    %v3639 = vand.u32 %v648, 4294901760
    %v3640 = vsub.f32 %v648, %v3639
    %v3641 = vand.u32 %v3640, 4294901760
    %v3642 = vsub.f32 %v3640, %v3641
    %v3643 = vand.u32 %v3642, 4294901760
    %3644 = vmatpush1.msra.mxu0 %v3643
    %3645 = vmatprep.subr.mxu0 0.0
    %v3646 = vand.u32 %v647, 4294901760
    %v3647 = vsub.f32 %v647, %v3646
    %v3648 = vand.u32 %v3647, 4294901760
    %v3649 = vsub.f32 %v3647, %v3648
    %v3650 = vand.u32 %v3649, 4294901760
    %3651 = vmatpush1.msra.mxu0 %v3650
    %3652 = vmatprep.subr.mxu0 0.0
    %v3653 = vand.u32 %v646, 4294901760
    %v3654 = vsub.f32 %v646, %v3653
    %v3655 = vand.u32 %v3654, 4294901760
    %v3656 = vsub.f32 %v3654, %v3655
    %v3657 = vand.u32 %v3656, 4294901760
    %3658 = vmatpush1.msra.mxu0 %v3657
    %3659 = vmatprep.subr.mxu0 0.0
    %v3660 = vand.u32 %v645, 4294901760
    %v3661 = vsub.f32 %v645, %v3660
    %v3662 = vand.u32 %v3661, 4294901760
    %v3663 = vsub.f32 %v3661, %v3662
    %v3664 = vand.u32 %v3663, 4294901760
    %3665 = vmatpush1.msra.mxu0 %v3664
    %3666 = vmatprep.subr.mxu0 0.0
    %v3667 = vand.u32 %v644, 4294901760
    %v3668 = vsub.f32 %v644, %v3667
    %v3669 = vand.u32 %v3668, 4294901760
    %v3670 = vsub.f32 %v3668, %v3669
    %v3671 = vand.u32 %v3670, 4294901760
    %3672 = vmatpush1.msra.mxu0 %v3671
    %3673 = vmatprep.subr.mxu0 0.0
    %v3674 = vand.u32 %v643, 4294901760
    %v3675 = vsub.f32 %v643, %v3674
    %v3676 = vand.u32 %v3675, 4294901760
    %v3677 = vsub.f32 %v3675, %v3676
    %v3678 = vand.u32 %v3677, 4294901760
    %3679 = vmatpush1.msra.mxu0 %v3678
    %3680 = vmatprep.subr.mxu0 0.0
    %v3681 = vand.u32 %v674, 4294901760
    %v3682 = vsub.f32 %v674, %v3681
    %v3683 = vand.u32 %v3682, 4294901760
    %v3684 = vsub.f32 %v3682, %v3683
    %v3685 = vand.u32 %v3684, 4294901760
    %3686 = vmatpush2.msra.mxu0 %v3685
    %3687 = vmatprep.subr.mxu0 0.0
    %v3688 = vand.u32 %v673, 4294901760
    %v3689 = vsub.f32 %v673, %v3688
    %v3690 = vand.u32 %v3689, 4294901760
    %v3691 = vsub.f32 %v3689, %v3690
    %v3692 = vand.u32 %v3691, 4294901760
    %3693 = vmatpush2.msra.mxu0 %v3692
    %3694 = vmatprep.subr.mxu0 0.0
    %v3695 = vand.u32 %v672, 4294901760
    %v3696 = vsub.f32 %v672, %v3695
    %v3697 = vand.u32 %v3696, 4294901760
    %v3698 = vsub.f32 %v3696, %v3697
    %v3699 = vand.u32 %v3698, 4294901760
    %3700 = vmatpush2.msra.mxu0 %v3699
    %3701 = vmatprep.subr.mxu0 0.0
    %v3702 = vand.u32 %v671, 4294901760
    %v3703 = vsub.f32 %v671, %v3702
    %v3704 = vand.u32 %v3703, 4294901760
    %v3705 = vsub.f32 %v3703, %v3704
    %v3706 = vand.u32 %v3705, 4294901760
    %3707 = vmatpush2.msra.mxu0 %v3706
    %3708 = vmatprep.subr.mxu0 0.0
    %v3709 = vand.u32 %v670, 4294901760
    %v3710 = vsub.f32 %v670, %v3709
    %v3711 = vand.u32 %v3710, 4294901760
    %v3712 = vsub.f32 %v3710, %v3711
    %v3713 = vand.u32 %v3712, 4294901760
    %3714 = vmatpush2.msra.mxu0 %v3713
    %3715 = vmatprep.subr.mxu0 0.0
    %v3716 = vand.u32 %v669, 4294901760
    %v3717 = vsub.f32 %v669, %v3716
    %v3718 = vand.u32 %v3717, 4294901760
    %v3719 = vsub.f32 %v3717, %v3718
    %v3720 = vand.u32 %v3719, 4294901760
    %3721 = vmatpush2.msra.mxu0 %v3720
    %3722 = vmatprep.subr.mxu0 0.0
    %v3723 = vand.u32 %v668, 4294901760
    %v3724 = vsub.f32 %v668, %v3723
    %v3725 = vand.u32 %v3724, 4294901760
    %v3726 = vsub.f32 %v3724, %v3725
    %v3727 = vand.u32 %v3726, 4294901760
    %3728 = vmatpush2.msra.mxu0 %v3727
    %3729 = vmatprep.subr.mxu0 0.0
    %v3730 = vand.u32 %v667, 4294901760
    %v3731 = vsub.f32 %v667, %v3730
    %v3732 = vand.u32 %v3731, 4294901760
    %v3733 = vsub.f32 %v3731, %v3732
    %v3734 = vand.u32 %v3733, 4294901760
    %3735 = vmatpush2.msra.mxu0 %v3734
    %3736 = vmatprep.subr.mxu0 0.0
    %v3737 = vand.u32 %v666, 4294901760
    %v3738 = vsub.f32 %v666, %v3737
    %v3739 = vand.u32 %v3738, 4294901760
    %v3740 = vsub.f32 %v3738, %v3739
    %v3741 = vand.u32 %v3740, 4294901760
    %3742 = vmatpush2.msra.mxu0 %v3741
    %3743 = vmatprep.subr.mxu0 0.0
    %v3744 = vand.u32 %v665, 4294901760
    %v3745 = vsub.f32 %v665, %v3744
    %v3746 = vand.u32 %v3745, 4294901760
    %v3747 = vsub.f32 %v3745, %v3746
    %v3748 = vand.u32 %v3747, 4294901760
    %3749 = vmatpush2.msra.mxu0 %v3748
    %3750 = vmatprep.subr.mxu0 0.0
    %v3751 = vand.u32 %v664, 4294901760
    %v3752 = vsub.f32 %v664, %v3751
    %v3753 = vand.u32 %v3752, 4294901760
    %v3754 = vsub.f32 %v3752, %v3753
    %v3755 = vand.u32 %v3754, 4294901760
    %3756 = vmatpush2.msra.mxu0 %v3755
    %3757 = vmatprep.subr.mxu0 0.0
    %v3758 = vand.u32 %v663, 4294901760
    %v3759 = vsub.f32 %v663, %v3758
    %v3760 = vand.u32 %v3759, 4294901760
    %v3761 = vsub.f32 %v3759, %v3760
    %v3762 = vand.u32 %v3761, 4294901760
    %3763 = vmatpush2.msra.mxu0 %v3762
    %3764 = vmatprep.subr.mxu0 0.0
    %v3765 = vand.u32 %v662, 4294901760
    %v3766 = vsub.f32 %v662, %v3765
    %v3767 = vand.u32 %v3766, 4294901760
    %v3768 = vsub.f32 %v3766, %v3767
    %v3769 = vand.u32 %v3768, 4294901760
    %3770 = vmatpush2.msra.mxu0 %v3769
    %3771 = vmatprep.subr.mxu0 0.0
    %v3772 = vand.u32 %v661, 4294901760
    %v3773 = vsub.f32 %v661, %v3772
    %v3774 = vand.u32 %v3773, 4294901760
    %v3775 = vsub.f32 %v3773, %v3774
    %v3776 = vand.u32 %v3775, 4294901760
    %3777 = vmatpush2.msra.mxu0 %v3776
    %3778 = vmatprep.subr.mxu0 0.0
    %v3779 = vand.u32 %v660, 4294901760
    %v3780 = vsub.f32 %v660, %v3779
    %v3781 = vand.u32 %v3780, 4294901760
    %v3782 = vsub.f32 %v3780, %v3781
    %v3783 = vand.u32 %v3782, 4294901760
    %3784 = vmatpush2.msra.mxu0 %v3783
    %3785 = vmatprep.subr.mxu0 0.0
    %v3786 = vand.u32 %v659, 4294901760
    %v3787 = vsub.f32 %v659, %v3786
    %v3788 = vand.u32 %v3787, 4294901760
    %v3789 = vsub.f32 %v3787, %v3788
    %v3790 = vand.u32 %v3789, 4294901760
    %3791 = vmatpush2.msra.mxu0 %v3790
    %v3792 = vand.u32 %v760, 4294901760
    %3793 = vmatprep.mubr.f32.mxu0 %v3792
    %v3794 = vand.u32 %v759, 4294901760
    %3795 = vmatmul.mubr.f32.gmra.mxu0 %v3794
    %v3796 = vpop.f32.mrf.mxu0
    %v3797 = vadd.f32 %v3460, %v3796
    %v3798 = vpop.f32.mrf.mxu0
    %v3799 = vand.u32 %v771, 4294901760
    %3800 = vmatprep.mubr.f32.mxu0 %v3799
    %v3801 = vand.u32 %v770, 4294901760
    %3802 = vmatmul.mubr.f32.gmra.mxu0 %v3801
    %v3803 = vpop.f32.mrf.mxu0
    %v3804 = vadd.f32 %v3475, %v3803
    %v3805 = vpop.f32.mrf.mxu0
    %v3806 = vand.u32 %v782, 4294901760
    %3807 = vmatprep.mubr.f32.mxu0 %v3806
    %v3808 = vand.u32 %v781, 4294901760
    %3809 = vmatmul.mubr.f32.gmra.mxu0 %v3808
    %v3810 = vpop.f32.mrf.mxu0
    %v3811 = vadd.f32 %v3490, %v3810
    %v3812 = vpop.f32.mrf.mxu0
    %v3813 = vand.u32 %v793, 4294901760
    %3814 = vmatprep.mubr.f32.mxu0 %v3813
    %v3815 = vand.u32 %v792, 4294901760
    %3816 = vmatmul.mubr.f32.gmra.mxu0 %v3815
    %v3817 = vpop.f32.mrf.mxu0
    %v3818 = vadd.f32 %v3505, %v3817
    %v3819 = vpop.f32.mrf.mxu0
    %v3820 = vand.u32 %v804, 4294901760
    %3821 = vmatprep.mubr.f32.mxu0 %v3820
    %v3822 = vand.u32 %v803, 4294901760
    %3823 = vmatmul.mubr.f32.gmra.mxu0 %v3822
    %v3824 = vpop.f32.mrf.mxu0
    %v3825 = vadd.f32 %v3520, %v3824
    %v3826 = vpop.f32.mrf.mxu0
    %v3827 = vand.u32 %v815, 4294901760
    %3828 = vmatprep.mubr.f32.mxu0 %v3827
    %v3829 = vand.u32 %v814, 4294901760
    %3830 = vmatmul.mubr.f32.gmra.mxu0 %v3829
    %v3831 = vpop.f32.mrf.mxu0
    %v3832 = vadd.f32 %v3535, %v3831
    %v3833 = vpop.f32.mrf.mxu0
    %v3834 = vand.u32 %v826, 4294901760
    %3835 = vmatprep.mubr.f32.mxu0 %v3834
    %v3836 = vand.u32 %v825, 4294901760
    %3837 = vmatmul.mubr.f32.gmra.mxu0 %v3836
    %v3838 = vpop.f32.mrf.mxu0
    %v3839 = vadd.f32 %v3550, %v3838
    %v3840 = vpop.f32.mrf.mxu0
    %v3841 = vand.u32 %v837, 4294901760
    %3842 = vmatprep.mubr.f32.mxu0 %v3841
    %v3843 = vand.u32 %v836, 4294901760
    %3844 = vmatmul.mubr.f32.gmra.mxu0 %v3843
    %v3845 = vpop.f32.mrf.mxu0
    %v3846 = vadd.f32 %v3565, %v3845
    %v3847 = vpop.f32.mrf.mxu0
    %3848 = vdwg.mxu0
    %3849 = vmatprep.subr.mxu0 0.0
    %v3850 = vand.u32 %v658, 4294901760
    %v3851 = vsub.f32 %v658, %v3850
    %3852 = vmatpush1.msra.mxu0 %v3851
    %3853 = vmatprep.subr.mxu0 0.0
    %v3854 = vand.u32 %v657, 4294901760
    %v3855 = vsub.f32 %v657, %v3854
    %3856 = vmatpush1.msra.mxu0 %v3855
    %3857 = vmatprep.subr.mxu0 0.0
    %v3858 = vand.u32 %v656, 4294901760
    %v3859 = vsub.f32 %v656, %v3858
    %3860 = vmatpush1.msra.mxu0 %v3859
    %3861 = vmatprep.subr.mxu0 0.0
    %v3862 = vand.u32 %v655, 4294901760
    %v3863 = vsub.f32 %v655, %v3862
    %3864 = vmatpush1.msra.mxu0 %v3863
    %3865 = vmatprep.subr.mxu0 0.0
    %v3866 = vand.u32 %v654, 4294901760
    %v3867 = vsub.f32 %v654, %v3866
    %3868 = vmatpush1.msra.mxu0 %v3867
    %3869 = vmatprep.subr.mxu0 0.0
    %v3870 = vand.u32 %v653, 4294901760
    %v3871 = vsub.f32 %v653, %v3870
    %3872 = vmatpush1.msra.mxu0 %v3871
    %3873 = vmatprep.subr.mxu0 0.0
    %v3874 = vand.u32 %v652, 4294901760
    %v3875 = vsub.f32 %v652, %v3874
    %3876 = vmatpush1.msra.mxu0 %v3875
    %3877 = vmatprep.subr.mxu0 0.0
    %v3878 = vand.u32 %v651, 4294901760
    %v3879 = vsub.f32 %v651, %v3878
    %3880 = vmatpush1.msra.mxu0 %v3879
    %3881 = vmatprep.subr.mxu0 0.0
    %v3882 = vand.u32 %v650, 4294901760
    %v3883 = vsub.f32 %v650, %v3882
    %3884 = vmatpush1.msra.mxu0 %v3883
    %3885 = vmatprep.subr.mxu0 0.0
    %v3886 = vand.u32 %v649, 4294901760
    %v3887 = vsub.f32 %v649, %v3886
    %3888 = vmatpush1.msra.mxu0 %v3887
    %3889 = vmatprep.subr.mxu0 0.0
    %v3890 = vand.u32 %v648, 4294901760
    %v3891 = vsub.f32 %v648, %v3890
    %3892 = vmatpush1.msra.mxu0 %v3891
    %3893 = vmatprep.subr.mxu0 0.0
    %v3894 = vand.u32 %v647, 4294901760
    %v3895 = vsub.f32 %v647, %v3894
    %3896 = vmatpush1.msra.mxu0 %v3895
    %3897 = vmatprep.subr.mxu0 0.0
    %v3898 = vand.u32 %v646, 4294901760
    %v3899 = vsub.f32 %v646, %v3898
    %3900 = vmatpush1.msra.mxu0 %v3899
    %3901 = vmatprep.subr.mxu0 0.0
    %v3902 = vand.u32 %v645, 4294901760
    %v3903 = vsub.f32 %v645, %v3902
    %3904 = vmatpush1.msra.mxu0 %v3903
    %3905 = vmatprep.subr.mxu0 0.0
    %v3906 = vand.u32 %v644, 4294901760
    %v3907 = vsub.f32 %v644, %v3906
    %3908 = vmatpush1.msra.mxu0 %v3907
    %3909 = vmatprep.subr.mxu0 0.0
    %v3910 = vand.u32 %v643, 4294901760
    %v3911 = vsub.f32 %v643, %v3910
    %3912 = vmatpush1.msra.mxu0 %v3911
    %3913 = vmatprep.subr.mxu0 0.0
    %v3914 = vand.u32 %v674, 4294901760
    %v3915 = vsub.f32 %v674, %v3914
    %3916 = vmatpush2.msra.mxu0 %v3915
    %3917 = vmatprep.subr.mxu0 0.0
    %v3918 = vand.u32 %v673, 4294901760
    %v3919 = vsub.f32 %v673, %v3918
    %3920 = vmatpush2.msra.mxu0 %v3919
    %3921 = vmatprep.subr.mxu0 0.0
    %v3922 = vand.u32 %v672, 4294901760
    %v3923 = vsub.f32 %v672, %v3922
    %3924 = vmatpush2.msra.mxu0 %v3923
    %3925 = vmatprep.subr.mxu0 0.0
    %v3926 = vand.u32 %v671, 4294901760
    %v3927 = vsub.f32 %v671, %v3926
    %3928 = vmatpush2.msra.mxu0 %v3927
    %3929 = vmatprep.subr.mxu0 0.0
    %v3930 = vand.u32 %v670, 4294901760
    %v3931 = vsub.f32 %v670, %v3930
    %3932 = vmatpush2.msra.mxu0 %v3931
    %3933 = vmatprep.subr.mxu0 0.0
    %v3934 = vand.u32 %v669, 4294901760
    %v3935 = vsub.f32 %v669, %v3934
    %3936 = vmatpush2.msra.mxu0 %v3935
    %3937 = vmatprep.subr.mxu0 0.0
    %v3938 = vand.u32 %v668, 4294901760
    %v3939 = vsub.f32 %v668, %v3938
    %3940 = vmatpush2.msra.mxu0 %v3939
    %3941 = vmatprep.subr.mxu0 0.0
    %v3942 = vand.u32 %v667, 4294901760
    %v3943 = vsub.f32 %v667, %v3942
    %3944 = vmatpush2.msra.mxu0 %v3943
    %3945 = vmatprep.subr.mxu0 0.0
    %v3946 = vand.u32 %v666, 4294901760
    %v3947 = vsub.f32 %v666, %v3946
    %3948 = vmatpush2.msra.mxu0 %v3947
    %3949 = vmatprep.subr.mxu0 0.0
    %v3950 = vand.u32 %v665, 4294901760
    %v3951 = vsub.f32 %v665, %v3950
    %3952 = vmatpush2.msra.mxu0 %v3951
    %3953 = vmatprep.subr.mxu0 0.0
    %v3954 = vand.u32 %v664, 4294901760
    %v3955 = vsub.f32 %v664, %v3954
    %3956 = vmatpush2.msra.mxu0 %v3955
    %3957 = vmatprep.subr.mxu0 0.0
    %v3958 = vand.u32 %v663, 4294901760
    %v3959 = vsub.f32 %v663, %v3958
    %3960 = vmatpush2.msra.mxu0 %v3959
    %3961 = vmatprep.subr.mxu0 0.0
    %v3962 = vand.u32 %v662, 4294901760
    %v3963 = vsub.f32 %v662, %v3962
    %3964 = vmatpush2.msra.mxu0 %v3963
    %3965 = vmatprep.subr.mxu0 0.0
    %v3966 = vand.u32 %v661, 4294901760
    %v3967 = vsub.f32 %v661, %v3966
    %3968 = vmatpush2.msra.mxu0 %v3967
    %3969 = vmatprep.subr.mxu0 0.0
    %v3970 = vand.u32 %v660, 4294901760
    %v3971 = vsub.f32 %v660, %v3970
    %3972 = vmatpush2.msra.mxu0 %v3971
    %3973 = vmatprep.subr.mxu0 0.0
    %v3974 = vand.u32 %v659, 4294901760
    %v3975 = vsub.f32 %v659, %v3974
    %3976 = vmatpush2.msra.mxu0 %v3975
    %v3977 = vand.u32 %v760, 4294901760
    %v3978 = vsub.f32 %v760, %v3977
    %3979 = vmatprep.mubr.f32.mxu0 %v3978
    %v3980 = vand.u32 %v759, 4294901760
    %v3981 = vsub.f32 %v759, %v3980
    %3982 = vmatmul.mubr.f32.gmra.mxu0 %v3981
    %v3983 = vpop.f32.mrf.mxu0
    %v3984 = vadd.f32 %v3797, %v3983
    %v3985 = vpop.f32.mrf.mxu0
    %v3986 = vand.u32 %v771, 4294901760
    %v3987 = vsub.f32 %v771, %v3986
    %3988 = vmatprep.mubr.f32.mxu0 %v3987
    %v3989 = vand.u32 %v770, 4294901760
    %v3990 = vsub.f32 %v770, %v3989
    %3991 = vmatmul.mubr.f32.gmra.mxu0 %v3990
    %v3992 = vpop.f32.mrf.mxu0
    %v3993 = vadd.f32 %v3804, %v3992
    %v3994 = vpop.f32.mrf.mxu0
    %v3995 = vand.u32 %v782, 4294901760
    %v3996 = vsub.f32 %v782, %v3995
    %3997 = vmatprep.mubr.f32.mxu0 %v3996
    %v3998 = vand.u32 %v781, 4294901760
    %v3999 = vsub.f32 %v781, %v3998
    %4000 = vmatmul.mubr.f32.gmra.mxu0 %v3999
    %v4001 = vpop.f32.mrf.mxu0
    %v4002 = vadd.f32 %v3811, %v4001
    %v4003 = vpop.f32.mrf.mxu0
    %v4004 = vand.u32 %v793, 4294901760
    %v4005 = vsub.f32 %v793, %v4004
    %4006 = vmatprep.mubr.f32.mxu0 %v4005
    %v4007 = vand.u32 %v792, 4294901760
    %v4008 = vsub.f32 %v792, %v4007
    %4009 = vmatmul.mubr.f32.gmra.mxu0 %v4008
    %v4010 = vpop.f32.mrf.mxu0
    %v4011 = vadd.f32 %v3818, %v4010
    %v4012 = vpop.f32.mrf.mxu0
    %v4013 = vand.u32 %v804, 4294901760
    %v4014 = vsub.f32 %v804, %v4013
    %4015 = vmatprep.mubr.f32.mxu0 %v4014
    %v4016 = vand.u32 %v803, 4294901760
    %v4017 = vsub.f32 %v803, %v4016
    %4018 = vmatmul.mubr.f32.gmra.mxu0 %v4017
    %v4019 = vpop.f32.mrf.mxu0
    %v4020 = vadd.f32 %v3825, %v4019
    %v4021 = vpop.f32.mrf.mxu0
    %v4022 = vand.u32 %v815, 4294901760
    %v4023 = vsub.f32 %v815, %v4022
    %4024 = vmatprep.mubr.f32.mxu0 %v4023
    %v4025 = vand.u32 %v814, 4294901760
    %v4026 = vsub.f32 %v814, %v4025
    %4027 = vmatmul.mubr.f32.gmra.mxu0 %v4026
    %v4028 = vpop.f32.mrf.mxu0
    %v4029 = vadd.f32 %v3832, %v4028
    %v4030 = vpop.f32.mrf.mxu0
    %v4031 = vand.u32 %v826, 4294901760
    %v4032 = vsub.f32 %v826, %v4031
    %4033 = vmatprep.mubr.f32.mxu0 %v4032
    %v4034 = vand.u32 %v825, 4294901760
    %v4035 = vsub.f32 %v825, %v4034
    %4036 = vmatmul.mubr.f32.gmra.mxu0 %v4035
    %v4037 = vpop.f32.mrf.mxu0
    %v4038 = vadd.f32 %v3839, %v4037
    %v4039 = vpop.f32.mrf.mxu0
    %v4040 = vand.u32 %v837, 4294901760
    %v4041 = vsub.f32 %v837, %v4040
    %4042 = vmatprep.mubr.f32.mxu0 %v4041
    %v4043 = vand.u32 %v836, 4294901760
    %v4044 = vsub.f32 %v836, %v4043
    %4045 = vmatmul.mubr.f32.gmra.mxu0 %v4044
    %v4046 = vpop.f32.mrf.mxu0
    %v4047 = vadd.f32 %v3846, %v4046
    %v4048 = vpop.f32.mrf.mxu0
    %4049 = vdwg.mxu0
    %4050 = vmatprep.subr.mxu0 0.0
    %v4051 = vand.u32 %v658, 4294901760
    %4052 = vmatpush1.msra.mxu0 %v4051
    %4053 = vmatprep.subr.mxu0 0.0
    %v4054 = vand.u32 %v657, 4294901760
    %4055 = vmatpush1.msra.mxu0 %v4054
    %4056 = vmatprep.subr.mxu0 0.0
    %v4057 = vand.u32 %v656, 4294901760
    %4058 = vmatpush1.msra.mxu0 %v4057
    %4059 = vmatprep.subr.mxu0 0.0
    %v4060 = vand.u32 %v655, 4294901760
    %4061 = vmatpush1.msra.mxu0 %v4060
    %4062 = vmatprep.subr.mxu0 0.0
    %v4063 = vand.u32 %v654, 4294901760
    %4064 = vmatpush1.msra.mxu0 %v4063
    %4065 = vmatprep.subr.mxu0 0.0
    %v4066 = vand.u32 %v653, 4294901760
    %4067 = vmatpush1.msra.mxu0 %v4066
    %4068 = vmatprep.subr.mxu0 0.0
    %v4069 = vand.u32 %v652, 4294901760
    %4070 = vmatpush1.msra.mxu0 %v4069
    %4071 = vmatprep.subr.mxu0 0.0
    %v4072 = vand.u32 %v651, 4294901760
    %4073 = vmatpush1.msra.mxu0 %v4072
    %4074 = vmatprep.subr.mxu0 0.0
    %v4075 = vand.u32 %v650, 4294901760
    %4076 = vmatpush1.msra.mxu0 %v4075
    %4077 = vmatprep.subr.mxu0 0.0
    %v4078 = vand.u32 %v649, 4294901760
    %4079 = vmatpush1.msra.mxu0 %v4078
    %4080 = vmatprep.subr.mxu0 0.0
    %v4081 = vand.u32 %v648, 4294901760
    %4082 = vmatpush1.msra.mxu0 %v4081
    %4083 = vmatprep.subr.mxu0 0.0
    %v4084 = vand.u32 %v647, 4294901760
    %4085 = vmatpush1.msra.mxu0 %v4084
    %4086 = vmatprep.subr.mxu0 0.0
    %v4087 = vand.u32 %v646, 4294901760
    %4088 = vmatpush1.msra.mxu0 %v4087
    %4089 = vmatprep.subr.mxu0 0.0
    %v4090 = vand.u32 %v645, 4294901760
    %4091 = vmatpush1.msra.mxu0 %v4090
    %4092 = vmatprep.subr.mxu0 0.0
    %v4093 = vand.u32 %v644, 4294901760
    %4094 = vmatpush1.msra.mxu0 %v4093
    %4095 = vmatprep.subr.mxu0 0.0
    %v4096 = vand.u32 %v643, 4294901760
    %4097 = vmatpush1.msra.mxu0 %v4096
    %4098 = vmatprep.subr.mxu0 0.0
    %v4099 = vand.u32 %v674, 4294901760
    %4100 = vmatpush2.msra.mxu0 %v4099
    %4101 = vmatprep.subr.mxu0 0.0
    %v4102 = vand.u32 %v673, 4294901760
    %4103 = vmatpush2.msra.mxu0 %v4102
    %4104 = vmatprep.subr.mxu0 0.0
    %v4105 = vand.u32 %v672, 4294901760
    %4106 = vmatpush2.msra.mxu0 %v4105
    %4107 = vmatprep.subr.mxu0 0.0
    %v4108 = vand.u32 %v671, 4294901760
    %4109 = vmatpush2.msra.mxu0 %v4108
    %4110 = vmatprep.subr.mxu0 0.0
    %v4111 = vand.u32 %v670, 4294901760
    %4112 = vmatpush2.msra.mxu0 %v4111
    %4113 = vmatprep.subr.mxu0 0.0
    %v4114 = vand.u32 %v669, 4294901760
    %4115 = vmatpush2.msra.mxu0 %v4114
    %4116 = vmatprep.subr.mxu0 0.0
    %v4117 = vand.u32 %v668, 4294901760
    %4118 = vmatpush2.msra.mxu0 %v4117
    %4119 = vmatprep.subr.mxu0 0.0
    %v4120 = vand.u32 %v667, 4294901760
    %4121 = vmatpush2.msra.mxu0 %v4120
    %4122 = vmatprep.subr.mxu0 0.0
    %v4123 = vand.u32 %v666, 4294901760
    %4124 = vmatpush2.msra.mxu0 %v4123
    %4125 = vmatprep.subr.mxu0 0.0
    %v4126 = vand.u32 %v665, 4294901760
    %4127 = vmatpush2.msra.mxu0 %v4126
    %4128 = vmatprep.subr.mxu0 0.0
    %v4129 = vand.u32 %v664, 4294901760
    %4130 = vmatpush2.msra.mxu0 %v4129
    %4131 = vmatprep.subr.mxu0 0.0
    %v4132 = vand.u32 %v663, 4294901760
    %4133 = vmatpush2.msra.mxu0 %v4132
    %4134 = vmatprep.subr.mxu0 0.0
    %v4135 = vand.u32 %v662, 4294901760
    %4136 = vmatpush2.msra.mxu0 %v4135
    %4137 = vmatprep.subr.mxu0 0.0
    %v4138 = vand.u32 %v661, 4294901760
    %4139 = vmatpush2.msra.mxu0 %v4138
    %4140 = vmatprep.subr.mxu0 0.0
    %v4141 = vand.u32 %v660, 4294901760
    %4142 = vmatpush2.msra.mxu0 %v4141
    %4143 = vmatprep.subr.mxu0 0.0
    %v4144 = vand.u32 %v659, 4294901760
    %4145 = vmatpush2.msra.mxu0 %v4144
    %v4146 = vand.u32 %v760, 4294901760
    %v4147 = vsub.f32 %v760, %v4146
    %v4148 = vand.u32 %v4147, 4294901760
    %4149 = vmatprep.mubr.f32.mxu0 %v4148
    %v4150 = vand.u32 %v759, 4294901760
    %v4151 = vsub.f32 %v759, %v4150
    %v4152 = vand.u32 %v4151, 4294901760
    %4153 = vmatmul.mubr.f32.gmra.mxu0 %v4152
    %v4154 = vpop.f32.mrf.mxu0
    %v4155 = vadd.f32 %v3984, %v4154
    %v4156 = vpop.f32.mrf.mxu0
    %v4157 = vand.u32 %v771, 4294901760
    %v4158 = vsub.f32 %v771, %v4157
    %v4159 = vand.u32 %v4158, 4294901760
    %4160 = vmatprep.mubr.f32.mxu0 %v4159
    %v4161 = vand.u32 %v770, 4294901760
    %v4162 = vsub.f32 %v770, %v4161
    %v4163 = vand.u32 %v4162, 4294901760
    %4164 = vmatmul.mubr.f32.gmra.mxu0 %v4163
    %v4165 = vpop.f32.mrf.mxu0
    %v4166 = vadd.f32 %v3993, %v4165
    %v4167 = vpop.f32.mrf.mxu0
    %v4168 = vand.u32 %v782, 4294901760
    %v4169 = vsub.f32 %v782, %v4168
    %v4170 = vand.u32 %v4169, 4294901760
    %4171 = vmatprep.mubr.f32.mxu0 %v4170
    %v4172 = vand.u32 %v781, 4294901760
    %v4173 = vsub.f32 %v781, %v4172
    %v4174 = vand.u32 %v4173, 4294901760
    %4175 = vmatmul.mubr.f32.gmra.mxu0 %v4174
    %v4176 = vpop.f32.mrf.mxu0
    %v4177 = vadd.f32 %v4002, %v4176
    %v4178 = vpop.f32.mrf.mxu0
    %v4179 = vand.u32 %v793, 4294901760
    %v4180 = vsub.f32 %v793, %v4179
    %v4181 = vand.u32 %v4180, 4294901760
    %4182 = vmatprep.mubr.f32.mxu0 %v4181
    %v4183 = vand.u32 %v792, 4294901760
    %v4184 = vsub.f32 %v792, %v4183
    %v4185 = vand.u32 %v4184, 4294901760
    %4186 = vmatmul.mubr.f32.gmra.mxu0 %v4185
    %v4187 = vpop.f32.mrf.mxu0
    %v4188 = vadd.f32 %v4011, %v4187
    %v4189 = vpop.f32.mrf.mxu0
    %v4190 = vand.u32 %v804, 4294901760
    %v4191 = vsub.f32 %v804, %v4190
    %v4192 = vand.u32 %v4191, 4294901760
    %4193 = vmatprep.mubr.f32.mxu0 %v4192
    %v4194 = vand.u32 %v803, 4294901760
    %v4195 = vsub.f32 %v803, %v4194
    %v4196 = vand.u32 %v4195, 4294901760
    %4197 = vmatmul.mubr.f32.gmra.mxu0 %v4196
    %v4198 = vpop.f32.mrf.mxu0
    %v4199 = vadd.f32 %v4020, %v4198
    %v4200 = vpop.f32.mrf.mxu0
    %v4201 = vand.u32 %v815, 4294901760
    %v4202 = vsub.f32 %v815, %v4201
    %v4203 = vand.u32 %v4202, 4294901760
    %4204 = vmatprep.mubr.f32.mxu0 %v4203
    %v4205 = vand.u32 %v814, 4294901760
    %v4206 = vsub.f32 %v814, %v4205
    %v4207 = vand.u32 %v4206, 4294901760
    %4208 = vmatmul.mubr.f32.gmra.mxu0 %v4207
    %v4209 = vpop.f32.mrf.mxu0
    %v4210 = vadd.f32 %v4029, %v4209
    %v4211 = vpop.f32.mrf.mxu0
    %v4212 = vand.u32 %v826, 4294901760
    %v4213 = vsub.f32 %v826, %v4212
    %v4214 = vand.u32 %v4213, 4294901760
    %4215 = vmatprep.mubr.f32.mxu0 %v4214
    %v4216 = vand.u32 %v825, 4294901760
    %v4217 = vsub.f32 %v825, %v4216
    %v4218 = vand.u32 %v4217, 4294901760
    %4219 = vmatmul.mubr.f32.gmra.mxu0 %v4218
    %v4220 = vpop.f32.mrf.mxu0
    %v4221 = vadd.f32 %v4038, %v4220
    %v4222 = vpop.f32.mrf.mxu0
    %v4223 = vand.u32 %v837, 4294901760
    %v4224 = vsub.f32 %v837, %v4223
    %v4225 = vand.u32 %v4224, 4294901760
    %4226 = vmatprep.mubr.f32.mxu0 %v4225
    %v4227 = vand.u32 %v836, 4294901760
    %v4228 = vsub.f32 %v836, %v4227
    %v4229 = vand.u32 %v4228, 4294901760
    %4230 = vmatmul.mubr.f32.gmra.mxu0 %v4229
    %v4231 = vpop.f32.mrf.mxu0
    %v4232 = vadd.f32 %v4047, %v4231
    %v4233 = vpop.f32.mrf.mxu0
    %4234 = vdwg.mxu0
    %4235 = vmatprep.subr.mxu0 0.0
    %v4236 = vand.u32 %v658, 4294901760
    %v4237 = vsub.f32 %v658, %v4236
    %v4238 = vand.u32 %v4237, 4294901760
    %4239 = vmatpush1.msra.mxu0 %v4238
    %4240 = vmatprep.subr.mxu0 0.0
    %v4241 = vand.u32 %v657, 4294901760
    %v4242 = vsub.f32 %v657, %v4241
    %v4243 = vand.u32 %v4242, 4294901760
    %4244 = vmatpush1.msra.mxu0 %v4243
    %4245 = vmatprep.subr.mxu0 0.0
    %v4246 = vand.u32 %v656, 4294901760
    %v4247 = vsub.f32 %v656, %v4246
    %v4248 = vand.u32 %v4247, 4294901760
    %4249 = vmatpush1.msra.mxu0 %v4248
    %4250 = vmatprep.subr.mxu0 0.0
    %v4251 = vand.u32 %v655, 4294901760
    %v4252 = vsub.f32 %v655, %v4251
    %v4253 = vand.u32 %v4252, 4294901760
    %4254 = vmatpush1.msra.mxu0 %v4253
    %4255 = vmatprep.subr.mxu0 0.0
    %v4256 = vand.u32 %v654, 4294901760
    %v4257 = vsub.f32 %v654, %v4256
    %v4258 = vand.u32 %v4257, 4294901760
    %4259 = vmatpush1.msra.mxu0 %v4258
    %4260 = vmatprep.subr.mxu0 0.0
    %v4261 = vand.u32 %v653, 4294901760
    %v4262 = vsub.f32 %v653, %v4261
    %v4263 = vand.u32 %v4262, 4294901760
    %4264 = vmatpush1.msra.mxu0 %v4263
    %4265 = vmatprep.subr.mxu0 0.0
    %v4266 = vand.u32 %v652, 4294901760
    %v4267 = vsub.f32 %v652, %v4266
    %v4268 = vand.u32 %v4267, 4294901760
    %4269 = vmatpush1.msra.mxu0 %v4268
    %4270 = vmatprep.subr.mxu0 0.0
    %v4271 = vand.u32 %v651, 4294901760
    %v4272 = vsub.f32 %v651, %v4271
    %v4273 = vand.u32 %v4272, 4294901760
    %4274 = vmatpush1.msra.mxu0 %v4273
    %4275 = vmatprep.subr.mxu0 0.0
    %v4276 = vand.u32 %v650, 4294901760
    %v4277 = vsub.f32 %v650, %v4276
    %v4278 = vand.u32 %v4277, 4294901760
    %4279 = vmatpush1.msra.mxu0 %v4278
    %4280 = vmatprep.subr.mxu0 0.0
    %v4281 = vand.u32 %v649, 4294901760
    %v4282 = vsub.f32 %v649, %v4281
    %v4283 = vand.u32 %v4282, 4294901760
    %4284 = vmatpush1.msra.mxu0 %v4283
    %4285 = vmatprep.subr.mxu0 0.0
    %v4286 = vand.u32 %v648, 4294901760
    %v4287 = vsub.f32 %v648, %v4286
    %v4288 = vand.u32 %v4287, 4294901760
    %4289 = vmatpush1.msra.mxu0 %v4288
    %4290 = vmatprep.subr.mxu0 0.0
    %v4291 = vand.u32 %v647, 4294901760
    %v4292 = vsub.f32 %v647, %v4291
    %v4293 = vand.u32 %v4292, 4294901760
    %4294 = vmatpush1.msra.mxu0 %v4293
    %4295 = vmatprep.subr.mxu0 0.0
    %v4296 = vand.u32 %v646, 4294901760
    %v4297 = vsub.f32 %v646, %v4296
    %v4298 = vand.u32 %v4297, 4294901760
    %4299 = vmatpush1.msra.mxu0 %v4298
    %4300 = vmatprep.subr.mxu0 0.0
    %v4301 = vand.u32 %v645, 4294901760
    %v4302 = vsub.f32 %v645, %v4301
    %v4303 = vand.u32 %v4302, 4294901760
    %4304 = vmatpush1.msra.mxu0 %v4303
    %4305 = vmatprep.subr.mxu0 0.0
    %v4306 = vand.u32 %v644, 4294901760
    %v4307 = vsub.f32 %v644, %v4306
    %v4308 = vand.u32 %v4307, 4294901760
    %4309 = vmatpush1.msra.mxu0 %v4308
    %4310 = vmatprep.subr.mxu0 0.0
    %v4311 = vand.u32 %v643, 4294901760
    %v4312 = vsub.f32 %v643, %v4311
    %v4313 = vand.u32 %v4312, 4294901760
    %4314 = vmatpush1.msra.mxu0 %v4313
    %4315 = vmatprep.subr.mxu0 0.0
    %v4316 = vand.u32 %v674, 4294901760
    %v4317 = vsub.f32 %v674, %v4316
    %v4318 = vand.u32 %v4317, 4294901760
    %4319 = vmatpush2.msra.mxu0 %v4318
    %4320 = vmatprep.subr.mxu0 0.0
    %v4321 = vand.u32 %v673, 4294901760
    %v4322 = vsub.f32 %v673, %v4321
    %v4323 = vand.u32 %v4322, 4294901760
    %4324 = vmatpush2.msra.mxu0 %v4323
    %4325 = vmatprep.subr.mxu0 0.0
    %v4326 = vand.u32 %v672, 4294901760
    %v4327 = vsub.f32 %v672, %v4326
    %v4328 = vand.u32 %v4327, 4294901760
    %4329 = vmatpush2.msra.mxu0 %v4328
    %4330 = vmatprep.subr.mxu0 0.0
    %v4331 = vand.u32 %v671, 4294901760
    %v4332 = vsub.f32 %v671, %v4331
    %v4333 = vand.u32 %v4332, 4294901760
    %4334 = vmatpush2.msra.mxu0 %v4333
    %4335 = vmatprep.subr.mxu0 0.0
    %v4336 = vand.u32 %v670, 4294901760
    %v4337 = vsub.f32 %v670, %v4336
    %v4338 = vand.u32 %v4337, 4294901760
    %4339 = vmatpush2.msra.mxu0 %v4338
    %4340 = vmatprep.subr.mxu0 0.0
    %v4341 = vand.u32 %v669, 4294901760
    %v4342 = vsub.f32 %v669, %v4341
    %v4343 = vand.u32 %v4342, 4294901760
    %4344 = vmatpush2.msra.mxu0 %v4343
    %4345 = vmatprep.subr.mxu0 0.0
    %v4346 = vand.u32 %v668, 4294901760
    %v4347 = vsub.f32 %v668, %v4346
    %v4348 = vand.u32 %v4347, 4294901760
    %4349 = vmatpush2.msra.mxu0 %v4348
    %4350 = vmatprep.subr.mxu0 0.0
    %v4351 = vand.u32 %v667, 4294901760
    %v4352 = vsub.f32 %v667, %v4351
    %v4353 = vand.u32 %v4352, 4294901760
    %4354 = vmatpush2.msra.mxu0 %v4353
    %4355 = vmatprep.subr.mxu0 0.0
    %v4356 = vand.u32 %v666, 4294901760
    %v4357 = vsub.f32 %v666, %v4356
    %v4358 = vand.u32 %v4357, 4294901760
    %4359 = vmatpush2.msra.mxu0 %v4358
    %4360 = vmatprep.subr.mxu0 0.0
    %v4361 = vand.u32 %v665, 4294901760
    %v4362 = vsub.f32 %v665, %v4361
    %v4363 = vand.u32 %v4362, 4294901760
    %4364 = vmatpush2.msra.mxu0 %v4363
    %4365 = vmatprep.subr.mxu0 0.0
    %v4366 = vand.u32 %v664, 4294901760
    %v4367 = vsub.f32 %v664, %v4366
    %v4368 = vand.u32 %v4367, 4294901760
    %4369 = vmatpush2.msra.mxu0 %v4368
    %4370 = vmatprep.subr.mxu0 0.0
    %v4371 = vand.u32 %v663, 4294901760
    %v4372 = vsub.f32 %v663, %v4371
    %v4373 = vand.u32 %v4372, 4294901760
    %4374 = vmatpush2.msra.mxu0 %v4373
    %4375 = vmatprep.subr.mxu0 0.0
    %v4376 = vand.u32 %v662, 4294901760
    %v4377 = vsub.f32 %v662, %v4376
    %v4378 = vand.u32 %v4377, 4294901760
    %4379 = vmatpush2.msra.mxu0 %v4378
    %4380 = vmatprep.subr.mxu0 0.0
    %v4381 = vand.u32 %v661, 4294901760
    %v4382 = vsub.f32 %v661, %v4381
    %v4383 = vand.u32 %v4382, 4294901760
    %4384 = vmatpush2.msra.mxu0 %v4383
    %4385 = vmatprep.subr.mxu0 0.0
    %v4386 = vand.u32 %v660, 4294901760
    %v4387 = vsub.f32 %v660, %v4386
    %v4388 = vand.u32 %v4387, 4294901760
    %4389 = vmatpush2.msra.mxu0 %v4388
    %4390 = vmatprep.subr.mxu0 0.0
    %v4391 = vand.u32 %v659, 4294901760
    %v4392 = vsub.f32 %v659, %v4391
    %v4393 = vand.u32 %v4392, 4294901760
    %4394 = vmatpush2.msra.mxu0 %v4393
    %v4395 = vand.u32 %v760, 4294901760
    %4396 = vmatprep.mubr.f32.mxu0 %v4395
    %v4397 = vand.u32 %v759, 4294901760
    %4398 = vmatmul.mubr.f32.gmra.mxu0 %v4397
    %v4399 = vpop.f32.mrf.mxu0
    %v4400 = vadd.f32 %v4155, %v4399
    %v4401 = vpop.f32.mrf.mxu0
    %v4402 = vand.u32 %v771, 4294901760
    %4403 = vmatprep.mubr.f32.mxu0 %v4402
    %v4404 = vand.u32 %v770, 4294901760
    %4405 = vmatmul.mubr.f32.gmra.mxu0 %v4404
    %v4406 = vpop.f32.mrf.mxu0
    %v4407 = vadd.f32 %v4166, %v4406
    %v4408 = vpop.f32.mrf.mxu0
    %v4409 = vand.u32 %v782, 4294901760
    %4410 = vmatprep.mubr.f32.mxu0 %v4409
    %v4411 = vand.u32 %v781, 4294901760
    %4412 = vmatmul.mubr.f32.gmra.mxu0 %v4411
    %v4413 = vpop.f32.mrf.mxu0
    %v4414 = vadd.f32 %v4177, %v4413
    %v4415 = vpop.f32.mrf.mxu0
    %v4416 = vand.u32 %v793, 4294901760
    %4417 = vmatprep.mubr.f32.mxu0 %v4416
    %v4418 = vand.u32 %v792, 4294901760
    %4419 = vmatmul.mubr.f32.gmra.mxu0 %v4418
    %v4420 = vpop.f32.mrf.mxu0
    %v4421 = vadd.f32 %v4188, %v4420
    %v4422 = vpop.f32.mrf.mxu0
    %v4423 = vand.u32 %v804, 4294901760
    %4424 = vmatprep.mubr.f32.mxu0 %v4423
    %v4425 = vand.u32 %v803, 4294901760
    %4426 = vmatmul.mubr.f32.gmra.mxu0 %v4425
    %v4427 = vpop.f32.mrf.mxu0
    %v4428 = vadd.f32 %v4199, %v4427
    %v4429 = vpop.f32.mrf.mxu0
    %v4430 = vand.u32 %v815, 4294901760
    %4431 = vmatprep.mubr.f32.mxu0 %v4430
    %v4432 = vand.u32 %v814, 4294901760
    %4433 = vmatmul.mubr.f32.gmra.mxu0 %v4432
    %v4434 = vpop.f32.mrf.mxu0
    %v4435 = vadd.f32 %v4210, %v4434
    %v4436 = vpop.f32.mrf.mxu0
    %v4437 = vand.u32 %v826, 4294901760
    %4438 = vmatprep.mubr.f32.mxu0 %v4437
    %v4439 = vand.u32 %v825, 4294901760
    %4440 = vmatmul.mubr.f32.gmra.mxu0 %v4439
    %v4441 = vpop.f32.mrf.mxu0
    %v4442 = vadd.f32 %v4221, %v4441
    %v4443 = vpop.f32.mrf.mxu0
    %v4444 = vand.u32 %v837, 4294901760
    %4445 = vmatprep.mubr.f32.mxu0 %v4444
    %v4446 = vand.u32 %v836, 4294901760
    %4447 = vmatmul.mubr.f32.gmra.mxu0 %v4446
    %v4448 = vpop.f32.mrf.mxu0
    %v4449 = vadd.f32 %v4232, %v4448
    %v4450 = vpop.f32.mrf.mxu0
    %4451 = vdwg.mxu0
    %4452 = vmatprep.subr.mxu0 0.0
    %v4453 = vand.u32 %v658, 4294901760
    %4454 = vmatpush1.msra.mxu0 %v4453
    %4455 = vmatprep.subr.mxu0 0.0
    %v4456 = vand.u32 %v657, 4294901760
    %4457 = vmatpush1.msra.mxu0 %v4456
    %4458 = vmatprep.subr.mxu0 0.0
    %v4459 = vand.u32 %v656, 4294901760
    %4460 = vmatpush1.msra.mxu0 %v4459
    %4461 = vmatprep.subr.mxu0 0.0
    %v4462 = vand.u32 %v655, 4294901760
    %4463 = vmatpush1.msra.mxu0 %v4462
    %4464 = vmatprep.subr.mxu0 0.0
    %v4465 = vand.u32 %v654, 4294901760
    %4466 = vmatpush1.msra.mxu0 %v4465
    %4467 = vmatprep.subr.mxu0 0.0
    %v4468 = vand.u32 %v653, 4294901760
    %4469 = vmatpush1.msra.mxu0 %v4468
    %4470 = vmatprep.subr.mxu0 0.0
    %v4471 = vand.u32 %v652, 4294901760
    %4472 = vmatpush1.msra.mxu0 %v4471
    %4473 = vmatprep.subr.mxu0 0.0
    %v4474 = vand.u32 %v651, 4294901760
    %4475 = vmatpush1.msra.mxu0 %v4474
    %4476 = vmatprep.subr.mxu0 0.0
    %v4477 = vand.u32 %v650, 4294901760
    %4478 = vmatpush1.msra.mxu0 %v4477
    %4479 = vmatprep.subr.mxu0 0.0
    %v4480 = vand.u32 %v649, 4294901760
    %4481 = vmatpush1.msra.mxu0 %v4480
    %4482 = vmatprep.subr.mxu0 0.0
    %v4483 = vand.u32 %v648, 4294901760
    %4484 = vmatpush1.msra.mxu0 %v4483
    %4485 = vmatprep.subr.mxu0 0.0
    %v4486 = vand.u32 %v647, 4294901760
    %4487 = vmatpush1.msra.mxu0 %v4486
    %4488 = vmatprep.subr.mxu0 0.0
    %v4489 = vand.u32 %v646, 4294901760
    %4490 = vmatpush1.msra.mxu0 %v4489
    %4491 = vmatprep.subr.mxu0 0.0
    %v4492 = vand.u32 %v645, 4294901760
    %4493 = vmatpush1.msra.mxu0 %v4492
    %4494 = vmatprep.subr.mxu0 0.0
    %v4495 = vand.u32 %v644, 4294901760
    %4496 = vmatpush1.msra.mxu0 %v4495
    %4497 = vmatprep.subr.mxu0 0.0
    %v4498 = vand.u32 %v643, 4294901760
    %4499 = vmatpush1.msra.mxu0 %v4498
    %4500 = vmatprep.subr.mxu0 0.0
    %v4501 = vand.u32 %v674, 4294901760
    %4502 = vmatpush2.msra.mxu0 %v4501
    %4503 = vmatprep.subr.mxu0 0.0
    %v4504 = vand.u32 %v673, 4294901760
    %4505 = vmatpush2.msra.mxu0 %v4504
    %4506 = vmatprep.subr.mxu0 0.0
    %v4507 = vand.u32 %v672, 4294901760
    %4508 = vmatpush2.msra.mxu0 %v4507
    %4509 = vmatprep.subr.mxu0 0.0
    %v4510 = vand.u32 %v671, 4294901760
    %4511 = vmatpush2.msra.mxu0 %v4510
    %4512 = vmatprep.subr.mxu0 0.0
    %v4513 = vand.u32 %v670, 4294901760
    %4514 = vmatpush2.msra.mxu0 %v4513
    %4515 = vmatprep.subr.mxu0 0.0
    %v4516 = vand.u32 %v669, 4294901760
    %4517 = vmatpush2.msra.mxu0 %v4516
    %4518 = vmatprep.subr.mxu0 0.0
    %v4519 = vand.u32 %v668, 4294901760
    %4520 = vmatpush2.msra.mxu0 %v4519
    %4521 = vmatprep.subr.mxu0 0.0
    %v4522 = vand.u32 %v667, 4294901760
    %4523 = vmatpush2.msra.mxu0 %v4522
    %4524 = vmatprep.subr.mxu0 0.0
    %v4525 = vand.u32 %v666, 4294901760
    %4526 = vmatpush2.msra.mxu0 %v4525
    %4527 = vmatprep.subr.mxu0 0.0
    %v4528 = vand.u32 %v665, 4294901760
    %4529 = vmatpush2.msra.mxu0 %v4528
    %4530 = vmatprep.subr.mxu0 0.0
    %v4531 = vand.u32 %v664, 4294901760
    %4532 = vmatpush2.msra.mxu0 %v4531
    %4533 = vmatprep.subr.mxu0 0.0
    %v4534 = vand.u32 %v663, 4294901760
    %4535 = vmatpush2.msra.mxu0 %v4534
    %4536 = vmatprep.subr.mxu0 0.0
    %v4537 = vand.u32 %v662, 4294901760
    %4538 = vmatpush2.msra.mxu0 %v4537
    %4539 = vmatprep.subr.mxu0 0.0
    %v4540 = vand.u32 %v661, 4294901760
    %4541 = vmatpush2.msra.mxu0 %v4540
    %4542 = vmatprep.subr.mxu0 0.0
    %v4543 = vand.u32 %v660, 4294901760
    %4544 = vmatpush2.msra.mxu0 %v4543
    %4545 = vmatprep.subr.mxu0 0.0
    %v4546 = vand.u32 %v659, 4294901760
    %4547 = vmatpush2.msra.mxu0 %v4546
    %v4548 = vand.u32 %v760, 4294901760
    %4549 = vmatprep.mubr.f32.mxu0 %v4548
    %v4550 = vand.u32 %v759, 4294901760
    %4551 = vmatmul.mubr.f32.gmra.mxu0 %v4550
    %v4552 = vpop.f32.mrf.mxu0
    %v4553 = vadd.f32 %v4400, %v4552
    %v4554 = vpop.f32.mrf.mxu0
    %v4555 = vand.u32 %v771, 4294901760
    %4556 = vmatprep.mubr.f32.mxu0 %v4555
    %v4557 = vand.u32 %v770, 4294901760
    %4558 = vmatmul.mubr.f32.gmra.mxu0 %v4557
    %v4559 = vpop.f32.mrf.mxu0
    %v4560 = vadd.f32 %v4407, %v4559
    %v4561 = vpop.f32.mrf.mxu0
    %v4562 = vand.u32 %v782, 4294901760
    %4563 = vmatprep.mubr.f32.mxu0 %v4562
    %v4564 = vand.u32 %v781, 4294901760
    %4565 = vmatmul.mubr.f32.gmra.mxu0 %v4564
    %v4566 = vpop.f32.mrf.mxu0
    %v4567 = vadd.f32 %v4414, %v4566
    %v4568 = vpop.f32.mrf.mxu0
    %v4569 = vand.u32 %v793, 4294901760
    %4570 = vmatprep.mubr.f32.mxu0 %v4569
    %v4571 = vand.u32 %v792, 4294901760
    %4572 = vmatmul.mubr.f32.gmra.mxu0 %v4571
    %v4573 = vpop.f32.mrf.mxu0
    %v4574 = vadd.f32 %v4421, %v4573
    %v4575 = vpop.f32.mrf.mxu0
    %v4576 = vand.u32 %v804, 4294901760
    %4577 = vmatprep.mubr.f32.mxu0 %v4576
    %v4578 = vand.u32 %v803, 4294901760
    %4579 = vmatmul.mubr.f32.gmra.mxu0 %v4578
    %v4580 = vpop.f32.mrf.mxu0
    %v4581 = vadd.f32 %v4428, %v4580
    %v4582 = vpop.f32.mrf.mxu0
    %v4583 = vand.u32 %v815, 4294901760
    %4584 = vmatprep.mubr.f32.mxu0 %v4583
    %v4585 = vand.u32 %v814, 4294901760
    %4586 = vmatmul.mubr.f32.gmra.mxu0 %v4585
    %v4587 = vpop.f32.mrf.mxu0
    %v4588 = vadd.f32 %v4435, %v4587
    %v4589 = vpop.f32.mrf.mxu0
    %v4590 = vand.u32 %v826, 4294901760
    %4591 = vmatprep.mubr.f32.mxu0 %v4590
    %v4592 = vand.u32 %v825, 4294901760
    %4593 = vmatmul.mubr.f32.gmra.mxu0 %v4592
    %v4594 = vpop.f32.mrf.mxu0
    %v4595 = vadd.f32 %v4442, %v4594
    %v4596 = vpop.f32.mrf.mxu0
    %v4597 = vand.u32 %v837, 4294901760
    %4598 = vmatprep.mubr.f32.mxu0 %v4597
    %v4599 = vand.u32 %v836, 4294901760
    %4600 = vmatmul.mubr.f32.gmra.mxu0 %v4599
    %v4601 = vpop.f32.mrf.mxu0
    %v4602 = vadd.f32 %v4449, %v4601
    %v4603 = vpop.f32.mrf.mxu0
    %4604 = vdwg.mxu0
    %4605 = vmatprep.subr.mxu0 0.0
    %v4606 = vand.u32 %v690, 4294901760
    %4607 = vmatpush1.msra.mxu0 %v4606
    %4608 = vmatprep.subr.mxu0 0.0
    %v4609 = vand.u32 %v689, 4294901760
    %4610 = vmatpush1.msra.mxu0 %v4609
    %4611 = vmatprep.subr.mxu0 0.0
    %v4612 = vand.u32 %v688, 4294901760
    %4613 = vmatpush1.msra.mxu0 %v4612
    %4614 = vmatprep.subr.mxu0 0.0
    %v4615 = vand.u32 %v687, 4294901760
    %4616 = vmatpush1.msra.mxu0 %v4615
    %4617 = vmatprep.subr.mxu0 0.0
    %v4618 = vand.u32 %v686, 4294901760
    %4619 = vmatpush1.msra.mxu0 %v4618
    %4620 = vmatprep.subr.mxu0 0.0
    %v4621 = vand.u32 %v685, 4294901760
    %4622 = vmatpush1.msra.mxu0 %v4621
    %4623 = vmatprep.subr.mxu0 0.0
    %v4624 = vand.u32 %v684, 4294901760
    %4625 = vmatpush1.msra.mxu0 %v4624
    %4626 = vmatprep.subr.mxu0 0.0
    %v4627 = vand.u32 %v683, 4294901760
    %4628 = vmatpush1.msra.mxu0 %v4627
    %4629 = vmatprep.subr.mxu0 0.0
    %v4630 = vand.u32 %v682, 4294901760
    %4631 = vmatpush1.msra.mxu0 %v4630
    %4632 = vmatprep.subr.mxu0 0.0
    %v4633 = vand.u32 %v681, 4294901760
    %4634 = vmatpush1.msra.mxu0 %v4633
    %4635 = vmatprep.subr.mxu0 0.0
    %v4636 = vand.u32 %v680, 4294901760
    %4637 = vmatpush1.msra.mxu0 %v4636
    %4638 = vmatprep.subr.mxu0 0.0
    %v4639 = vand.u32 %v679, 4294901760
    %4640 = vmatpush1.msra.mxu0 %v4639
    %4641 = vmatprep.subr.mxu0 0.0
    %v4642 = vand.u32 %v678, 4294901760
    %4643 = vmatpush1.msra.mxu0 %v4642
    %4644 = vmatprep.subr.mxu0 0.0
    %v4645 = vand.u32 %v677, 4294901760
    %4646 = vmatpush1.msra.mxu0 %v4645
    %4647 = vmatprep.subr.mxu0 0.0
    %v4648 = vand.u32 %v676, 4294901760
    %4649 = vmatpush1.msra.mxu0 %v4648
    %4650 = vmatprep.subr.mxu0 0.0
    %v4651 = vand.u32 %v675, 4294901760
    %4652 = vmatpush1.msra.mxu0 %v4651
    %4653 = vmatprep.subr.mxu0 0.0
    %v4654 = vand.u32 %v706, 4294901760
    %4655 = vmatpush2.msra.mxu0 %v4654
    %4656 = vmatprep.subr.mxu0 0.0
    %v4657 = vand.u32 %v705, 4294901760
    %4658 = vmatpush2.msra.mxu0 %v4657
    %4659 = vmatprep.subr.mxu0 0.0
    %v4660 = vand.u32 %v704, 4294901760
    %4661 = vmatpush2.msra.mxu0 %v4660
    %4662 = vmatprep.subr.mxu0 0.0
    %v4663 = vand.u32 %v703, 4294901760
    %4664 = vmatpush2.msra.mxu0 %v4663
    %4665 = vmatprep.subr.mxu0 0.0
    %v4666 = vand.u32 %v702, 4294901760
    %4667 = vmatpush2.msra.mxu0 %v4666
    %4668 = vmatprep.subr.mxu0 0.0
    %v4669 = vand.u32 %v701, 4294901760
    %4670 = vmatpush2.msra.mxu0 %v4669
    %4671 = vmatprep.subr.mxu0 0.0
    %v4672 = vand.u32 %v700, 4294901760
    %4673 = vmatpush2.msra.mxu0 %v4672
    %4674 = vmatprep.subr.mxu0 0.0
    %v4675 = vand.u32 %v699, 4294901760
    %4676 = vmatpush2.msra.mxu0 %v4675
    %4677 = vmatprep.subr.mxu0 0.0
    %v4678 = vand.u32 %v698, 4294901760
    %4679 = vmatpush2.msra.mxu0 %v4678
    %4680 = vmatprep.subr.mxu0 0.0
    %v4681 = vand.u32 %v697, 4294901760
    %4682 = vmatpush2.msra.mxu0 %v4681
    %4683 = vmatprep.subr.mxu0 0.0
    %v4684 = vand.u32 %v696, 4294901760
    %4685 = vmatpush2.msra.mxu0 %v4684
    %4686 = vmatprep.subr.mxu0 0.0
    %v4687 = vand.u32 %v695, 4294901760
    %4688 = vmatpush2.msra.mxu0 %v4687
    %4689 = vmatprep.subr.mxu0 0.0
    %v4690 = vand.u32 %v694, 4294901760
    %4691 = vmatpush2.msra.mxu0 %v4690
    %4692 = vmatprep.subr.mxu0 0.0
    %v4693 = vand.u32 %v693, 4294901760
    %4694 = vmatpush2.msra.mxu0 %v4693
    %4695 = vmatprep.subr.mxu0 0.0
    %v4696 = vand.u32 %v692, 4294901760
    %4697 = vmatpush2.msra.mxu0 %v4696
    %4698 = vmatprep.subr.mxu0 0.0
    %v4699 = vand.u32 %v691, 4294901760
    %4700 = vmatpush2.msra.mxu0 %v4699
    %v4701 = vand.u32 %v762, 4294901760
    %v4702 = vsub.f32 %v762, %v4701
    %v4703 = vand.u32 %v4702, 4294901760
    %v4704 = vsub.f32 %v4702, %v4703
    %v4705 = vand.u32 %v4704, 4294901760
    %4706 = vmatprep.mubr.f32.mxu0 %v4705
    %v4707 = vand.u32 %v761, 4294901760
    %v4708 = vsub.f32 %v761, %v4707
    %v4709 = vand.u32 %v4708, 4294901760
    %v4710 = vsub.f32 %v4708, %v4709
    %v4711 = vand.u32 %v4710, 4294901760
    %4712 = vmatmul.mubr.f32.gmra.mxu0 %v4711
    %v4713 = vpop.f32.mrf.mxu0
    %v4714 = vadd.f32 %v4553, %v4713
    %v4715 = vpop.f32.mrf.mxu0
    %v4716 = vand.u32 %v773, 4294901760
    %v4717 = vsub.f32 %v773, %v4716
    %v4718 = vand.u32 %v4717, 4294901760
    %v4719 = vsub.f32 %v4717, %v4718
    %v4720 = vand.u32 %v4719, 4294901760
    %4721 = vmatprep.mubr.f32.mxu0 %v4720
    %v4722 = vand.u32 %v772, 4294901760
    %v4723 = vsub.f32 %v772, %v4722
    %v4724 = vand.u32 %v4723, 4294901760
    %v4725 = vsub.f32 %v4723, %v4724
    %v4726 = vand.u32 %v4725, 4294901760
    %4727 = vmatmul.mubr.f32.gmra.mxu0 %v4726
    %v4728 = vpop.f32.mrf.mxu0
    %v4729 = vadd.f32 %v4560, %v4728
    %v4730 = vpop.f32.mrf.mxu0
    %v4731 = vand.u32 %v784, 4294901760
    %v4732 = vsub.f32 %v784, %v4731
    %v4733 = vand.u32 %v4732, 4294901760
    %v4734 = vsub.f32 %v4732, %v4733
    %v4735 = vand.u32 %v4734, 4294901760
    %4736 = vmatprep.mubr.f32.mxu0 %v4735
    %v4737 = vand.u32 %v783, 4294901760
    %v4738 = vsub.f32 %v783, %v4737
    %v4739 = vand.u32 %v4738, 4294901760
    %v4740 = vsub.f32 %v4738, %v4739
    %v4741 = vand.u32 %v4740, 4294901760
    %4742 = vmatmul.mubr.f32.gmra.mxu0 %v4741
    %v4743 = vpop.f32.mrf.mxu0
    %v4744 = vadd.f32 %v4567, %v4743
    %v4745 = vpop.f32.mrf.mxu0
    %v4746 = vand.u32 %v795, 4294901760
    %v4747 = vsub.f32 %v795, %v4746
    %v4748 = vand.u32 %v4747, 4294901760
    %v4749 = vsub.f32 %v4747, %v4748
    %v4750 = vand.u32 %v4749, 4294901760
    %4751 = vmatprep.mubr.f32.mxu0 %v4750
    %v4752 = vand.u32 %v794, 4294901760
    %v4753 = vsub.f32 %v794, %v4752
    %v4754 = vand.u32 %v4753, 4294901760
    %v4755 = vsub.f32 %v4753, %v4754
    %v4756 = vand.u32 %v4755, 4294901760
    %4757 = vmatmul.mubr.f32.gmra.mxu0 %v4756
    %v4758 = vpop.f32.mrf.mxu0
    %v4759 = vadd.f32 %v4574, %v4758
    %v4760 = vpop.f32.mrf.mxu0
    %v4761 = vand.u32 %v806, 4294901760
    %v4762 = vsub.f32 %v806, %v4761
    %v4763 = vand.u32 %v4762, 4294901760
    %v4764 = vsub.f32 %v4762, %v4763
    %v4765 = vand.u32 %v4764, 4294901760
    %4766 = vmatprep.mubr.f32.mxu0 %v4765
    %v4767 = vand.u32 %v805, 4294901760
    %v4768 = vsub.f32 %v805, %v4767
    %v4769 = vand.u32 %v4768, 4294901760
    %v4770 = vsub.f32 %v4768, %v4769
    %v4771 = vand.u32 %v4770, 4294901760
    %4772 = vmatmul.mubr.f32.gmra.mxu0 %v4771
    %v4773 = vpop.f32.mrf.mxu0
    %v4774 = vadd.f32 %v4581, %v4773
    %v4775 = vpop.f32.mrf.mxu0
    %v4776 = vand.u32 %v817, 4294901760
    %v4777 = vsub.f32 %v817, %v4776
    %v4778 = vand.u32 %v4777, 4294901760
    %v4779 = vsub.f32 %v4777, %v4778
    %v4780 = vand.u32 %v4779, 4294901760
    %4781 = vmatprep.mubr.f32.mxu0 %v4780
    %v4782 = vand.u32 %v816, 4294901760
    %v4783 = vsub.f32 %v816, %v4782
    %v4784 = vand.u32 %v4783, 4294901760
    %v4785 = vsub.f32 %v4783, %v4784
    %v4786 = vand.u32 %v4785, 4294901760
    %4787 = vmatmul.mubr.f32.gmra.mxu0 %v4786
    %v4788 = vpop.f32.mrf.mxu0
    %v4789 = vadd.f32 %v4588, %v4788
    %v4790 = vpop.f32.mrf.mxu0
    %v4791 = vand.u32 %v828, 4294901760
    %v4792 = vsub.f32 %v828, %v4791
    %v4793 = vand.u32 %v4792, 4294901760
    %v4794 = vsub.f32 %v4792, %v4793
    %v4795 = vand.u32 %v4794, 4294901760
    %4796 = vmatprep.mubr.f32.mxu0 %v4795
    %v4797 = vand.u32 %v827, 4294901760
    %v4798 = vsub.f32 %v827, %v4797
    %v4799 = vand.u32 %v4798, 4294901760
    %v4800 = vsub.f32 %v4798, %v4799
    %v4801 = vand.u32 %v4800, 4294901760
    %4802 = vmatmul.mubr.f32.gmra.mxu0 %v4801
    %v4803 = vpop.f32.mrf.mxu0
    %v4804 = vadd.f32 %v4595, %v4803
    %v4805 = vpop.f32.mrf.mxu0
    %v4806 = vand.u32 %v839, 4294901760
    %v4807 = vsub.f32 %v839, %v4806
    %v4808 = vand.u32 %v4807, 4294901760
    %v4809 = vsub.f32 %v4807, %v4808
    %v4810 = vand.u32 %v4809, 4294901760
    %4811 = vmatprep.mubr.f32.mxu0 %v4810
    %v4812 = vand.u32 %v838, 4294901760
    %v4813 = vsub.f32 %v838, %v4812
    %v4814 = vand.u32 %v4813, 4294901760
    %v4815 = vsub.f32 %v4813, %v4814
    %v4816 = vand.u32 %v4815, 4294901760
    %4817 = vmatmul.mubr.f32.gmra.mxu0 %v4816
    %v4818 = vpop.f32.mrf.mxu0
    %v4819 = vadd.f32 %v4602, %v4818
    %v4820 = vpop.f32.mrf.mxu0
    %4821 = vdwg.mxu0
    %4822 = vmatprep.subr.mxu0 0.0
    %v4823 = vand.u32 %v690, 4294901760
    %v4824 = vsub.f32 %v690, %v4823
    %v4825 = vand.u32 %v4824, 4294901760
    %v4826 = vsub.f32 %v4824, %v4825
    %v4827 = vand.u32 %v4826, 4294901760
    %4828 = vmatpush1.msra.mxu0 %v4827
    %4829 = vmatprep.subr.mxu0 0.0
    %v4830 = vand.u32 %v689, 4294901760
    %v4831 = vsub.f32 %v689, %v4830
    %v4832 = vand.u32 %v4831, 4294901760
    %v4833 = vsub.f32 %v4831, %v4832
    %v4834 = vand.u32 %v4833, 4294901760
    %4835 = vmatpush1.msra.mxu0 %v4834
    %4836 = vmatprep.subr.mxu0 0.0
    %v4837 = vand.u32 %v688, 4294901760
    %v4838 = vsub.f32 %v688, %v4837
    %v4839 = vand.u32 %v4838, 4294901760
    %v4840 = vsub.f32 %v4838, %v4839
    %v4841 = vand.u32 %v4840, 4294901760
    %4842 = vmatpush1.msra.mxu0 %v4841
    %4843 = vmatprep.subr.mxu0 0.0
    %v4844 = vand.u32 %v687, 4294901760
    %v4845 = vsub.f32 %v687, %v4844
    %v4846 = vand.u32 %v4845, 4294901760
    %v4847 = vsub.f32 %v4845, %v4846
    %v4848 = vand.u32 %v4847, 4294901760
    %4849 = vmatpush1.msra.mxu0 %v4848
    %4850 = vmatprep.subr.mxu0 0.0
    %v4851 = vand.u32 %v686, 4294901760
    %v4852 = vsub.f32 %v686, %v4851
    %v4853 = vand.u32 %v4852, 4294901760
    %v4854 = vsub.f32 %v4852, %v4853
    %v4855 = vand.u32 %v4854, 4294901760
    %4856 = vmatpush1.msra.mxu0 %v4855
    %4857 = vmatprep.subr.mxu0 0.0
    %v4858 = vand.u32 %v685, 4294901760
    %v4859 = vsub.f32 %v685, %v4858
    %v4860 = vand.u32 %v4859, 4294901760
    %v4861 = vsub.f32 %v4859, %v4860
    %v4862 = vand.u32 %v4861, 4294901760
    %4863 = vmatpush1.msra.mxu0 %v4862
    %4864 = vmatprep.subr.mxu0 0.0
    %v4865 = vand.u32 %v684, 4294901760
    %v4866 = vsub.f32 %v684, %v4865
    %v4867 = vand.u32 %v4866, 4294901760
    %v4868 = vsub.f32 %v4866, %v4867
    %v4869 = vand.u32 %v4868, 4294901760
    %4870 = vmatpush1.msra.mxu0 %v4869
    %4871 = vmatprep.subr.mxu0 0.0
    %v4872 = vand.u32 %v683, 4294901760
    %v4873 = vsub.f32 %v683, %v4872
    %v4874 = vand.u32 %v4873, 4294901760
    %v4875 = vsub.f32 %v4873, %v4874
    %v4876 = vand.u32 %v4875, 4294901760
    %4877 = vmatpush1.msra.mxu0 %v4876
    %4878 = vmatprep.subr.mxu0 0.0
    %v4879 = vand.u32 %v682, 4294901760
    %v4880 = vsub.f32 %v682, %v4879
    %v4881 = vand.u32 %v4880, 4294901760
    %v4882 = vsub.f32 %v4880, %v4881
    %v4883 = vand.u32 %v4882, 4294901760
    %4884 = vmatpush1.msra.mxu0 %v4883
    %4885 = vmatprep.subr.mxu0 0.0
    %v4886 = vand.u32 %v681, 4294901760
    %v4887 = vsub.f32 %v681, %v4886
    %v4888 = vand.u32 %v4887, 4294901760
    %v4889 = vsub.f32 %v4887, %v4888
    %v4890 = vand.u32 %v4889, 4294901760
    %4891 = vmatpush1.msra.mxu0 %v4890
    %4892 = vmatprep.subr.mxu0 0.0
    %v4893 = vand.u32 %v680, 4294901760
    %v4894 = vsub.f32 %v680, %v4893
    %v4895 = vand.u32 %v4894, 4294901760
    %v4896 = vsub.f32 %v4894, %v4895
    %v4897 = vand.u32 %v4896, 4294901760
    %4898 = vmatpush1.msra.mxu0 %v4897
    %4899 = vmatprep.subr.mxu0 0.0
    %v4900 = vand.u32 %v679, 4294901760
    %v4901 = vsub.f32 %v679, %v4900
    %v4902 = vand.u32 %v4901, 4294901760
    %v4903 = vsub.f32 %v4901, %v4902
    %v4904 = vand.u32 %v4903, 4294901760
    %4905 = vmatpush1.msra.mxu0 %v4904
    %4906 = vmatprep.subr.mxu0 0.0
    %v4907 = vand.u32 %v678, 4294901760
    %v4908 = vsub.f32 %v678, %v4907
    %v4909 = vand.u32 %v4908, 4294901760
    %v4910 = vsub.f32 %v4908, %v4909
    %v4911 = vand.u32 %v4910, 4294901760
    %4912 = vmatpush1.msra.mxu0 %v4911
    %4913 = vmatprep.subr.mxu0 0.0
    %v4914 = vand.u32 %v677, 4294901760
    %v4915 = vsub.f32 %v677, %v4914
    %v4916 = vand.u32 %v4915, 4294901760
    %v4917 = vsub.f32 %v4915, %v4916
    %v4918 = vand.u32 %v4917, 4294901760
    %4919 = vmatpush1.msra.mxu0 %v4918
    %4920 = vmatprep.subr.mxu0 0.0
    %v4921 = vand.u32 %v676, 4294901760
    %v4922 = vsub.f32 %v676, %v4921
    %v4923 = vand.u32 %v4922, 4294901760
    %v4924 = vsub.f32 %v4922, %v4923
    %v4925 = vand.u32 %v4924, 4294901760
    %4926 = vmatpush1.msra.mxu0 %v4925
    %4927 = vmatprep.subr.mxu0 0.0
    %v4928 = vand.u32 %v675, 4294901760
    %v4929 = vsub.f32 %v675, %v4928
    %v4930 = vand.u32 %v4929, 4294901760
    %v4931 = vsub.f32 %v4929, %v4930
    %v4932 = vand.u32 %v4931, 4294901760
    %4933 = vmatpush1.msra.mxu0 %v4932
    %4934 = vmatprep.subr.mxu0 0.0
    %v4935 = vand.u32 %v706, 4294901760
    %v4936 = vsub.f32 %v706, %v4935
    %v4937 = vand.u32 %v4936, 4294901760
    %v4938 = vsub.f32 %v4936, %v4937
    %v4939 = vand.u32 %v4938, 4294901760
    %4940 = vmatpush2.msra.mxu0 %v4939
    %4941 = vmatprep.subr.mxu0 0.0
    %v4942 = vand.u32 %v705, 4294901760
    %v4943 = vsub.f32 %v705, %v4942
    %v4944 = vand.u32 %v4943, 4294901760
    %v4945 = vsub.f32 %v4943, %v4944
    %v4946 = vand.u32 %v4945, 4294901760
    %4947 = vmatpush2.msra.mxu0 %v4946
    %4948 = vmatprep.subr.mxu0 0.0
    %v4949 = vand.u32 %v704, 4294901760
    %v4950 = vsub.f32 %v704, %v4949
    %v4951 = vand.u32 %v4950, 4294901760
    %v4952 = vsub.f32 %v4950, %v4951
    %v4953 = vand.u32 %v4952, 4294901760
    %4954 = vmatpush2.msra.mxu0 %v4953
    %4955 = vmatprep.subr.mxu0 0.0
    %v4956 = vand.u32 %v703, 4294901760
    %v4957 = vsub.f32 %v703, %v4956
    %v4958 = vand.u32 %v4957, 4294901760
    %v4959 = vsub.f32 %v4957, %v4958
    %v4960 = vand.u32 %v4959, 4294901760
    %4961 = vmatpush2.msra.mxu0 %v4960
    %4962 = vmatprep.subr.mxu0 0.0
    %v4963 = vand.u32 %v702, 4294901760
    %v4964 = vsub.f32 %v702, %v4963
    %v4965 = vand.u32 %v4964, 4294901760
    %v4966 = vsub.f32 %v4964, %v4965
    %v4967 = vand.u32 %v4966, 4294901760
    %4968 = vmatpush2.msra.mxu0 %v4967
    %4969 = vmatprep.subr.mxu0 0.0
    %v4970 = vand.u32 %v701, 4294901760
    %v4971 = vsub.f32 %v701, %v4970
    %v4972 = vand.u32 %v4971, 4294901760
    %v4973 = vsub.f32 %v4971, %v4972
    %v4974 = vand.u32 %v4973, 4294901760
    %4975 = vmatpush2.msra.mxu0 %v4974
    %4976 = vmatprep.subr.mxu0 0.0
    %v4977 = vand.u32 %v700, 4294901760
    %v4978 = vsub.f32 %v700, %v4977
    %v4979 = vand.u32 %v4978, 4294901760
    %v4980 = vsub.f32 %v4978, %v4979
    %v4981 = vand.u32 %v4980, 4294901760
    %4982 = vmatpush2.msra.mxu0 %v4981
    %4983 = vmatprep.subr.mxu0 0.0
    %v4984 = vand.u32 %v699, 4294901760
    %v4985 = vsub.f32 %v699, %v4984
    %v4986 = vand.u32 %v4985, 4294901760
    %v4987 = vsub.f32 %v4985, %v4986
    %v4988 = vand.u32 %v4987, 4294901760
    %4989 = vmatpush2.msra.mxu0 %v4988
    %4990 = vmatprep.subr.mxu0 0.0
    %v4991 = vand.u32 %v698, 4294901760
    %v4992 = vsub.f32 %v698, %v4991
    %v4993 = vand.u32 %v4992, 4294901760
    %v4994 = vsub.f32 %v4992, %v4993
    %v4995 = vand.u32 %v4994, 4294901760
    %4996 = vmatpush2.msra.mxu0 %v4995
    %4997 = vmatprep.subr.mxu0 0.0
    %v4998 = vand.u32 %v697, 4294901760
    %v4999 = vsub.f32 %v697, %v4998
    %v5000 = vand.u32 %v4999, 4294901760
    %v5001 = vsub.f32 %v4999, %v5000
    %v5002 = vand.u32 %v5001, 4294901760
    %5003 = vmatpush2.msra.mxu0 %v5002
    %5004 = vmatprep.subr.mxu0 0.0
    %v5005 = vand.u32 %v696, 4294901760
    %v5006 = vsub.f32 %v696, %v5005
    %v5007 = vand.u32 %v5006, 4294901760
    %v5008 = vsub.f32 %v5006, %v5007
    %v5009 = vand.u32 %v5008, 4294901760
    %5010 = vmatpush2.msra.mxu0 %v5009
    %5011 = vmatprep.subr.mxu0 0.0
    %v5012 = vand.u32 %v695, 4294901760
    %v5013 = vsub.f32 %v695, %v5012
    %v5014 = vand.u32 %v5013, 4294901760
    %v5015 = vsub.f32 %v5013, %v5014
    %v5016 = vand.u32 %v5015, 4294901760
    %5017 = vmatpush2.msra.mxu0 %v5016
    %5018 = vmatprep.subr.mxu0 0.0
    %v5019 = vand.u32 %v694, 4294901760
    %v5020 = vsub.f32 %v694, %v5019
    %v5021 = vand.u32 %v5020, 4294901760
    %v5022 = vsub.f32 %v5020, %v5021
    %v5023 = vand.u32 %v5022, 4294901760
    %5024 = vmatpush2.msra.mxu0 %v5023
    %5025 = vmatprep.subr.mxu0 0.0
    %v5026 = vand.u32 %v693, 4294901760
    %v5027 = vsub.f32 %v693, %v5026
    %v5028 = vand.u32 %v5027, 4294901760
    %v5029 = vsub.f32 %v5027, %v5028
    %v5030 = vand.u32 %v5029, 4294901760
    %5031 = vmatpush2.msra.mxu0 %v5030
    %5032 = vmatprep.subr.mxu0 0.0
    %v5033 = vand.u32 %v692, 4294901760
    %v5034 = vsub.f32 %v692, %v5033
    %v5035 = vand.u32 %v5034, 4294901760
    %v5036 = vsub.f32 %v5034, %v5035
    %v5037 = vand.u32 %v5036, 4294901760
    %5038 = vmatpush2.msra.mxu0 %v5037
    %5039 = vmatprep.subr.mxu0 0.0
    %v5040 = vand.u32 %v691, 4294901760
    %v5041 = vsub.f32 %v691, %v5040
    %v5042 = vand.u32 %v5041, 4294901760
    %v5043 = vsub.f32 %v5041, %v5042
    %v5044 = vand.u32 %v5043, 4294901760
    %5045 = vmatpush2.msra.mxu0 %v5044
    %v5046 = vand.u32 %v762, 4294901760
    %5047 = vmatprep.mubr.f32.mxu0 %v5046
    %v5048 = vand.u32 %v761, 4294901760
    %5049 = vmatmul.mubr.f32.gmra.mxu0 %v5048
    %v5050 = vpop.f32.mrf.mxu0
    %v5051 = vadd.f32 %v4714, %v5050
    %v5052 = vpop.f32.mrf.mxu0
    %v5053 = vand.u32 %v773, 4294901760
    %5054 = vmatprep.mubr.f32.mxu0 %v5053
    %v5055 = vand.u32 %v772, 4294901760
    %5056 = vmatmul.mubr.f32.gmra.mxu0 %v5055
    %v5057 = vpop.f32.mrf.mxu0
    %v5058 = vadd.f32 %v4729, %v5057
    %v5059 = vpop.f32.mrf.mxu0
    %v5060 = vand.u32 %v784, 4294901760
    %5061 = vmatprep.mubr.f32.mxu0 %v5060
    %v5062 = vand.u32 %v783, 4294901760
    %5063 = vmatmul.mubr.f32.gmra.mxu0 %v5062
    %v5064 = vpop.f32.mrf.mxu0
    %v5065 = vadd.f32 %v4744, %v5064
    %v5066 = vpop.f32.mrf.mxu0
    %v5067 = vand.u32 %v795, 4294901760
    %5068 = vmatprep.mubr.f32.mxu0 %v5067
    %v5069 = vand.u32 %v794, 4294901760
    %5070 = vmatmul.mubr.f32.gmra.mxu0 %v5069
    %v5071 = vpop.f32.mrf.mxu0
    %v5072 = vadd.f32 %v4759, %v5071
    %v5073 = vpop.f32.mrf.mxu0
    %v5074 = vand.u32 %v806, 4294901760
    %5075 = vmatprep.mubr.f32.mxu0 %v5074
    %v5076 = vand.u32 %v805, 4294901760
    %5077 = vmatmul.mubr.f32.gmra.mxu0 %v5076
    %v5078 = vpop.f32.mrf.mxu0
    %v5079 = vadd.f32 %v4774, %v5078
    %v5080 = vpop.f32.mrf.mxu0
    %v5081 = vand.u32 %v817, 4294901760
    %5082 = vmatprep.mubr.f32.mxu0 %v5081
    %v5083 = vand.u32 %v816, 4294901760
    %5084 = vmatmul.mubr.f32.gmra.mxu0 %v5083
    %v5085 = vpop.f32.mrf.mxu0
    %v5086 = vadd.f32 %v4789, %v5085
    %v5087 = vpop.f32.mrf.mxu0
    %v5088 = vand.u32 %v828, 4294901760
    %5089 = vmatprep.mubr.f32.mxu0 %v5088
    %v5090 = vand.u32 %v827, 4294901760
    %5091 = vmatmul.mubr.f32.gmra.mxu0 %v5090
    %v5092 = vpop.f32.mrf.mxu0
    %v5093 = vadd.f32 %v4804, %v5092
    %v5094 = vpop.f32.mrf.mxu0
    %v5095 = vand.u32 %v839, 4294901760
    %5096 = vmatprep.mubr.f32.mxu0 %v5095
    %v5097 = vand.u32 %v838, 4294901760
    %5098 = vmatmul.mubr.f32.gmra.mxu0 %v5097
    %v5099 = vpop.f32.mrf.mxu0
    %v5100 = vadd.f32 %v4819, %v5099
    %v5101 = vpop.f32.mrf.mxu0
    %5102 = vdwg.mxu0
    %5103 = vmatprep.subr.mxu0 0.0
    %v5104 = vand.u32 %v690, 4294901760
    %v5105 = vsub.f32 %v690, %v5104
    %5106 = vmatpush1.msra.mxu0 %v5105
    %5107 = vmatprep.subr.mxu0 0.0
    %v5108 = vand.u32 %v689, 4294901760
    %v5109 = vsub.f32 %v689, %v5108
    %5110 = vmatpush1.msra.mxu0 %v5109
    %5111 = vmatprep.subr.mxu0 0.0
    %v5112 = vand.u32 %v688, 4294901760
    %v5113 = vsub.f32 %v688, %v5112
    %5114 = vmatpush1.msra.mxu0 %v5113
    %5115 = vmatprep.subr.mxu0 0.0
    %v5116 = vand.u32 %v687, 4294901760
    %v5117 = vsub.f32 %v687, %v5116
    %5118 = vmatpush1.msra.mxu0 %v5117
    %5119 = vmatprep.subr.mxu0 0.0
    %v5120 = vand.u32 %v686, 4294901760
    %v5121 = vsub.f32 %v686, %v5120
    %5122 = vmatpush1.msra.mxu0 %v5121
    %5123 = vmatprep.subr.mxu0 0.0
    %v5124 = vand.u32 %v685, 4294901760
    %v5125 = vsub.f32 %v685, %v5124
    %5126 = vmatpush1.msra.mxu0 %v5125
    %5127 = vmatprep.subr.mxu0 0.0
    %v5128 = vand.u32 %v684, 4294901760
    %v5129 = vsub.f32 %v684, %v5128
    %5130 = vmatpush1.msra.mxu0 %v5129
    %5131 = vmatprep.subr.mxu0 0.0
    %v5132 = vand.u32 %v683, 4294901760
    %v5133 = vsub.f32 %v683, %v5132
    %5134 = vmatpush1.msra.mxu0 %v5133
    %5135 = vmatprep.subr.mxu0 0.0
    %v5136 = vand.u32 %v682, 4294901760
    %v5137 = vsub.f32 %v682, %v5136
    %5138 = vmatpush1.msra.mxu0 %v5137
    %5139 = vmatprep.subr.mxu0 0.0
    %v5140 = vand.u32 %v681, 4294901760
    %v5141 = vsub.f32 %v681, %v5140
    %5142 = vmatpush1.msra.mxu0 %v5141
    %5143 = vmatprep.subr.mxu0 0.0
    %v5144 = vand.u32 %v680, 4294901760
    %v5145 = vsub.f32 %v680, %v5144
    %5146 = vmatpush1.msra.mxu0 %v5145
    %5147 = vmatprep.subr.mxu0 0.0
    %v5148 = vand.u32 %v679, 4294901760
    %v5149 = vsub.f32 %v679, %v5148
    %5150 = vmatpush1.msra.mxu0 %v5149
    %5151 = vmatprep.subr.mxu0 0.0
    %v5152 = vand.u32 %v678, 4294901760
    %v5153 = vsub.f32 %v678, %v5152
    %5154 = vmatpush1.msra.mxu0 %v5153
    %5155 = vmatprep.subr.mxu0 0.0
    %v5156 = vand.u32 %v677, 4294901760
    %v5157 = vsub.f32 %v677, %v5156
    %5158 = vmatpush1.msra.mxu0 %v5157
    %5159 = vmatprep.subr.mxu0 0.0
    %v5160 = vand.u32 %v676, 4294901760
    %v5161 = vsub.f32 %v676, %v5160
    %5162 = vmatpush1.msra.mxu0 %v5161
    %5163 = vmatprep.subr.mxu0 0.0
    %v5164 = vand.u32 %v675, 4294901760
    %v5165 = vsub.f32 %v675, %v5164
    %5166 = vmatpush1.msra.mxu0 %v5165
    %5167 = vmatprep.subr.mxu0 0.0
    %v5168 = vand.u32 %v706, 4294901760
    %v5169 = vsub.f32 %v706, %v5168
    %5170 = vmatpush2.msra.mxu0 %v5169
    %5171 = vmatprep.subr.mxu0 0.0
    %v5172 = vand.u32 %v705, 4294901760
    %v5173 = vsub.f32 %v705, %v5172
    %5174 = vmatpush2.msra.mxu0 %v5173
    %5175 = vmatprep.subr.mxu0 0.0
    %v5176 = vand.u32 %v704, 4294901760
    %v5177 = vsub.f32 %v704, %v5176
    %5178 = vmatpush2.msra.mxu0 %v5177
    %5179 = vmatprep.subr.mxu0 0.0
    %v5180 = vand.u32 %v703, 4294901760
    %v5181 = vsub.f32 %v703, %v5180
    %5182 = vmatpush2.msra.mxu0 %v5181
    %5183 = vmatprep.subr.mxu0 0.0
    %v5184 = vand.u32 %v702, 4294901760
    %v5185 = vsub.f32 %v702, %v5184
    %5186 = vmatpush2.msra.mxu0 %v5185
    %5187 = vmatprep.subr.mxu0 0.0
    %v5188 = vand.u32 %v701, 4294901760
    %v5189 = vsub.f32 %v701, %v5188
    %5190 = vmatpush2.msra.mxu0 %v5189
    %5191 = vmatprep.subr.mxu0 0.0
    %v5192 = vand.u32 %v700, 4294901760
    %v5193 = vsub.f32 %v700, %v5192
    %5194 = vmatpush2.msra.mxu0 %v5193
    %5195 = vmatprep.subr.mxu0 0.0
    %v5196 = vand.u32 %v699, 4294901760
    %v5197 = vsub.f32 %v699, %v5196
    %5198 = vmatpush2.msra.mxu0 %v5197
    %5199 = vmatprep.subr.mxu0 0.0
    %v5200 = vand.u32 %v698, 4294901760
    %v5201 = vsub.f32 %v698, %v5200
    %5202 = vmatpush2.msra.mxu0 %v5201
    %5203 = vmatprep.subr.mxu0 0.0
    %v5204 = vand.u32 %v697, 4294901760
    %v5205 = vsub.f32 %v697, %v5204
    %5206 = vmatpush2.msra.mxu0 %v5205
    %5207 = vmatprep.subr.mxu0 0.0
    %v5208 = vand.u32 %v696, 4294901760
    %v5209 = vsub.f32 %v696, %v5208
    %5210 = vmatpush2.msra.mxu0 %v5209
    %5211 = vmatprep.subr.mxu0 0.0
    %v5212 = vand.u32 %v695, 4294901760
    %v5213 = vsub.f32 %v695, %v5212
    %5214 = vmatpush2.msra.mxu0 %v5213
    %5215 = vmatprep.subr.mxu0 0.0
    %v5216 = vand.u32 %v694, 4294901760
    %v5217 = vsub.f32 %v694, %v5216
    %5218 = vmatpush2.msra.mxu0 %v5217
    %5219 = vmatprep.subr.mxu0 0.0
    %v5220 = vand.u32 %v693, 4294901760
    %v5221 = vsub.f32 %v693, %v5220
    %5222 = vmatpush2.msra.mxu0 %v5221
    %5223 = vmatprep.subr.mxu0 0.0
    %v5224 = vand.u32 %v692, 4294901760
    %v5225 = vsub.f32 %v692, %v5224
    %5226 = vmatpush2.msra.mxu0 %v5225
    %5227 = vmatprep.subr.mxu0 0.0
    %v5228 = vand.u32 %v691, 4294901760
    %v5229 = vsub.f32 %v691, %v5228
    %5230 = vmatpush2.msra.mxu0 %v5229
    %v5231 = vand.u32 %v762, 4294901760
    %v5232 = vsub.f32 %v762, %v5231
    %5233 = vmatprep.mubr.f32.mxu0 %v5232
    %v5234 = vand.u32 %v761, 4294901760
    %v5235 = vsub.f32 %v761, %v5234
    %5236 = vmatmul.mubr.f32.gmra.mxu0 %v5235
    %v5237 = vpop.f32.mrf.mxu0
    %v5238 = vadd.f32 %v5051, %v5237
    %v5239 = vpop.f32.mrf.mxu0
    %v5240 = vand.u32 %v773, 4294901760
    %v5241 = vsub.f32 %v773, %v5240
    %5242 = vmatprep.mubr.f32.mxu0 %v5241
    %v5243 = vand.u32 %v772, 4294901760
    %v5244 = vsub.f32 %v772, %v5243
    %5245 = vmatmul.mubr.f32.gmra.mxu0 %v5244
    %v5246 = vpop.f32.mrf.mxu0
    %v5247 = vadd.f32 %v5058, %v5246
    %v5248 = vpop.f32.mrf.mxu0
    %v5249 = vand.u32 %v784, 4294901760
    %v5250 = vsub.f32 %v784, %v5249
    %5251 = vmatprep.mubr.f32.mxu0 %v5250
    %v5252 = vand.u32 %v783, 4294901760
    %v5253 = vsub.f32 %v783, %v5252
    %5254 = vmatmul.mubr.f32.gmra.mxu0 %v5253
    %v5255 = vpop.f32.mrf.mxu0
    %v5256 = vadd.f32 %v5065, %v5255
    %v5257 = vpop.f32.mrf.mxu0
    %v5258 = vand.u32 %v795, 4294901760
    %v5259 = vsub.f32 %v795, %v5258
    %5260 = vmatprep.mubr.f32.mxu0 %v5259
    %v5261 = vand.u32 %v794, 4294901760
    %v5262 = vsub.f32 %v794, %v5261
    %5263 = vmatmul.mubr.f32.gmra.mxu0 %v5262
    %v5264 = vpop.f32.mrf.mxu0
    %v5265 = vadd.f32 %v5072, %v5264
    %v5266 = vpop.f32.mrf.mxu0
    %v5267 = vand.u32 %v806, 4294901760
    %v5268 = vsub.f32 %v806, %v5267
    %5269 = vmatprep.mubr.f32.mxu0 %v5268
    %v5270 = vand.u32 %v805, 4294901760
    %v5271 = vsub.f32 %v805, %v5270
    %5272 = vmatmul.mubr.f32.gmra.mxu0 %v5271
    %v5273 = vpop.f32.mrf.mxu0
    %v5274 = vadd.f32 %v5079, %v5273
    %v5275 = vpop.f32.mrf.mxu0
    %v5276 = vand.u32 %v817, 4294901760
    %v5277 = vsub.f32 %v817, %v5276
    %5278 = vmatprep.mubr.f32.mxu0 %v5277
    %v5279 = vand.u32 %v816, 4294901760
    %v5280 = vsub.f32 %v816, %v5279
    %5281 = vmatmul.mubr.f32.gmra.mxu0 %v5280
    %v5282 = vpop.f32.mrf.mxu0
    %v5283 = vadd.f32 %v5086, %v5282
    %v5284 = vpop.f32.mrf.mxu0
    %v5285 = vand.u32 %v828, 4294901760
    %v5286 = vsub.f32 %v828, %v5285
    %5287 = vmatprep.mubr.f32.mxu0 %v5286
    %v5288 = vand.u32 %v827, 4294901760
    %v5289 = vsub.f32 %v827, %v5288
    %5290 = vmatmul.mubr.f32.gmra.mxu0 %v5289
    %v5291 = vpop.f32.mrf.mxu0
    %v5292 = vadd.f32 %v5093, %v5291
    %v5293 = vpop.f32.mrf.mxu0
    %v5294 = vand.u32 %v839, 4294901760
    %v5295 = vsub.f32 %v839, %v5294
    %5296 = vmatprep.mubr.f32.mxu0 %v5295
    %v5297 = vand.u32 %v838, 4294901760
    %v5298 = vsub.f32 %v838, %v5297
    %5299 = vmatmul.mubr.f32.gmra.mxu0 %v5298
    %v5300 = vpop.f32.mrf.mxu0
    %v5301 = vadd.f32 %v5100, %v5300
    %v5302 = vpop.f32.mrf.mxu0
    %5303 = vdwg.mxu0
    %5304 = vmatprep.subr.mxu0 0.0
    %v5305 = vand.u32 %v690, 4294901760
    %5306 = vmatpush1.msra.mxu0 %v5305
    %5307 = vmatprep.subr.mxu0 0.0
    %v5308 = vand.u32 %v689, 4294901760
    %5309 = vmatpush1.msra.mxu0 %v5308
    %5310 = vmatprep.subr.mxu0 0.0
    %v5311 = vand.u32 %v688, 4294901760
    %5312 = vmatpush1.msra.mxu0 %v5311
    %5313 = vmatprep.subr.mxu0 0.0
    %v5314 = vand.u32 %v687, 4294901760
    %5315 = vmatpush1.msra.mxu0 %v5314
    %5316 = vmatprep.subr.mxu0 0.0
    %v5317 = vand.u32 %v686, 4294901760
    %5318 = vmatpush1.msra.mxu0 %v5317
    %5319 = vmatprep.subr.mxu0 0.0
    %v5320 = vand.u32 %v685, 4294901760
    %5321 = vmatpush1.msra.mxu0 %v5320
    %5322 = vmatprep.subr.mxu0 0.0
    %v5323 = vand.u32 %v684, 4294901760
    %5324 = vmatpush1.msra.mxu0 %v5323
    %5325 = vmatprep.subr.mxu0 0.0
    %v5326 = vand.u32 %v683, 4294901760
    %5327 = vmatpush1.msra.mxu0 %v5326
    %5328 = vmatprep.subr.mxu0 0.0
    %v5329 = vand.u32 %v682, 4294901760
    %5330 = vmatpush1.msra.mxu0 %v5329
    %5331 = vmatprep.subr.mxu0 0.0
    %v5332 = vand.u32 %v681, 4294901760
    %5333 = vmatpush1.msra.mxu0 %v5332
    %5334 = vmatprep.subr.mxu0 0.0
    %v5335 = vand.u32 %v680, 4294901760
    %5336 = vmatpush1.msra.mxu0 %v5335
    %5337 = vmatprep.subr.mxu0 0.0
    %v5338 = vand.u32 %v679, 4294901760
    %5339 = vmatpush1.msra.mxu0 %v5338
    %5340 = vmatprep.subr.mxu0 0.0
    %v5341 = vand.u32 %v678, 4294901760
    %5342 = vmatpush1.msra.mxu0 %v5341
    %5343 = vmatprep.subr.mxu0 0.0
    %v5344 = vand.u32 %v677, 4294901760
    %5345 = vmatpush1.msra.mxu0 %v5344
    %5346 = vmatprep.subr.mxu0 0.0
    %v5347 = vand.u32 %v676, 4294901760
    %5348 = vmatpush1.msra.mxu0 %v5347
    %5349 = vmatprep.subr.mxu0 0.0
    %v5350 = vand.u32 %v675, 4294901760
    %5351 = vmatpush1.msra.mxu0 %v5350
    %5352 = vmatprep.subr.mxu0 0.0
    %v5353 = vand.u32 %v706, 4294901760
    %5354 = vmatpush2.msra.mxu0 %v5353
    %5355 = vmatprep.subr.mxu0 0.0
    %v5356 = vand.u32 %v705, 4294901760
    %5357 = vmatpush2.msra.mxu0 %v5356
    %5358 = vmatprep.subr.mxu0 0.0
    %v5359 = vand.u32 %v704, 4294901760
    %5360 = vmatpush2.msra.mxu0 %v5359
    %5361 = vmatprep.subr.mxu0 0.0
    %v5362 = vand.u32 %v703, 4294901760
    %5363 = vmatpush2.msra.mxu0 %v5362
    %5364 = vmatprep.subr.mxu0 0.0
    %v5365 = vand.u32 %v702, 4294901760
    %5366 = vmatpush2.msra.mxu0 %v5365
    %5367 = vmatprep.subr.mxu0 0.0
    %v5368 = vand.u32 %v701, 4294901760
    %5369 = vmatpush2.msra.mxu0 %v5368
    %5370 = vmatprep.subr.mxu0 0.0
    %v5371 = vand.u32 %v700, 4294901760
    %5372 = vmatpush2.msra.mxu0 %v5371
    %5373 = vmatprep.subr.mxu0 0.0
    %v5374 = vand.u32 %v699, 4294901760
    %5375 = vmatpush2.msra.mxu0 %v5374
    %5376 = vmatprep.subr.mxu0 0.0
    %v5377 = vand.u32 %v698, 4294901760
    %5378 = vmatpush2.msra.mxu0 %v5377
    %5379 = vmatprep.subr.mxu0 0.0
    %v5380 = vand.u32 %v697, 4294901760
    %5381 = vmatpush2.msra.mxu0 %v5380
    %5382 = vmatprep.subr.mxu0 0.0
    %v5383 = vand.u32 %v696, 4294901760
    %5384 = vmatpush2.msra.mxu0 %v5383
    %5385 = vmatprep.subr.mxu0 0.0
    %v5386 = vand.u32 %v695, 4294901760
    %5387 = vmatpush2.msra.mxu0 %v5386
    %5388 = vmatprep.subr.mxu0 0.0
    %v5389 = vand.u32 %v694, 4294901760
    %5390 = vmatpush2.msra.mxu0 %v5389
    %5391 = vmatprep.subr.mxu0 0.0
    %v5392 = vand.u32 %v693, 4294901760
    %5393 = vmatpush2.msra.mxu0 %v5392
    %5394 = vmatprep.subr.mxu0 0.0
    %v5395 = vand.u32 %v692, 4294901760
    %5396 = vmatpush2.msra.mxu0 %v5395
    %5397 = vmatprep.subr.mxu0 0.0
    %v5398 = vand.u32 %v691, 4294901760
    %5399 = vmatpush2.msra.mxu0 %v5398
    %v5400 = vand.u32 %v762, 4294901760
    %v5401 = vsub.f32 %v762, %v5400
    %v5402 = vand.u32 %v5401, 4294901760
    %5403 = vmatprep.mubr.f32.mxu0 %v5402
    %v5404 = vand.u32 %v761, 4294901760
    %v5405 = vsub.f32 %v761, %v5404
    %v5406 = vand.u32 %v5405, 4294901760
    %5407 = vmatmul.mubr.f32.gmra.mxu0 %v5406
    %v5408 = vpop.f32.mrf.mxu0
    %v5409 = vadd.f32 %v5238, %v5408
    %v5410 = vpop.f32.mrf.mxu0
    %v5411 = vand.u32 %v773, 4294901760
    %v5412 = vsub.f32 %v773, %v5411
    %v5413 = vand.u32 %v5412, 4294901760
    %5414 = vmatprep.mubr.f32.mxu0 %v5413
    %v5415 = vand.u32 %v772, 4294901760
    %v5416 = vsub.f32 %v772, %v5415
    %v5417 = vand.u32 %v5416, 4294901760
    %5418 = vmatmul.mubr.f32.gmra.mxu0 %v5417
    %v5419 = vpop.f32.mrf.mxu0
    %v5420 = vadd.f32 %v5247, %v5419
    %v5421 = vpop.f32.mrf.mxu0
    %v5422 = vand.u32 %v784, 4294901760
    %v5423 = vsub.f32 %v784, %v5422
    %v5424 = vand.u32 %v5423, 4294901760
    %5425 = vmatprep.mubr.f32.mxu0 %v5424
    %v5426 = vand.u32 %v783, 4294901760
    %v5427 = vsub.f32 %v783, %v5426
    %v5428 = vand.u32 %v5427, 4294901760
    %5429 = vmatmul.mubr.f32.gmra.mxu0 %v5428
    %v5430 = vpop.f32.mrf.mxu0
    %v5431 = vadd.f32 %v5256, %v5430
    %v5432 = vpop.f32.mrf.mxu0
    %v5433 = vand.u32 %v795, 4294901760
    %v5434 = vsub.f32 %v795, %v5433
    %v5435 = vand.u32 %v5434, 4294901760
    %5436 = vmatprep.mubr.f32.mxu0 %v5435
    %v5437 = vand.u32 %v794, 4294901760
    %v5438 = vsub.f32 %v794, %v5437
    %v5439 = vand.u32 %v5438, 4294901760
    %5440 = vmatmul.mubr.f32.gmra.mxu0 %v5439
    %v5441 = vpop.f32.mrf.mxu0
    %v5442 = vadd.f32 %v5265, %v5441
    %v5443 = vpop.f32.mrf.mxu0
    %v5444 = vand.u32 %v806, 4294901760
    %v5445 = vsub.f32 %v806, %v5444
    %v5446 = vand.u32 %v5445, 4294901760
    %5447 = vmatprep.mubr.f32.mxu0 %v5446
    %v5448 = vand.u32 %v805, 4294901760
    %v5449 = vsub.f32 %v805, %v5448
    %v5450 = vand.u32 %v5449, 4294901760
    %5451 = vmatmul.mubr.f32.gmra.mxu0 %v5450
    %v5452 = vpop.f32.mrf.mxu0
    %v5453 = vadd.f32 %v5274, %v5452
    %v5454 = vpop.f32.mrf.mxu0
    %v5455 = vand.u32 %v817, 4294901760
    %v5456 = vsub.f32 %v817, %v5455
    %v5457 = vand.u32 %v5456, 4294901760
    %5458 = vmatprep.mubr.f32.mxu0 %v5457
    %v5459 = vand.u32 %v816, 4294901760
    %v5460 = vsub.f32 %v816, %v5459
    %v5461 = vand.u32 %v5460, 4294901760
    %5462 = vmatmul.mubr.f32.gmra.mxu0 %v5461
    %v5463 = vpop.f32.mrf.mxu0
    %v5464 = vadd.f32 %v5283, %v5463
    %v5465 = vpop.f32.mrf.mxu0
    %v5466 = vand.u32 %v828, 4294901760
    %v5467 = vsub.f32 %v828, %v5466
    %v5468 = vand.u32 %v5467, 4294901760
    %5469 = vmatprep.mubr.f32.mxu0 %v5468
    %v5470 = vand.u32 %v827, 4294901760
    %v5471 = vsub.f32 %v827, %v5470
    %v5472 = vand.u32 %v5471, 4294901760
    %5473 = vmatmul.mubr.f32.gmra.mxu0 %v5472
    %v5474 = vpop.f32.mrf.mxu0
    %v5475 = vadd.f32 %v5292, %v5474
    %v5476 = vpop.f32.mrf.mxu0
    %v5477 = vand.u32 %v839, 4294901760
    %v5478 = vsub.f32 %v839, %v5477
    %v5479 = vand.u32 %v5478, 4294901760
    %5480 = vmatprep.mubr.f32.mxu0 %v5479
    %v5481 = vand.u32 %v838, 4294901760
    %v5482 = vsub.f32 %v838, %v5481
    %v5483 = vand.u32 %v5482, 4294901760
    %5484 = vmatmul.mubr.f32.gmra.mxu0 %v5483
    %v5485 = vpop.f32.mrf.mxu0
    %v5486 = vadd.f32 %v5301, %v5485
    %v5487 = vpop.f32.mrf.mxu0
    %5488 = vdwg.mxu0
    %5489 = vmatprep.subr.mxu0 0.0
    %v5490 = vand.u32 %v690, 4294901760
    %v5491 = vsub.f32 %v690, %v5490
    %v5492 = vand.u32 %v5491, 4294901760
    %5493 = vmatpush1.msra.mxu0 %v5492
    %5494 = vmatprep.subr.mxu0 0.0
    %v5495 = vand.u32 %v689, 4294901760
    %v5496 = vsub.f32 %v689, %v5495
    %v5497 = vand.u32 %v5496, 4294901760
    %5498 = vmatpush1.msra.mxu0 %v5497
    %5499 = vmatprep.subr.mxu0 0.0
    %v5500 = vand.u32 %v688, 4294901760
    %v5501 = vsub.f32 %v688, %v5500
    %v5502 = vand.u32 %v5501, 4294901760
    %5503 = vmatpush1.msra.mxu0 %v5502
    %5504 = vmatprep.subr.mxu0 0.0
    %v5505 = vand.u32 %v687, 4294901760
    %v5506 = vsub.f32 %v687, %v5505
    %v5507 = vand.u32 %v5506, 4294901760
    %5508 = vmatpush1.msra.mxu0 %v5507
    %5509 = vmatprep.subr.mxu0 0.0
    %v5510 = vand.u32 %v686, 4294901760
    %v5511 = vsub.f32 %v686, %v5510
    %v5512 = vand.u32 %v5511, 4294901760
    %5513 = vmatpush1.msra.mxu0 %v5512
    %5514 = vmatprep.subr.mxu0 0.0
    %v5515 = vand.u32 %v685, 4294901760
    %v5516 = vsub.f32 %v685, %v5515
    %v5517 = vand.u32 %v5516, 4294901760
    %5518 = vmatpush1.msra.mxu0 %v5517
    %5519 = vmatprep.subr.mxu0 0.0
    %v5520 = vand.u32 %v684, 4294901760
    %v5521 = vsub.f32 %v684, %v5520
    %v5522 = vand.u32 %v5521, 4294901760
    %5523 = vmatpush1.msra.mxu0 %v5522
    %5524 = vmatprep.subr.mxu0 0.0
    %v5525 = vand.u32 %v683, 4294901760
    %v5526 = vsub.f32 %v683, %v5525
    %v5527 = vand.u32 %v5526, 4294901760
    %5528 = vmatpush1.msra.mxu0 %v5527
    %5529 = vmatprep.subr.mxu0 0.0
    %v5530 = vand.u32 %v682, 4294901760
    %v5531 = vsub.f32 %v682, %v5530
    %v5532 = vand.u32 %v5531, 4294901760
    %5533 = vmatpush1.msra.mxu0 %v5532
    %5534 = vmatprep.subr.mxu0 0.0
    %v5535 = vand.u32 %v681, 4294901760
    %v5536 = vsub.f32 %v681, %v5535
    %v5537 = vand.u32 %v5536, 4294901760
    %5538 = vmatpush1.msra.mxu0 %v5537
    %5539 = vmatprep.subr.mxu0 0.0
    %v5540 = vand.u32 %v680, 4294901760
    %v5541 = vsub.f32 %v680, %v5540
    %v5542 = vand.u32 %v5541, 4294901760
    %5543 = vmatpush1.msra.mxu0 %v5542
    %5544 = vmatprep.subr.mxu0 0.0
    %v5545 = vand.u32 %v679, 4294901760
    %v5546 = vsub.f32 %v679, %v5545
    %v5547 = vand.u32 %v5546, 4294901760
    %5548 = vmatpush1.msra.mxu0 %v5547
    %5549 = vmatprep.subr.mxu0 0.0
    %v5550 = vand.u32 %v678, 4294901760
    %v5551 = vsub.f32 %v678, %v5550
    %v5552 = vand.u32 %v5551, 4294901760
    %5553 = vmatpush1.msra.mxu0 %v5552
    %5554 = vmatprep.subr.mxu0 0.0
    %v5555 = vand.u32 %v677, 4294901760
    %v5556 = vsub.f32 %v677, %v5555
    %v5557 = vand.u32 %v5556, 4294901760
    %5558 = vmatpush1.msra.mxu0 %v5557
    %5559 = vmatprep.subr.mxu0 0.0
    %v5560 = vand.u32 %v676, 4294901760
    %v5561 = vsub.f32 %v676, %v5560
    %v5562 = vand.u32 %v5561, 4294901760
    %5563 = vmatpush1.msra.mxu0 %v5562
    %5564 = vmatprep.subr.mxu0 0.0
    %v5565 = vand.u32 %v675, 4294901760
    %v5566 = vsub.f32 %v675, %v5565
    %v5567 = vand.u32 %v5566, 4294901760
    %5568 = vmatpush1.msra.mxu0 %v5567
    %5569 = vmatprep.subr.mxu0 0.0
    %v5570 = vand.u32 %v706, 4294901760
    %v5571 = vsub.f32 %v706, %v5570
    %v5572 = vand.u32 %v5571, 4294901760
    %5573 = vmatpush2.msra.mxu0 %v5572
    %5574 = vmatprep.subr.mxu0 0.0
    %v5575 = vand.u32 %v705, 4294901760
    %v5576 = vsub.f32 %v705, %v5575
    %v5577 = vand.u32 %v5576, 4294901760
    %5578 = vmatpush2.msra.mxu0 %v5577
    %5579 = vmatprep.subr.mxu0 0.0
    %v5580 = vand.u32 %v704, 4294901760
    %v5581 = vsub.f32 %v704, %v5580
    %v5582 = vand.u32 %v5581, 4294901760
    %5583 = vmatpush2.msra.mxu0 %v5582
    %5584 = vmatprep.subr.mxu0 0.0
    %v5585 = vand.u32 %v703, 4294901760
    %v5586 = vsub.f32 %v703, %v5585
    %v5587 = vand.u32 %v5586, 4294901760
    %5588 = vmatpush2.msra.mxu0 %v5587
    %5589 = vmatprep.subr.mxu0 0.0
    %v5590 = vand.u32 %v702, 4294901760
    %v5591 = vsub.f32 %v702, %v5590
    %v5592 = vand.u32 %v5591, 4294901760
    %5593 = vmatpush2.msra.mxu0 %v5592
    %5594 = vmatprep.subr.mxu0 0.0
    %v5595 = vand.u32 %v701, 4294901760
    %v5596 = vsub.f32 %v701, %v5595
    %v5597 = vand.u32 %v5596, 4294901760
    %5598 = vmatpush2.msra.mxu0 %v5597
    %5599 = vmatprep.subr.mxu0 0.0
    %v5600 = vand.u32 %v700, 4294901760
    %v5601 = vsub.f32 %v700, %v5600
    %v5602 = vand.u32 %v5601, 4294901760
    %5603 = vmatpush2.msra.mxu0 %v5602
    %5604 = vmatprep.subr.mxu0 0.0
    %v5605 = vand.u32 %v699, 4294901760
    %v5606 = vsub.f32 %v699, %v5605
    %v5607 = vand.u32 %v5606, 4294901760
    %5608 = vmatpush2.msra.mxu0 %v5607
    %5609 = vmatprep.subr.mxu0 0.0
    %v5610 = vand.u32 %v698, 4294901760
    %v5611 = vsub.f32 %v698, %v5610
    %v5612 = vand.u32 %v5611, 4294901760
    %5613 = vmatpush2.msra.mxu0 %v5612
    %5614 = vmatprep.subr.mxu0 0.0
    %v5615 = vand.u32 %v697, 4294901760
    %v5616 = vsub.f32 %v697, %v5615
    %v5617 = vand.u32 %v5616, 4294901760
    %5618 = vmatpush2.msra.mxu0 %v5617
    %5619 = vmatprep.subr.mxu0 0.0
    %v5620 = vand.u32 %v696, 4294901760
    %v5621 = vsub.f32 %v696, %v5620
    %v5622 = vand.u32 %v5621, 4294901760
    %5623 = vmatpush2.msra.mxu0 %v5622
    %5624 = vmatprep.subr.mxu0 0.0
    %v5625 = vand.u32 %v695, 4294901760
    %v5626 = vsub.f32 %v695, %v5625
    %v5627 = vand.u32 %v5626, 4294901760
    %5628 = vmatpush2.msra.mxu0 %v5627
    %5629 = vmatprep.subr.mxu0 0.0
    %v5630 = vand.u32 %v694, 4294901760
    %v5631 = vsub.f32 %v694, %v5630
    %v5632 = vand.u32 %v5631, 4294901760
    %5633 = vmatpush2.msra.mxu0 %v5632
    %5634 = vmatprep.subr.mxu0 0.0
    %v5635 = vand.u32 %v693, 4294901760
    %v5636 = vsub.f32 %v693, %v5635
    %v5637 = vand.u32 %v5636, 4294901760
    %5638 = vmatpush2.msra.mxu0 %v5637
    %5639 = vmatprep.subr.mxu0 0.0
    %v5640 = vand.u32 %v692, 4294901760
    %v5641 = vsub.f32 %v692, %v5640
    %v5642 = vand.u32 %v5641, 4294901760
    %5643 = vmatpush2.msra.mxu0 %v5642
    %5644 = vmatprep.subr.mxu0 0.0
    %v5645 = vand.u32 %v691, 4294901760
    %v5646 = vsub.f32 %v691, %v5645
    %v5647 = vand.u32 %v5646, 4294901760
    %5648 = vmatpush2.msra.mxu0 %v5647
    %v5649 = vand.u32 %v762, 4294901760
    %5650 = vmatprep.mubr.f32.mxu0 %v5649
    %v5651 = vand.u32 %v761, 4294901760
    %5652 = vmatmul.mubr.f32.gmra.mxu0 %v5651
    %v5653 = vpop.f32.mrf.mxu0
    %v5654 = vadd.f32 %v5409, %v5653
    %v5655 = vpop.f32.mrf.mxu0
    %v5656 = vand.u32 %v773, 4294901760
    %5657 = vmatprep.mubr.f32.mxu0 %v5656
    %v5658 = vand.u32 %v772, 4294901760
    %5659 = vmatmul.mubr.f32.gmra.mxu0 %v5658
    %v5660 = vpop.f32.mrf.mxu0
    %v5661 = vadd.f32 %v5420, %v5660
    %v5662 = vpop.f32.mrf.mxu0
    %v5663 = vand.u32 %v784, 4294901760
    %5664 = vmatprep.mubr.f32.mxu0 %v5663
    %v5665 = vand.u32 %v783, 4294901760
    %5666 = vmatmul.mubr.f32.gmra.mxu0 %v5665
    %v5667 = vpop.f32.mrf.mxu0
    %v5668 = vadd.f32 %v5431, %v5667
    %v5669 = vpop.f32.mrf.mxu0
    %v5670 = vand.u32 %v795, 4294901760
    %5671 = vmatprep.mubr.f32.mxu0 %v5670
    %v5672 = vand.u32 %v794, 4294901760
    %5673 = vmatmul.mubr.f32.gmra.mxu0 %v5672
    %v5674 = vpop.f32.mrf.mxu0
    %v5675 = vadd.f32 %v5442, %v5674
    %v5676 = vpop.f32.mrf.mxu0
    %v5677 = vand.u32 %v806, 4294901760
    %5678 = vmatprep.mubr.f32.mxu0 %v5677
    %v5679 = vand.u32 %v805, 4294901760
    %5680 = vmatmul.mubr.f32.gmra.mxu0 %v5679
    %v5681 = vpop.f32.mrf.mxu0
    %v5682 = vadd.f32 %v5453, %v5681
    %v5683 = vpop.f32.mrf.mxu0
    %v5684 = vand.u32 %v817, 4294901760
    %5685 = vmatprep.mubr.f32.mxu0 %v5684
    %v5686 = vand.u32 %v816, 4294901760
    %5687 = vmatmul.mubr.f32.gmra.mxu0 %v5686
    %v5688 = vpop.f32.mrf.mxu0
    %v5689 = vadd.f32 %v5464, %v5688
    %v5690 = vpop.f32.mrf.mxu0
    %v5691 = vand.u32 %v828, 4294901760
    %5692 = vmatprep.mubr.f32.mxu0 %v5691
    %v5693 = vand.u32 %v827, 4294901760
    %5694 = vmatmul.mubr.f32.gmra.mxu0 %v5693
    %v5695 = vpop.f32.mrf.mxu0
    %v5696 = vadd.f32 %v5475, %v5695
    %v5697 = vpop.f32.mrf.mxu0
    %v5698 = vand.u32 %v839, 4294901760
    %5699 = vmatprep.mubr.f32.mxu0 %v5698
    %v5700 = vand.u32 %v838, 4294901760
    %5701 = vmatmul.mubr.f32.gmra.mxu0 %v5700
    %v5702 = vpop.f32.mrf.mxu0
    %v5703 = vadd.f32 %v5486, %v5702
    %v5704 = vpop.f32.mrf.mxu0
    %5705 = vdwg.mxu0
    %5706 = vmatprep.subr.mxu0 0.0
    %v5707 = vand.u32 %v690, 4294901760
    %5708 = vmatpush1.msra.mxu0 %v5707
    %5709 = vmatprep.subr.mxu0 0.0
    %v5710 = vand.u32 %v689, 4294901760
    %5711 = vmatpush1.msra.mxu0 %v5710
    %5712 = vmatprep.subr.mxu0 0.0
    %v5713 = vand.u32 %v688, 4294901760
    %5714 = vmatpush1.msra.mxu0 %v5713
    %5715 = vmatprep.subr.mxu0 0.0
    %v5716 = vand.u32 %v687, 4294901760
    %5717 = vmatpush1.msra.mxu0 %v5716
    %5718 = vmatprep.subr.mxu0 0.0
    %v5719 = vand.u32 %v686, 4294901760
    %5720 = vmatpush1.msra.mxu0 %v5719
    %5721 = vmatprep.subr.mxu0 0.0
    %v5722 = vand.u32 %v685, 4294901760
    %5723 = vmatpush1.msra.mxu0 %v5722
    %5724 = vmatprep.subr.mxu0 0.0
    %v5725 = vand.u32 %v684, 4294901760
    %5726 = vmatpush1.msra.mxu0 %v5725
    %5727 = vmatprep.subr.mxu0 0.0
    %v5728 = vand.u32 %v683, 4294901760
    %5729 = vmatpush1.msra.mxu0 %v5728
    %5730 = vmatprep.subr.mxu0 0.0
    %v5731 = vand.u32 %v682, 4294901760
    %5732 = vmatpush1.msra.mxu0 %v5731
    %5733 = vmatprep.subr.mxu0 0.0
    %v5734 = vand.u32 %v681, 4294901760
    %5735 = vmatpush1.msra.mxu0 %v5734
    %5736 = vmatprep.subr.mxu0 0.0
    %v5737 = vand.u32 %v680, 4294901760
    %5738 = vmatpush1.msra.mxu0 %v5737
    %5739 = vmatprep.subr.mxu0 0.0
    %v5740 = vand.u32 %v679, 4294901760
    %5741 = vmatpush1.msra.mxu0 %v5740
    %5742 = vmatprep.subr.mxu0 0.0
    %v5743 = vand.u32 %v678, 4294901760
    %5744 = vmatpush1.msra.mxu0 %v5743
    %5745 = vmatprep.subr.mxu0 0.0
    %v5746 = vand.u32 %v677, 4294901760
    %5747 = vmatpush1.msra.mxu0 %v5746
    %5748 = vmatprep.subr.mxu0 0.0
    %v5749 = vand.u32 %v676, 4294901760
    %5750 = vmatpush1.msra.mxu0 %v5749
    %5751 = vmatprep.subr.mxu0 0.0
    %v5752 = vand.u32 %v675, 4294901760
    %5753 = vmatpush1.msra.mxu0 %v5752
    %5754 = vmatprep.subr.mxu0 0.0
    %v5755 = vand.u32 %v706, 4294901760
    %5756 = vmatpush2.msra.mxu0 %v5755
    %5757 = vmatprep.subr.mxu0 0.0
    %v5758 = vand.u32 %v705, 4294901760
    %5759 = vmatpush2.msra.mxu0 %v5758
    %5760 = vmatprep.subr.mxu0 0.0
    %v5761 = vand.u32 %v704, 4294901760
    %5762 = vmatpush2.msra.mxu0 %v5761
    %5763 = vmatprep.subr.mxu0 0.0
    %v5764 = vand.u32 %v703, 4294901760
    %5765 = vmatpush2.msra.mxu0 %v5764
    %5766 = vmatprep.subr.mxu0 0.0
    %v5767 = vand.u32 %v702, 4294901760
    %5768 = vmatpush2.msra.mxu0 %v5767
    %5769 = vmatprep.subr.mxu0 0.0
    %v5770 = vand.u32 %v701, 4294901760
    %5771 = vmatpush2.msra.mxu0 %v5770
    %5772 = vmatprep.subr.mxu0 0.0
    %v5773 = vand.u32 %v700, 4294901760
    %5774 = vmatpush2.msra.mxu0 %v5773
    %5775 = vmatprep.subr.mxu0 0.0
    %v5776 = vand.u32 %v699, 4294901760
    %5777 = vmatpush2.msra.mxu0 %v5776
    %5778 = vmatprep.subr.mxu0 0.0
    %v5779 = vand.u32 %v698, 4294901760
    %5780 = vmatpush2.msra.mxu0 %v5779
    %5781 = vmatprep.subr.mxu0 0.0
    %v5782 = vand.u32 %v697, 4294901760
    %5783 = vmatpush2.msra.mxu0 %v5782
    %5784 = vmatprep.subr.mxu0 0.0
    %v5785 = vand.u32 %v696, 4294901760
    %5786 = vmatpush2.msra.mxu0 %v5785
    %5787 = vmatprep.subr.mxu0 0.0
    %v5788 = vand.u32 %v695, 4294901760
    %5789 = vmatpush2.msra.mxu0 %v5788
    %5790 = vmatprep.subr.mxu0 0.0
    %v5791 = vand.u32 %v694, 4294901760
    %5792 = vmatpush2.msra.mxu0 %v5791
    %5793 = vmatprep.subr.mxu0 0.0
    %v5794 = vand.u32 %v693, 4294901760
    %5795 = vmatpush2.msra.mxu0 %v5794
    %5796 = vmatprep.subr.mxu0 0.0
    %v5797 = vand.u32 %v692, 4294901760
    %5798 = vmatpush2.msra.mxu0 %v5797
    %5799 = vmatprep.subr.mxu0 0.0
    %v5800 = vand.u32 %v691, 4294901760
    %5801 = vmatpush2.msra.mxu0 %v5800
    %v5802 = vand.u32 %v762, 4294901760
    %5803 = vmatprep.mubr.f32.mxu0 %v5802
    %v5804 = vand.u32 %v761, 4294901760
    %5805 = vmatmul.mubr.f32.gmra.mxu0 %v5804
    %v5806 = vpop.f32.mrf.mxu0
    %v5807 = vadd.f32 %v5654, %v5806
    %v5808 = vpop.f32.mrf.mxu0
    %v5809 = vand.u32 %v773, 4294901760
    %5810 = vmatprep.mubr.f32.mxu0 %v5809
    %v5811 = vand.u32 %v772, 4294901760
    %5812 = vmatmul.mubr.f32.gmra.mxu0 %v5811
    %v5813 = vpop.f32.mrf.mxu0
    %v5814 = vadd.f32 %v5661, %v5813
    %v5815 = vpop.f32.mrf.mxu0
    %v5816 = vand.u32 %v784, 4294901760
    %5817 = vmatprep.mubr.f32.mxu0 %v5816
    %v5818 = vand.u32 %v783, 4294901760
    %5819 = vmatmul.mubr.f32.gmra.mxu0 %v5818
    %v5820 = vpop.f32.mrf.mxu0
    %v5821 = vadd.f32 %v5668, %v5820
    %v5822 = vpop.f32.mrf.mxu0
    %v5823 = vand.u32 %v795, 4294901760
    %5824 = vmatprep.mubr.f32.mxu0 %v5823
    %v5825 = vand.u32 %v794, 4294901760
    %5826 = vmatmul.mubr.f32.gmra.mxu0 %v5825
    %v5827 = vpop.f32.mrf.mxu0
    %v5828 = vadd.f32 %v5675, %v5827
    %v5829 = vpop.f32.mrf.mxu0
    %v5830 = vand.u32 %v806, 4294901760
    %5831 = vmatprep.mubr.f32.mxu0 %v5830
    %v5832 = vand.u32 %v805, 4294901760
    %5833 = vmatmul.mubr.f32.gmra.mxu0 %v5832
    %v5834 = vpop.f32.mrf.mxu0
    %v5835 = vadd.f32 %v5682, %v5834
    %v5836 = vpop.f32.mrf.mxu0
    %v5837 = vand.u32 %v817, 4294901760
    %5838 = vmatprep.mubr.f32.mxu0 %v5837
    %v5839 = vand.u32 %v816, 4294901760
    %5840 = vmatmul.mubr.f32.gmra.mxu0 %v5839
    %v5841 = vpop.f32.mrf.mxu0
    %v5842 = vadd.f32 %v5689, %v5841
    %v5843 = vpop.f32.mrf.mxu0
    %v5844 = vand.u32 %v828, 4294901760
    %5845 = vmatprep.mubr.f32.mxu0 %v5844
    %v5846 = vand.u32 %v827, 4294901760
    %5847 = vmatmul.mubr.f32.gmra.mxu0 %v5846
    %v5848 = vpop.f32.mrf.mxu0
    %v5849 = vadd.f32 %v5696, %v5848
    %v5850 = vpop.f32.mrf.mxu0
    %v5851 = vand.u32 %v839, 4294901760
    %5852 = vmatprep.mubr.f32.mxu0 %v5851
    %v5853 = vand.u32 %v838, 4294901760
    %5854 = vmatmul.mubr.f32.gmra.mxu0 %v5853
    %v5855 = vpop.f32.mrf.mxu0
    %v5856 = vadd.f32 %v5703, %v5855
    %v5857 = vpop.f32.mrf.mxu0
    %5858 = vdwg.mxu0
    %5859 = vmatprep.subr.mxu0 0.0
    %v5860 = vand.u32 %v722, 4294901760
    %5861 = vmatpush1.msra.mxu0 %v5860
    %5862 = vmatprep.subr.mxu0 0.0
    %v5863 = vand.u32 %v721, 4294901760
    %5864 = vmatpush1.msra.mxu0 %v5863
    %5865 = vmatprep.subr.mxu0 0.0
    %v5866 = vand.u32 %v720, 4294901760
    %5867 = vmatpush1.msra.mxu0 %v5866
    %5868 = vmatprep.subr.mxu0 0.0
    %v5869 = vand.u32 %v719, 4294901760
    %5870 = vmatpush1.msra.mxu0 %v5869
    %5871 = vmatprep.subr.mxu0 0.0
    %v5872 = vand.u32 %v718, 4294901760
    %5873 = vmatpush1.msra.mxu0 %v5872
    %5874 = vmatprep.subr.mxu0 0.0
    %v5875 = vand.u32 %v717, 4294901760
    %5876 = vmatpush1.msra.mxu0 %v5875
    %5877 = vmatprep.subr.mxu0 0.0
    %v5878 = vand.u32 %v716, 4294901760
    %5879 = vmatpush1.msra.mxu0 %v5878
    %5880 = vmatprep.subr.mxu0 0.0
    %v5881 = vand.u32 %v715, 4294901760
    %5882 = vmatpush1.msra.mxu0 %v5881
    %5883 = vmatprep.subr.mxu0 0.0
    %v5884 = vand.u32 %v714, 4294901760
    %5885 = vmatpush1.msra.mxu0 %v5884
    %5886 = vmatprep.subr.mxu0 0.0
    %v5887 = vand.u32 %v713, 4294901760
    %5888 = vmatpush1.msra.mxu0 %v5887
    %5889 = vmatprep.subr.mxu0 0.0
    %v5890 = vand.u32 %v712, 4294901760
    %5891 = vmatpush1.msra.mxu0 %v5890
    %5892 = vmatprep.subr.mxu0 0.0
    %v5893 = vand.u32 %v711, 4294901760
    %5894 = vmatpush1.msra.mxu0 %v5893
    %5895 = vmatprep.subr.mxu0 0.0
    %v5896 = vand.u32 %v710, 4294901760
    %5897 = vmatpush1.msra.mxu0 %v5896
    %5898 = vmatprep.subr.mxu0 0.0
    %v5899 = vand.u32 %v709, 4294901760
    %5900 = vmatpush1.msra.mxu0 %v5899
    %5901 = vmatprep.subr.mxu0 0.0
    %v5902 = vand.u32 %v708, 4294901760
    %5903 = vmatpush1.msra.mxu0 %v5902
    %5904 = vmatprep.subr.mxu0 0.0
    %v5905 = vand.u32 %v707, 4294901760
    %5906 = vmatpush1.msra.mxu0 %v5905
    %5907 = vmatprep.subr.mxu0 0.0
    %v5908 = vand.u32 %v738, 4294901760
    %5909 = vmatpush2.msra.mxu0 %v5908
    %5910 = vmatprep.subr.mxu0 0.0
    %v5911 = vand.u32 %v737, 4294901760
    %5912 = vmatpush2.msra.mxu0 %v5911
    %5913 = vmatprep.subr.mxu0 0.0
    %v5914 = vand.u32 %v736, 4294901760
    %5915 = vmatpush2.msra.mxu0 %v5914
    %5916 = vmatprep.subr.mxu0 0.0
    %v5917 = vand.u32 %v735, 4294901760
    %5918 = vmatpush2.msra.mxu0 %v5917
    %5919 = vmatprep.subr.mxu0 0.0
    %v5920 = vand.u32 %v734, 4294901760
    %5921 = vmatpush2.msra.mxu0 %v5920
    %5922 = vmatprep.subr.mxu0 0.0
    %v5923 = vand.u32 %v733, 4294901760
    %5924 = vmatpush2.msra.mxu0 %v5923
    %5925 = vmatprep.subr.mxu0 0.0
    %v5926 = vand.u32 %v732, 4294901760
    %5927 = vmatpush2.msra.mxu0 %v5926
    %5928 = vmatprep.subr.mxu0 0.0
    %v5929 = vand.u32 %v731, 4294901760
    %5930 = vmatpush2.msra.mxu0 %v5929
    %5931 = vmatprep.subr.mxu0 0.0
    %v5932 = vand.u32 %v730, 4294901760
    %5933 = vmatpush2.msra.mxu0 %v5932
    %5934 = vmatprep.subr.mxu0 0.0
    %v5935 = vand.u32 %v729, 4294901760
    %5936 = vmatpush2.msra.mxu0 %v5935
    %5937 = vmatprep.subr.mxu0 0.0
    %v5938 = vand.u32 %v728, 4294901760
    %5939 = vmatpush2.msra.mxu0 %v5938
    %5940 = vmatprep.subr.mxu0 0.0
    %v5941 = vand.u32 %v727, 4294901760
    %5942 = vmatpush2.msra.mxu0 %v5941
    %5943 = vmatprep.subr.mxu0 0.0
    %v5944 = vand.u32 %v726, 4294901760
    %5945 = vmatpush2.msra.mxu0 %v5944
    %5946 = vmatprep.subr.mxu0 0.0
    %v5947 = vand.u32 %v725, 4294901760
    %5948 = vmatpush2.msra.mxu0 %v5947
    %5949 = vmatprep.subr.mxu0 0.0
    %v5950 = vand.u32 %v724, 4294901760
    %5951 = vmatpush2.msra.mxu0 %v5950
    %5952 = vmatprep.subr.mxu0 0.0
    %v5953 = vand.u32 %v723, 4294901760
    %5954 = vmatpush2.msra.mxu0 %v5953
    %v5955 = vand.u32 %v764, 4294901760
    %v5956 = vsub.f32 %v764, %v5955
    %v5957 = vand.u32 %v5956, 4294901760
    %v5958 = vsub.f32 %v5956, %v5957
    %v5959 = vand.u32 %v5958, 4294901760
    %5960 = vmatprep.mubr.f32.mxu0 %v5959
    %v5961 = vand.u32 %v763, 4294901760
    %v5962 = vsub.f32 %v763, %v5961
    %v5963 = vand.u32 %v5962, 4294901760
    %v5964 = vsub.f32 %v5962, %v5963
    %v5965 = vand.u32 %v5964, 4294901760
    %5966 = vmatmul.mubr.f32.gmra.mxu0 %v5965
    %v5967 = vpop.f32.mrf.mxu0
    %v5968 = vadd.f32 %v5807, %v5967
    %v5969 = vpop.f32.mrf.mxu0
    %v5970 = vand.u32 %v775, 4294901760
    %v5971 = vsub.f32 %v775, %v5970
    %v5972 = vand.u32 %v5971, 4294901760
    %v5973 = vsub.f32 %v5971, %v5972
    %v5974 = vand.u32 %v5973, 4294901760
    %5975 = vmatprep.mubr.f32.mxu0 %v5974
    %v5976 = vand.u32 %v774, 4294901760
    %v5977 = vsub.f32 %v774, %v5976
    %v5978 = vand.u32 %v5977, 4294901760
    %v5979 = vsub.f32 %v5977, %v5978
    %v5980 = vand.u32 %v5979, 4294901760
    %5981 = vmatmul.mubr.f32.gmra.mxu0 %v5980
    %v5982 = vpop.f32.mrf.mxu0
    %v5983 = vadd.f32 %v5814, %v5982
    %v5984 = vpop.f32.mrf.mxu0
    %v5985 = vand.u32 %v786, 4294901760
    %v5986 = vsub.f32 %v786, %v5985
    %v5987 = vand.u32 %v5986, 4294901760
    %v5988 = vsub.f32 %v5986, %v5987
    %v5989 = vand.u32 %v5988, 4294901760
    %5990 = vmatprep.mubr.f32.mxu0 %v5989
    %v5991 = vand.u32 %v785, 4294901760
    %v5992 = vsub.f32 %v785, %v5991
    %v5993 = vand.u32 %v5992, 4294901760
    %v5994 = vsub.f32 %v5992, %v5993
    %v5995 = vand.u32 %v5994, 4294901760
    %5996 = vmatmul.mubr.f32.gmra.mxu0 %v5995
    %v5997 = vpop.f32.mrf.mxu0
    %v5998 = vadd.f32 %v5821, %v5997
    %v5999 = vpop.f32.mrf.mxu0
    %v6000 = vand.u32 %v797, 4294901760
    %v6001 = vsub.f32 %v797, %v6000
    %v6002 = vand.u32 %v6001, 4294901760
    %v6003 = vsub.f32 %v6001, %v6002
    %v6004 = vand.u32 %v6003, 4294901760
    %6005 = vmatprep.mubr.f32.mxu0 %v6004
    %v6006 = vand.u32 %v796, 4294901760
    %v6007 = vsub.f32 %v796, %v6006
    %v6008 = vand.u32 %v6007, 4294901760
    %v6009 = vsub.f32 %v6007, %v6008
    %v6010 = vand.u32 %v6009, 4294901760
    %6011 = vmatmul.mubr.f32.gmra.mxu0 %v6010
    %v6012 = vpop.f32.mrf.mxu0
    %v6013 = vadd.f32 %v5828, %v6012
    %v6014 = vpop.f32.mrf.mxu0
    %v6015 = vand.u32 %v808, 4294901760
    %v6016 = vsub.f32 %v808, %v6015
    %v6017 = vand.u32 %v6016, 4294901760
    %v6018 = vsub.f32 %v6016, %v6017
    %v6019 = vand.u32 %v6018, 4294901760
    %6020 = vmatprep.mubr.f32.mxu0 %v6019
    %v6021 = vand.u32 %v807, 4294901760
    %v6022 = vsub.f32 %v807, %v6021
    %v6023 = vand.u32 %v6022, 4294901760
    %v6024 = vsub.f32 %v6022, %v6023
    %v6025 = vand.u32 %v6024, 4294901760
    %6026 = vmatmul.mubr.f32.gmra.mxu0 %v6025
    %v6027 = vpop.f32.mrf.mxu0
    %v6028 = vadd.f32 %v5835, %v6027
    %v6029 = vpop.f32.mrf.mxu0
    %v6030 = vand.u32 %v819, 4294901760
    %v6031 = vsub.f32 %v819, %v6030
    %v6032 = vand.u32 %v6031, 4294901760
    %v6033 = vsub.f32 %v6031, %v6032
    %v6034 = vand.u32 %v6033, 4294901760
    %6035 = vmatprep.mubr.f32.mxu0 %v6034
    %v6036 = vand.u32 %v818, 4294901760
    %v6037 = vsub.f32 %v818, %v6036
    %v6038 = vand.u32 %v6037, 4294901760
    %v6039 = vsub.f32 %v6037, %v6038
    %v6040 = vand.u32 %v6039, 4294901760
    %6041 = vmatmul.mubr.f32.gmra.mxu0 %v6040
    %v6042 = vpop.f32.mrf.mxu0
    %v6043 = vadd.f32 %v5842, %v6042
    %v6044 = vpop.f32.mrf.mxu0
    %v6045 = vand.u32 %v830, 4294901760
    %v6046 = vsub.f32 %v830, %v6045
    %v6047 = vand.u32 %v6046, 4294901760
    %v6048 = vsub.f32 %v6046, %v6047
    %v6049 = vand.u32 %v6048, 4294901760
    %6050 = vmatprep.mubr.f32.mxu0 %v6049
    %v6051 = vand.u32 %v829, 4294901760
    %v6052 = vsub.f32 %v829, %v6051
    %v6053 = vand.u32 %v6052, 4294901760
    %v6054 = vsub.f32 %v6052, %v6053
    %v6055 = vand.u32 %v6054, 4294901760
    %6056 = vmatmul.mubr.f32.gmra.mxu0 %v6055
    %v6057 = vpop.f32.mrf.mxu0
    %v6058 = vadd.f32 %v5849, %v6057
    %v6059 = vpop.f32.mrf.mxu0
    %v6060 = vand.u32 %v841, 4294901760
    %v6061 = vsub.f32 %v841, %v6060
    %v6062 = vand.u32 %v6061, 4294901760
    %v6063 = vsub.f32 %v6061, %v6062
    %v6064 = vand.u32 %v6063, 4294901760
    %6065 = vmatprep.mubr.f32.mxu0 %v6064
    %v6066 = vand.u32 %v840, 4294901760
    %v6067 = vsub.f32 %v840, %v6066
    %v6068 = vand.u32 %v6067, 4294901760
    %v6069 = vsub.f32 %v6067, %v6068
    %v6070 = vand.u32 %v6069, 4294901760
    %6071 = vmatmul.mubr.f32.gmra.mxu0 %v6070
    %v6072 = vpop.f32.mrf.mxu0
    %v6073 = vadd.f32 %v5856, %v6072
    %v6074 = vpop.f32.mrf.mxu0
    %6075 = vdwg.mxu0
    %6076 = vmatprep.subr.mxu0 0.0
    %v6077 = vand.u32 %v722, 4294901760
    %v6078 = vsub.f32 %v722, %v6077
    %v6079 = vand.u32 %v6078, 4294901760
    %v6080 = vsub.f32 %v6078, %v6079
    %v6081 = vand.u32 %v6080, 4294901760
    %6082 = vmatpush1.msra.mxu0 %v6081
    %6083 = vmatprep.subr.mxu0 0.0
    %v6084 = vand.u32 %v721, 4294901760
    %v6085 = vsub.f32 %v721, %v6084
    %v6086 = vand.u32 %v6085, 4294901760
    %v6087 = vsub.f32 %v6085, %v6086
    %v6088 = vand.u32 %v6087, 4294901760
    %6089 = vmatpush1.msra.mxu0 %v6088
    %6090 = vmatprep.subr.mxu0 0.0
    %v6091 = vand.u32 %v720, 4294901760
    %v6092 = vsub.f32 %v720, %v6091
    %v6093 = vand.u32 %v6092, 4294901760
    %v6094 = vsub.f32 %v6092, %v6093
    %v6095 = vand.u32 %v6094, 4294901760
    %6096 = vmatpush1.msra.mxu0 %v6095
    %6097 = vmatprep.subr.mxu0 0.0
    %v6098 = vand.u32 %v719, 4294901760
    %v6099 = vsub.f32 %v719, %v6098
    %v6100 = vand.u32 %v6099, 4294901760
    %v6101 = vsub.f32 %v6099, %v6100
    %v6102 = vand.u32 %v6101, 4294901760
    %6103 = vmatpush1.msra.mxu0 %v6102
    %6104 = vmatprep.subr.mxu0 0.0
    %v6105 = vand.u32 %v718, 4294901760
    %v6106 = vsub.f32 %v718, %v6105
    %v6107 = vand.u32 %v6106, 4294901760
    %v6108 = vsub.f32 %v6106, %v6107
    %v6109 = vand.u32 %v6108, 4294901760
    %6110 = vmatpush1.msra.mxu0 %v6109
    %6111 = vmatprep.subr.mxu0 0.0
    %v6112 = vand.u32 %v717, 4294901760
    %v6113 = vsub.f32 %v717, %v6112
    %v6114 = vand.u32 %v6113, 4294901760
    %v6115 = vsub.f32 %v6113, %v6114
    %v6116 = vand.u32 %v6115, 4294901760
    %6117 = vmatpush1.msra.mxu0 %v6116
    %6118 = vmatprep.subr.mxu0 0.0
    %v6119 = vand.u32 %v716, 4294901760
    %v6120 = vsub.f32 %v716, %v6119
    %v6121 = vand.u32 %v6120, 4294901760
    %v6122 = vsub.f32 %v6120, %v6121
    %v6123 = vand.u32 %v6122, 4294901760
    %6124 = vmatpush1.msra.mxu0 %v6123
    %6125 = vmatprep.subr.mxu0 0.0
    %v6126 = vand.u32 %v715, 4294901760
    %v6127 = vsub.f32 %v715, %v6126
    %v6128 = vand.u32 %v6127, 4294901760
    %v6129 = vsub.f32 %v6127, %v6128
    %v6130 = vand.u32 %v6129, 4294901760
    %6131 = vmatpush1.msra.mxu0 %v6130
    %6132 = vmatprep.subr.mxu0 0.0
    %v6133 = vand.u32 %v714, 4294901760
    %v6134 = vsub.f32 %v714, %v6133
    %v6135 = vand.u32 %v6134, 4294901760
    %v6136 = vsub.f32 %v6134, %v6135
    %v6137 = vand.u32 %v6136, 4294901760
    %6138 = vmatpush1.msra.mxu0 %v6137
    %6139 = vmatprep.subr.mxu0 0.0
    %v6140 = vand.u32 %v713, 4294901760
    %v6141 = vsub.f32 %v713, %v6140
    %v6142 = vand.u32 %v6141, 4294901760
    %v6143 = vsub.f32 %v6141, %v6142
    %v6144 = vand.u32 %v6143, 4294901760
    %6145 = vmatpush1.msra.mxu0 %v6144
    %6146 = vmatprep.subr.mxu0 0.0
    %v6147 = vand.u32 %v712, 4294901760
    %v6148 = vsub.f32 %v712, %v6147
    %v6149 = vand.u32 %v6148, 4294901760
    %v6150 = vsub.f32 %v6148, %v6149
    %v6151 = vand.u32 %v6150, 4294901760
    %6152 = vmatpush1.msra.mxu0 %v6151
    %6153 = vmatprep.subr.mxu0 0.0
    %v6154 = vand.u32 %v711, 4294901760
    %v6155 = vsub.f32 %v711, %v6154
    %v6156 = vand.u32 %v6155, 4294901760
    %v6157 = vsub.f32 %v6155, %v6156
    %v6158 = vand.u32 %v6157, 4294901760
    %6159 = vmatpush1.msra.mxu0 %v6158
    %6160 = vmatprep.subr.mxu0 0.0
    %v6161 = vand.u32 %v710, 4294901760
    %v6162 = vsub.f32 %v710, %v6161
    %v6163 = vand.u32 %v6162, 4294901760
    %v6164 = vsub.f32 %v6162, %v6163
    %v6165 = vand.u32 %v6164, 4294901760
    %6166 = vmatpush1.msra.mxu0 %v6165
    %6167 = vmatprep.subr.mxu0 0.0
    %v6168 = vand.u32 %v709, 4294901760
    %v6169 = vsub.f32 %v709, %v6168
    %v6170 = vand.u32 %v6169, 4294901760
    %v6171 = vsub.f32 %v6169, %v6170
    %v6172 = vand.u32 %v6171, 4294901760
    %6173 = vmatpush1.msra.mxu0 %v6172
    %6174 = vmatprep.subr.mxu0 0.0
    %v6175 = vand.u32 %v708, 4294901760
    %v6176 = vsub.f32 %v708, %v6175
    %v6177 = vand.u32 %v6176, 4294901760
    %v6178 = vsub.f32 %v6176, %v6177
    %v6179 = vand.u32 %v6178, 4294901760
    %6180 = vmatpush1.msra.mxu0 %v6179
    %6181 = vmatprep.subr.mxu0 0.0
    %v6182 = vand.u32 %v707, 4294901760
    %v6183 = vsub.f32 %v707, %v6182
    %v6184 = vand.u32 %v6183, 4294901760
    %v6185 = vsub.f32 %v6183, %v6184
    %v6186 = vand.u32 %v6185, 4294901760
    %6187 = vmatpush1.msra.mxu0 %v6186
    %6188 = vmatprep.subr.mxu0 0.0
    %v6189 = vand.u32 %v738, 4294901760
    %v6190 = vsub.f32 %v738, %v6189
    %v6191 = vand.u32 %v6190, 4294901760
    %v6192 = vsub.f32 %v6190, %v6191
    %v6193 = vand.u32 %v6192, 4294901760
    %6194 = vmatpush2.msra.mxu0 %v6193
    %6195 = vmatprep.subr.mxu0 0.0
    %v6196 = vand.u32 %v737, 4294901760
    %v6197 = vsub.f32 %v737, %v6196
    %v6198 = vand.u32 %v6197, 4294901760
    %v6199 = vsub.f32 %v6197, %v6198
    %v6200 = vand.u32 %v6199, 4294901760
    %6201 = vmatpush2.msra.mxu0 %v6200
    %6202 = vmatprep.subr.mxu0 0.0
    %v6203 = vand.u32 %v736, 4294901760
    %v6204 = vsub.f32 %v736, %v6203
    %v6205 = vand.u32 %v6204, 4294901760
    %v6206 = vsub.f32 %v6204, %v6205
    %v6207 = vand.u32 %v6206, 4294901760
    %6208 = vmatpush2.msra.mxu0 %v6207
    %6209 = vmatprep.subr.mxu0 0.0
    %v6210 = vand.u32 %v735, 4294901760
    %v6211 = vsub.f32 %v735, %v6210
    %v6212 = vand.u32 %v6211, 4294901760
    %v6213 = vsub.f32 %v6211, %v6212
    %v6214 = vand.u32 %v6213, 4294901760
    %6215 = vmatpush2.msra.mxu0 %v6214
    %6216 = vmatprep.subr.mxu0 0.0
    %v6217 = vand.u32 %v734, 4294901760
    %v6218 = vsub.f32 %v734, %v6217
    %v6219 = vand.u32 %v6218, 4294901760
    %v6220 = vsub.f32 %v6218, %v6219
    %v6221 = vand.u32 %v6220, 4294901760
    %6222 = vmatpush2.msra.mxu0 %v6221
    %6223 = vmatprep.subr.mxu0 0.0
    %v6224 = vand.u32 %v733, 4294901760
    %v6225 = vsub.f32 %v733, %v6224
    %v6226 = vand.u32 %v6225, 4294901760
    %v6227 = vsub.f32 %v6225, %v6226
    %v6228 = vand.u32 %v6227, 4294901760
    %6229 = vmatpush2.msra.mxu0 %v6228
    %6230 = vmatprep.subr.mxu0 0.0
    %v6231 = vand.u32 %v732, 4294901760
    %v6232 = vsub.f32 %v732, %v6231
    %v6233 = vand.u32 %v6232, 4294901760
    %v6234 = vsub.f32 %v6232, %v6233
    %v6235 = vand.u32 %v6234, 4294901760
    %6236 = vmatpush2.msra.mxu0 %v6235
    %6237 = vmatprep.subr.mxu0 0.0
    %v6238 = vand.u32 %v731, 4294901760
    %v6239 = vsub.f32 %v731, %v6238
    %v6240 = vand.u32 %v6239, 4294901760
    %v6241 = vsub.f32 %v6239, %v6240
    %v6242 = vand.u32 %v6241, 4294901760
    %6243 = vmatpush2.msra.mxu0 %v6242
    %6244 = vmatprep.subr.mxu0 0.0
    %v6245 = vand.u32 %v730, 4294901760
    %v6246 = vsub.f32 %v730, %v6245
    %v6247 = vand.u32 %v6246, 4294901760
    %v6248 = vsub.f32 %v6246, %v6247
    %v6249 = vand.u32 %v6248, 4294901760
    %6250 = vmatpush2.msra.mxu0 %v6249
    %6251 = vmatprep.subr.mxu0 0.0
    %v6252 = vand.u32 %v729, 4294901760
    %v6253 = vsub.f32 %v729, %v6252
    %v6254 = vand.u32 %v6253, 4294901760
    %v6255 = vsub.f32 %v6253, %v6254
    %v6256 = vand.u32 %v6255, 4294901760
    %6257 = vmatpush2.msra.mxu0 %v6256
    %6258 = vmatprep.subr.mxu0 0.0
    %v6259 = vand.u32 %v728, 4294901760
    %v6260 = vsub.f32 %v728, %v6259
    %v6261 = vand.u32 %v6260, 4294901760
    %v6262 = vsub.f32 %v6260, %v6261
    %v6263 = vand.u32 %v6262, 4294901760
    %6264 = vmatpush2.msra.mxu0 %v6263
    %6265 = vmatprep.subr.mxu0 0.0
    %v6266 = vand.u32 %v727, 4294901760
    %v6267 = vsub.f32 %v727, %v6266
    %v6268 = vand.u32 %v6267, 4294901760
    %v6269 = vsub.f32 %v6267, %v6268
    %v6270 = vand.u32 %v6269, 4294901760
    %6271 = vmatpush2.msra.mxu0 %v6270
    %6272 = vmatprep.subr.mxu0 0.0
    %v6273 = vand.u32 %v726, 4294901760
    %v6274 = vsub.f32 %v726, %v6273
    %v6275 = vand.u32 %v6274, 4294901760
    %v6276 = vsub.f32 %v6274, %v6275
    %v6277 = vand.u32 %v6276, 4294901760
    %6278 = vmatpush2.msra.mxu0 %v6277
    %6279 = vmatprep.subr.mxu0 0.0
    %v6280 = vand.u32 %v725, 4294901760
    %v6281 = vsub.f32 %v725, %v6280
    %v6282 = vand.u32 %v6281, 4294901760
    %v6283 = vsub.f32 %v6281, %v6282
    %v6284 = vand.u32 %v6283, 4294901760
    %6285 = vmatpush2.msra.mxu0 %v6284
    %6286 = vmatprep.subr.mxu0 0.0
    %v6287 = vand.u32 %v724, 4294901760
    %v6288 = vsub.f32 %v724, %v6287
    %v6289 = vand.u32 %v6288, 4294901760
    %v6290 = vsub.f32 %v6288, %v6289
    %v6291 = vand.u32 %v6290, 4294901760
    %6292 = vmatpush2.msra.mxu0 %v6291
    %6293 = vmatprep.subr.mxu0 0.0
    %v6294 = vand.u32 %v723, 4294901760
    %v6295 = vsub.f32 %v723, %v6294
    %v6296 = vand.u32 %v6295, 4294901760
    %v6297 = vsub.f32 %v6295, %v6296
    %v6298 = vand.u32 %v6297, 4294901760
    %6299 = vmatpush2.msra.mxu0 %v6298
    %v6300 = vand.u32 %v764, 4294901760
    %6301 = vmatprep.mubr.f32.mxu0 %v6300
    %v6302 = vand.u32 %v763, 4294901760
    %6303 = vmatmul.mubr.f32.gmra.mxu0 %v6302
    %v6304 = vpop.f32.mrf.mxu0
    %v6305 = vadd.f32 %v5968, %v6304
    %v6306 = vpop.f32.mrf.mxu0
    %v6307 = vand.u32 %v775, 4294901760
    %6308 = vmatprep.mubr.f32.mxu0 %v6307
    %v6309 = vand.u32 %v774, 4294901760
    %6310 = vmatmul.mubr.f32.gmra.mxu0 %v6309
    %v6311 = vpop.f32.mrf.mxu0
    %v6312 = vadd.f32 %v5983, %v6311
    %v6313 = vpop.f32.mrf.mxu0
    %v6314 = vand.u32 %v786, 4294901760
    %6315 = vmatprep.mubr.f32.mxu0 %v6314
    %v6316 = vand.u32 %v785, 4294901760
    %6317 = vmatmul.mubr.f32.gmra.mxu0 %v6316
    %v6318 = vpop.f32.mrf.mxu0
    %v6319 = vadd.f32 %v5998, %v6318
    %v6320 = vpop.f32.mrf.mxu0
    %v6321 = vand.u32 %v797, 4294901760
    %6322 = vmatprep.mubr.f32.mxu0 %v6321
    %v6323 = vand.u32 %v796, 4294901760
    %6324 = vmatmul.mubr.f32.gmra.mxu0 %v6323
    %v6325 = vpop.f32.mrf.mxu0
    %v6326 = vadd.f32 %v6013, %v6325
    %v6327 = vpop.f32.mrf.mxu0
    %v6328 = vand.u32 %v808, 4294901760
    %6329 = vmatprep.mubr.f32.mxu0 %v6328
    %v6330 = vand.u32 %v807, 4294901760
    %6331 = vmatmul.mubr.f32.gmra.mxu0 %v6330
    %v6332 = vpop.f32.mrf.mxu0
    %v6333 = vadd.f32 %v6028, %v6332
    %v6334 = vpop.f32.mrf.mxu0
    %v6335 = vand.u32 %v819, 4294901760
    %6336 = vmatprep.mubr.f32.mxu0 %v6335
    %v6337 = vand.u32 %v818, 4294901760
    %6338 = vmatmul.mubr.f32.gmra.mxu0 %v6337
    %v6339 = vpop.f32.mrf.mxu0
    %v6340 = vadd.f32 %v6043, %v6339
    %v6341 = vpop.f32.mrf.mxu0
    %v6342 = vand.u32 %v830, 4294901760
    %6343 = vmatprep.mubr.f32.mxu0 %v6342
    %v6344 = vand.u32 %v829, 4294901760
    %6345 = vmatmul.mubr.f32.gmra.mxu0 %v6344
    %v6346 = vpop.f32.mrf.mxu0
    %v6347 = vadd.f32 %v6058, %v6346
    %v6348 = vpop.f32.mrf.mxu0
    %v6349 = vand.u32 %v841, 4294901760
    %6350 = vmatprep.mubr.f32.mxu0 %v6349
    %v6351 = vand.u32 %v840, 4294901760
    %6352 = vmatmul.mubr.f32.gmra.mxu0 %v6351
    %v6353 = vpop.f32.mrf.mxu0
    %v6354 = vadd.f32 %v6073, %v6353
    %v6355 = vpop.f32.mrf.mxu0
    %6356 = vdwg.mxu0
    %6357 = vmatprep.subr.mxu0 0.0
    %v6358 = vand.u32 %v722, 4294901760
    %v6359 = vsub.f32 %v722, %v6358
    %6360 = vmatpush1.msra.mxu0 %v6359
    %6361 = vmatprep.subr.mxu0 0.0
    %v6362 = vand.u32 %v721, 4294901760
    %v6363 = vsub.f32 %v721, %v6362
    %6364 = vmatpush1.msra.mxu0 %v6363
    %6365 = vmatprep.subr.mxu0 0.0
    %v6366 = vand.u32 %v720, 4294901760
    %v6367 = vsub.f32 %v720, %v6366
    %6368 = vmatpush1.msra.mxu0 %v6367
    %6369 = vmatprep.subr.mxu0 0.0
    %v6370 = vand.u32 %v719, 4294901760
    %v6371 = vsub.f32 %v719, %v6370
    %6372 = vmatpush1.msra.mxu0 %v6371
    %6373 = vmatprep.subr.mxu0 0.0
    %v6374 = vand.u32 %v718, 4294901760
    %v6375 = vsub.f32 %v718, %v6374
    %6376 = vmatpush1.msra.mxu0 %v6375
    %6377 = vmatprep.subr.mxu0 0.0
    %v6378 = vand.u32 %v717, 4294901760
    %v6379 = vsub.f32 %v717, %v6378
    %6380 = vmatpush1.msra.mxu0 %v6379
    %6381 = vmatprep.subr.mxu0 0.0
    %v6382 = vand.u32 %v716, 4294901760
    %v6383 = vsub.f32 %v716, %v6382
    %6384 = vmatpush1.msra.mxu0 %v6383
    %6385 = vmatprep.subr.mxu0 0.0
    %v6386 = vand.u32 %v715, 4294901760
    %v6387 = vsub.f32 %v715, %v6386
    %6388 = vmatpush1.msra.mxu0 %v6387
    %6389 = vmatprep.subr.mxu0 0.0
    %v6390 = vand.u32 %v714, 4294901760
    %v6391 = vsub.f32 %v714, %v6390
    %6392 = vmatpush1.msra.mxu0 %v6391
    %6393 = vmatprep.subr.mxu0 0.0
    %v6394 = vand.u32 %v713, 4294901760
    %v6395 = vsub.f32 %v713, %v6394
    %6396 = vmatpush1.msra.mxu0 %v6395
    %6397 = vmatprep.subr.mxu0 0.0
    %v6398 = vand.u32 %v712, 4294901760
    %v6399 = vsub.f32 %v712, %v6398
    %6400 = vmatpush1.msra.mxu0 %v6399
    %6401 = vmatprep.subr.mxu0 0.0
    %v6402 = vand.u32 %v711, 4294901760
    %v6403 = vsub.f32 %v711, %v6402
    %6404 = vmatpush1.msra.mxu0 %v6403
    %6405 = vmatprep.subr.mxu0 0.0
    %v6406 = vand.u32 %v710, 4294901760
    %v6407 = vsub.f32 %v710, %v6406
    %6408 = vmatpush1.msra.mxu0 %v6407
    %6409 = vmatprep.subr.mxu0 0.0
    %v6410 = vand.u32 %v709, 4294901760
    %v6411 = vsub.f32 %v709, %v6410
    %6412 = vmatpush1.msra.mxu0 %v6411
    %6413 = vmatprep.subr.mxu0 0.0
    %v6414 = vand.u32 %v708, 4294901760
    %v6415 = vsub.f32 %v708, %v6414
    %6416 = vmatpush1.msra.mxu0 %v6415
    %6417 = vmatprep.subr.mxu0 0.0
    %v6418 = vand.u32 %v707, 4294901760
    %v6419 = vsub.f32 %v707, %v6418
    %6420 = vmatpush1.msra.mxu0 %v6419
    %6421 = vmatprep.subr.mxu0 0.0
    %v6422 = vand.u32 %v738, 4294901760
    %v6423 = vsub.f32 %v738, %v6422
    %6424 = vmatpush2.msra.mxu0 %v6423
    %6425 = vmatprep.subr.mxu0 0.0
    %v6426 = vand.u32 %v737, 4294901760
    %v6427 = vsub.f32 %v737, %v6426
    %6428 = vmatpush2.msra.mxu0 %v6427
    %6429 = vmatprep.subr.mxu0 0.0
    %v6430 = vand.u32 %v736, 4294901760
    %v6431 = vsub.f32 %v736, %v6430
    %6432 = vmatpush2.msra.mxu0 %v6431
    %6433 = vmatprep.subr.mxu0 0.0
    %v6434 = vand.u32 %v735, 4294901760
    %v6435 = vsub.f32 %v735, %v6434
    %6436 = vmatpush2.msra.mxu0 %v6435
    %6437 = vmatprep.subr.mxu0 0.0
    %v6438 = vand.u32 %v734, 4294901760
    %v6439 = vsub.f32 %v734, %v6438
    %6440 = vmatpush2.msra.mxu0 %v6439
    %6441 = vmatprep.subr.mxu0 0.0
    %v6442 = vand.u32 %v733, 4294901760
    %v6443 = vsub.f32 %v733, %v6442
    %6444 = vmatpush2.msra.mxu0 %v6443
    %6445 = vmatprep.subr.mxu0 0.0
    %v6446 = vand.u32 %v732, 4294901760
    %v6447 = vsub.f32 %v732, %v6446
    %6448 = vmatpush2.msra.mxu0 %v6447
    %6449 = vmatprep.subr.mxu0 0.0
    %v6450 = vand.u32 %v731, 4294901760
    %v6451 = vsub.f32 %v731, %v6450
    %6452 = vmatpush2.msra.mxu0 %v6451
    %6453 = vmatprep.subr.mxu0 0.0
    %v6454 = vand.u32 %v730, 4294901760
    %v6455 = vsub.f32 %v730, %v6454
    %6456 = vmatpush2.msra.mxu0 %v6455
    %6457 = vmatprep.subr.mxu0 0.0
    %v6458 = vand.u32 %v729, 4294901760
    %v6459 = vsub.f32 %v729, %v6458
    %6460 = vmatpush2.msra.mxu0 %v6459
    %6461 = vmatprep.subr.mxu0 0.0
    %v6462 = vand.u32 %v728, 4294901760
    %v6463 = vsub.f32 %v728, %v6462
    %6464 = vmatpush2.msra.mxu0 %v6463
    %6465 = vmatprep.subr.mxu0 0.0
    %v6466 = vand.u32 %v727, 4294901760
    %v6467 = vsub.f32 %v727, %v6466
    %6468 = vmatpush2.msra.mxu0 %v6467
    %6469 = vmatprep.subr.mxu0 0.0
    %v6470 = vand.u32 %v726, 4294901760
    %v6471 = vsub.f32 %v726, %v6470
    %6472 = vmatpush2.msra.mxu0 %v6471
    %6473 = vmatprep.subr.mxu0 0.0
    %v6474 = vand.u32 %v725, 4294901760
    %v6475 = vsub.f32 %v725, %v6474
    %6476 = vmatpush2.msra.mxu0 %v6475
    %6477 = vmatprep.subr.mxu0 0.0
    %v6478 = vand.u32 %v724, 4294901760
    %v6479 = vsub.f32 %v724, %v6478
    %6480 = vmatpush2.msra.mxu0 %v6479
    %6481 = vmatprep.subr.mxu0 0.0
    %v6482 = vand.u32 %v723, 4294901760
    %v6483 = vsub.f32 %v723, %v6482
    %6484 = vmatpush2.msra.mxu0 %v6483
    %v6485 = vand.u32 %v764, 4294901760
    %v6486 = vsub.f32 %v764, %v6485
    %6487 = vmatprep.mubr.f32.mxu0 %v6486
    %v6488 = vand.u32 %v763, 4294901760
    %v6489 = vsub.f32 %v763, %v6488
    %6490 = vmatmul.mubr.f32.gmra.mxu0 %v6489
    %v6491 = vpop.f32.mrf.mxu0
    %v6492 = vadd.f32 %v6305, %v6491
    %v6493 = vpop.f32.mrf.mxu0
    %v6494 = vand.u32 %v775, 4294901760
    %v6495 = vsub.f32 %v775, %v6494
    %6496 = vmatprep.mubr.f32.mxu0 %v6495
    %v6497 = vand.u32 %v774, 4294901760
    %v6498 = vsub.f32 %v774, %v6497
    %6499 = vmatmul.mubr.f32.gmra.mxu0 %v6498
    %v6500 = vpop.f32.mrf.mxu0
    %v6501 = vadd.f32 %v6312, %v6500
    %v6502 = vpop.f32.mrf.mxu0
    %v6503 = vand.u32 %v786, 4294901760
    %v6504 = vsub.f32 %v786, %v6503
    %6505 = vmatprep.mubr.f32.mxu0 %v6504
    %v6506 = vand.u32 %v785, 4294901760
    %v6507 = vsub.f32 %v785, %v6506
    %6508 = vmatmul.mubr.f32.gmra.mxu0 %v6507
    %v6509 = vpop.f32.mrf.mxu0
    %v6510 = vadd.f32 %v6319, %v6509
    %v6511 = vpop.f32.mrf.mxu0
    %v6512 = vand.u32 %v797, 4294901760
    %v6513 = vsub.f32 %v797, %v6512
    %6514 = vmatprep.mubr.f32.mxu0 %v6513
    %v6515 = vand.u32 %v796, 4294901760
    %v6516 = vsub.f32 %v796, %v6515
    %6517 = vmatmul.mubr.f32.gmra.mxu0 %v6516
    %v6518 = vpop.f32.mrf.mxu0
    %v6519 = vadd.f32 %v6326, %v6518
    %v6520 = vpop.f32.mrf.mxu0
    %v6521 = vand.u32 %v808, 4294901760
    %v6522 = vsub.f32 %v808, %v6521
    %6523 = vmatprep.mubr.f32.mxu0 %v6522
    %v6524 = vand.u32 %v807, 4294901760
    %v6525 = vsub.f32 %v807, %v6524
    %6526 = vmatmul.mubr.f32.gmra.mxu0 %v6525
    %v6527 = vpop.f32.mrf.mxu0
    %v6528 = vadd.f32 %v6333, %v6527
    %v6529 = vpop.f32.mrf.mxu0
    %v6530 = vand.u32 %v819, 4294901760
    %v6531 = vsub.f32 %v819, %v6530
    %6532 = vmatprep.mubr.f32.mxu0 %v6531
    %v6533 = vand.u32 %v818, 4294901760
    %v6534 = vsub.f32 %v818, %v6533
    %6535 = vmatmul.mubr.f32.gmra.mxu0 %v6534
    %v6536 = vpop.f32.mrf.mxu0
    %v6537 = vadd.f32 %v6340, %v6536
    %v6538 = vpop.f32.mrf.mxu0
    %v6539 = vand.u32 %v830, 4294901760
    %v6540 = vsub.f32 %v830, %v6539
    %6541 = vmatprep.mubr.f32.mxu0 %v6540
    %v6542 = vand.u32 %v829, 4294901760
    %v6543 = vsub.f32 %v829, %v6542
    %6544 = vmatmul.mubr.f32.gmra.mxu0 %v6543
    %v6545 = vpop.f32.mrf.mxu0
    %v6546 = vadd.f32 %v6347, %v6545
    %v6547 = vpop.f32.mrf.mxu0
    %v6548 = vand.u32 %v841, 4294901760
    %v6549 = vsub.f32 %v841, %v6548
    %6550 = vmatprep.mubr.f32.mxu0 %v6549
    %v6551 = vand.u32 %v840, 4294901760
    %v6552 = vsub.f32 %v840, %v6551
    %6553 = vmatmul.mubr.f32.gmra.mxu0 %v6552
    %v6554 = vpop.f32.mrf.mxu0
    %v6555 = vadd.f32 %v6354, %v6554
    %v6556 = vpop.f32.mrf.mxu0
    %6557 = vdwg.mxu0
    %6558 = vmatprep.subr.mxu0 0.0
    %v6559 = vand.u32 %v722, 4294901760
    %6560 = vmatpush1.msra.mxu0 %v6559
    %6561 = vmatprep.subr.mxu0 0.0
    %v6562 = vand.u32 %v721, 4294901760
    %6563 = vmatpush1.msra.mxu0 %v6562
    %6564 = vmatprep.subr.mxu0 0.0
    %v6565 = vand.u32 %v720, 4294901760
    %6566 = vmatpush1.msra.mxu0 %v6565
    %6567 = vmatprep.subr.mxu0 0.0
    %v6568 = vand.u32 %v719, 4294901760
    %6569 = vmatpush1.msra.mxu0 %v6568
    %6570 = vmatprep.subr.mxu0 0.0
    %v6571 = vand.u32 %v718, 4294901760
    %6572 = vmatpush1.msra.mxu0 %v6571
    %6573 = vmatprep.subr.mxu0 0.0
    %v6574 = vand.u32 %v717, 4294901760
    %6575 = vmatpush1.msra.mxu0 %v6574
    %6576 = vmatprep.subr.mxu0 0.0
    %v6577 = vand.u32 %v716, 4294901760
    %6578 = vmatpush1.msra.mxu0 %v6577
    %6579 = vmatprep.subr.mxu0 0.0
    %v6580 = vand.u32 %v715, 4294901760
    %6581 = vmatpush1.msra.mxu0 %v6580
    %6582 = vmatprep.subr.mxu0 0.0
    %v6583 = vand.u32 %v714, 4294901760
    %6584 = vmatpush1.msra.mxu0 %v6583
    %6585 = vmatprep.subr.mxu0 0.0
    %v6586 = vand.u32 %v713, 4294901760
    %6587 = vmatpush1.msra.mxu0 %v6586
    %6588 = vmatprep.subr.mxu0 0.0
    %v6589 = vand.u32 %v712, 4294901760
    %6590 = vmatpush1.msra.mxu0 %v6589
    %6591 = vmatprep.subr.mxu0 0.0
    %v6592 = vand.u32 %v711, 4294901760
    %6593 = vmatpush1.msra.mxu0 %v6592
    %6594 = vmatprep.subr.mxu0 0.0
    %v6595 = vand.u32 %v710, 4294901760
    %6596 = vmatpush1.msra.mxu0 %v6595
    %6597 = vmatprep.subr.mxu0 0.0
    %v6598 = vand.u32 %v709, 4294901760
    %6599 = vmatpush1.msra.mxu0 %v6598
    %6600 = vmatprep.subr.mxu0 0.0
    %v6601 = vand.u32 %v708, 4294901760
    %6602 = vmatpush1.msra.mxu0 %v6601
    %6603 = vmatprep.subr.mxu0 0.0
    %v6604 = vand.u32 %v707, 4294901760
    %6605 = vmatpush1.msra.mxu0 %v6604
    %6606 = vmatprep.subr.mxu0 0.0
    %v6607 = vand.u32 %v738, 4294901760
    %6608 = vmatpush2.msra.mxu0 %v6607
    %6609 = vmatprep.subr.mxu0 0.0
    %v6610 = vand.u32 %v737, 4294901760
    %6611 = vmatpush2.msra.mxu0 %v6610
    %6612 = vmatprep.subr.mxu0 0.0
    %v6613 = vand.u32 %v736, 4294901760
    %6614 = vmatpush2.msra.mxu0 %v6613
    %6615 = vmatprep.subr.mxu0 0.0
    %v6616 = vand.u32 %v735, 4294901760
    %6617 = vmatpush2.msra.mxu0 %v6616
    %6618 = vmatprep.subr.mxu0 0.0
    %v6619 = vand.u32 %v734, 4294901760
    %6620 = vmatpush2.msra.mxu0 %v6619
    %6621 = vmatprep.subr.mxu0 0.0
    %v6622 = vand.u32 %v733, 4294901760
    %6623 = vmatpush2.msra.mxu0 %v6622
    %6624 = vmatprep.subr.mxu0 0.0
    %v6625 = vand.u32 %v732, 4294901760
    %6626 = vmatpush2.msra.mxu0 %v6625
    %6627 = vmatprep.subr.mxu0 0.0
    %v6628 = vand.u32 %v731, 4294901760
    %6629 = vmatpush2.msra.mxu0 %v6628
    %6630 = vmatprep.subr.mxu0 0.0
    %v6631 = vand.u32 %v730, 4294901760
    %6632 = vmatpush2.msra.mxu0 %v6631
    %6633 = vmatprep.subr.mxu0 0.0
    %v6634 = vand.u32 %v729, 4294901760
    %6635 = vmatpush2.msra.mxu0 %v6634
    %6636 = vmatprep.subr.mxu0 0.0
    %v6637 = vand.u32 %v728, 4294901760
    %6638 = vmatpush2.msra.mxu0 %v6637
    %6639 = vmatprep.subr.mxu0 0.0
    %v6640 = vand.u32 %v727, 4294901760
    %6641 = vmatpush2.msra.mxu0 %v6640
    %6642 = vmatprep.subr.mxu0 0.0
    %v6643 = vand.u32 %v726, 4294901760
    %6644 = vmatpush2.msra.mxu0 %v6643
    %6645 = vmatprep.subr.mxu0 0.0
    %v6646 = vand.u32 %v725, 4294901760
    %6647 = vmatpush2.msra.mxu0 %v6646
    %6648 = vmatprep.subr.mxu0 0.0
    %v6649 = vand.u32 %v724, 4294901760
    %6650 = vmatpush2.msra.mxu0 %v6649
    %6651 = vmatprep.subr.mxu0 0.0
    %v6652 = vand.u32 %v723, 4294901760
    %6653 = vmatpush2.msra.mxu0 %v6652
    %v6654 = vand.u32 %v764, 4294901760
    %v6655 = vsub.f32 %v764, %v6654
    %v6656 = vand.u32 %v6655, 4294901760
    %6657 = vmatprep.mubr.f32.mxu0 %v6656
    %v6658 = vand.u32 %v763, 4294901760
    %v6659 = vsub.f32 %v763, %v6658
    %v6660 = vand.u32 %v6659, 4294901760
    %6661 = vmatmul.mubr.f32.gmra.mxu0 %v6660
    %v6662 = vpop.f32.mrf.mxu0
    %v6663 = vadd.f32 %v6492, %v6662
    %v6664 = vpop.f32.mrf.mxu0
    %v6665 = vand.u32 %v775, 4294901760
    %v6666 = vsub.f32 %v775, %v6665
    %v6667 = vand.u32 %v6666, 4294901760
    %6668 = vmatprep.mubr.f32.mxu0 %v6667
    %v6669 = vand.u32 %v774, 4294901760
    %v6670 = vsub.f32 %v774, %v6669
    %v6671 = vand.u32 %v6670, 4294901760
    %6672 = vmatmul.mubr.f32.gmra.mxu0 %v6671
    %v6673 = vpop.f32.mrf.mxu0
    %v6674 = vadd.f32 %v6501, %v6673
    %v6675 = vpop.f32.mrf.mxu0
    %v6676 = vand.u32 %v786, 4294901760
    %v6677 = vsub.f32 %v786, %v6676
    %v6678 = vand.u32 %v6677, 4294901760
    %6679 = vmatprep.mubr.f32.mxu0 %v6678
    %v6680 = vand.u32 %v785, 4294901760
    %v6681 = vsub.f32 %v785, %v6680
    %v6682 = vand.u32 %v6681, 4294901760
    %6683 = vmatmul.mubr.f32.gmra.mxu0 %v6682
    %v6684 = vpop.f32.mrf.mxu0
    %v6685 = vadd.f32 %v6510, %v6684
    %v6686 = vpop.f32.mrf.mxu0
    %v6687 = vand.u32 %v797, 4294901760
    %v6688 = vsub.f32 %v797, %v6687
    %v6689 = vand.u32 %v6688, 4294901760
    %6690 = vmatprep.mubr.f32.mxu0 %v6689
    %v6691 = vand.u32 %v796, 4294901760
    %v6692 = vsub.f32 %v796, %v6691
    %v6693 = vand.u32 %v6692, 4294901760
    %6694 = vmatmul.mubr.f32.gmra.mxu0 %v6693
    %v6695 = vpop.f32.mrf.mxu0
    %v6696 = vadd.f32 %v6519, %v6695
    %v6697 = vpop.f32.mrf.mxu0
    %v6698 = vand.u32 %v808, 4294901760
    %v6699 = vsub.f32 %v808, %v6698
    %v6700 = vand.u32 %v6699, 4294901760
    %6701 = vmatprep.mubr.f32.mxu0 %v6700
    %v6702 = vand.u32 %v807, 4294901760
    %v6703 = vsub.f32 %v807, %v6702
    %v6704 = vand.u32 %v6703, 4294901760
    %6705 = vmatmul.mubr.f32.gmra.mxu0 %v6704
    %v6706 = vpop.f32.mrf.mxu0
    %v6707 = vadd.f32 %v6528, %v6706
    %v6708 = vpop.f32.mrf.mxu0
    %v6709 = vand.u32 %v819, 4294901760
    %v6710 = vsub.f32 %v819, %v6709
    %v6711 = vand.u32 %v6710, 4294901760
    %6712 = vmatprep.mubr.f32.mxu0 %v6711
    %v6713 = vand.u32 %v818, 4294901760
    %v6714 = vsub.f32 %v818, %v6713
    %v6715 = vand.u32 %v6714, 4294901760
    %6716 = vmatmul.mubr.f32.gmra.mxu0 %v6715
    %v6717 = vpop.f32.mrf.mxu0
    %v6718 = vadd.f32 %v6537, %v6717
    %v6719 = vpop.f32.mrf.mxu0
    %v6720 = vand.u32 %v830, 4294901760
    %v6721 = vsub.f32 %v830, %v6720
    %v6722 = vand.u32 %v6721, 4294901760
    %6723 = vmatprep.mubr.f32.mxu0 %v6722
    %v6724 = vand.u32 %v829, 4294901760
    %v6725 = vsub.f32 %v829, %v6724
    %v6726 = vand.u32 %v6725, 4294901760
    %6727 = vmatmul.mubr.f32.gmra.mxu0 %v6726
    %v6728 = vpop.f32.mrf.mxu0
    %v6729 = vadd.f32 %v6546, %v6728
    %v6730 = vpop.f32.mrf.mxu0
    %v6731 = vand.u32 %v841, 4294901760
    %v6732 = vsub.f32 %v841, %v6731
    %v6733 = vand.u32 %v6732, 4294901760
    %6734 = vmatprep.mubr.f32.mxu0 %v6733
    %v6735 = vand.u32 %v840, 4294901760
    %v6736 = vsub.f32 %v840, %v6735
    %v6737 = vand.u32 %v6736, 4294901760
    %6738 = vmatmul.mubr.f32.gmra.mxu0 %v6737
    %v6739 = vpop.f32.mrf.mxu0
    %v6740 = vadd.f32 %v6555, %v6739
    %v6741 = vpop.f32.mrf.mxu0
    %6742 = vdwg.mxu0
    %6743 = vmatprep.subr.mxu0 0.0
    %v6744 = vand.u32 %v722, 4294901760
    %v6745 = vsub.f32 %v722, %v6744
    %v6746 = vand.u32 %v6745, 4294901760
    %6747 = vmatpush1.msra.mxu0 %v6746
    %6748 = vmatprep.subr.mxu0 0.0
    %v6749 = vand.u32 %v721, 4294901760
    %v6750 = vsub.f32 %v721, %v6749
    %v6751 = vand.u32 %v6750, 4294901760
    %6752 = vmatpush1.msra.mxu0 %v6751
    %6753 = vmatprep.subr.mxu0 0.0
    %v6754 = vand.u32 %v720, 4294901760
    %v6755 = vsub.f32 %v720, %v6754
    %v6756 = vand.u32 %v6755, 4294901760
    %6757 = vmatpush1.msra.mxu0 %v6756
    %6758 = vmatprep.subr.mxu0 0.0
    %v6759 = vand.u32 %v719, 4294901760
    %v6760 = vsub.f32 %v719, %v6759
    %v6761 = vand.u32 %v6760, 4294901760
    %6762 = vmatpush1.msra.mxu0 %v6761
    %6763 = vmatprep.subr.mxu0 0.0
    %v6764 = vand.u32 %v718, 4294901760
    %v6765 = vsub.f32 %v718, %v6764
    %v6766 = vand.u32 %v6765, 4294901760
    %6767 = vmatpush1.msra.mxu0 %v6766
    %6768 = vmatprep.subr.mxu0 0.0
    %v6769 = vand.u32 %v717, 4294901760
    %v6770 = vsub.f32 %v717, %v6769
    %v6771 = vand.u32 %v6770, 4294901760
    %6772 = vmatpush1.msra.mxu0 %v6771
    %6773 = vmatprep.subr.mxu0 0.0
    %v6774 = vand.u32 %v716, 4294901760
    %v6775 = vsub.f32 %v716, %v6774
    %v6776 = vand.u32 %v6775, 4294901760
    %6777 = vmatpush1.msra.mxu0 %v6776
    %6778 = vmatprep.subr.mxu0 0.0
    %v6779 = vand.u32 %v715, 4294901760
    %v6780 = vsub.f32 %v715, %v6779
    %v6781 = vand.u32 %v6780, 4294901760
    %6782 = vmatpush1.msra.mxu0 %v6781
    %6783 = vmatprep.subr.mxu0 0.0
    %v6784 = vand.u32 %v714, 4294901760
    %v6785 = vsub.f32 %v714, %v6784
    %v6786 = vand.u32 %v6785, 4294901760
    %6787 = vmatpush1.msra.mxu0 %v6786
    %6788 = vmatprep.subr.mxu0 0.0
    %v6789 = vand.u32 %v713, 4294901760
    %v6790 = vsub.f32 %v713, %v6789
    %v6791 = vand.u32 %v6790, 4294901760
    %6792 = vmatpush1.msra.mxu0 %v6791
    %6793 = vmatprep.subr.mxu0 0.0
    %v6794 = vand.u32 %v712, 4294901760
    %v6795 = vsub.f32 %v712, %v6794
    %v6796 = vand.u32 %v6795, 4294901760
    %6797 = vmatpush1.msra.mxu0 %v6796
    %6798 = vmatprep.subr.mxu0 0.0
    %v6799 = vand.u32 %v711, 4294901760
    %v6800 = vsub.f32 %v711, %v6799
    %v6801 = vand.u32 %v6800, 4294901760
    %6802 = vmatpush1.msra.mxu0 %v6801
    %6803 = vmatprep.subr.mxu0 0.0
    %v6804 = vand.u32 %v710, 4294901760
    %v6805 = vsub.f32 %v710, %v6804
    %v6806 = vand.u32 %v6805, 4294901760
    %6807 = vmatpush1.msra.mxu0 %v6806
    %6808 = vmatprep.subr.mxu0 0.0
    %v6809 = vand.u32 %v709, 4294901760
    %v6810 = vsub.f32 %v709, %v6809
    %v6811 = vand.u32 %v6810, 4294901760
    %6812 = vmatpush1.msra.mxu0 %v6811
    %6813 = vmatprep.subr.mxu0 0.0
    %v6814 = vand.u32 %v708, 4294901760
    %v6815 = vsub.f32 %v708, %v6814
    %v6816 = vand.u32 %v6815, 4294901760
    %6817 = vmatpush1.msra.mxu0 %v6816
    %6818 = vmatprep.subr.mxu0 0.0
    %v6819 = vand.u32 %v707, 4294901760
    %v6820 = vsub.f32 %v707, %v6819
    %v6821 = vand.u32 %v6820, 4294901760
    %6822 = vmatpush1.msra.mxu0 %v6821
    %6823 = vmatprep.subr.mxu0 0.0
    %v6824 = vand.u32 %v738, 4294901760
    %v6825 = vsub.f32 %v738, %v6824
    %v6826 = vand.u32 %v6825, 4294901760
    %6827 = vmatpush2.msra.mxu0 %v6826
    %6828 = vmatprep.subr.mxu0 0.0
    %v6829 = vand.u32 %v737, 4294901760
    %v6830 = vsub.f32 %v737, %v6829
    %v6831 = vand.u32 %v6830, 4294901760
    %6832 = vmatpush2.msra.mxu0 %v6831
    %6833 = vmatprep.subr.mxu0 0.0
    %v6834 = vand.u32 %v736, 4294901760
    %v6835 = vsub.f32 %v736, %v6834
    %v6836 = vand.u32 %v6835, 4294901760
    %6837 = vmatpush2.msra.mxu0 %v6836
    %6838 = vmatprep.subr.mxu0 0.0
    %v6839 = vand.u32 %v735, 4294901760
    %v6840 = vsub.f32 %v735, %v6839
    %v6841 = vand.u32 %v6840, 4294901760
    %6842 = vmatpush2.msra.mxu0 %v6841
    %6843 = vmatprep.subr.mxu0 0.0
    %v6844 = vand.u32 %v734, 4294901760
    %v6845 = vsub.f32 %v734, %v6844
    %v6846 = vand.u32 %v6845, 4294901760
    %6847 = vmatpush2.msra.mxu0 %v6846
    %6848 = vmatprep.subr.mxu0 0.0
    %v6849 = vand.u32 %v733, 4294901760
    %v6850 = vsub.f32 %v733, %v6849
    %v6851 = vand.u32 %v6850, 4294901760
    %6852 = vmatpush2.msra.mxu0 %v6851
    %6853 = vmatprep.subr.mxu0 0.0
    %v6854 = vand.u32 %v732, 4294901760
    %v6855 = vsub.f32 %v732, %v6854
    %v6856 = vand.u32 %v6855, 4294901760
    %6857 = vmatpush2.msra.mxu0 %v6856
    %6858 = vmatprep.subr.mxu0 0.0
    %v6859 = vand.u32 %v731, 4294901760
    %v6860 = vsub.f32 %v731, %v6859
    %v6861 = vand.u32 %v6860, 4294901760
    %6862 = vmatpush2.msra.mxu0 %v6861
    %6863 = vmatprep.subr.mxu0 0.0
    %v6864 = vand.u32 %v730, 4294901760
    %v6865 = vsub.f32 %v730, %v6864
    %v6866 = vand.u32 %v6865, 4294901760
    %6867 = vmatpush2.msra.mxu0 %v6866
    %6868 = vmatprep.subr.mxu0 0.0
    %v6869 = vand.u32 %v729, 4294901760
    %v6870 = vsub.f32 %v729, %v6869
    %v6871 = vand.u32 %v6870, 4294901760
    %6872 = vmatpush2.msra.mxu0 %v6871
    %6873 = vmatprep.subr.mxu0 0.0
    %v6874 = vand.u32 %v728, 4294901760
    %v6875 = vsub.f32 %v728, %v6874
    %v6876 = vand.u32 %v6875, 4294901760
    %6877 = vmatpush2.msra.mxu0 %v6876
    %6878 = vmatprep.subr.mxu0 0.0
    %v6879 = vand.u32 %v727, 4294901760
    %v6880 = vsub.f32 %v727, %v6879
    %v6881 = vand.u32 %v6880, 4294901760
    %6882 = vmatpush2.msra.mxu0 %v6881
    %6883 = vmatprep.subr.mxu0 0.0
    %v6884 = vand.u32 %v726, 4294901760
    %v6885 = vsub.f32 %v726, %v6884
    %v6886 = vand.u32 %v6885, 4294901760
    %6887 = vmatpush2.msra.mxu0 %v6886
    %6888 = vmatprep.subr.mxu0 0.0
    %v6889 = vand.u32 %v725, 4294901760
    %v6890 = vsub.f32 %v725, %v6889
    %v6891 = vand.u32 %v6890, 4294901760
    %6892 = vmatpush2.msra.mxu0 %v6891
    %6893 = vmatprep.subr.mxu0 0.0
    %v6894 = vand.u32 %v724, 4294901760
    %v6895 = vsub.f32 %v724, %v6894
    %v6896 = vand.u32 %v6895, 4294901760
    %6897 = vmatpush2.msra.mxu0 %v6896
    %6898 = vmatprep.subr.mxu0 0.0
    %v6899 = vand.u32 %v723, 4294901760
    %v6900 = vsub.f32 %v723, %v6899
    %v6901 = vand.u32 %v6900, 4294901760
    %6902 = vmatpush2.msra.mxu0 %v6901
    %v6903 = vand.u32 %v764, 4294901760
    %6904 = vmatprep.mubr.f32.mxu0 %v6903
    %v6905 = vand.u32 %v763, 4294901760
    %6906 = vmatmul.mubr.f32.gmra.mxu0 %v6905
    %v6907 = vpop.f32.mrf.mxu0
    %v6908 = vadd.f32 %v6663, %v6907
    %v6909 = vpop.f32.mrf.mxu0
    %v6910 = vand.u32 %v775, 4294901760
    %6911 = vmatprep.mubr.f32.mxu0 %v6910
    %v6912 = vand.u32 %v774, 4294901760
    %6913 = vmatmul.mubr.f32.gmra.mxu0 %v6912
    %v6914 = vpop.f32.mrf.mxu0
    %v6915 = vadd.f32 %v6674, %v6914
    %v6916 = vpop.f32.mrf.mxu0
    %v6917 = vand.u32 %v786, 4294901760
    %6918 = vmatprep.mubr.f32.mxu0 %v6917
    %v6919 = vand.u32 %v785, 4294901760
    %6920 = vmatmul.mubr.f32.gmra.mxu0 %v6919
    %v6921 = vpop.f32.mrf.mxu0
    %v6922 = vadd.f32 %v6685, %v6921
    %v6923 = vpop.f32.mrf.mxu0
    %v6924 = vand.u32 %v797, 4294901760
    %6925 = vmatprep.mubr.f32.mxu0 %v6924
    %v6926 = vand.u32 %v796, 4294901760
    %6927 = vmatmul.mubr.f32.gmra.mxu0 %v6926
    %v6928 = vpop.f32.mrf.mxu0
    %v6929 = vadd.f32 %v6696, %v6928
    %v6930 = vpop.f32.mrf.mxu0
    %v6931 = vand.u32 %v808, 4294901760
    %6932 = vmatprep.mubr.f32.mxu0 %v6931
    %v6933 = vand.u32 %v807, 4294901760
    %6934 = vmatmul.mubr.f32.gmra.mxu0 %v6933
    %v6935 = vpop.f32.mrf.mxu0
    %v6936 = vadd.f32 %v6707, %v6935
    %v6937 = vpop.f32.mrf.mxu0
    %v6938 = vand.u32 %v819, 4294901760
    %6939 = vmatprep.mubr.f32.mxu0 %v6938
    %v6940 = vand.u32 %v818, 4294901760
    %6941 = vmatmul.mubr.f32.gmra.mxu0 %v6940
    %v6942 = vpop.f32.mrf.mxu0
    %v6943 = vadd.f32 %v6718, %v6942
    %v6944 = vpop.f32.mrf.mxu0
    %v6945 = vand.u32 %v830, 4294901760
    %6946 = vmatprep.mubr.f32.mxu0 %v6945
    %v6947 = vand.u32 %v829, 4294901760
    %6948 = vmatmul.mubr.f32.gmra.mxu0 %v6947
    %v6949 = vpop.f32.mrf.mxu0
    %v6950 = vadd.f32 %v6729, %v6949
    %v6951 = vpop.f32.mrf.mxu0
    %v6952 = vand.u32 %v841, 4294901760
    %6953 = vmatprep.mubr.f32.mxu0 %v6952
    %v6954 = vand.u32 %v840, 4294901760
    %6955 = vmatmul.mubr.f32.gmra.mxu0 %v6954
    %v6956 = vpop.f32.mrf.mxu0
    %v6957 = vadd.f32 %v6740, %v6956
    %v6958 = vpop.f32.mrf.mxu0
    %6959 = vdwg.mxu0
    %6960 = vmatprep.subr.mxu0 0.0
    %v6961 = vand.u32 %v722, 4294901760
    %6962 = vmatpush1.msra.mxu0 %v6961
    %6963 = vmatprep.subr.mxu0 0.0
    %v6964 = vand.u32 %v721, 4294901760
    %6965 = vmatpush1.msra.mxu0 %v6964
    %6966 = vmatprep.subr.mxu0 0.0
    %v6967 = vand.u32 %v720, 4294901760
    %6968 = vmatpush1.msra.mxu0 %v6967
    %6969 = vmatprep.subr.mxu0 0.0
    %v6970 = vand.u32 %v719, 4294901760
    %6971 = vmatpush1.msra.mxu0 %v6970
    %6972 = vmatprep.subr.mxu0 0.0
    %v6973 = vand.u32 %v718, 4294901760
    %6974 = vmatpush1.msra.mxu0 %v6973
    %6975 = vmatprep.subr.mxu0 0.0
    %v6976 = vand.u32 %v717, 4294901760
    %6977 = vmatpush1.msra.mxu0 %v6976
    %6978 = vmatprep.subr.mxu0 0.0
    %v6979 = vand.u32 %v716, 4294901760
    %6980 = vmatpush1.msra.mxu0 %v6979
    %6981 = vmatprep.subr.mxu0 0.0
    %v6982 = vand.u32 %v715, 4294901760
    %6983 = vmatpush1.msra.mxu0 %v6982
    %6984 = vmatprep.subr.mxu0 0.0
    %v6985 = vand.u32 %v714, 4294901760
    %6986 = vmatpush1.msra.mxu0 %v6985
    %6987 = vmatprep.subr.mxu0 0.0
    %v6988 = vand.u32 %v713, 4294901760
    %6989 = vmatpush1.msra.mxu0 %v6988
    %6990 = vmatprep.subr.mxu0 0.0
    %v6991 = vand.u32 %v712, 4294901760
    %6992 = vmatpush1.msra.mxu0 %v6991
    %6993 = vmatprep.subr.mxu0 0.0
    %v6994 = vand.u32 %v711, 4294901760
    %6995 = vmatpush1.msra.mxu0 %v6994
    %6996 = vmatprep.subr.mxu0 0.0
    %v6997 = vand.u32 %v710, 4294901760
    %6998 = vmatpush1.msra.mxu0 %v6997
    %6999 = vmatprep.subr.mxu0 0.0
    %v7000 = vand.u32 %v709, 4294901760
    %7001 = vmatpush1.msra.mxu0 %v7000
    %7002 = vmatprep.subr.mxu0 0.0
    %v7003 = vand.u32 %v708, 4294901760
    %7004 = vmatpush1.msra.mxu0 %v7003
    %7005 = vmatprep.subr.mxu0 0.0
    %v7006 = vand.u32 %v707, 4294901760
    %7007 = vmatpush1.msra.mxu0 %v7006
    %7008 = vmatprep.subr.mxu0 0.0
    %v7009 = vand.u32 %v738, 4294901760
    %7010 = vmatpush2.msra.mxu0 %v7009
    %7011 = vmatprep.subr.mxu0 0.0
    %v7012 = vand.u32 %v737, 4294901760
    %7013 = vmatpush2.msra.mxu0 %v7012
    %7014 = vmatprep.subr.mxu0 0.0
    %v7015 = vand.u32 %v736, 4294901760
    %7016 = vmatpush2.msra.mxu0 %v7015
    %7017 = vmatprep.subr.mxu0 0.0
    %v7018 = vand.u32 %v735, 4294901760
    %7019 = vmatpush2.msra.mxu0 %v7018
    %7020 = vmatprep.subr.mxu0 0.0
    %v7021 = vand.u32 %v734, 4294901760
    %7022 = vmatpush2.msra.mxu0 %v7021
    %7023 = vmatprep.subr.mxu0 0.0
    %v7024 = vand.u32 %v733, 4294901760
    %7025 = vmatpush2.msra.mxu0 %v7024
    %7026 = vmatprep.subr.mxu0 0.0
    %v7027 = vand.u32 %v732, 4294901760
    %7028 = vmatpush2.msra.mxu0 %v7027
    %7029 = vmatprep.subr.mxu0 0.0
    %v7030 = vand.u32 %v731, 4294901760
    %7031 = vmatpush2.msra.mxu0 %v7030
    %7032 = vmatprep.subr.mxu0 0.0
    %v7033 = vand.u32 %v730, 4294901760
    %7034 = vmatpush2.msra.mxu0 %v7033
    %7035 = vmatprep.subr.mxu0 0.0
    %v7036 = vand.u32 %v729, 4294901760
    %7037 = vmatpush2.msra.mxu0 %v7036
    %7038 = vmatprep.subr.mxu0 0.0
    %v7039 = vand.u32 %v728, 4294901760
    %7040 = vmatpush2.msra.mxu0 %v7039
    %7041 = vmatprep.subr.mxu0 0.0
    %v7042 = vand.u32 %v727, 4294901760
    %7043 = vmatpush2.msra.mxu0 %v7042
    %7044 = vmatprep.subr.mxu0 0.0
    %v7045 = vand.u32 %v726, 4294901760
    %7046 = vmatpush2.msra.mxu0 %v7045
    %7047 = vmatprep.subr.mxu0 0.0
    %v7048 = vand.u32 %v725, 4294901760
    %7049 = vmatpush2.msra.mxu0 %v7048
    %7050 = vmatprep.subr.mxu0 0.0
    %v7051 = vand.u32 %v724, 4294901760
    %7052 = vmatpush2.msra.mxu0 %v7051
    %7053 = vmatprep.subr.mxu0 0.0
    %v7054 = vand.u32 %v723, 4294901760
    %7055 = vmatpush2.msra.mxu0 %v7054
    %v7056 = vand.u32 %v764, 4294901760
    %7057 = vmatprep.mubr.f32.mxu0 %v7056
    %v7058 = vand.u32 %v763, 4294901760
    %7059 = vmatmul.mubr.f32.gmra.mxu0 %v7058
    %v7060 = vpop.f32.mrf.mxu0
    %v7061 = vadd.f32 %v6908, %v7060
    %v7062 = vpop.f32.mrf.mxu0
    %v7063 = vand.u32 %v775, 4294901760
    %7064 = vmatprep.mubr.f32.mxu0 %v7063
    %v7065 = vand.u32 %v774, 4294901760
    %7066 = vmatmul.mubr.f32.gmra.mxu0 %v7065
    %v7067 = vpop.f32.mrf.mxu0
    %v7068 = vadd.f32 %v6915, %v7067
    %v7069 = vpop.f32.mrf.mxu0
    %v7070 = vand.u32 %v786, 4294901760
    %7071 = vmatprep.mubr.f32.mxu0 %v7070
    %v7072 = vand.u32 %v785, 4294901760
    %7073 = vmatmul.mubr.f32.gmra.mxu0 %v7072
    %v7074 = vpop.f32.mrf.mxu0
    %v7075 = vadd.f32 %v6922, %v7074
    %v7076 = vpop.f32.mrf.mxu0
    %v7077 = vand.u32 %v797, 4294901760
    %7078 = vmatprep.mubr.f32.mxu0 %v7077
    %v7079 = vand.u32 %v796, 4294901760
    %7080 = vmatmul.mubr.f32.gmra.mxu0 %v7079
    %v7081 = vpop.f32.mrf.mxu0
    %v7082 = vadd.f32 %v6929, %v7081
    %v7083 = vpop.f32.mrf.mxu0
    %v7084 = vand.u32 %v808, 4294901760
    %7085 = vmatprep.mubr.f32.mxu0 %v7084
    %v7086 = vand.u32 %v807, 4294901760
    %7087 = vmatmul.mubr.f32.gmra.mxu0 %v7086
    %v7088 = vpop.f32.mrf.mxu0
    %v7089 = vadd.f32 %v6936, %v7088
    %v7090 = vpop.f32.mrf.mxu0
    %v7091 = vand.u32 %v819, 4294901760
    %7092 = vmatprep.mubr.f32.mxu0 %v7091
    %v7093 = vand.u32 %v818, 4294901760
    %7094 = vmatmul.mubr.f32.gmra.mxu0 %v7093
    %v7095 = vpop.f32.mrf.mxu0
    %v7096 = vadd.f32 %v6943, %v7095
    %v7097 = vpop.f32.mrf.mxu0
    %v7098 = vand.u32 %v830, 4294901760
    %7099 = vmatprep.mubr.f32.mxu0 %v7098
    %v7100 = vand.u32 %v829, 4294901760
    %7101 = vmatmul.mubr.f32.gmra.mxu0 %v7100
    %v7102 = vpop.f32.mrf.mxu0
    %v7103 = vadd.f32 %v6950, %v7102
    %v7104 = vpop.f32.mrf.mxu0
    %v7105 = vand.u32 %v841, 4294901760
    %7106 = vmatprep.mubr.f32.mxu0 %v7105
    %v7107 = vand.u32 %v840, 4294901760
    %7108 = vmatmul.mubr.f32.gmra.mxu0 %v7107
    %v7109 = vpop.f32.mrf.mxu0
    %v7110 = vadd.f32 %v6957, %v7109
    %v7111 = vpop.f32.mrf.mxu0
    %7112 = vdwg.mxu0
    %7113 = vmatprep.subr.mxu0 0.0
    %v7114 = vand.u32 %v754, 4294901760
    %7115 = vmatpush1.msra.mxu0 %v7114
    %7116 = vmatprep.subr.mxu0 0.0
    %v7117 = vand.u32 %v753, 4294901760
    %7118 = vmatpush1.msra.mxu0 %v7117
    %7119 = vmatprep.subr.mxu0 0.0
    %v7120 = vand.u32 %v752, 4294901760
    %7121 = vmatpush1.msra.mxu0 %v7120
    %7122 = vmatprep.subr.mxu0 0.0
    %v7123 = vand.u32 %v751, 4294901760
    %7124 = vmatpush1.msra.mxu0 %v7123
    %7125 = vmatprep.subr.mxu0 0.0
    %v7126 = vand.u32 %v750, 4294901760
    %7127 = vmatpush1.msra.mxu0 %v7126
    %7128 = vmatprep.subr.mxu0 0.0
    %v7129 = vand.u32 %v749, 4294901760
    %7130 = vmatpush1.msra.mxu0 %v7129
    %7131 = vmatprep.subr.mxu0 0.0
    %v7132 = vand.u32 %v748, 4294901760
    %7133 = vmatpush1.msra.mxu0 %v7132
    %7134 = vmatprep.subr.mxu0 0.0
    %v7135 = vand.u32 %v747, 4294901760
    %7136 = vmatpush1.msra.mxu0 %v7135
    %7137 = vmatprep.subr.mxu0 0.0
    %v7138 = vand.u32 %v746, 4294901760
    %7139 = vmatpush1.msra.mxu0 %v7138
    %7140 = vmatprep.subr.mxu0 0.0
    %v7141 = vand.u32 %v745, 4294901760
    %7142 = vmatpush1.msra.mxu0 %v7141
    %7143 = vmatprep.subr.mxu0 0.0
    %v7144 = vand.u32 %v744, 4294901760
    %7145 = vmatpush1.msra.mxu0 %v7144
    %7146 = vmatprep.subr.mxu0 0.0
    %v7147 = vand.u32 %v743, 4294901760
    %7148 = vmatpush1.msra.mxu0 %v7147
    %7149 = vmatprep.subr.mxu0 0.0
    %v7150 = vand.u32 %v742, 4294901760
    %7151 = vmatpush1.msra.mxu0 %v7150
    %7152 = vmatprep.subr.mxu0 0.0
    %v7153 = vand.u32 %v741, 4294901760
    %7154 = vmatpush1.msra.mxu0 %v7153
    %7155 = vmatprep.subr.mxu0 0.0
    %v7156 = vand.u32 %v740, 4294901760
    %7157 = vmatpush1.msra.mxu0 %v7156
    %7158 = vmatprep.subr.mxu0 0.0
    %v7159 = vand.u32 %v739, 4294901760
    %7160 = vmatpush1.msra.mxu0 %v7159
    %7161 = vmatprep.subr.mxu0 0.0
    %7162 = vmatpush2.msra.mxu0 0.0
    %7163 = vmatprep.subr.mxu0 0.0
    %7164 = vmatpush2.msra.mxu0 0.0
    %7165 = vmatprep.subr.mxu0 0.0
    %7166 = vmatpush2.msra.mxu0 0.0
    %7167 = vmatprep.subr.mxu0 0.0
    %7168 = vmatpush2.msra.mxu0 0.0
    %7169 = vmatprep.subr.mxu0 0.0
    %7170 = vmatpush2.msra.mxu0 0.0
    %7171 = vmatprep.subr.mxu0 0.0
    %7172 = vmatpush2.msra.mxu0 0.0
    %7173 = vmatprep.subr.mxu0 0.0
    %7174 = vmatpush2.msra.mxu0 0.0
    %7175 = vmatprep.subr.mxu0 0.0
    %7176 = vmatpush2.msra.mxu0 0.0
    %7177 = vmatprep.subr.mxu0 0.0
    %7178 = vmatpush2.msra.mxu0 0.0
    %7179 = vmatprep.subr.mxu0 0.0
    %7180 = vmatpush2.msra.mxu0 0.0
    %7181 = vmatprep.subr.mxu0 0.0
    %7182 = vmatpush2.msra.mxu0 0.0
    %7183 = vmatprep.subr.mxu0 0.0
    %7184 = vmatpush2.msra.mxu0 0.0
    %7185 = vmatprep.subr.mxu0 0.0
    %7186 = vmatpush2.msra.mxu0 0.0
    %7187 = vmatprep.subr.mxu0 0.0
    %7188 = vmatpush2.msra.mxu0 0.0
    %7189 = vmatprep.subr.mxu0 0.0
    %7190 = vmatpush2.msra.mxu0 0.0
    %7191 = vmatprep.subr.mxu0 0.0
    %7192 = vmatpush2.msra.mxu0 0.0
    %7193 = vmatprep.mubr.f32.mxu0 0.0
    %v7194 = vand.u32 %v765, 4294901760
    %v7195 = vsub.f32 %v765, %v7194
    %v7196 = vand.u32 %v7195, 4294901760
    %v7197 = vsub.f32 %v7195, %v7196
    %v7198 = vand.u32 %v7197, 4294901760
    %7199 = vmatmul.mubr.f32.gmra.mxu0 %v7198
    %v7200 = vpop.f32.mrf.mxu0
    %v7201 = vadd.f32 %v7061, %v7200
    %v7202 = vpop.f32.mrf.mxu0
    %7203 = vmatprep.mubr.f32.mxu0 0.0
    %v7204 = vand.u32 %v776, 4294901760
    %v7205 = vsub.f32 %v776, %v7204
    %v7206 = vand.u32 %v7205, 4294901760
    %v7207 = vsub.f32 %v7205, %v7206
    %v7208 = vand.u32 %v7207, 4294901760
    %7209 = vmatmul.mubr.f32.gmra.mxu0 %v7208
    %v7210 = vpop.f32.mrf.mxu0
    %v7211 = vadd.f32 %v7068, %v7210
    %v7212 = vpop.f32.mrf.mxu0
    %7213 = vmatprep.mubr.f32.mxu0 0.0
    %v7214 = vand.u32 %v787, 4294901760
    %v7215 = vsub.f32 %v787, %v7214
    %v7216 = vand.u32 %v7215, 4294901760
    %v7217 = vsub.f32 %v7215, %v7216
    %v7218 = vand.u32 %v7217, 4294901760
    %7219 = vmatmul.mubr.f32.gmra.mxu0 %v7218
    %v7220 = vpop.f32.mrf.mxu0
    %v7221 = vadd.f32 %v7075, %v7220
    %v7222 = vpop.f32.mrf.mxu0
    %7223 = vmatprep.mubr.f32.mxu0 0.0
    %v7224 = vand.u32 %v798, 4294901760
    %v7225 = vsub.f32 %v798, %v7224
    %v7226 = vand.u32 %v7225, 4294901760
    %v7227 = vsub.f32 %v7225, %v7226
    %v7228 = vand.u32 %v7227, 4294901760
    %7229 = vmatmul.mubr.f32.gmra.mxu0 %v7228
    %v7230 = vpop.f32.mrf.mxu0
    %v7231 = vadd.f32 %v7082, %v7230
    %v7232 = vpop.f32.mrf.mxu0
    %7233 = vmatprep.mubr.f32.mxu0 0.0
    %v7234 = vand.u32 %v809, 4294901760
    %v7235 = vsub.f32 %v809, %v7234
    %v7236 = vand.u32 %v7235, 4294901760
    %v7237 = vsub.f32 %v7235, %v7236
    %v7238 = vand.u32 %v7237, 4294901760
    %7239 = vmatmul.mubr.f32.gmra.mxu0 %v7238
    %v7240 = vpop.f32.mrf.mxu0
    %v7241 = vadd.f32 %v7089, %v7240
    %v7242 = vpop.f32.mrf.mxu0
    %7243 = vmatprep.mubr.f32.mxu0 0.0
    %v7244 = vand.u32 %v820, 4294901760
    %v7245 = vsub.f32 %v820, %v7244
    %v7246 = vand.u32 %v7245, 4294901760
    %v7247 = vsub.f32 %v7245, %v7246
    %v7248 = vand.u32 %v7247, 4294901760
    %7249 = vmatmul.mubr.f32.gmra.mxu0 %v7248
    %v7250 = vpop.f32.mrf.mxu0
    %v7251 = vadd.f32 %v7096, %v7250
    %v7252 = vpop.f32.mrf.mxu0
    %7253 = vmatprep.mubr.f32.mxu0 0.0
    %v7254 = vand.u32 %v831, 4294901760
    %v7255 = vsub.f32 %v831, %v7254
    %v7256 = vand.u32 %v7255, 4294901760
    %v7257 = vsub.f32 %v7255, %v7256
    %v7258 = vand.u32 %v7257, 4294901760
    %7259 = vmatmul.mubr.f32.gmra.mxu0 %v7258
    %v7260 = vpop.f32.mrf.mxu0
    %v7261 = vadd.f32 %v7103, %v7260
    %v7262 = vpop.f32.mrf.mxu0
    %7263 = vmatprep.mubr.f32.mxu0 0.0
    %v7264 = vand.u32 %v842, 4294901760
    %v7265 = vsub.f32 %v842, %v7264
    %v7266 = vand.u32 %v7265, 4294901760
    %v7267 = vsub.f32 %v7265, %v7266
    %v7268 = vand.u32 %v7267, 4294901760
    %7269 = vmatmul.mubr.f32.gmra.mxu0 %v7268
    %v7270 = vpop.f32.mrf.mxu0
    %v7271 = vadd.f32 %v7110, %v7270
    %v7272 = vpop.f32.mrf.mxu0
    %7273 = vdwg.mxu0
    %7274 = vmatprep.subr.mxu0 0.0
    %v7275 = vand.u32 %v754, 4294901760
    %v7276 = vsub.f32 %v754, %v7275
    %v7277 = vand.u32 %v7276, 4294901760
    %v7278 = vsub.f32 %v7276, %v7277
    %v7279 = vand.u32 %v7278, 4294901760
    %7280 = vmatpush1.msra.mxu0 %v7279
    %7281 = vmatprep.subr.mxu0 0.0
    %v7282 = vand.u32 %v753, 4294901760
    %v7283 = vsub.f32 %v753, %v7282
    %v7284 = vand.u32 %v7283, 4294901760
    %v7285 = vsub.f32 %v7283, %v7284
    %v7286 = vand.u32 %v7285, 4294901760
    %7287 = vmatpush1.msra.mxu0 %v7286
    %7288 = vmatprep.subr.mxu0 0.0
    %v7289 = vand.u32 %v752, 4294901760
    %v7290 = vsub.f32 %v752, %v7289
    %v7291 = vand.u32 %v7290, 4294901760
    %v7292 = vsub.f32 %v7290, %v7291
    %v7293 = vand.u32 %v7292, 4294901760
    %7294 = vmatpush1.msra.mxu0 %v7293
    %7295 = vmatprep.subr.mxu0 0.0
    %v7296 = vand.u32 %v751, 4294901760
    %v7297 = vsub.f32 %v751, %v7296
    %v7298 = vand.u32 %v7297, 4294901760
    %v7299 = vsub.f32 %v7297, %v7298
    %v7300 = vand.u32 %v7299, 4294901760
    %7301 = vmatpush1.msra.mxu0 %v7300
    %7302 = vmatprep.subr.mxu0 0.0
    %v7303 = vand.u32 %v750, 4294901760
    %v7304 = vsub.f32 %v750, %v7303
    %v7305 = vand.u32 %v7304, 4294901760
    %v7306 = vsub.f32 %v7304, %v7305
    %v7307 = vand.u32 %v7306, 4294901760
    %7308 = vmatpush1.msra.mxu0 %v7307
    %7309 = vmatprep.subr.mxu0 0.0
    %v7310 = vand.u32 %v749, 4294901760
    %v7311 = vsub.f32 %v749, %v7310
    %v7312 = vand.u32 %v7311, 4294901760
    %v7313 = vsub.f32 %v7311, %v7312
    %v7314 = vand.u32 %v7313, 4294901760
    %7315 = vmatpush1.msra.mxu0 %v7314
    %7316 = vmatprep.subr.mxu0 0.0
    %v7317 = vand.u32 %v748, 4294901760
    %v7318 = vsub.f32 %v748, %v7317
    %v7319 = vand.u32 %v7318, 4294901760
    %v7320 = vsub.f32 %v7318, %v7319
    %v7321 = vand.u32 %v7320, 4294901760
    %7322 = vmatpush1.msra.mxu0 %v7321
    %7323 = vmatprep.subr.mxu0 0.0
    %v7324 = vand.u32 %v747, 4294901760
    %v7325 = vsub.f32 %v747, %v7324
    %v7326 = vand.u32 %v7325, 4294901760
    %v7327 = vsub.f32 %v7325, %v7326
    %v7328 = vand.u32 %v7327, 4294901760
    %7329 = vmatpush1.msra.mxu0 %v7328
    %7330 = vmatprep.subr.mxu0 0.0
    %v7331 = vand.u32 %v746, 4294901760
    %v7332 = vsub.f32 %v746, %v7331
    %v7333 = vand.u32 %v7332, 4294901760
    %v7334 = vsub.f32 %v7332, %v7333
    %v7335 = vand.u32 %v7334, 4294901760
    %7336 = vmatpush1.msra.mxu0 %v7335
    %7337 = vmatprep.subr.mxu0 0.0
    %v7338 = vand.u32 %v745, 4294901760
    %v7339 = vsub.f32 %v745, %v7338
    %v7340 = vand.u32 %v7339, 4294901760
    %v7341 = vsub.f32 %v7339, %v7340
    %v7342 = vand.u32 %v7341, 4294901760
    %7343 = vmatpush1.msra.mxu0 %v7342
    %7344 = vmatprep.subr.mxu0 0.0
    %v7345 = vand.u32 %v744, 4294901760
    %v7346 = vsub.f32 %v744, %v7345
    %v7347 = vand.u32 %v7346, 4294901760
    %v7348 = vsub.f32 %v7346, %v7347
    %v7349 = vand.u32 %v7348, 4294901760
    %7350 = vmatpush1.msra.mxu0 %v7349
    %7351 = vmatprep.subr.mxu0 0.0
    %v7352 = vand.u32 %v743, 4294901760
    %v7353 = vsub.f32 %v743, %v7352
    %v7354 = vand.u32 %v7353, 4294901760
    %v7355 = vsub.f32 %v7353, %v7354
    %v7356 = vand.u32 %v7355, 4294901760
    %7357 = vmatpush1.msra.mxu0 %v7356
    %7358 = vmatprep.subr.mxu0 0.0
    %v7359 = vand.u32 %v742, 4294901760
    %v7360 = vsub.f32 %v742, %v7359
    %v7361 = vand.u32 %v7360, 4294901760
    %v7362 = vsub.f32 %v7360, %v7361
    %v7363 = vand.u32 %v7362, 4294901760
    %7364 = vmatpush1.msra.mxu0 %v7363
    %7365 = vmatprep.subr.mxu0 0.0
    %v7366 = vand.u32 %v741, 4294901760
    %v7367 = vsub.f32 %v741, %v7366
    %v7368 = vand.u32 %v7367, 4294901760
    %v7369 = vsub.f32 %v7367, %v7368
    %v7370 = vand.u32 %v7369, 4294901760
    %7371 = vmatpush1.msra.mxu0 %v7370
    %7372 = vmatprep.subr.mxu0 0.0
    %v7373 = vand.u32 %v740, 4294901760
    %v7374 = vsub.f32 %v740, %v7373
    %v7375 = vand.u32 %v7374, 4294901760
    %v7376 = vsub.f32 %v7374, %v7375
    %v7377 = vand.u32 %v7376, 4294901760
    %7378 = vmatpush1.msra.mxu0 %v7377
    %7379 = vmatprep.subr.mxu0 0.0
    %v7380 = vand.u32 %v739, 4294901760
    %v7381 = vsub.f32 %v739, %v7380
    %v7382 = vand.u32 %v7381, 4294901760
    %v7383 = vsub.f32 %v7381, %v7382
    %v7384 = vand.u32 %v7383, 4294901760
    %7385 = vmatpush1.msra.mxu0 %v7384
    %7386 = vmatprep.subr.mxu0 0.0
    %7387 = vmatpush2.msra.mxu0 0.0
    %7388 = vmatprep.subr.mxu0 0.0
    %7389 = vmatpush2.msra.mxu0 0.0
    %7390 = vmatprep.subr.mxu0 0.0
    %7391 = vmatpush2.msra.mxu0 0.0
    %7392 = vmatprep.subr.mxu0 0.0
    %7393 = vmatpush2.msra.mxu0 0.0
    %7394 = vmatprep.subr.mxu0 0.0
    %7395 = vmatpush2.msra.mxu0 0.0
    %7396 = vmatprep.subr.mxu0 0.0
    %7397 = vmatpush2.msra.mxu0 0.0
    %7398 = vmatprep.subr.mxu0 0.0
    %7399 = vmatpush2.msra.mxu0 0.0
    %7400 = vmatprep.subr.mxu0 0.0
    %7401 = vmatpush2.msra.mxu0 0.0
    %7402 = vmatprep.subr.mxu0 0.0
    %7403 = vmatpush2.msra.mxu0 0.0
    %7404 = vmatprep.subr.mxu0 0.0
    %7405 = vmatpush2.msra.mxu0 0.0
    %7406 = vmatprep.subr.mxu0 0.0
    %7407 = vmatpush2.msra.mxu0 0.0
    %7408 = vmatprep.subr.mxu0 0.0
    %7409 = vmatpush2.msra.mxu0 0.0
    %7410 = vmatprep.subr.mxu0 0.0
    %7411 = vmatpush2.msra.mxu0 0.0
    %7412 = vmatprep.subr.mxu0 0.0
    %7413 = vmatpush2.msra.mxu0 0.0
    %7414 = vmatprep.subr.mxu0 0.0
    %7415 = vmatpush2.msra.mxu0 0.0
    %7416 = vmatprep.subr.mxu0 0.0
    %7417 = vmatpush2.msra.mxu0 0.0
    %7418 = vmatprep.mubr.f32.mxu0 0.0
    %v7419 = vand.u32 %v765, 4294901760
    %7420 = vmatmul.mubr.f32.gmra.mxu0 %v7419
    %v7421 = vpop.f32.mrf.mxu0
    %v7422 = vadd.f32 %v7201, %v7421
    %v7423 = vpop.f32.mrf.mxu0
    %7424 = vmatprep.mubr.f32.mxu0 0.0
    %v7425 = vand.u32 %v776, 4294901760
    %7426 = vmatmul.mubr.f32.gmra.mxu0 %v7425
    %v7427 = vpop.f32.mrf.mxu0
    %v7428 = vadd.f32 %v7211, %v7427
    %v7429 = vpop.f32.mrf.mxu0
    %7430 = vmatprep.mubr.f32.mxu0 0.0
    %v7431 = vand.u32 %v787, 4294901760
    %7432 = vmatmul.mubr.f32.gmra.mxu0 %v7431
    %v7433 = vpop.f32.mrf.mxu0
    %v7434 = vadd.f32 %v7221, %v7433
    %v7435 = vpop.f32.mrf.mxu0
    %7436 = vmatprep.mubr.f32.mxu0 0.0
    %v7437 = vand.u32 %v798, 4294901760
    %7438 = vmatmul.mubr.f32.gmra.mxu0 %v7437
    %v7439 = vpop.f32.mrf.mxu0
    %v7440 = vadd.f32 %v7231, %v7439
    %v7441 = vpop.f32.mrf.mxu0
    %7442 = vmatprep.mubr.f32.mxu0 0.0
    %v7443 = vand.u32 %v809, 4294901760
    %7444 = vmatmul.mubr.f32.gmra.mxu0 %v7443
    %v7445 = vpop.f32.mrf.mxu0
    %v7446 = vadd.f32 %v7241, %v7445
    %v7447 = vpop.f32.mrf.mxu0
    %7448 = vmatprep.mubr.f32.mxu0 0.0
    %v7449 = vand.u32 %v820, 4294901760
    %7450 = vmatmul.mubr.f32.gmra.mxu0 %v7449
    %v7451 = vpop.f32.mrf.mxu0
    %v7452 = vadd.f32 %v7251, %v7451
    %v7453 = vpop.f32.mrf.mxu0
    %7454 = vmatprep.mubr.f32.mxu0 0.0
    %v7455 = vand.u32 %v831, 4294901760
    %7456 = vmatmul.mubr.f32.gmra.mxu0 %v7455
    %v7457 = vpop.f32.mrf.mxu0
    %v7458 = vadd.f32 %v7261, %v7457
    %v7459 = vpop.f32.mrf.mxu0
    %7460 = vmatprep.mubr.f32.mxu0 0.0
    %v7461 = vand.u32 %v842, 4294901760
    %7462 = vmatmul.mubr.f32.gmra.mxu0 %v7461
    %v7463 = vpop.f32.mrf.mxu0
    %v7464 = vadd.f32 %v7271, %v7463
    %v7465 = vpop.f32.mrf.mxu0
    %7466 = vdwg.mxu0
    %7467 = vmatprep.subr.mxu0 0.0
    %v7468 = vand.u32 %v754, 4294901760
    %v7469 = vsub.f32 %v754, %v7468
    %7470 = vmatpush1.msra.mxu0 %v7469
    %7471 = vmatprep.subr.mxu0 0.0
    %v7472 = vand.u32 %v753, 4294901760
    %v7473 = vsub.f32 %v753, %v7472
    %7474 = vmatpush1.msra.mxu0 %v7473
    %7475 = vmatprep.subr.mxu0 0.0
    %v7476 = vand.u32 %v752, 4294901760
    %v7477 = vsub.f32 %v752, %v7476
    %7478 = vmatpush1.msra.mxu0 %v7477
    %7479 = vmatprep.subr.mxu0 0.0
    %v7480 = vand.u32 %v751, 4294901760
    %v7481 = vsub.f32 %v751, %v7480
    %7482 = vmatpush1.msra.mxu0 %v7481
    %7483 = vmatprep.subr.mxu0 0.0
    %v7484 = vand.u32 %v750, 4294901760
    %v7485 = vsub.f32 %v750, %v7484
    %7486 = vmatpush1.msra.mxu0 %v7485
    %7487 = vmatprep.subr.mxu0 0.0
    %v7488 = vand.u32 %v749, 4294901760
    %v7489 = vsub.f32 %v749, %v7488
    %7490 = vmatpush1.msra.mxu0 %v7489
    %7491 = vmatprep.subr.mxu0 0.0
    %v7492 = vand.u32 %v748, 4294901760
    %v7493 = vsub.f32 %v748, %v7492
    %7494 = vmatpush1.msra.mxu0 %v7493
    %7495 = vmatprep.subr.mxu0 0.0
    %v7496 = vand.u32 %v747, 4294901760
    %v7497 = vsub.f32 %v747, %v7496
    %7498 = vmatpush1.msra.mxu0 %v7497
    %7499 = vmatprep.subr.mxu0 0.0
    %v7500 = vand.u32 %v746, 4294901760
    %v7501 = vsub.f32 %v746, %v7500
    %7502 = vmatpush1.msra.mxu0 %v7501
    %7503 = vmatprep.subr.mxu0 0.0
    %v7504 = vand.u32 %v745, 4294901760
    %v7505 = vsub.f32 %v745, %v7504
    %7506 = vmatpush1.msra.mxu0 %v7505
    %7507 = vmatprep.subr.mxu0 0.0
    %v7508 = vand.u32 %v744, 4294901760
    %v7509 = vsub.f32 %v744, %v7508
    %7510 = vmatpush1.msra.mxu0 %v7509
    %7511 = vmatprep.subr.mxu0 0.0
    %v7512 = vand.u32 %v743, 4294901760
    %v7513 = vsub.f32 %v743, %v7512
    %7514 = vmatpush1.msra.mxu0 %v7513
    %7515 = vmatprep.subr.mxu0 0.0
    %v7516 = vand.u32 %v742, 4294901760
    %v7517 = vsub.f32 %v742, %v7516
    %7518 = vmatpush1.msra.mxu0 %v7517
    %7519 = vmatprep.subr.mxu0 0.0
    %v7520 = vand.u32 %v741, 4294901760
    %v7521 = vsub.f32 %v741, %v7520
    %7522 = vmatpush1.msra.mxu0 %v7521
    %7523 = vmatprep.subr.mxu0 0.0
    %v7524 = vand.u32 %v740, 4294901760
    %v7525 = vsub.f32 %v740, %v7524
    %7526 = vmatpush1.msra.mxu0 %v7525
    %7527 = vmatprep.subr.mxu0 0.0
    %v7528 = vand.u32 %v739, 4294901760
    %v7529 = vsub.f32 %v739, %v7528
    %7530 = vmatpush1.msra.mxu0 %v7529
    %7531 = vmatprep.subr.mxu0 0.0
    %7532 = vmatpush2.msra.mxu0 0.0
    %7533 = vmatprep.subr.mxu0 0.0
    %7534 = vmatpush2.msra.mxu0 0.0
    %7535 = vmatprep.subr.mxu0 0.0
    %7536 = vmatpush2.msra.mxu0 0.0
    %7537 = vmatprep.subr.mxu0 0.0
    %7538 = vmatpush2.msra.mxu0 0.0
    %7539 = vmatprep.subr.mxu0 0.0
    %7540 = vmatpush2.msra.mxu0 0.0
    %7541 = vmatprep.subr.mxu0 0.0
    %7542 = vmatpush2.msra.mxu0 0.0
    %7543 = vmatprep.subr.mxu0 0.0
    %7544 = vmatpush2.msra.mxu0 0.0
    %7545 = vmatprep.subr.mxu0 0.0
    %7546 = vmatpush2.msra.mxu0 0.0
    %7547 = vmatprep.subr.mxu0 0.0
    %7548 = vmatpush2.msra.mxu0 0.0
    %7549 = vmatprep.subr.mxu0 0.0
    %7550 = vmatpush2.msra.mxu0 0.0
    %7551 = vmatprep.subr.mxu0 0.0
    %7552 = vmatpush2.msra.mxu0 0.0
    %7553 = vmatprep.subr.mxu0 0.0
    %7554 = vmatpush2.msra.mxu0 0.0
    %7555 = vmatprep.subr.mxu0 0.0
    %7556 = vmatpush2.msra.mxu0 0.0
    %7557 = vmatprep.subr.mxu0 0.0
    %7558 = vmatpush2.msra.mxu0 0.0
    %7559 = vmatprep.subr.mxu0 0.0
    %7560 = vmatpush2.msra.mxu0 0.0
    %7561 = vmatprep.subr.mxu0 0.0
    %7562 = vmatpush2.msra.mxu0 0.0
    %7563 = vmatprep.mubr.f32.mxu0 0.0
    %v7564 = vand.u32 %v765, 4294901760
    %v7565 = vsub.f32 %v765, %v7564
    %7566 = vmatmul.mubr.f32.gmra.mxu0 %v7565
    %v7567 = vpop.f32.mrf.mxu0
    %v7568 = vadd.f32 %v7422, %v7567
    %v7569 = vpop.f32.mrf.mxu0
    %7570 = vmatprep.mubr.f32.mxu0 0.0
    %v7571 = vand.u32 %v776, 4294901760
    %v7572 = vsub.f32 %v776, %v7571
    %7573 = vmatmul.mubr.f32.gmra.mxu0 %v7572
    %v7574 = vpop.f32.mrf.mxu0
    %v7575 = vadd.f32 %v7428, %v7574
    %v7576 = vpop.f32.mrf.mxu0
    %7577 = vmatprep.mubr.f32.mxu0 0.0
    %v7578 = vand.u32 %v787, 4294901760
    %v7579 = vsub.f32 %v787, %v7578
    %7580 = vmatmul.mubr.f32.gmra.mxu0 %v7579
    %v7581 = vpop.f32.mrf.mxu0
    %v7582 = vadd.f32 %v7434, %v7581
    %v7583 = vpop.f32.mrf.mxu0
    %7584 = vmatprep.mubr.f32.mxu0 0.0
    %v7585 = vand.u32 %v798, 4294901760
    %v7586 = vsub.f32 %v798, %v7585
    %7587 = vmatmul.mubr.f32.gmra.mxu0 %v7586
    %v7588 = vpop.f32.mrf.mxu0
    %v7589 = vadd.f32 %v7440, %v7588
    %v7590 = vpop.f32.mrf.mxu0
    %7591 = vmatprep.mubr.f32.mxu0 0.0
    %v7592 = vand.u32 %v809, 4294901760
    %v7593 = vsub.f32 %v809, %v7592
    %7594 = vmatmul.mubr.f32.gmra.mxu0 %v7593
    %v7595 = vpop.f32.mrf.mxu0
    %v7596 = vadd.f32 %v7446, %v7595
    %v7597 = vpop.f32.mrf.mxu0
    %7598 = vmatprep.mubr.f32.mxu0 0.0
    %v7599 = vand.u32 %v820, 4294901760
    %v7600 = vsub.f32 %v820, %v7599
    %7601 = vmatmul.mubr.f32.gmra.mxu0 %v7600
    %v7602 = vpop.f32.mrf.mxu0
    %v7603 = vadd.f32 %v7452, %v7602
    %v7604 = vpop.f32.mrf.mxu0
    %7605 = vmatprep.mubr.f32.mxu0 0.0
    %v7606 = vand.u32 %v831, 4294901760
    %v7607 = vsub.f32 %v831, %v7606
    %7608 = vmatmul.mubr.f32.gmra.mxu0 %v7607
    %v7609 = vpop.f32.mrf.mxu0
    %v7610 = vadd.f32 %v7458, %v7609
    %v7611 = vpop.f32.mrf.mxu0
    %7612 = vmatprep.mubr.f32.mxu0 0.0
    %v7613 = vand.u32 %v842, 4294901760
    %v7614 = vsub.f32 %v842, %v7613
    %7615 = vmatmul.mubr.f32.gmra.mxu0 %v7614
    %v7616 = vpop.f32.mrf.mxu0
    %v7617 = vadd.f32 %v7464, %v7616
    %v7618 = vpop.f32.mrf.mxu0
    %7619 = vdwg.mxu0
    %7620 = vmatprep.subr.mxu0 0.0
    %v7621 = vand.u32 %v754, 4294901760
    %7622 = vmatpush1.msra.mxu0 %v7621
    %7623 = vmatprep.subr.mxu0 0.0
    %v7624 = vand.u32 %v753, 4294901760
    %7625 = vmatpush1.msra.mxu0 %v7624
    %7626 = vmatprep.subr.mxu0 0.0
    %v7627 = vand.u32 %v752, 4294901760
    %7628 = vmatpush1.msra.mxu0 %v7627
    %7629 = vmatprep.subr.mxu0 0.0
    %v7630 = vand.u32 %v751, 4294901760
    %7631 = vmatpush1.msra.mxu0 %v7630
    %7632 = vmatprep.subr.mxu0 0.0
    %v7633 = vand.u32 %v750, 4294901760
    %7634 = vmatpush1.msra.mxu0 %v7633
    %7635 = vmatprep.subr.mxu0 0.0
    %v7636 = vand.u32 %v749, 4294901760
    %7637 = vmatpush1.msra.mxu0 %v7636
    %7638 = vmatprep.subr.mxu0 0.0
    %v7639 = vand.u32 %v748, 4294901760
    %7640 = vmatpush1.msra.mxu0 %v7639
    %7641 = vmatprep.subr.mxu0 0.0
    %v7642 = vand.u32 %v747, 4294901760
    %7643 = vmatpush1.msra.mxu0 %v7642
    %7644 = vmatprep.subr.mxu0 0.0
    %v7645 = vand.u32 %v746, 4294901760
    %7646 = vmatpush1.msra.mxu0 %v7645
    %7647 = vmatprep.subr.mxu0 0.0
    %v7648 = vand.u32 %v745, 4294901760
    %7649 = vmatpush1.msra.mxu0 %v7648
    %7650 = vmatprep.subr.mxu0 0.0
    %v7651 = vand.u32 %v744, 4294901760
    %7652 = vmatpush1.msra.mxu0 %v7651
    %7653 = vmatprep.subr.mxu0 0.0
    %v7654 = vand.u32 %v743, 4294901760
    %7655 = vmatpush1.msra.mxu0 %v7654
    %7656 = vmatprep.subr.mxu0 0.0
    %v7657 = vand.u32 %v742, 4294901760
    %7658 = vmatpush1.msra.mxu0 %v7657
    %7659 = vmatprep.subr.mxu0 0.0
    %v7660 = vand.u32 %v741, 4294901760
    %7661 = vmatpush1.msra.mxu0 %v7660
    %7662 = vmatprep.subr.mxu0 0.0
    %v7663 = vand.u32 %v740, 4294901760
    %7664 = vmatpush1.msra.mxu0 %v7663
    %7665 = vmatprep.subr.mxu0 0.0
    %v7666 = vand.u32 %v739, 4294901760
    %7667 = vmatpush1.msra.mxu0 %v7666
    %7668 = vmatprep.subr.mxu0 0.0
    %7669 = vmatpush2.msra.mxu0 0.0
    %7670 = vmatprep.subr.mxu0 0.0
    %7671 = vmatpush2.msra.mxu0 0.0
    %7672 = vmatprep.subr.mxu0 0.0
    %7673 = vmatpush2.msra.mxu0 0.0
    %7674 = vmatprep.subr.mxu0 0.0
    %7675 = vmatpush2.msra.mxu0 0.0
    %7676 = vmatprep.subr.mxu0 0.0
    %7677 = vmatpush2.msra.mxu0 0.0
    %7678 = vmatprep.subr.mxu0 0.0
    %7679 = vmatpush2.msra.mxu0 0.0
    %7680 = vmatprep.subr.mxu0 0.0
    %7681 = vmatpush2.msra.mxu0 0.0
    %7682 = vmatprep.subr.mxu0 0.0
    %7683 = vmatpush2.msra.mxu0 0.0
    %7684 = vmatprep.subr.mxu0 0.0
    %7685 = vmatpush2.msra.mxu0 0.0
    %7686 = vmatprep.subr.mxu0 0.0
    %7687 = vmatpush2.msra.mxu0 0.0
    %7688 = vmatprep.subr.mxu0 0.0
    %7689 = vmatpush2.msra.mxu0 0.0
    %7690 = vmatprep.subr.mxu0 0.0
    %7691 = vmatpush2.msra.mxu0 0.0
    %7692 = vmatprep.subr.mxu0 0.0
    %7693 = vmatpush2.msra.mxu0 0.0
    %7694 = vmatprep.subr.mxu0 0.0
    %7695 = vmatpush2.msra.mxu0 0.0
    %7696 = vmatprep.subr.mxu0 0.0
    %7697 = vmatpush2.msra.mxu0 0.0
    %7698 = vmatprep.subr.mxu0 0.0
    %7699 = vmatpush2.msra.mxu0 0.0
    %7700 = vmatprep.mubr.f32.mxu0 0.0
    %v7701 = vand.u32 %v765, 4294901760
    %v7702 = vsub.f32 %v765, %v7701
    %v7703 = vand.u32 %v7702, 4294901760
    %7704 = vmatmul.mubr.f32.gmra.mxu0 %v7703
    %v7705 = vpop.f32.mrf.mxu0
    %v7706 = vadd.f32 %v7568, %v7705
    %v7707 = vpop.f32.mrf.mxu0
    %7708 = vmatprep.mubr.f32.mxu0 0.0
    %v7709 = vand.u32 %v776, 4294901760
    %v7710 = vsub.f32 %v776, %v7709
    %v7711 = vand.u32 %v7710, 4294901760
    %7712 = vmatmul.mubr.f32.gmra.mxu0 %v7711
    %v7713 = vpop.f32.mrf.mxu0
    %v7714 = vadd.f32 %v7575, %v7713
    %v7715 = vpop.f32.mrf.mxu0
    %7716 = vmatprep.mubr.f32.mxu0 0.0
    %v7717 = vand.u32 %v787, 4294901760
    %v7718 = vsub.f32 %v787, %v7717
    %v7719 = vand.u32 %v7718, 4294901760
    %7720 = vmatmul.mubr.f32.gmra.mxu0 %v7719
    %v7721 = vpop.f32.mrf.mxu0
    %v7722 = vadd.f32 %v7582, %v7721
    %v7723 = vpop.f32.mrf.mxu0
    %7724 = vmatprep.mubr.f32.mxu0 0.0
    %v7725 = vand.u32 %v798, 4294901760
    %v7726 = vsub.f32 %v798, %v7725
    %v7727 = vand.u32 %v7726, 4294901760
    %7728 = vmatmul.mubr.f32.gmra.mxu0 %v7727
    %v7729 = vpop.f32.mrf.mxu0
    %v7730 = vadd.f32 %v7589, %v7729
    %v7731 = vpop.f32.mrf.mxu0
    %7732 = vmatprep.mubr.f32.mxu0 0.0
    %v7733 = vand.u32 %v809, 4294901760
    %v7734 = vsub.f32 %v809, %v7733
    %v7735 = vand.u32 %v7734, 4294901760
    %7736 = vmatmul.mubr.f32.gmra.mxu0 %v7735
    %v7737 = vpop.f32.mrf.mxu0
    %v7738 = vadd.f32 %v7596, %v7737
    %v7739 = vpop.f32.mrf.mxu0
    %7740 = vmatprep.mubr.f32.mxu0 0.0
    %v7741 = vand.u32 %v820, 4294901760
    %v7742 = vsub.f32 %v820, %v7741
    %v7743 = vand.u32 %v7742, 4294901760
    %7744 = vmatmul.mubr.f32.gmra.mxu0 %v7743
    %v7745 = vpop.f32.mrf.mxu0
    %v7746 = vadd.f32 %v7603, %v7745
    %v7747 = vpop.f32.mrf.mxu0
    %7748 = vmatprep.mubr.f32.mxu0 0.0
    %v7749 = vand.u32 %v831, 4294901760
    %v7750 = vsub.f32 %v831, %v7749
    %v7751 = vand.u32 %v7750, 4294901760
    %7752 = vmatmul.mubr.f32.gmra.mxu0 %v7751
    %v7753 = vpop.f32.mrf.mxu0
    %v7754 = vadd.f32 %v7610, %v7753
    %v7755 = vpop.f32.mrf.mxu0
    %7756 = vmatprep.mubr.f32.mxu0 0.0
    %v7757 = vand.u32 %v842, 4294901760
    %v7758 = vsub.f32 %v842, %v7757
    %v7759 = vand.u32 %v7758, 4294901760
    %7760 = vmatmul.mubr.f32.gmra.mxu0 %v7759
    %v7761 = vpop.f32.mrf.mxu0
    %v7762 = vadd.f32 %v7617, %v7761
    %v7763 = vpop.f32.mrf.mxu0
    %7764 = vdwg.mxu0
    %7765 = vmatprep.subr.mxu0 0.0
    %v7766 = vand.u32 %v754, 4294901760
    %v7767 = vsub.f32 %v754, %v7766
    %v7768 = vand.u32 %v7767, 4294901760
    %7769 = vmatpush1.msra.mxu0 %v7768
    %7770 = vmatprep.subr.mxu0 0.0
    %v7771 = vand.u32 %v753, 4294901760
    %v7772 = vsub.f32 %v753, %v7771
    %v7773 = vand.u32 %v7772, 4294901760
    %7774 = vmatpush1.msra.mxu0 %v7773
    %7775 = vmatprep.subr.mxu0 0.0
    %v7776 = vand.u32 %v752, 4294901760
    %v7777 = vsub.f32 %v752, %v7776
    %v7778 = vand.u32 %v7777, 4294901760
    %7779 = vmatpush1.msra.mxu0 %v7778
    %7780 = vmatprep.subr.mxu0 0.0
    %v7781 = vand.u32 %v751, 4294901760
    %v7782 = vsub.f32 %v751, %v7781
    %v7783 = vand.u32 %v7782, 4294901760
    %7784 = vmatpush1.msra.mxu0 %v7783
    %7785 = vmatprep.subr.mxu0 0.0
    %v7786 = vand.u32 %v750, 4294901760
    %v7787 = vsub.f32 %v750, %v7786
    %v7788 = vand.u32 %v7787, 4294901760
    %7789 = vmatpush1.msra.mxu0 %v7788
    %7790 = vmatprep.subr.mxu0 0.0
    %v7791 = vand.u32 %v749, 4294901760
    %v7792 = vsub.f32 %v749, %v7791
    %v7793 = vand.u32 %v7792, 4294901760
    %7794 = vmatpush1.msra.mxu0 %v7793
    %7795 = vmatprep.subr.mxu0 0.0
    %v7796 = vand.u32 %v748, 4294901760
    %v7797 = vsub.f32 %v748, %v7796
    %v7798 = vand.u32 %v7797, 4294901760
    %7799 = vmatpush1.msra.mxu0 %v7798
    %7800 = vmatprep.subr.mxu0 0.0
    %v7801 = vand.u32 %v747, 4294901760
    %v7802 = vsub.f32 %v747, %v7801
    %v7803 = vand.u32 %v7802, 4294901760
    %7804 = vmatpush1.msra.mxu0 %v7803
    %7805 = vmatprep.subr.mxu0 0.0
    %v7806 = vand.u32 %v746, 4294901760
    %v7807 = vsub.f32 %v746, %v7806
    %v7808 = vand.u32 %v7807, 4294901760
    %7809 = vmatpush1.msra.mxu0 %v7808
    %7810 = vmatprep.subr.mxu0 0.0
    %v7811 = vand.u32 %v745, 4294901760
    %v7812 = vsub.f32 %v745, %v7811
    %v7813 = vand.u32 %v7812, 4294901760
    %7814 = vmatpush1.msra.mxu0 %v7813
    %7815 = vmatprep.subr.mxu0 0.0
    %v7816 = vand.u32 %v744, 4294901760
    %v7817 = vsub.f32 %v744, %v7816
    %v7818 = vand.u32 %v7817, 4294901760
    %7819 = vmatpush1.msra.mxu0 %v7818
    %7820 = vmatprep.subr.mxu0 0.0
    %v7821 = vand.u32 %v743, 4294901760
    %v7822 = vsub.f32 %v743, %v7821
    %v7823 = vand.u32 %v7822, 4294901760
    %7824 = vmatpush1.msra.mxu0 %v7823
    %7825 = vmatprep.subr.mxu0 0.0
    %v7826 = vand.u32 %v742, 4294901760
    %v7827 = vsub.f32 %v742, %v7826
    %v7828 = vand.u32 %v7827, 4294901760
    %7829 = vmatpush1.msra.mxu0 %v7828
    %7830 = vmatprep.subr.mxu0 0.0
    %v7831 = vand.u32 %v741, 4294901760
    %v7832 = vsub.f32 %v741, %v7831
    %v7833 = vand.u32 %v7832, 4294901760
    %7834 = vmatpush1.msra.mxu0 %v7833
    %7835 = vmatprep.subr.mxu0 0.0
    %v7836 = vand.u32 %v740, 4294901760
    %v7837 = vsub.f32 %v740, %v7836
    %v7838 = vand.u32 %v7837, 4294901760
    %7839 = vmatpush1.msra.mxu0 %v7838
    %7840 = vmatprep.subr.mxu0 0.0
    %v7841 = vand.u32 %v739, 4294901760
    %v7842 = vsub.f32 %v739, %v7841
    %v7843 = vand.u32 %v7842, 4294901760
    %7844 = vmatpush1.msra.mxu0 %v7843
    %7845 = vmatprep.subr.mxu0 0.0
    %7846 = vmatpush2.msra.mxu0 0.0
    %7847 = vmatprep.subr.mxu0 0.0
    %7848 = vmatpush2.msra.mxu0 0.0
    %7849 = vmatprep.subr.mxu0 0.0
    %7850 = vmatpush2.msra.mxu0 0.0
    %7851 = vmatprep.subr.mxu0 0.0
    %7852 = vmatpush2.msra.mxu0 0.0
    %7853 = vmatprep.subr.mxu0 0.0
    %7854 = vmatpush2.msra.mxu0 0.0
    %7855 = vmatprep.subr.mxu0 0.0
    %7856 = vmatpush2.msra.mxu0 0.0
    %7857 = vmatprep.subr.mxu0 0.0
    %7858 = vmatpush2.msra.mxu0 0.0
    %7859 = vmatprep.subr.mxu0 0.0
    %7860 = vmatpush2.msra.mxu0 0.0
    %7861 = vmatprep.subr.mxu0 0.0
    %7862 = vmatpush2.msra.mxu0 0.0
    %7863 = vmatprep.subr.mxu0 0.0
    %7864 = vmatpush2.msra.mxu0 0.0
    %7865 = vmatprep.subr.mxu0 0.0
    %7866 = vmatpush2.msra.mxu0 0.0
    %7867 = vmatprep.subr.mxu0 0.0
    %7868 = vmatpush2.msra.mxu0 0.0
    %7869 = vmatprep.subr.mxu0 0.0
    %7870 = vmatpush2.msra.mxu0 0.0
    %7871 = vmatprep.subr.mxu0 0.0
    %7872 = vmatpush2.msra.mxu0 0.0
    %7873 = vmatprep.subr.mxu0 0.0
    %7874 = vmatpush2.msra.mxu0 0.0
    %7875 = vmatprep.subr.mxu0 0.0
    %7876 = vmatpush2.msra.mxu0 0.0
    %7877 = vmatprep.mubr.f32.mxu0 0.0
    %v7878 = vand.u32 %v765, 4294901760
    %7879 = vmatmul.mubr.f32.gmra.mxu0 %v7878
    %v7880 = vpop.f32.mrf.mxu0
    %v7881 = vadd.f32 %v7706, %v7880
    %v7882 = vpop.f32.mrf.mxu0
    %7883 = vmatprep.mubr.f32.mxu0 0.0
    %v7884 = vand.u32 %v776, 4294901760
    %7885 = vmatmul.mubr.f32.gmra.mxu0 %v7884
    %v7886 = vpop.f32.mrf.mxu0
    %v7887 = vadd.f32 %v7714, %v7886
    %v7888 = vpop.f32.mrf.mxu0
    %7889 = vmatprep.mubr.f32.mxu0 0.0
    %v7890 = vand.u32 %v787, 4294901760
    %7891 = vmatmul.mubr.f32.gmra.mxu0 %v7890
    %v7892 = vpop.f32.mrf.mxu0
    %v7893 = vadd.f32 %v7722, %v7892
    %v7894 = vpop.f32.mrf.mxu0
    %7895 = vmatprep.mubr.f32.mxu0 0.0
    %v7896 = vand.u32 %v798, 4294901760
    %7897 = vmatmul.mubr.f32.gmra.mxu0 %v7896
    %v7898 = vpop.f32.mrf.mxu0
    %v7899 = vadd.f32 %v7730, %v7898
    %v7900 = vpop.f32.mrf.mxu0
    %7901 = vmatprep.mubr.f32.mxu0 0.0
    %v7902 = vand.u32 %v809, 4294901760
    %7903 = vmatmul.mubr.f32.gmra.mxu0 %v7902
    %v7904 = vpop.f32.mrf.mxu0
    %v7905 = vadd.f32 %v7738, %v7904
    %v7906 = vpop.f32.mrf.mxu0
    %7907 = vmatprep.mubr.f32.mxu0 0.0
    %v7908 = vand.u32 %v820, 4294901760
    %7909 = vmatmul.mubr.f32.gmra.mxu0 %v7908
    %v7910 = vpop.f32.mrf.mxu0
    %v7911 = vadd.f32 %v7746, %v7910
    %v7912 = vpop.f32.mrf.mxu0
    %7913 = vmatprep.mubr.f32.mxu0 0.0
    %v7914 = vand.u32 %v831, 4294901760
    %7915 = vmatmul.mubr.f32.gmra.mxu0 %v7914
    %v7916 = vpop.f32.mrf.mxu0
    %v7917 = vadd.f32 %v7754, %v7916
    %v7918 = vpop.f32.mrf.mxu0
    %7919 = vmatprep.mubr.f32.mxu0 0.0
    %v7920 = vand.u32 %v842, 4294901760
    %7921 = vmatmul.mubr.f32.gmra.mxu0 %v7920
    %v7922 = vpop.f32.mrf.mxu0
    %v7923 = vadd.f32 %v7762, %v7922
    %v7924 = vpop.f32.mrf.mxu0
    %7925 = vdwg.mxu0
    %7926 = vmatprep.subr.mxu0 0.0
    %v7927 = vand.u32 %v754, 4294901760
    %7928 = vmatpush1.msra.mxu0 %v7927
    %7929 = vmatprep.subr.mxu0 0.0
    %v7930 = vand.u32 %v753, 4294901760
    %7931 = vmatpush1.msra.mxu0 %v7930
    %7932 = vmatprep.subr.mxu0 0.0
    %v7933 = vand.u32 %v752, 4294901760
    %7934 = vmatpush1.msra.mxu0 %v7933
    %7935 = vmatprep.subr.mxu0 0.0
    %v7936 = vand.u32 %v751, 4294901760
    %7937 = vmatpush1.msra.mxu0 %v7936
    %7938 = vmatprep.subr.mxu0 0.0
    %v7939 = vand.u32 %v750, 4294901760
    %7940 = vmatpush1.msra.mxu0 %v7939
    %7941 = vmatprep.subr.mxu0 0.0
    %v7942 = vand.u32 %v749, 4294901760
    %7943 = vmatpush1.msra.mxu0 %v7942
    %7944 = vmatprep.subr.mxu0 0.0
    %v7945 = vand.u32 %v748, 4294901760
    %7946 = vmatpush1.msra.mxu0 %v7945
    %7947 = vmatprep.subr.mxu0 0.0
    %v7948 = vand.u32 %v747, 4294901760
    %7949 = vmatpush1.msra.mxu0 %v7948
    %7950 = vmatprep.subr.mxu0 0.0
    %v7951 = vand.u32 %v746, 4294901760
    %7952 = vmatpush1.msra.mxu0 %v7951
    %7953 = vmatprep.subr.mxu0 0.0
    %v7954 = vand.u32 %v745, 4294901760
    %7955 = vmatpush1.msra.mxu0 %v7954
    %7956 = vmatprep.subr.mxu0 0.0
    %v7957 = vand.u32 %v744, 4294901760
    %7958 = vmatpush1.msra.mxu0 %v7957
    %7959 = vmatprep.subr.mxu0 0.0
    %v7960 = vand.u32 %v743, 4294901760
    %7961 = vmatpush1.msra.mxu0 %v7960
    %7962 = vmatprep.subr.mxu0 0.0
    %v7963 = vand.u32 %v742, 4294901760
    %7964 = vmatpush1.msra.mxu0 %v7963
    %7965 = vmatprep.subr.mxu0 0.0
    %v7966 = vand.u32 %v741, 4294901760
    %7967 = vmatpush1.msra.mxu0 %v7966
    %7968 = vmatprep.subr.mxu0 0.0
    %v7969 = vand.u32 %v740, 4294901760
    %7970 = vmatpush1.msra.mxu0 %v7969
    %7971 = vmatprep.subr.mxu0 0.0
    %v7972 = vand.u32 %v739, 4294901760
    %7973 = vmatpush1.msra.mxu0 %v7972
    %7974 = vmatprep.subr.mxu0 0.0
    %7975 = vmatpush2.msra.mxu0 0.0
    %7976 = vmatprep.subr.mxu0 0.0
    %7977 = vmatpush2.msra.mxu0 0.0
    %7978 = vmatprep.subr.mxu0 0.0
    %7979 = vmatpush2.msra.mxu0 0.0
    %7980 = vmatprep.subr.mxu0 0.0
    %7981 = vmatpush2.msra.mxu0 0.0
    %7982 = vmatprep.subr.mxu0 0.0
    %7983 = vmatpush2.msra.mxu0 0.0
    %7984 = vmatprep.subr.mxu0 0.0
    %7985 = vmatpush2.msra.mxu0 0.0
    %7986 = vmatprep.subr.mxu0 0.0
    %7987 = vmatpush2.msra.mxu0 0.0
    %7988 = vmatprep.subr.mxu0 0.0
    %7989 = vmatpush2.msra.mxu0 0.0
    %7990 = vmatprep.subr.mxu0 0.0
    %7991 = vmatpush2.msra.mxu0 0.0
    %7992 = vmatprep.subr.mxu0 0.0
    %7993 = vmatpush2.msra.mxu0 0.0
    %7994 = vmatprep.subr.mxu0 0.0
    %7995 = vmatpush2.msra.mxu0 0.0
    %7996 = vmatprep.subr.mxu0 0.0
    %7997 = vmatpush2.msra.mxu0 0.0
    %7998 = vmatprep.subr.mxu0 0.0
    %7999 = vmatpush2.msra.mxu0 0.0
    %8000 = vmatprep.subr.mxu0 0.0
    %8001 = vmatpush2.msra.mxu0 0.0
    %8002 = vmatprep.subr.mxu0 0.0
    %8003 = vmatpush2.msra.mxu0 0.0
    %8004 = vmatprep.subr.mxu0 0.0
    %8005 = vmatpush2.msra.mxu0 0.0
    %8006 = vmatprep.mubr.f32.mxu0 0.0
    %v8007 = vand.u32 %v765, 4294901760
    %8008 = vmatmul.mubr.f32.gmra.mxu0 %v8007
    %v8009 = vpop.f32.mrf.mxu0
    %v8010 = vadd.f32 %v7881, %v8009
    %v8011 = vpop.f32.mrf.mxu0
    %8012 = vmatprep.mubr.f32.mxu0 0.0
    %v8013 = vand.u32 %v776, 4294901760
    %8014 = vmatmul.mubr.f32.gmra.mxu0 %v8013
    %v8015 = vpop.f32.mrf.mxu0
    %v8016 = vadd.f32 %v7887, %v8015
    %v8017 = vpop.f32.mrf.mxu0
    %8018 = vmatprep.mubr.f32.mxu0 0.0
    %v8019 = vand.u32 %v787, 4294901760
    %8020 = vmatmul.mubr.f32.gmra.mxu0 %v8019
    %v8021 = vpop.f32.mrf.mxu0
    %v8022 = vadd.f32 %v7893, %v8021
    %v8023 = vpop.f32.mrf.mxu0
    %8024 = vmatprep.mubr.f32.mxu0 0.0
    %v8025 = vand.u32 %v798, 4294901760
    %8026 = vmatmul.mubr.f32.gmra.mxu0 %v8025
    %v8027 = vpop.f32.mrf.mxu0
    %v8028 = vadd.f32 %v7899, %v8027
    %v8029 = vpop.f32.mrf.mxu0
    %8030 = vmatprep.mubr.f32.mxu0 0.0
    %v8031 = vand.u32 %v809, 4294901760
    %8032 = vmatmul.mubr.f32.gmra.mxu0 %v8031
    %v8033 = vpop.f32.mrf.mxu0
    %v8034 = vadd.f32 %v7905, %v8033
    %v8035 = vpop.f32.mrf.mxu0
    %8036 = vmatprep.mubr.f32.mxu0 0.0
    %v8037 = vand.u32 %v820, 4294901760
    %8038 = vmatmul.mubr.f32.gmra.mxu0 %v8037
    %v8039 = vpop.f32.mrf.mxu0
    %v8040 = vadd.f32 %v7911, %v8039
    %v8041 = vpop.f32.mrf.mxu0
    %8042 = vmatprep.mubr.f32.mxu0 0.0
    %v8043 = vand.u32 %v831, 4294901760
    %8044 = vmatmul.mubr.f32.gmra.mxu0 %v8043
    %v8045 = vpop.f32.mrf.mxu0
    %v8046 = vadd.f32 %v7917, %v8045
    %v8047 = vpop.f32.mrf.mxu0
    %8048 = vmatprep.mubr.f32.mxu0 0.0
    %v8049 = vand.u32 %v842, 4294901760
    %8050 = vmatmul.mubr.f32.gmra.mxu0 %v8049
    %v8051 = vpop.f32.mrf.mxu0
    %v8052 = vadd.f32 %v7923, %v8051
    %v8053 = vpop.f32.mrf.mxu0
    %8054 = vdwg.mxu0
    %v8055 = vld [vmem:[%s2] sm:$0xff]
    %v8056 = vld [vmem:[%s2 + $0x8] sm:$0xff]
    %v8057 = vld [vmem:[%s2 + $0x10] sm:$0xff]
    %v8058 = vld [vmem:[%s2 + $0x18] sm:$0xff]
    %v8059 = vld [vmem:[%s2 + $0x20] sm:$0xff]
    %v8060 = vld [vmem:[%s2 + $0x28] sm:$0xff]
    %v8061 = vld [vmem:[%s2 + $0x30] sm:$0xff]
    %v8062 = vld [vmem:[%s2 + $0x38] sm:$0xff]
    %v8063 = vld [vmem:[%s3] sm:$0xff]
    %v8064 = vld [vmem:[%s3 + $0x8] sm:$0xff]
    %v8065 = vld [vmem:[%s3 + $0x10] sm:$0xff]
    %v8066 = vld [vmem:[%s3 + $0x18] sm:$0xff]
    %v8067 = vld [vmem:[%s3 + $0x20] sm:$0xff]
    %v8068 = vld [vmem:[%s3 + $0x28] sm:$0xff]
    %v8069 = vld [vmem:[%s3 + $0x30] sm:$0xff]
    %v8070 = vld [vmem:[%s3 + $0x38] sm:$0xff]
    %8072 = vset.pattern.permute.xlu0 0
    %8073 = vperm.xlu0 %8072, %v8063
    %v8074 = vpop.permute.xlu0 %8073
    %8077 = vset.pattern.permute.xlu0 0
    %8078 = vperm.xlu0 %8077, %v8064
    %v8079 = vpop.permute.xlu0 %8078
    %8082 = vset.pattern.permute.xlu0 0
    %8083 = vperm.xlu0 %8082, %v8065
    %v8084 = vpop.permute.xlu0 %8083
    %8087 = vset.pattern.permute.xlu0 0
    %8088 = vperm.xlu0 %8087, %v8066
    %v8089 = vpop.permute.xlu0 %8088
    %8092 = vset.pattern.permute.xlu0 0
    %8093 = vperm.xlu0 %8092, %v8067
    %v8094 = vpop.permute.xlu0 %8093
    %8097 = vset.pattern.permute.xlu0 0
    %8098 = vperm.xlu0 %8097, %v8068
    %v8099 = vpop.permute.xlu0 %8098
    %8102 = vset.pattern.permute.xlu0 0
    %8103 = vperm.xlu0 %8102, %v8069
    %v8104 = vpop.permute.xlu0 %8103
    %8107 = vset.pattern.permute.xlu0 0
    %8108 = vperm.xlu0 %8107, %v8070
    %v8109 = vpop.permute.xlu0 %8108
    %vm8111 = vcmask 523264
    %v8113 = vsel %vm8111, %v8055, 0
    %v8116 = vsel %vm8111, %v8056, 0
    %v8119 = vsel %vm8111, %v8057, 0
    %v8122 = vsel %vm8111, %v8058, 0
    %v8125 = vsel %vm8111, %v8059, 0
    %v8128 = vsel %vm8111, %v8060, 0
    %v8131 = vsel %vm8111, %v8061, 0
    %v8134 = vsel %vm8111, %v8062, 0
    %8136 = vmatprep.subr.mxu0 0.0
    %8137 = vmatpush1.msra.mxu0 0.0
    %8138 = vmatprep.subr.mxu0 0.0
    %8139 = vmatpush1.msra.mxu0 0.0
    %8140 = vmatprep.subr.mxu0 0.0
    %8141 = vmatpush1.msra.mxu0 0.0
    %8142 = vmatprep.subr.mxu0 0.0
    %8143 = vmatpush1.msra.mxu0 0.0
    %8144 = vmatprep.subr.mxu0 0.0
    %8145 = vmatpush1.msra.mxu0 0.0
    %8146 = vmatprep.subr.mxu0 0.0
    %8147 = vmatpush1.msra.mxu0 0.0
    %8148 = vmatprep.subr.mxu0 0.0
    %8149 = vmatpush1.msra.mxu0 0.0
    %8150 = vmatprep.subr.mxu0 0.0
    %8151 = vmatpush1.msra.mxu0 0.0
    %8152 = vmatprep.subr.mxu0 0.0
    %v8153 = vand.u32 %v8052, 4294901760
    %8154 = vmatpush1.msra.mxu0 %v8153
    %8155 = vmatprep.subr.mxu0 0.0
    %v8156 = vand.u32 %v8046, 4294901760
    %8157 = vmatpush1.msra.mxu0 %v8156
    %8158 = vmatprep.subr.mxu0 0.0
    %v8159 = vand.u32 %v8040, 4294901760
    %8160 = vmatpush1.msra.mxu0 %v8159
    %8161 = vmatprep.subr.mxu0 0.0
    %v8162 = vand.u32 %v8034, 4294901760
    %8163 = vmatpush1.msra.mxu0 %v8162
    %8164 = vmatprep.subr.mxu0 0.0
    %v8165 = vand.u32 %v8028, 4294901760
    %8166 = vmatpush1.msra.mxu0 %v8165
    %8167 = vmatprep.subr.mxu0 0.0
    %v8168 = vand.u32 %v8022, 4294901760
    %8169 = vmatpush1.msra.mxu0 %v8168
    %8170 = vmatprep.subr.mxu0 0.0
    %v8171 = vand.u32 %v8016, 4294901760
    %8172 = vmatpush1.msra.mxu0 %v8171
    %8173 = vmatprep.subr.mxu0 0.0
    %v8174 = vand.u32 %v8010, 4294901760
    %8175 = vmatpush1.msra.mxu0 %v8174
    %8176 = vmatprep.subr.mxu0 0.0
    %8177 = vmatpush2.msra.mxu0 0.0
    %8178 = vmatprep.subr.mxu0 0.0
    %8179 = vmatpush2.msra.mxu0 0.0
    %8180 = vmatprep.subr.mxu0 0.0
    %8181 = vmatpush2.msra.mxu0 0.0
    %8182 = vmatprep.subr.mxu0 0.0
    %8183 = vmatpush2.msra.mxu0 0.0
    %8184 = vmatprep.subr.mxu0 0.0
    %8185 = vmatpush2.msra.mxu0 0.0
    %8186 = vmatprep.subr.mxu0 0.0
    %8187 = vmatpush2.msra.mxu0 0.0
    %8188 = vmatprep.subr.mxu0 0.0
    %8189 = vmatpush2.msra.mxu0 0.0
    %8190 = vmatprep.subr.mxu0 0.0
    %8191 = vmatpush2.msra.mxu0 0.0
    %8192 = vmatprep.subr.mxu0 0.0
    %8193 = vmatpush2.msra.mxu0 0.0
    %8194 = vmatprep.subr.mxu0 0.0
    %8195 = vmatpush2.msra.mxu0 0.0
    %8196 = vmatprep.subr.mxu0 0.0
    %8197 = vmatpush2.msra.mxu0 0.0
    %8198 = vmatprep.subr.mxu0 0.0
    %8199 = vmatpush2.msra.mxu0 0.0
    %8200 = vmatprep.subr.mxu0 0.0
    %8201 = vmatpush2.msra.mxu0 0.0
    %8202 = vmatprep.subr.mxu0 0.0
    %8203 = vmatpush2.msra.mxu0 0.0
    %8204 = vmatprep.subr.mxu0 0.0
    %8205 = vmatpush2.msra.mxu0 0.0
    %8206 = vmatprep.subr.mxu0 0.0
    %8207 = vmatpush2.msra.mxu0 0.0
    %8208 = vmatprep.mubr.f32.mxu0 0.0
    %v8209 = vand.u32 %v8113, 4294901760
    %v8210 = vsub.f32 %v8113, %v8209
    %v8211 = vand.u32 %v8210, 4294901760
    %v8212 = vsub.f32 %v8210, %v8211
    %v8213 = vand.u32 %v8212, 4294901760
    %8214 = vmatmul.mubr.f32.gmra.mxu0 %v8213
    %v8215 = vpop.f32.mrf.mxu0
    %v8216 = vadd.f32 %v8074, %v8215
    %v8217 = vpop.f32.mrf.mxu0
    %8218 = vmatprep.mubr.f32.mxu0 0.0
    %v8219 = vand.u32 %v8116, 4294901760
    %v8220 = vsub.f32 %v8116, %v8219
    %v8221 = vand.u32 %v8220, 4294901760
    %v8222 = vsub.f32 %v8220, %v8221
    %v8223 = vand.u32 %v8222, 4294901760
    %8224 = vmatmul.mubr.f32.gmra.mxu0 %v8223
    %v8225 = vpop.f32.mrf.mxu0
    %v8226 = vadd.f32 %v8079, %v8225
    %v8227 = vpop.f32.mrf.mxu0
    %8228 = vmatprep.mubr.f32.mxu0 0.0
    %v8229 = vand.u32 %v8119, 4294901760
    %v8230 = vsub.f32 %v8119, %v8229
    %v8231 = vand.u32 %v8230, 4294901760
    %v8232 = vsub.f32 %v8230, %v8231
    %v8233 = vand.u32 %v8232, 4294901760
    %8234 = vmatmul.mubr.f32.gmra.mxu0 %v8233
    %v8235 = vpop.f32.mrf.mxu0
    %v8236 = vadd.f32 %v8084, %v8235
    %v8237 = vpop.f32.mrf.mxu0
    %8238 = vmatprep.mubr.f32.mxu0 0.0
    %v8239 = vand.u32 %v8122, 4294901760
    %v8240 = vsub.f32 %v8122, %v8239
    %v8241 = vand.u32 %v8240, 4294901760
    %v8242 = vsub.f32 %v8240, %v8241
    %v8243 = vand.u32 %v8242, 4294901760
    %8244 = vmatmul.mubr.f32.gmra.mxu0 %v8243
    %v8245 = vpop.f32.mrf.mxu0
    %v8246 = vadd.f32 %v8089, %v8245
    %v8247 = vpop.f32.mrf.mxu0
    %8248 = vmatprep.mubr.f32.mxu0 0.0
    %v8249 = vand.u32 %v8125, 4294901760
    %v8250 = vsub.f32 %v8125, %v8249
    %v8251 = vand.u32 %v8250, 4294901760
    %v8252 = vsub.f32 %v8250, %v8251
    %v8253 = vand.u32 %v8252, 4294901760
    %8254 = vmatmul.mubr.f32.gmra.mxu0 %v8253
    %v8255 = vpop.f32.mrf.mxu0
    %v8256 = vadd.f32 %v8094, %v8255
    %v8257 = vpop.f32.mrf.mxu0
    %8258 = vmatprep.mubr.f32.mxu0 0.0
    %v8259 = vand.u32 %v8128, 4294901760
    %v8260 = vsub.f32 %v8128, %v8259
    %v8261 = vand.u32 %v8260, 4294901760
    %v8262 = vsub.f32 %v8260, %v8261
    %v8263 = vand.u32 %v8262, 4294901760
    %8264 = vmatmul.mubr.f32.gmra.mxu0 %v8263
    %v8265 = vpop.f32.mrf.mxu0
    %v8266 = vadd.f32 %v8099, %v8265
    %v8267 = vpop.f32.mrf.mxu0
    %8268 = vmatprep.mubr.f32.mxu0 0.0
    %v8269 = vand.u32 %v8131, 4294901760
    %v8270 = vsub.f32 %v8131, %v8269
    %v8271 = vand.u32 %v8270, 4294901760
    %v8272 = vsub.f32 %v8270, %v8271
    %v8273 = vand.u32 %v8272, 4294901760
    %8274 = vmatmul.mubr.f32.gmra.mxu0 %v8273
    %v8275 = vpop.f32.mrf.mxu0
    %v8276 = vadd.f32 %v8104, %v8275
    %v8277 = vpop.f32.mrf.mxu0
    %8278 = vmatprep.mubr.f32.mxu0 0.0
    %v8279 = vand.u32 %v8134, 4294901760
    %v8280 = vsub.f32 %v8134, %v8279
    %v8281 = vand.u32 %v8280, 4294901760
    %v8282 = vsub.f32 %v8280, %v8281
    %v8283 = vand.u32 %v8282, 4294901760
    %8284 = vmatmul.mubr.f32.gmra.mxu0 %v8283
    %v8285 = vpop.f32.mrf.mxu0
    %v8286 = vadd.f32 %v8109, %v8285
    %v8287 = vpop.f32.mrf.mxu0
    %8288 = vdwg.mxu0
    %8289 = vmatprep.subr.mxu0 0.0
    %8290 = vmatpush1.msra.mxu0 0.0
    %8291 = vmatprep.subr.mxu0 0.0
    %8292 = vmatpush1.msra.mxu0 0.0
    %8293 = vmatprep.subr.mxu0 0.0
    %8294 = vmatpush1.msra.mxu0 0.0
    %8295 = vmatprep.subr.mxu0 0.0
    %8296 = vmatpush1.msra.mxu0 0.0
    %8297 = vmatprep.subr.mxu0 0.0
    %8298 = vmatpush1.msra.mxu0 0.0
    %8299 = vmatprep.subr.mxu0 0.0
    %8300 = vmatpush1.msra.mxu0 0.0
    %8301 = vmatprep.subr.mxu0 0.0
    %8302 = vmatpush1.msra.mxu0 0.0
    %8303 = vmatprep.subr.mxu0 0.0
    %8304 = vmatpush1.msra.mxu0 0.0
    %8305 = vmatprep.subr.mxu0 0.0
    %v8306 = vand.u32 %v8052, 4294901760
    %v8307 = vsub.f32 %v8052, %v8306
    %v8308 = vand.u32 %v8307, 4294901760
    %v8309 = vsub.f32 %v8307, %v8308
    %v8310 = vand.u32 %v8309, 4294901760
    %8311 = vmatpush1.msra.mxu0 %v8310
    %8312 = vmatprep.subr.mxu0 0.0
    %v8313 = vand.u32 %v8046, 4294901760
    %v8314 = vsub.f32 %v8046, %v8313
    %v8315 = vand.u32 %v8314, 4294901760
    %v8316 = vsub.f32 %v8314, %v8315
    %v8317 = vand.u32 %v8316, 4294901760
    %8318 = vmatpush1.msra.mxu0 %v8317
    %8319 = vmatprep.subr.mxu0 0.0
    %v8320 = vand.u32 %v8040, 4294901760
    %v8321 = vsub.f32 %v8040, %v8320
    %v8322 = vand.u32 %v8321, 4294901760
    %v8323 = vsub.f32 %v8321, %v8322
    %v8324 = vand.u32 %v8323, 4294901760
    %8325 = vmatpush1.msra.mxu0 %v8324
    %8326 = vmatprep.subr.mxu0 0.0
    %v8327 = vand.u32 %v8034, 4294901760
    %v8328 = vsub.f32 %v8034, %v8327
    %v8329 = vand.u32 %v8328, 4294901760
    %v8330 = vsub.f32 %v8328, %v8329
    %v8331 = vand.u32 %v8330, 4294901760
    %8332 = vmatpush1.msra.mxu0 %v8331
    %8333 = vmatprep.subr.mxu0 0.0
    %v8334 = vand.u32 %v8028, 4294901760
    %v8335 = vsub.f32 %v8028, %v8334
    %v8336 = vand.u32 %v8335, 4294901760
    %v8337 = vsub.f32 %v8335, %v8336
    %v8338 = vand.u32 %v8337, 4294901760
    %8339 = vmatpush1.msra.mxu0 %v8338
    %8340 = vmatprep.subr.mxu0 0.0
    %v8341 = vand.u32 %v8022, 4294901760
    %v8342 = vsub.f32 %v8022, %v8341
    %v8343 = vand.u32 %v8342, 4294901760
    %v8344 = vsub.f32 %v8342, %v8343
    %v8345 = vand.u32 %v8344, 4294901760
    %8346 = vmatpush1.msra.mxu0 %v8345
    %8347 = vmatprep.subr.mxu0 0.0
    %v8348 = vand.u32 %v8016, 4294901760
    %v8349 = vsub.f32 %v8016, %v8348
    %v8350 = vand.u32 %v8349, 4294901760
    %v8351 = vsub.f32 %v8349, %v8350
    %v8352 = vand.u32 %v8351, 4294901760
    %8353 = vmatpush1.msra.mxu0 %v8352
    %8354 = vmatprep.subr.mxu0 0.0
    %v8355 = vand.u32 %v8010, 4294901760
    %v8356 = vsub.f32 %v8010, %v8355
    %v8357 = vand.u32 %v8356, 4294901760
    %v8358 = vsub.f32 %v8356, %v8357
    %v8359 = vand.u32 %v8358, 4294901760
    %8360 = vmatpush1.msra.mxu0 %v8359
    %8361 = vmatprep.subr.mxu0 0.0
    %8362 = vmatpush2.msra.mxu0 0.0
    %8363 = vmatprep.subr.mxu0 0.0
    %8364 = vmatpush2.msra.mxu0 0.0
    %8365 = vmatprep.subr.mxu0 0.0
    %8366 = vmatpush2.msra.mxu0 0.0
    %8367 = vmatprep.subr.mxu0 0.0
    %8368 = vmatpush2.msra.mxu0 0.0
    %8369 = vmatprep.subr.mxu0 0.0
    %8370 = vmatpush2.msra.mxu0 0.0
    %8371 = vmatprep.subr.mxu0 0.0
    %8372 = vmatpush2.msra.mxu0 0.0
    %8373 = vmatprep.subr.mxu0 0.0
    %8374 = vmatpush2.msra.mxu0 0.0
    %8375 = vmatprep.subr.mxu0 0.0
    %8376 = vmatpush2.msra.mxu0 0.0
    %8377 = vmatprep.subr.mxu0 0.0
    %8378 = vmatpush2.msra.mxu0 0.0
    %8379 = vmatprep.subr.mxu0 0.0
    %8380 = vmatpush2.msra.mxu0 0.0
    %8381 = vmatprep.subr.mxu0 0.0
    %8382 = vmatpush2.msra.mxu0 0.0
    %8383 = vmatprep.subr.mxu0 0.0
    %8384 = vmatpush2.msra.mxu0 0.0
    %8385 = vmatprep.subr.mxu0 0.0
    %8386 = vmatpush2.msra.mxu0 0.0
    %8387 = vmatprep.subr.mxu0 0.0
    %8388 = vmatpush2.msra.mxu0 0.0
    %8389 = vmatprep.subr.mxu0 0.0
    %8390 = vmatpush2.msra.mxu0 0.0
    %8391 = vmatprep.subr.mxu0 0.0
    %8392 = vmatpush2.msra.mxu0 0.0
    %8393 = vmatprep.mubr.f32.mxu0 0.0
    %v8394 = vand.u32 %v8113, 4294901760
    %8395 = vmatmul.mubr.f32.gmra.mxu0 %v8394
    %v8396 = vpop.f32.mrf.mxu0
    %v8397 = vadd.f32 %v8216, %v8396
    %v8398 = vpop.f32.mrf.mxu0
    %8399 = vmatprep.mubr.f32.mxu0 0.0
    %v8400 = vand.u32 %v8116, 4294901760
    %8401 = vmatmul.mubr.f32.gmra.mxu0 %v8400
    %v8402 = vpop.f32.mrf.mxu0
    %v8403 = vadd.f32 %v8226, %v8402
    %v8404 = vpop.f32.mrf.mxu0
    %8405 = vmatprep.mubr.f32.mxu0 0.0
    %v8406 = vand.u32 %v8119, 4294901760
    %8407 = vmatmul.mubr.f32.gmra.mxu0 %v8406
    %v8408 = vpop.f32.mrf.mxu0
    %v8409 = vadd.f32 %v8236, %v8408
    %v8410 = vpop.f32.mrf.mxu0
    %8411 = vmatprep.mubr.f32.mxu0 0.0
    %v8412 = vand.u32 %v8122, 4294901760
    %8413 = vmatmul.mubr.f32.gmra.mxu0 %v8412
    %v8414 = vpop.f32.mrf.mxu0
    %v8415 = vadd.f32 %v8246, %v8414
    %v8416 = vpop.f32.mrf.mxu0
    %8417 = vmatprep.mubr.f32.mxu0 0.0
    %v8418 = vand.u32 %v8125, 4294901760
    %8419 = vmatmul.mubr.f32.gmra.mxu0 %v8418
    %v8420 = vpop.f32.mrf.mxu0
    %v8421 = vadd.f32 %v8256, %v8420
    %v8422 = vpop.f32.mrf.mxu0
    %8423 = vmatprep.mubr.f32.mxu0 0.0
    %v8424 = vand.u32 %v8128, 4294901760
    %8425 = vmatmul.mubr.f32.gmra.mxu0 %v8424
    %v8426 = vpop.f32.mrf.mxu0
    %v8427 = vadd.f32 %v8266, %v8426
    %v8428 = vpop.f32.mrf.mxu0
    %8429 = vmatprep.mubr.f32.mxu0 0.0
    %v8430 = vand.u32 %v8131, 4294901760
    %8431 = vmatmul.mubr.f32.gmra.mxu0 %v8430
    %v8432 = vpop.f32.mrf.mxu0
    %v8433 = vadd.f32 %v8276, %v8432
    %v8434 = vpop.f32.mrf.mxu0
    %8435 = vmatprep.mubr.f32.mxu0 0.0
    %v8436 = vand.u32 %v8134, 4294901760
    %8437 = vmatmul.mubr.f32.gmra.mxu0 %v8436
    %v8438 = vpop.f32.mrf.mxu0
    %v8439 = vadd.f32 %v8286, %v8438
    %v8440 = vpop.f32.mrf.mxu0
    %8441 = vdwg.mxu0
    %8442 = vmatprep.subr.mxu0 0.0
    %8443 = vmatpush1.msra.mxu0 0.0
    %8444 = vmatprep.subr.mxu0 0.0
    %8445 = vmatpush1.msra.mxu0 0.0
    %8446 = vmatprep.subr.mxu0 0.0
    %8447 = vmatpush1.msra.mxu0 0.0
    %8448 = vmatprep.subr.mxu0 0.0
    %8449 = vmatpush1.msra.mxu0 0.0
    %8450 = vmatprep.subr.mxu0 0.0
    %8451 = vmatpush1.msra.mxu0 0.0
    %8452 = vmatprep.subr.mxu0 0.0
    %8453 = vmatpush1.msra.mxu0 0.0
    %8454 = vmatprep.subr.mxu0 0.0
    %8455 = vmatpush1.msra.mxu0 0.0
    %8456 = vmatprep.subr.mxu0 0.0
    %8457 = vmatpush1.msra.mxu0 0.0
    %8458 = vmatprep.subr.mxu0 0.0
    %v8459 = vand.u32 %v8052, 4294901760
    %v8460 = vsub.f32 %v8052, %v8459
    %8461 = vmatpush1.msra.mxu0 %v8460
    %8462 = vmatprep.subr.mxu0 0.0
    %v8463 = vand.u32 %v8046, 4294901760
    %v8464 = vsub.f32 %v8046, %v8463
    %8465 = vmatpush1.msra.mxu0 %v8464
    %8466 = vmatprep.subr.mxu0 0.0
    %v8467 = vand.u32 %v8040, 4294901760
    %v8468 = vsub.f32 %v8040, %v8467
    %8469 = vmatpush1.msra.mxu0 %v8468
    %8470 = vmatprep.subr.mxu0 0.0
    %v8471 = vand.u32 %v8034, 4294901760
    %v8472 = vsub.f32 %v8034, %v8471
    %8473 = vmatpush1.msra.mxu0 %v8472
    %8474 = vmatprep.subr.mxu0 0.0
    %v8475 = vand.u32 %v8028, 4294901760
    %v8476 = vsub.f32 %v8028, %v8475
    %8477 = vmatpush1.msra.mxu0 %v8476
    %8478 = vmatprep.subr.mxu0 0.0
    %v8479 = vand.u32 %v8022, 4294901760
    %v8480 = vsub.f32 %v8022, %v8479
    %8481 = vmatpush1.msra.mxu0 %v8480
    %8482 = vmatprep.subr.mxu0 0.0
    %v8483 = vand.u32 %v8016, 4294901760
    %v8484 = vsub.f32 %v8016, %v8483
    %8485 = vmatpush1.msra.mxu0 %v8484
    %8486 = vmatprep.subr.mxu0 0.0
    %v8487 = vand.u32 %v8010, 4294901760
    %v8488 = vsub.f32 %v8010, %v8487
    %8489 = vmatpush1.msra.mxu0 %v8488
    %8490 = vmatprep.subr.mxu0 0.0
    %8491 = vmatpush2.msra.mxu0 0.0
    %8492 = vmatprep.subr.mxu0 0.0
    %8493 = vmatpush2.msra.mxu0 0.0
    %8494 = vmatprep.subr.mxu0 0.0
    %8495 = vmatpush2.msra.mxu0 0.0
    %8496 = vmatprep.subr.mxu0 0.0
    %8497 = vmatpush2.msra.mxu0 0.0
    %8498 = vmatprep.subr.mxu0 0.0
    %8499 = vmatpush2.msra.mxu0 0.0
    %8500 = vmatprep.subr.mxu0 0.0
    %8501 = vmatpush2.msra.mxu0 0.0
    %8502 = vmatprep.subr.mxu0 0.0
    %8503 = vmatpush2.msra.mxu0 0.0
    %8504 = vmatprep.subr.mxu0 0.0
    %8505 = vmatpush2.msra.mxu0 0.0
    %8506 = vmatprep.subr.mxu0 0.0
    %8507 = vmatpush2.msra.mxu0 0.0
    %8508 = vmatprep.subr.mxu0 0.0
    %8509 = vmatpush2.msra.mxu0 0.0
    %8510 = vmatprep.subr.mxu0 0.0
    %8511 = vmatpush2.msra.mxu0 0.0
    %8512 = vmatprep.subr.mxu0 0.0
    %8513 = vmatpush2.msra.mxu0 0.0
    %8514 = vmatprep.subr.mxu0 0.0
    %8515 = vmatpush2.msra.mxu0 0.0
    %8516 = vmatprep.subr.mxu0 0.0
    %8517 = vmatpush2.msra.mxu0 0.0
    %8518 = vmatprep.subr.mxu0 0.0
    %8519 = vmatpush2.msra.mxu0 0.0
    %8520 = vmatprep.subr.mxu0 0.0
    %8521 = vmatpush2.msra.mxu0 0.0
    %8522 = vmatprep.mubr.f32.mxu0 0.0
    %v8523 = vand.u32 %v8113, 4294901760
    %v8524 = vsub.f32 %v8113, %v8523
    %8525 = vmatmul.mubr.f32.gmra.mxu0 %v8524
    %v8526 = vpop.f32.mrf.mxu0
    %v8527 = vadd.f32 %v8397, %v8526
    %v8528 = vpop.f32.mrf.mxu0
    %8529 = vmatprep.mubr.f32.mxu0 0.0
    %v8530 = vand.u32 %v8116, 4294901760
    %v8531 = vsub.f32 %v8116, %v8530
    %8532 = vmatmul.mubr.f32.gmra.mxu0 %v8531
    %v8533 = vpop.f32.mrf.mxu0
    %v8534 = vadd.f32 %v8403, %v8533
    %v8535 = vpop.f32.mrf.mxu0
    %8536 = vmatprep.mubr.f32.mxu0 0.0
    %v8537 = vand.u32 %v8119, 4294901760
    %v8538 = vsub.f32 %v8119, %v8537
    %8539 = vmatmul.mubr.f32.gmra.mxu0 %v8538
    %v8540 = vpop.f32.mrf.mxu0
    %v8541 = vadd.f32 %v8409, %v8540
    %v8542 = vpop.f32.mrf.mxu0
    %8543 = vmatprep.mubr.f32.mxu0 0.0
    %v8544 = vand.u32 %v8122, 4294901760
    %v8545 = vsub.f32 %v8122, %v8544
    %8546 = vmatmul.mubr.f32.gmra.mxu0 %v8545
    %v8547 = vpop.f32.mrf.mxu0
    %v8548 = vadd.f32 %v8415, %v8547
    %v8549 = vpop.f32.mrf.mxu0
    %8550 = vmatprep.mubr.f32.mxu0 0.0
    %v8551 = vand.u32 %v8125, 4294901760
    %v8552 = vsub.f32 %v8125, %v8551
    %8553 = vmatmul.mubr.f32.gmra.mxu0 %v8552
    %v8554 = vpop.f32.mrf.mxu0
    %v8555 = vadd.f32 %v8421, %v8554
    %v8556 = vpop.f32.mrf.mxu0
    %8557 = vmatprep.mubr.f32.mxu0 0.0
    %v8558 = vand.u32 %v8128, 4294901760
    %v8559 = vsub.f32 %v8128, %v8558
    %8560 = vmatmul.mubr.f32.gmra.mxu0 %v8559
    %v8561 = vpop.f32.mrf.mxu0
    %v8562 = vadd.f32 %v8427, %v8561
    %v8563 = vpop.f32.mrf.mxu0
    %8564 = vmatprep.mubr.f32.mxu0 0.0
    %v8565 = vand.u32 %v8131, 4294901760
    %v8566 = vsub.f32 %v8131, %v8565
    %8567 = vmatmul.mubr.f32.gmra.mxu0 %v8566
    %v8568 = vpop.f32.mrf.mxu0
    %v8569 = vadd.f32 %v8433, %v8568
    %v8570 = vpop.f32.mrf.mxu0
    %8571 = vmatprep.mubr.f32.mxu0 0.0
    %v8572 = vand.u32 %v8134, 4294901760
    %v8573 = vsub.f32 %v8134, %v8572
    %8574 = vmatmul.mubr.f32.gmra.mxu0 %v8573
    %v8575 = vpop.f32.mrf.mxu0
    %v8576 = vadd.f32 %v8439, %v8575
    %v8577 = vpop.f32.mrf.mxu0
    %8578 = vdwg.mxu0
    %8579 = vmatprep.subr.mxu0 0.0
    %8580 = vmatpush1.msra.mxu0 0.0
    %8581 = vmatprep.subr.mxu0 0.0
    %8582 = vmatpush1.msra.mxu0 0.0
    %8583 = vmatprep.subr.mxu0 0.0
    %8584 = vmatpush1.msra.mxu0 0.0
    %8585 = vmatprep.subr.mxu0 0.0
    %8586 = vmatpush1.msra.mxu0 0.0
    %8587 = vmatprep.subr.mxu0 0.0
    %8588 = vmatpush1.msra.mxu0 0.0
    %8589 = vmatprep.subr.mxu0 0.0
    %8590 = vmatpush1.msra.mxu0 0.0
    %8591 = vmatprep.subr.mxu0 0.0
    %8592 = vmatpush1.msra.mxu0 0.0
    %8593 = vmatprep.subr.mxu0 0.0
    %8594 = vmatpush1.msra.mxu0 0.0
    %8595 = vmatprep.subr.mxu0 0.0
    %v8596 = vand.u32 %v8052, 4294901760
    %8597 = vmatpush1.msra.mxu0 %v8596
    %8598 = vmatprep.subr.mxu0 0.0
    %v8599 = vand.u32 %v8046, 4294901760
    %8600 = vmatpush1.msra.mxu0 %v8599
    %8601 = vmatprep.subr.mxu0 0.0
    %v8602 = vand.u32 %v8040, 4294901760
    %8603 = vmatpush1.msra.mxu0 %v8602
    %8604 = vmatprep.subr.mxu0 0.0
    %v8605 = vand.u32 %v8034, 4294901760
    %8606 = vmatpush1.msra.mxu0 %v8605
    %8607 = vmatprep.subr.mxu0 0.0
    %v8608 = vand.u32 %v8028, 4294901760
    %8609 = vmatpush1.msra.mxu0 %v8608
    %8610 = vmatprep.subr.mxu0 0.0
    %v8611 = vand.u32 %v8022, 4294901760
    %8612 = vmatpush1.msra.mxu0 %v8611
    %8613 = vmatprep.subr.mxu0 0.0
    %v8614 = vand.u32 %v8016, 4294901760
    %8615 = vmatpush1.msra.mxu0 %v8614
    %8616 = vmatprep.subr.mxu0 0.0
    %v8617 = vand.u32 %v8010, 4294901760
    %8618 = vmatpush1.msra.mxu0 %v8617
    %8619 = vmatprep.subr.mxu0 0.0
    %8620 = vmatpush2.msra.mxu0 0.0
    %8621 = vmatprep.subr.mxu0 0.0
    %8622 = vmatpush2.msra.mxu0 0.0
    %8623 = vmatprep.subr.mxu0 0.0
    %8624 = vmatpush2.msra.mxu0 0.0
    %8625 = vmatprep.subr.mxu0 0.0
    %8626 = vmatpush2.msra.mxu0 0.0
    %8627 = vmatprep.subr.mxu0 0.0
    %8628 = vmatpush2.msra.mxu0 0.0
    %8629 = vmatprep.subr.mxu0 0.0
    %8630 = vmatpush2.msra.mxu0 0.0
    %8631 = vmatprep.subr.mxu0 0.0
    %8632 = vmatpush2.msra.mxu0 0.0
    %8633 = vmatprep.subr.mxu0 0.0
    %8634 = vmatpush2.msra.mxu0 0.0
    %8635 = vmatprep.subr.mxu0 0.0
    %8636 = vmatpush2.msra.mxu0 0.0
    %8637 = vmatprep.subr.mxu0 0.0
    %8638 = vmatpush2.msra.mxu0 0.0
    %8639 = vmatprep.subr.mxu0 0.0
    %8640 = vmatpush2.msra.mxu0 0.0
    %8641 = vmatprep.subr.mxu0 0.0
    %8642 = vmatpush2.msra.mxu0 0.0
    %8643 = vmatprep.subr.mxu0 0.0
    %8644 = vmatpush2.msra.mxu0 0.0
    %8645 = vmatprep.subr.mxu0 0.0
    %8646 = vmatpush2.msra.mxu0 0.0
    %8647 = vmatprep.subr.mxu0 0.0
    %8648 = vmatpush2.msra.mxu0 0.0
    %8649 = vmatprep.subr.mxu0 0.0
    %8650 = vmatpush2.msra.mxu0 0.0
    %8651 = vmatprep.mubr.f32.mxu0 0.0
    %v8652 = vand.u32 %v8113, 4294901760
    %v8653 = vsub.f32 %v8113, %v8652
    %v8654 = vand.u32 %v8653, 4294901760
    %8655 = vmatmul.mubr.f32.gmra.mxu0 %v8654
    %v8656 = vpop.f32.mrf.mxu0
    %v8657 = vadd.f32 %v8527, %v8656
    %v8658 = vpop.f32.mrf.mxu0
    %8659 = vmatprep.mubr.f32.mxu0 0.0
    %v8660 = vand.u32 %v8116, 4294901760
    %v8661 = vsub.f32 %v8116, %v8660
    %v8662 = vand.u32 %v8661, 4294901760
    %8663 = vmatmul.mubr.f32.gmra.mxu0 %v8662
    %v8664 = vpop.f32.mrf.mxu0
    %v8665 = vadd.f32 %v8534, %v8664
    %v8666 = vpop.f32.mrf.mxu0
    %8667 = vmatprep.mubr.f32.mxu0 0.0
    %v8668 = vand.u32 %v8119, 4294901760
    %v8669 = vsub.f32 %v8119, %v8668
    %v8670 = vand.u32 %v8669, 4294901760
    %8671 = vmatmul.mubr.f32.gmra.mxu0 %v8670
    %v8672 = vpop.f32.mrf.mxu0
    %v8673 = vadd.f32 %v8541, %v8672
    %v8674 = vpop.f32.mrf.mxu0
    %8675 = vmatprep.mubr.f32.mxu0 0.0
    %v8676 = vand.u32 %v8122, 4294901760
    %v8677 = vsub.f32 %v8122, %v8676
    %v8678 = vand.u32 %v8677, 4294901760
    %8679 = vmatmul.mubr.f32.gmra.mxu0 %v8678
    %v8680 = vpop.f32.mrf.mxu0
    %v8681 = vadd.f32 %v8548, %v8680
    %v8682 = vpop.f32.mrf.mxu0
    %8683 = vmatprep.mubr.f32.mxu0 0.0
    %v8684 = vand.u32 %v8125, 4294901760
    %v8685 = vsub.f32 %v8125, %v8684
    %v8686 = vand.u32 %v8685, 4294901760
    %8687 = vmatmul.mubr.f32.gmra.mxu0 %v8686
    %v8688 = vpop.f32.mrf.mxu0
    %v8689 = vadd.f32 %v8555, %v8688
    %v8690 = vpop.f32.mrf.mxu0
    %8691 = vmatprep.mubr.f32.mxu0 0.0
    %v8692 = vand.u32 %v8128, 4294901760
    %v8693 = vsub.f32 %v8128, %v8692
    %v8694 = vand.u32 %v8693, 4294901760
    %8695 = vmatmul.mubr.f32.gmra.mxu0 %v8694
    %v8696 = vpop.f32.mrf.mxu0
    %v8697 = vadd.f32 %v8562, %v8696
    %v8698 = vpop.f32.mrf.mxu0
    %8699 = vmatprep.mubr.f32.mxu0 0.0
    %v8700 = vand.u32 %v8131, 4294901760
    %v8701 = vsub.f32 %v8131, %v8700
    %v8702 = vand.u32 %v8701, 4294901760
    %8703 = vmatmul.mubr.f32.gmra.mxu0 %v8702
    %v8704 = vpop.f32.mrf.mxu0
    %v8705 = vadd.f32 %v8569, %v8704
    %v8706 = vpop.f32.mrf.mxu0
    %8707 = vmatprep.mubr.f32.mxu0 0.0
    %v8708 = vand.u32 %v8134, 4294901760
    %v8709 = vsub.f32 %v8134, %v8708
    %v8710 = vand.u32 %v8709, 4294901760
    %8711 = vmatmul.mubr.f32.gmra.mxu0 %v8710
    %v8712 = vpop.f32.mrf.mxu0
    %v8713 = vadd.f32 %v8576, %v8712
    %v8714 = vpop.f32.mrf.mxu0
    %8715 = vdwg.mxu0
    %8716 = vmatprep.subr.mxu0 0.0
    %8717 = vmatpush1.msra.mxu0 0.0
    %8718 = vmatprep.subr.mxu0 0.0
    %8719 = vmatpush1.msra.mxu0 0.0
    %8720 = vmatprep.subr.mxu0 0.0
    %8721 = vmatpush1.msra.mxu0 0.0
    %8722 = vmatprep.subr.mxu0 0.0
    %8723 = vmatpush1.msra.mxu0 0.0
    %8724 = vmatprep.subr.mxu0 0.0
    %8725 = vmatpush1.msra.mxu0 0.0
    %8726 = vmatprep.subr.mxu0 0.0
    %8727 = vmatpush1.msra.mxu0 0.0
    %8728 = vmatprep.subr.mxu0 0.0
    %8729 = vmatpush1.msra.mxu0 0.0
    %8730 = vmatprep.subr.mxu0 0.0
    %8731 = vmatpush1.msra.mxu0 0.0
    %8732 = vmatprep.subr.mxu0 0.0
    %v8733 = vand.u32 %v8052, 4294901760
    %v8734 = vsub.f32 %v8052, %v8733
    %v8735 = vand.u32 %v8734, 4294901760
    %8736 = vmatpush1.msra.mxu0 %v8735
    %8737 = vmatprep.subr.mxu0 0.0
    %v8738 = vand.u32 %v8046, 4294901760
    %v8739 = vsub.f32 %v8046, %v8738
    %v8740 = vand.u32 %v8739, 4294901760
    %8741 = vmatpush1.msra.mxu0 %v8740
    %8742 = vmatprep.subr.mxu0 0.0
    %v8743 = vand.u32 %v8040, 4294901760
    %v8744 = vsub.f32 %v8040, %v8743
    %v8745 = vand.u32 %v8744, 4294901760
    %8746 = vmatpush1.msra.mxu0 %v8745
    %8747 = vmatprep.subr.mxu0 0.0
    %v8748 = vand.u32 %v8034, 4294901760
    %v8749 = vsub.f32 %v8034, %v8748
    %v8750 = vand.u32 %v8749, 4294901760
    %8751 = vmatpush1.msra.mxu0 %v8750
    %8752 = vmatprep.subr.mxu0 0.0
    %v8753 = vand.u32 %v8028, 4294901760
    %v8754 = vsub.f32 %v8028, %v8753
    %v8755 = vand.u32 %v8754, 4294901760
    %8756 = vmatpush1.msra.mxu0 %v8755
    %8757 = vmatprep.subr.mxu0 0.0
    %v8758 = vand.u32 %v8022, 4294901760
    %v8759 = vsub.f32 %v8022, %v8758
    %v8760 = vand.u32 %v8759, 4294901760
    %8761 = vmatpush1.msra.mxu0 %v8760
    %8762 = vmatprep.subr.mxu0 0.0
    %v8763 = vand.u32 %v8016, 4294901760
    %v8764 = vsub.f32 %v8016, %v8763
    %v8765 = vand.u32 %v8764, 4294901760
    %8766 = vmatpush1.msra.mxu0 %v8765
    %8767 = vmatprep.subr.mxu0 0.0
    %v8768 = vand.u32 %v8010, 4294901760
    %v8769 = vsub.f32 %v8010, %v8768
    %v8770 = vand.u32 %v8769, 4294901760
    %8771 = vmatpush1.msra.mxu0 %v8770
    %8772 = vmatprep.subr.mxu0 0.0
    %8773 = vmatpush2.msra.mxu0 0.0
    %8774 = vmatprep.subr.mxu0 0.0
    %8775 = vmatpush2.msra.mxu0 0.0
    %8776 = vmatprep.subr.mxu0 0.0
    %8777 = vmatpush2.msra.mxu0 0.0
    %8778 = vmatprep.subr.mxu0 0.0
    %8779 = vmatpush2.msra.mxu0 0.0
    %8780 = vmatprep.subr.mxu0 0.0
    %8781 = vmatpush2.msra.mxu0 0.0
    %8782 = vmatprep.subr.mxu0 0.0
    %8783 = vmatpush2.msra.mxu0 0.0
    %8784 = vmatprep.subr.mxu0 0.0
    %8785 = vmatpush2.msra.mxu0 0.0
    %8786 = vmatprep.subr.mxu0 0.0
    %8787 = vmatpush2.msra.mxu0 0.0
    %8788 = vmatprep.subr.mxu0 0.0
    %8789 = vmatpush2.msra.mxu0 0.0
    %8790 = vmatprep.subr.mxu0 0.0
    %8791 = vmatpush2.msra.mxu0 0.0
    %8792 = vmatprep.subr.mxu0 0.0
    %8793 = vmatpush2.msra.mxu0 0.0
    %8794 = vmatprep.subr.mxu0 0.0
    %8795 = vmatpush2.msra.mxu0 0.0
    %8796 = vmatprep.subr.mxu0 0.0
    %8797 = vmatpush2.msra.mxu0 0.0
    %8798 = vmatprep.subr.mxu0 0.0
    %8799 = vmatpush2.msra.mxu0 0.0
    %8800 = vmatprep.subr.mxu0 0.0
    %8801 = vmatpush2.msra.mxu0 0.0
    %8802 = vmatprep.subr.mxu0 0.0
    %8803 = vmatpush2.msra.mxu0 0.0
    %8804 = vmatprep.mubr.f32.mxu0 0.0
    %v8805 = vand.u32 %v8113, 4294901760
    %8806 = vmatmul.mubr.f32.gmra.mxu0 %v8805
    %v8807 = vpop.f32.mrf.mxu0
    %v8808 = vadd.f32 %v8657, %v8807
    %v8809 = vpop.f32.mrf.mxu0
    %8810 = vmatprep.mubr.f32.mxu0 0.0
    %v8811 = vand.u32 %v8116, 4294901760
    %8812 = vmatmul.mubr.f32.gmra.mxu0 %v8811
    %v8813 = vpop.f32.mrf.mxu0
    %v8814 = vadd.f32 %v8665, %v8813
    %v8815 = vpop.f32.mrf.mxu0
    %8816 = vmatprep.mubr.f32.mxu0 0.0
    %v8817 = vand.u32 %v8119, 4294901760
    %8818 = vmatmul.mubr.f32.gmra.mxu0 %v8817
    %v8819 = vpop.f32.mrf.mxu0
    %v8820 = vadd.f32 %v8673, %v8819
    %v8821 = vpop.f32.mrf.mxu0
    %8822 = vmatprep.mubr.f32.mxu0 0.0
    %v8823 = vand.u32 %v8122, 4294901760
    %8824 = vmatmul.mubr.f32.gmra.mxu0 %v8823
    %v8825 = vpop.f32.mrf.mxu0
    %v8826 = vadd.f32 %v8681, %v8825
    %v8827 = vpop.f32.mrf.mxu0
    %8828 = vmatprep.mubr.f32.mxu0 0.0
    %v8829 = vand.u32 %v8125, 4294901760
    %8830 = vmatmul.mubr.f32.gmra.mxu0 %v8829
    %v8831 = vpop.f32.mrf.mxu0
    %v8832 = vadd.f32 %v8689, %v8831
    %v8833 = vpop.f32.mrf.mxu0
    %8834 = vmatprep.mubr.f32.mxu0 0.0
    %v8835 = vand.u32 %v8128, 4294901760
    %8836 = vmatmul.mubr.f32.gmra.mxu0 %v8835
    %v8837 = vpop.f32.mrf.mxu0
    %v8838 = vadd.f32 %v8697, %v8837
    %v8839 = vpop.f32.mrf.mxu0
    %8840 = vmatprep.mubr.f32.mxu0 0.0
    %v8841 = vand.u32 %v8131, 4294901760
    %8842 = vmatmul.mubr.f32.gmra.mxu0 %v8841
    %v8843 = vpop.f32.mrf.mxu0
    %v8844 = vadd.f32 %v8705, %v8843
    %v8845 = vpop.f32.mrf.mxu0
    %8846 = vmatprep.mubr.f32.mxu0 0.0
    %v8847 = vand.u32 %v8134, 4294901760
    %8848 = vmatmul.mubr.f32.gmra.mxu0 %v8847
    %v8849 = vpop.f32.mrf.mxu0
    %v8850 = vadd.f32 %v8713, %v8849
    %v8851 = vpop.f32.mrf.mxu0
    %8852 = vdwg.mxu0
    %8853 = vmatprep.subr.mxu0 0.0
    %8854 = vmatpush1.msra.mxu0 0.0
    %8855 = vmatprep.subr.mxu0 0.0
    %8856 = vmatpush1.msra.mxu0 0.0
    %8857 = vmatprep.subr.mxu0 0.0
    %8858 = vmatpush1.msra.mxu0 0.0
    %8859 = vmatprep.subr.mxu0 0.0
    %8860 = vmatpush1.msra.mxu0 0.0
    %8861 = vmatprep.subr.mxu0 0.0
    %8862 = vmatpush1.msra.mxu0 0.0
    %8863 = vmatprep.subr.mxu0 0.0
    %8864 = vmatpush1.msra.mxu0 0.0
    %8865 = vmatprep.subr.mxu0 0.0
    %8866 = vmatpush1.msra.mxu0 0.0
    %8867 = vmatprep.subr.mxu0 0.0
    %8868 = vmatpush1.msra.mxu0 0.0
    %8869 = vmatprep.subr.mxu0 0.0
    %v8870 = vand.u32 %v8052, 4294901760
    %8871 = vmatpush1.msra.mxu0 %v8870
    %8872 = vmatprep.subr.mxu0 0.0
    %v8873 = vand.u32 %v8046, 4294901760
    %8874 = vmatpush1.msra.mxu0 %v8873
    %8875 = vmatprep.subr.mxu0 0.0
    %v8876 = vand.u32 %v8040, 4294901760
    %8877 = vmatpush1.msra.mxu0 %v8876
    %8878 = vmatprep.subr.mxu0 0.0
    %v8879 = vand.u32 %v8034, 4294901760
    %8880 = vmatpush1.msra.mxu0 %v8879
    %8881 = vmatprep.subr.mxu0 0.0
    %v8882 = vand.u32 %v8028, 4294901760
    %8883 = vmatpush1.msra.mxu0 %v8882
    %8884 = vmatprep.subr.mxu0 0.0
    %v8885 = vand.u32 %v8022, 4294901760
    %8886 = vmatpush1.msra.mxu0 %v8885
    %8887 = vmatprep.subr.mxu0 0.0
    %v8888 = vand.u32 %v8016, 4294901760
    %8889 = vmatpush1.msra.mxu0 %v8888
    %8890 = vmatprep.subr.mxu0 0.0
    %v8891 = vand.u32 %v8010, 4294901760
    %8892 = vmatpush1.msra.mxu0 %v8891
    %8893 = vmatprep.subr.mxu0 0.0
    %8894 = vmatpush2.msra.mxu0 0.0
    %8895 = vmatprep.subr.mxu0 0.0
    %8896 = vmatpush2.msra.mxu0 0.0
    %8897 = vmatprep.subr.mxu0 0.0
    %8898 = vmatpush2.msra.mxu0 0.0
    %8899 = vmatprep.subr.mxu0 0.0
    %8900 = vmatpush2.msra.mxu0 0.0
    %8901 = vmatprep.subr.mxu0 0.0
    %8902 = vmatpush2.msra.mxu0 0.0
    %8903 = vmatprep.subr.mxu0 0.0
    %8904 = vmatpush2.msra.mxu0 0.0
    %8905 = vmatprep.subr.mxu0 0.0
    %8906 = vmatpush2.msra.mxu0 0.0
    %8907 = vmatprep.subr.mxu0 0.0
    %8908 = vmatpush2.msra.mxu0 0.0
    %8909 = vmatprep.subr.mxu0 0.0
    %8910 = vmatpush2.msra.mxu0 0.0
    %8911 = vmatprep.subr.mxu0 0.0
    %8912 = vmatpush2.msra.mxu0 0.0
    %8913 = vmatprep.subr.mxu0 0.0
    %8914 = vmatpush2.msra.mxu0 0.0
    %8915 = vmatprep.subr.mxu0 0.0
    %8916 = vmatpush2.msra.mxu0 0.0
    %8917 = vmatprep.subr.mxu0 0.0
    %8918 = vmatpush2.msra.mxu0 0.0
    %8919 = vmatprep.subr.mxu0 0.0
    %8920 = vmatpush2.msra.mxu0 0.0
    %8921 = vmatprep.subr.mxu0 0.0
    %8922 = vmatpush2.msra.mxu0 0.0
    %8923 = vmatprep.subr.mxu0 0.0
    %8924 = vmatpush2.msra.mxu0 0.0
    %8925 = vmatprep.mubr.f32.mxu0 0.0
    %v8926 = vand.u32 %v8113, 4294901760
    %8927 = vmatmul.mubr.f32.gmra.mxu0 %v8926
    %v8928 = vpop.f32.mrf.mxu0
    %v8929 = vadd.f32 %v8808, %v8928
    %v8930 = vpop.f32.mrf.mxu0
    %8931 = vmatprep.mubr.f32.mxu0 0.0
    %v8932 = vand.u32 %v8116, 4294901760
    %8933 = vmatmul.mubr.f32.gmra.mxu0 %v8932
    %v8934 = vpop.f32.mrf.mxu0
    %v8935 = vadd.f32 %v8814, %v8934
    %v8936 = vpop.f32.mrf.mxu0
    %8937 = vmatprep.mubr.f32.mxu0 0.0
    %v8938 = vand.u32 %v8119, 4294901760
    %8939 = vmatmul.mubr.f32.gmra.mxu0 %v8938
    %v8940 = vpop.f32.mrf.mxu0
    %v8941 = vadd.f32 %v8820, %v8940
    %v8942 = vpop.f32.mrf.mxu0
    %8943 = vmatprep.mubr.f32.mxu0 0.0
    %v8944 = vand.u32 %v8122, 4294901760
    %8945 = vmatmul.mubr.f32.gmra.mxu0 %v8944
    %v8946 = vpop.f32.mrf.mxu0
    %v8947 = vadd.f32 %v8826, %v8946
    %v8948 = vpop.f32.mrf.mxu0
    %8949 = vmatprep.mubr.f32.mxu0 0.0
    %v8950 = vand.u32 %v8125, 4294901760
    %8951 = vmatmul.mubr.f32.gmra.mxu0 %v8950
    %v8952 = vpop.f32.mrf.mxu0
    %v8953 = vadd.f32 %v8832, %v8952
    %v8954 = vpop.f32.mrf.mxu0
    %8955 = vmatprep.mubr.f32.mxu0 0.0
    %v8956 = vand.u32 %v8128, 4294901760
    %8957 = vmatmul.mubr.f32.gmra.mxu0 %v8956
    %v8958 = vpop.f32.mrf.mxu0
    %v8959 = vadd.f32 %v8838, %v8958
    %v8960 = vpop.f32.mrf.mxu0
    %8961 = vmatprep.mubr.f32.mxu0 0.0
    %v8962 = vand.u32 %v8131, 4294901760
    %8963 = vmatmul.mubr.f32.gmra.mxu0 %v8962
    %v8964 = vpop.f32.mrf.mxu0
    %v8965 = vadd.f32 %v8844, %v8964
    %v8966 = vpop.f32.mrf.mxu0
    %8967 = vmatprep.mubr.f32.mxu0 0.0
    %v8968 = vand.u32 %v8134, 4294901760
    %8969 = vmatmul.mubr.f32.gmra.mxu0 %v8968
    %v8970 = vpop.f32.mrf.mxu0
    %v8971 = vadd.f32 %v8850, %v8970
    %v8972 = vpop.f32.mrf.mxu0
    %8973 = vdwg.mxu0
    %v8974 = vmax.f32 %v8929, 0.0
    %v8975 = vmax.f32 %v8935, 0.0
    %v8976 = vmax.f32 %v8941, 0.0
    %v8977 = vmax.f32 %v8947, 0.0
    %v8978 = vmax.f32 %v8953, 0.0
    %v8979 = vmax.f32 %v8959, 0.0
    %v8980 = vmax.f32 %v8965, 0.0
    %v8981 = vmax.f32 %v8971, 0.0
    %v8982 = vld [vmem:[%s4] sm:$0xff]
    %v8983 = vld [vmem:[%s4 + $0x8] sm:$0xff]
    %v8984 = vld [vmem:[%s4 + $0x10] sm:$0xff]
    %v8985 = vld [vmem:[%s4 + $0x18] sm:$0xff]
    %v8986 = vld [vmem:[%s4 + $0x20] sm:$0xff]
    %v8987 = vld [vmem:[%s4 + $0x28] sm:$0xff]
    %v8988 = vld [vmem:[%s4 + $0x30] sm:$0xff]
    %v8989 = vld [vmem:[%s4 + $0x38] sm:$0xff]
    %v8990 = vld [vmem:[%s5] sm:$0xff]
    %v8991 = vld [vmem:[%s5 + $0x8] sm:$0xff]
    %v8992 = vld [vmem:[%s5 + $0x10] sm:$0xff]
    %v8993 = vld [vmem:[%s5 + $0x18] sm:$0xff]
    %v8994 = vld [vmem:[%s5 + $0x20] sm:$0xff]
    %v8995 = vld [vmem:[%s5 + $0x28] sm:$0xff]
    %v8996 = vld [vmem:[%s5 + $0x30] sm:$0xff]
    %v8997 = vld [vmem:[%s5 + $0x38] sm:$0xff]
    %8999 = vset.pattern.permute.xlu0 0
    %9000 = vperm.xlu0 %8999, %v8990
    %v9001 = vpop.permute.xlu0 %9000
    %9004 = vset.pattern.permute.xlu0 0
    %9005 = vperm.xlu0 %9004, %v8991
    %v9006 = vpop.permute.xlu0 %9005
    %9009 = vset.pattern.permute.xlu0 0
    %9010 = vperm.xlu0 %9009, %v8992
    %v9011 = vpop.permute.xlu0 %9010
    %9014 = vset.pattern.permute.xlu0 0
    %9015 = vperm.xlu0 %9014, %v8993
    %v9016 = vpop.permute.xlu0 %9015
    %9019 = vset.pattern.permute.xlu0 0
    %9020 = vperm.xlu0 %9019, %v8994
    %v9021 = vpop.permute.xlu0 %9020
    %9024 = vset.pattern.permute.xlu0 0
    %9025 = vperm.xlu0 %9024, %v8995
    %v9026 = vpop.permute.xlu0 %9025
    %9029 = vset.pattern.permute.xlu0 0
    %9030 = vperm.xlu0 %9029, %v8996
    %v9031 = vpop.permute.xlu0 %9030
    %9034 = vset.pattern.permute.xlu0 0
    %9035 = vperm.xlu0 %9034, %v8997
    %v9036 = vpop.permute.xlu0 %9035
    %v9039 = vsel %vm8111, %v8982, 0
    %v9042 = vsel %vm8111, %v8983, 0
    %v9045 = vsel %vm8111, %v8984, 0
    %v9048 = vsel %vm8111, %v8985, 0
    %v9051 = vsel %vm8111, %v8986, 0
    %v9054 = vsel %vm8111, %v8987, 0
    %v9057 = vsel %vm8111, %v8988, 0
    %v9060 = vsel %vm8111, %v8989, 0
    %9062 = vmatprep.subr.mxu0 0.0
    %9063 = vmatpush1.msra.mxu0 0.0
    %9064 = vmatprep.subr.mxu0 0.0
    %9065 = vmatpush1.msra.mxu0 0.0
    %9066 = vmatprep.subr.mxu0 0.0
    %9067 = vmatpush1.msra.mxu0 0.0
    %9068 = vmatprep.subr.mxu0 0.0
    %9069 = vmatpush1.msra.mxu0 0.0
    %9070 = vmatprep.subr.mxu0 0.0
    %9071 = vmatpush1.msra.mxu0 0.0
    %9072 = vmatprep.subr.mxu0 0.0
    %9073 = vmatpush1.msra.mxu0 0.0
    %9074 = vmatprep.subr.mxu0 0.0
    %9075 = vmatpush1.msra.mxu0 0.0
    %9076 = vmatprep.subr.mxu0 0.0
    %9077 = vmatpush1.msra.mxu0 0.0
    %9078 = vmatprep.subr.mxu0 0.0
    %v9079 = vand.u32 %v8981, 4294901760
    %9080 = vmatpush1.msra.mxu0 %v9079
    %9081 = vmatprep.subr.mxu0 0.0
    %v9082 = vand.u32 %v8980, 4294901760
    %9083 = vmatpush1.msra.mxu0 %v9082
    %9084 = vmatprep.subr.mxu0 0.0
    %v9085 = vand.u32 %v8979, 4294901760
    %9086 = vmatpush1.msra.mxu0 %v9085
    %9087 = vmatprep.subr.mxu0 0.0
    %v9088 = vand.u32 %v8978, 4294901760
    %9089 = vmatpush1.msra.mxu0 %v9088
    %9090 = vmatprep.subr.mxu0 0.0
    %v9091 = vand.u32 %v8977, 4294901760
    %9092 = vmatpush1.msra.mxu0 %v9091
    %9093 = vmatprep.subr.mxu0 0.0
    %v9094 = vand.u32 %v8976, 4294901760
    %9095 = vmatpush1.msra.mxu0 %v9094
    %9096 = vmatprep.subr.mxu0 0.0
    %v9097 = vand.u32 %v8975, 4294901760
    %9098 = vmatpush1.msra.mxu0 %v9097
    %9099 = vmatprep.subr.mxu0 0.0
    %v9100 = vand.u32 %v8974, 4294901760
    %9101 = vmatpush1.msra.mxu0 %v9100
    %9102 = vmatprep.subr.mxu0 0.0
    %9103 = vmatpush2.msra.mxu0 0.0
    %9104 = vmatprep.subr.mxu0 0.0
    %9105 = vmatpush2.msra.mxu0 0.0
    %9106 = vmatprep.subr.mxu0 0.0
    %9107 = vmatpush2.msra.mxu0 0.0
    %9108 = vmatprep.subr.mxu0 0.0
    %9109 = vmatpush2.msra.mxu0 0.0
    %9110 = vmatprep.subr.mxu0 0.0
    %9111 = vmatpush2.msra.mxu0 0.0
    %9112 = vmatprep.subr.mxu0 0.0
    %9113 = vmatpush2.msra.mxu0 0.0
    %9114 = vmatprep.subr.mxu0 0.0
    %9115 = vmatpush2.msra.mxu0 0.0
    %9116 = vmatprep.subr.mxu0 0.0
    %9117 = vmatpush2.msra.mxu0 0.0
    %9118 = vmatprep.subr.mxu0 0.0
    %9119 = vmatpush2.msra.mxu0 0.0
    %9120 = vmatprep.subr.mxu0 0.0
    %9121 = vmatpush2.msra.mxu0 0.0
    %9122 = vmatprep.subr.mxu0 0.0
    %9123 = vmatpush2.msra.mxu0 0.0
    %9124 = vmatprep.subr.mxu0 0.0
    %9125 = vmatpush2.msra.mxu0 0.0
    %9126 = vmatprep.subr.mxu0 0.0
    %9127 = vmatpush2.msra.mxu0 0.0
    %9128 = vmatprep.subr.mxu0 0.0
    %9129 = vmatpush2.msra.mxu0 0.0
    %9130 = vmatprep.subr.mxu0 0.0
    %9131 = vmatpush2.msra.mxu0 0.0
    %9132 = vmatprep.subr.mxu0 0.0
    %9133 = vmatpush2.msra.mxu0 0.0
    %9134 = vmatprep.mubr.f32.mxu0 0.0
    %v9135 = vand.u32 %v9039, 4294901760
    %v9136 = vsub.f32 %v9039, %v9135
    %v9137 = vand.u32 %v9136, 4294901760
    %v9138 = vsub.f32 %v9136, %v9137
    %v9139 = vand.u32 %v9138, 4294901760
    %9140 = vmatmul.mubr.f32.gmra.mxu0 %v9139
    %v9141 = vpop.f32.mrf.mxu0
    %v9142 = vadd.f32 %v9001, %v9141
    %v9143 = vpop.f32.mrf.mxu0
    %9144 = vmatprep.mubr.f32.mxu0 0.0
    %v9145 = vand.u32 %v9042, 4294901760
    %v9146 = vsub.f32 %v9042, %v9145
    %v9147 = vand.u32 %v9146, 4294901760
    %v9148 = vsub.f32 %v9146, %v9147
    %v9149 = vand.u32 %v9148, 4294901760
    %9150 = vmatmul.mubr.f32.gmra.mxu0 %v9149
    %v9151 = vpop.f32.mrf.mxu0
    %v9152 = vadd.f32 %v9006, %v9151
    %v9153 = vpop.f32.mrf.mxu0
    %9154 = vmatprep.mubr.f32.mxu0 0.0
    %v9155 = vand.u32 %v9045, 4294901760
    %v9156 = vsub.f32 %v9045, %v9155
    %v9157 = vand.u32 %v9156, 4294901760
    %v9158 = vsub.f32 %v9156, %v9157
    %v9159 = vand.u32 %v9158, 4294901760
    %9160 = vmatmul.mubr.f32.gmra.mxu0 %v9159
    %v9161 = vpop.f32.mrf.mxu0
    %v9162 = vadd.f32 %v9011, %v9161
    %v9163 = vpop.f32.mrf.mxu0
    %9164 = vmatprep.mubr.f32.mxu0 0.0
    %v9165 = vand.u32 %v9048, 4294901760
    %v9166 = vsub.f32 %v9048, %v9165
    %v9167 = vand.u32 %v9166, 4294901760
    %v9168 = vsub.f32 %v9166, %v9167
    %v9169 = vand.u32 %v9168, 4294901760
    %9170 = vmatmul.mubr.f32.gmra.mxu0 %v9169
    %v9171 = vpop.f32.mrf.mxu0
    %v9172 = vadd.f32 %v9016, %v9171
    %v9173 = vpop.f32.mrf.mxu0
    %9174 = vmatprep.mubr.f32.mxu0 0.0
    %v9175 = vand.u32 %v9051, 4294901760
    %v9176 = vsub.f32 %v9051, %v9175
    %v9177 = vand.u32 %v9176, 4294901760
    %v9178 = vsub.f32 %v9176, %v9177
    %v9179 = vand.u32 %v9178, 4294901760
    %9180 = vmatmul.mubr.f32.gmra.mxu0 %v9179
    %v9181 = vpop.f32.mrf.mxu0
    %v9182 = vadd.f32 %v9021, %v9181
    %v9183 = vpop.f32.mrf.mxu0
    %9184 = vmatprep.mubr.f32.mxu0 0.0
    %v9185 = vand.u32 %v9054, 4294901760
    %v9186 = vsub.f32 %v9054, %v9185
    %v9187 = vand.u32 %v9186, 4294901760
    %v9188 = vsub.f32 %v9186, %v9187
    %v9189 = vand.u32 %v9188, 4294901760
    %9190 = vmatmul.mubr.f32.gmra.mxu0 %v9189
    %v9191 = vpop.f32.mrf.mxu0
    %v9192 = vadd.f32 %v9026, %v9191
    %v9193 = vpop.f32.mrf.mxu0
    %9194 = vmatprep.mubr.f32.mxu0 0.0
    %v9195 = vand.u32 %v9057, 4294901760
    %v9196 = vsub.f32 %v9057, %v9195
    %v9197 = vand.u32 %v9196, 4294901760
    %v9198 = vsub.f32 %v9196, %v9197
    %v9199 = vand.u32 %v9198, 4294901760
    %9200 = vmatmul.mubr.f32.gmra.mxu0 %v9199
    %v9201 = vpop.f32.mrf.mxu0
    %v9202 = vadd.f32 %v9031, %v9201
    %v9203 = vpop.f32.mrf.mxu0
    %9204 = vmatprep.mubr.f32.mxu0 0.0
    %v9205 = vand.u32 %v9060, 4294901760
    %v9206 = vsub.f32 %v9060, %v9205
    %v9207 = vand.u32 %v9206, 4294901760
    %v9208 = vsub.f32 %v9206, %v9207
    %v9209 = vand.u32 %v9208, 4294901760
    %9210 = vmatmul.mubr.f32.gmra.mxu0 %v9209
    %v9211 = vpop.f32.mrf.mxu0
    %v9212 = vadd.f32 %v9036, %v9211
    %v9213 = vpop.f32.mrf.mxu0
    %9214 = vdwg.mxu0
    %9215 = vmatprep.subr.mxu0 0.0
    %9216 = vmatpush1.msra.mxu0 0.0
    %9217 = vmatprep.subr.mxu0 0.0
    %9218 = vmatpush1.msra.mxu0 0.0
    %9219 = vmatprep.subr.mxu0 0.0
    %9220 = vmatpush1.msra.mxu0 0.0
    %9221 = vmatprep.subr.mxu0 0.0
    %9222 = vmatpush1.msra.mxu0 0.0
    %9223 = vmatprep.subr.mxu0 0.0
    %9224 = vmatpush1.msra.mxu0 0.0
    %9225 = vmatprep.subr.mxu0 0.0
    %9226 = vmatpush1.msra.mxu0 0.0
    %9227 = vmatprep.subr.mxu0 0.0
    %9228 = vmatpush1.msra.mxu0 0.0
    %9229 = vmatprep.subr.mxu0 0.0
    %9230 = vmatpush1.msra.mxu0 0.0
    %9231 = vmatprep.subr.mxu0 0.0
    %v9232 = vand.u32 %v8981, 4294901760
    %v9233 = vsub.f32 %v8981, %v9232
    %v9234 = vand.u32 %v9233, 4294901760
    %v9235 = vsub.f32 %v9233, %v9234
    %v9236 = vand.u32 %v9235, 4294901760
    %9237 = vmatpush1.msra.mxu0 %v9236
    %9238 = vmatprep.subr.mxu0 0.0
    %v9239 = vand.u32 %v8980, 4294901760
    %v9240 = vsub.f32 %v8980, %v9239
    %v9241 = vand.u32 %v9240, 4294901760
    %v9242 = vsub.f32 %v9240, %v9241
    %v9243 = vand.u32 %v9242, 4294901760
    %9244 = vmatpush1.msra.mxu0 %v9243
    %9245 = vmatprep.subr.mxu0 0.0
    %v9246 = vand.u32 %v8979, 4294901760
    %v9247 = vsub.f32 %v8979, %v9246
    %v9248 = vand.u32 %v9247, 4294901760
    %v9249 = vsub.f32 %v9247, %v9248
    %v9250 = vand.u32 %v9249, 4294901760
    %9251 = vmatpush1.msra.mxu0 %v9250
    %9252 = vmatprep.subr.mxu0 0.0
    %v9253 = vand.u32 %v8978, 4294901760
    %v9254 = vsub.f32 %v8978, %v9253
    %v9255 = vand.u32 %v9254, 4294901760
    %v9256 = vsub.f32 %v9254, %v9255
    %v9257 = vand.u32 %v9256, 4294901760
    %9258 = vmatpush1.msra.mxu0 %v9257
    %9259 = vmatprep.subr.mxu0 0.0
    %v9260 = vand.u32 %v8977, 4294901760
    %v9261 = vsub.f32 %v8977, %v9260
    %v9262 = vand.u32 %v9261, 4294901760
    %v9263 = vsub.f32 %v9261, %v9262
    %v9264 = vand.u32 %v9263, 4294901760
    %9265 = vmatpush1.msra.mxu0 %v9264
    %9266 = vmatprep.subr.mxu0 0.0
    %v9267 = vand.u32 %v8976, 4294901760
    %v9268 = vsub.f32 %v8976, %v9267
    %v9269 = vand.u32 %v9268, 4294901760
    %v9270 = vsub.f32 %v9268, %v9269
    %v9271 = vand.u32 %v9270, 4294901760
    %9272 = vmatpush1.msra.mxu0 %v9271
    %9273 = vmatprep.subr.mxu0 0.0
    %v9274 = vand.u32 %v8975, 4294901760
    %v9275 = vsub.f32 %v8975, %v9274
    %v9276 = vand.u32 %v9275, 4294901760
    %v9277 = vsub.f32 %v9275, %v9276
    %v9278 = vand.u32 %v9277, 4294901760
    %9279 = vmatpush1.msra.mxu0 %v9278
    %9280 = vmatprep.subr.mxu0 0.0
    %v9281 = vand.u32 %v8974, 4294901760
    %v9282 = vsub.f32 %v8974, %v9281
    %v9283 = vand.u32 %v9282, 4294901760
    %v9284 = vsub.f32 %v9282, %v9283
    %v9285 = vand.u32 %v9284, 4294901760
    %9286 = vmatpush1.msra.mxu0 %v9285
    %9287 = vmatprep.subr.mxu0 0.0
    %9288 = vmatpush2.msra.mxu0 0.0
    %9289 = vmatprep.subr.mxu0 0.0
    %9290 = vmatpush2.msra.mxu0 0.0
    %9291 = vmatprep.subr.mxu0 0.0
    %9292 = vmatpush2.msra.mxu0 0.0
    %9293 = vmatprep.subr.mxu0 0.0
    %9294 = vmatpush2.msra.mxu0 0.0
    %9295 = vmatprep.subr.mxu0 0.0
    %9296 = vmatpush2.msra.mxu0 0.0
    %9297 = vmatprep.subr.mxu0 0.0
    %9298 = vmatpush2.msra.mxu0 0.0
    %9299 = vmatprep.subr.mxu0 0.0
    %9300 = vmatpush2.msra.mxu0 0.0
    %9301 = vmatprep.subr.mxu0 0.0
    %9302 = vmatpush2.msra.mxu0 0.0
    %9303 = vmatprep.subr.mxu0 0.0
    %9304 = vmatpush2.msra.mxu0 0.0
    %9305 = vmatprep.subr.mxu0 0.0
    %9306 = vmatpush2.msra.mxu0 0.0
    %9307 = vmatprep.subr.mxu0 0.0
    %9308 = vmatpush2.msra.mxu0 0.0
    %9309 = vmatprep.subr.mxu0 0.0
    %9310 = vmatpush2.msra.mxu0 0.0
    %9311 = vmatprep.subr.mxu0 0.0
    %9312 = vmatpush2.msra.mxu0 0.0
    %9313 = vmatprep.subr.mxu0 0.0
    %9314 = vmatpush2.msra.mxu0 0.0
    %9315 = vmatprep.subr.mxu0 0.0
    %9316 = vmatpush2.msra.mxu0 0.0
    %9317 = vmatprep.subr.mxu0 0.0
    %9318 = vmatpush2.msra.mxu0 0.0
    %9319 = vmatprep.mubr.f32.mxu0 0.0
    %v9320 = vand.u32 %v9039, 4294901760
    %9321 = vmatmul.mubr.f32.gmra.mxu0 %v9320
    %v9322 = vpop.f32.mrf.mxu0
    %v9323 = vadd.f32 %v9142, %v9322
    %v9324 = vpop.f32.mrf.mxu0
    %9325 = vmatprep.mubr.f32.mxu0 0.0
    %v9326 = vand.u32 %v9042, 4294901760
    %9327 = vmatmul.mubr.f32.gmra.mxu0 %v9326
    %v9328 = vpop.f32.mrf.mxu0
    %v9329 = vadd.f32 %v9152, %v9328
    %v9330 = vpop.f32.mrf.mxu0
    %9331 = vmatprep.mubr.f32.mxu0 0.0
    %v9332 = vand.u32 %v9045, 4294901760
    %9333 = vmatmul.mubr.f32.gmra.mxu0 %v9332
    %v9334 = vpop.f32.mrf.mxu0
    %v9335 = vadd.f32 %v9162, %v9334
    %v9336 = vpop.f32.mrf.mxu0
    %9337 = vmatprep.mubr.f32.mxu0 0.0
    %v9338 = vand.u32 %v9048, 4294901760
    %9339 = vmatmul.mubr.f32.gmra.mxu0 %v9338
    %v9340 = vpop.f32.mrf.mxu0
    %v9341 = vadd.f32 %v9172, %v9340
    %v9342 = vpop.f32.mrf.mxu0
    %9343 = vmatprep.mubr.f32.mxu0 0.0
    %v9344 = vand.u32 %v9051, 4294901760
    %9345 = vmatmul.mubr.f32.gmra.mxu0 %v9344
    %v9346 = vpop.f32.mrf.mxu0
    %v9347 = vadd.f32 %v9182, %v9346
    %v9348 = vpop.f32.mrf.mxu0
    %9349 = vmatprep.mubr.f32.mxu0 0.0
    %v9350 = vand.u32 %v9054, 4294901760
    %9351 = vmatmul.mubr.f32.gmra.mxu0 %v9350
    %v9352 = vpop.f32.mrf.mxu0
    %v9353 = vadd.f32 %v9192, %v9352
    %v9354 = vpop.f32.mrf.mxu0
    %9355 = vmatprep.mubr.f32.mxu0 0.0
    %v9356 = vand.u32 %v9057, 4294901760
    %9357 = vmatmul.mubr.f32.gmra.mxu0 %v9356
    %v9358 = vpop.f32.mrf.mxu0
    %v9359 = vadd.f32 %v9202, %v9358
    %v9360 = vpop.f32.mrf.mxu0
    %9361 = vmatprep.mubr.f32.mxu0 0.0
    %v9362 = vand.u32 %v9060, 4294901760
    %9363 = vmatmul.mubr.f32.gmra.mxu0 %v9362
    %v9364 = vpop.f32.mrf.mxu0
    %v9365 = vadd.f32 %v9212, %v9364
    %v9366 = vpop.f32.mrf.mxu0
    %9367 = vdwg.mxu0
    %9368 = vmatprep.subr.mxu0 0.0
    %9369 = vmatpush1.msra.mxu0 0.0
    %9370 = vmatprep.subr.mxu0 0.0
    %9371 = vmatpush1.msra.mxu0 0.0
    %9372 = vmatprep.subr.mxu0 0.0
    %9373 = vmatpush1.msra.mxu0 0.0
    %9374 = vmatprep.subr.mxu0 0.0
    %9375 = vmatpush1.msra.mxu0 0.0
    %9376 = vmatprep.subr.mxu0 0.0
    %9377 = vmatpush1.msra.mxu0 0.0
    %9378 = vmatprep.subr.mxu0 0.0
    %9379 = vmatpush1.msra.mxu0 0.0
    %9380 = vmatprep.subr.mxu0 0.0
    %9381 = vmatpush1.msra.mxu0 0.0
    %9382 = vmatprep.subr.mxu0 0.0
    %9383 = vmatpush1.msra.mxu0 0.0
    %9384 = vmatprep.subr.mxu0 0.0
    %v9385 = vand.u32 %v8981, 4294901760
    %v9386 = vsub.f32 %v8981, %v9385
    %9387 = vmatpush1.msra.mxu0 %v9386
    %9388 = vmatprep.subr.mxu0 0.0
    %v9389 = vand.u32 %v8980, 4294901760
    %v9390 = vsub.f32 %v8980, %v9389
    %9391 = vmatpush1.msra.mxu0 %v9390
    %9392 = vmatprep.subr.mxu0 0.0
    %v9393 = vand.u32 %v8979, 4294901760
    %v9394 = vsub.f32 %v8979, %v9393
    %9395 = vmatpush1.msra.mxu0 %v9394
    %9396 = vmatprep.subr.mxu0 0.0
    %v9397 = vand.u32 %v8978, 4294901760
    %v9398 = vsub.f32 %v8978, %v9397
    %9399 = vmatpush1.msra.mxu0 %v9398
    %9400 = vmatprep.subr.mxu0 0.0
    %v9401 = vand.u32 %v8977, 4294901760
    %v9402 = vsub.f32 %v8977, %v9401
    %9403 = vmatpush1.msra.mxu0 %v9402
    %9404 = vmatprep.subr.mxu0 0.0
    %v9405 = vand.u32 %v8976, 4294901760
    %v9406 = vsub.f32 %v8976, %v9405
    %9407 = vmatpush1.msra.mxu0 %v9406
    %9408 = vmatprep.subr.mxu0 0.0
    %v9409 = vand.u32 %v8975, 4294901760
    %v9410 = vsub.f32 %v8975, %v9409
    %9411 = vmatpush1.msra.mxu0 %v9410
    %9412 = vmatprep.subr.mxu0 0.0
    %v9413 = vand.u32 %v8974, 4294901760
    %v9414 = vsub.f32 %v8974, %v9413
    %9415 = vmatpush1.msra.mxu0 %v9414
    %9416 = vmatprep.subr.mxu0 0.0
    %9417 = vmatpush2.msra.mxu0 0.0
    %9418 = vmatprep.subr.mxu0 0.0
    %9419 = vmatpush2.msra.mxu0 0.0
    %9420 = vmatprep.subr.mxu0 0.0
    %9421 = vmatpush2.msra.mxu0 0.0
    %9422 = vmatprep.subr.mxu0 0.0
    %9423 = vmatpush2.msra.mxu0 0.0
    %9424 = vmatprep.subr.mxu0 0.0
    %9425 = vmatpush2.msra.mxu0 0.0
    %9426 = vmatprep.subr.mxu0 0.0
    %9427 = vmatpush2.msra.mxu0 0.0
    %9428 = vmatprep.subr.mxu0 0.0
    %9429 = vmatpush2.msra.mxu0 0.0
    %9430 = vmatprep.subr.mxu0 0.0
    %9431 = vmatpush2.msra.mxu0 0.0
    %9432 = vmatprep.subr.mxu0 0.0
    %9433 = vmatpush2.msra.mxu0 0.0
    %9434 = vmatprep.subr.mxu0 0.0
    %9435 = vmatpush2.msra.mxu0 0.0
    %9436 = vmatprep.subr.mxu0 0.0
    %9437 = vmatpush2.msra.mxu0 0.0
    %9438 = vmatprep.subr.mxu0 0.0
    %9439 = vmatpush2.msra.mxu0 0.0
    %9440 = vmatprep.subr.mxu0 0.0
    %9441 = vmatpush2.msra.mxu0 0.0
    %9442 = vmatprep.subr.mxu0 0.0
    %9443 = vmatpush2.msra.mxu0 0.0
    %9444 = vmatprep.subr.mxu0 0.0
    %9445 = vmatpush2.msra.mxu0 0.0
    %9446 = vmatprep.subr.mxu0 0.0
    %9447 = vmatpush2.msra.mxu0 0.0
    %9448 = vmatprep.mubr.f32.mxu0 0.0
    %v9449 = vand.u32 %v9039, 4294901760
    %v9450 = vsub.f32 %v9039, %v9449
    %9451 = vmatmul.mubr.f32.gmra.mxu0 %v9450
    %v9452 = vpop.f32.mrf.mxu0
    %v9453 = vadd.f32 %v9323, %v9452
    %v9454 = vpop.f32.mrf.mxu0
    %9455 = vmatprep.mubr.f32.mxu0 0.0
    %v9456 = vand.u32 %v9042, 4294901760
    %v9457 = vsub.f32 %v9042, %v9456
    %9458 = vmatmul.mubr.f32.gmra.mxu0 %v9457
    %v9459 = vpop.f32.mrf.mxu0
    %v9460 = vadd.f32 %v9329, %v9459
    %v9461 = vpop.f32.mrf.mxu0
    %9462 = vmatprep.mubr.f32.mxu0 0.0
    %v9463 = vand.u32 %v9045, 4294901760
    %v9464 = vsub.f32 %v9045, %v9463
    %9465 = vmatmul.mubr.f32.gmra.mxu0 %v9464
    %v9466 = vpop.f32.mrf.mxu0
    %v9467 = vadd.f32 %v9335, %v9466
    %v9468 = vpop.f32.mrf.mxu0
    %9469 = vmatprep.mubr.f32.mxu0 0.0
    %v9470 = vand.u32 %v9048, 4294901760
    %v9471 = vsub.f32 %v9048, %v9470
    %9472 = vmatmul.mubr.f32.gmra.mxu0 %v9471
    %v9473 = vpop.f32.mrf.mxu0
    %v9474 = vadd.f32 %v9341, %v9473
    %v9475 = vpop.f32.mrf.mxu0
    %9476 = vmatprep.mubr.f32.mxu0 0.0
    %v9477 = vand.u32 %v9051, 4294901760
    %v9478 = vsub.f32 %v9051, %v9477
    %9479 = vmatmul.mubr.f32.gmra.mxu0 %v9478
    %v9480 = vpop.f32.mrf.mxu0
    %v9481 = vadd.f32 %v9347, %v9480
    %v9482 = vpop.f32.mrf.mxu0
    %9483 = vmatprep.mubr.f32.mxu0 0.0
    %v9484 = vand.u32 %v9054, 4294901760
    %v9485 = vsub.f32 %v9054, %v9484
    %9486 = vmatmul.mubr.f32.gmra.mxu0 %v9485
    %v9487 = vpop.f32.mrf.mxu0
    %v9488 = vadd.f32 %v9353, %v9487
    %v9489 = vpop.f32.mrf.mxu0
    %9490 = vmatprep.mubr.f32.mxu0 0.0
    %v9491 = vand.u32 %v9057, 4294901760
    %v9492 = vsub.f32 %v9057, %v9491
    %9493 = vmatmul.mubr.f32.gmra.mxu0 %v9492
    %v9494 = vpop.f32.mrf.mxu0
    %v9495 = vadd.f32 %v9359, %v9494
    %v9496 = vpop.f32.mrf.mxu0
    %9497 = vmatprep.mubr.f32.mxu0 0.0
    %v9498 = vand.u32 %v9060, 4294901760
    %v9499 = vsub.f32 %v9060, %v9498
    %9500 = vmatmul.mubr.f32.gmra.mxu0 %v9499
    %v9501 = vpop.f32.mrf.mxu0
    %v9502 = vadd.f32 %v9365, %v9501
    %v9503 = vpop.f32.mrf.mxu0
    %9504 = vdwg.mxu0
    %9505 = vmatprep.subr.mxu0 0.0
    %9506 = vmatpush1.msra.mxu0 0.0
    %9507 = vmatprep.subr.mxu0 0.0
    %9508 = vmatpush1.msra.mxu0 0.0
    %9509 = vmatprep.subr.mxu0 0.0
    %9510 = vmatpush1.msra.mxu0 0.0
    %9511 = vmatprep.subr.mxu0 0.0
    %9512 = vmatpush1.msra.mxu0 0.0
    %9513 = vmatprep.subr.mxu0 0.0
    %9514 = vmatpush1.msra.mxu0 0.0
    %9515 = vmatprep.subr.mxu0 0.0
    %9516 = vmatpush1.msra.mxu0 0.0
    %9517 = vmatprep.subr.mxu0 0.0
    %9518 = vmatpush1.msra.mxu0 0.0
    %9519 = vmatprep.subr.mxu0 0.0
    %9520 = vmatpush1.msra.mxu0 0.0
    %9521 = vmatprep.subr.mxu0 0.0
    %v9522 = vand.u32 %v8981, 4294901760
    %9523 = vmatpush1.msra.mxu0 %v9522
    %9524 = vmatprep.subr.mxu0 0.0
    %v9525 = vand.u32 %v8980, 4294901760
    %9526 = vmatpush1.msra.mxu0 %v9525
    %9527 = vmatprep.subr.mxu0 0.0
    %v9528 = vand.u32 %v8979, 4294901760
    %9529 = vmatpush1.msra.mxu0 %v9528
    %9530 = vmatprep.subr.mxu0 0.0
    %v9531 = vand.u32 %v8978, 4294901760
    %9532 = vmatpush1.msra.mxu0 %v9531
    %9533 = vmatprep.subr.mxu0 0.0
    %v9534 = vand.u32 %v8977, 4294901760
    %9535 = vmatpush1.msra.mxu0 %v9534
    %9536 = vmatprep.subr.mxu0 0.0
    %v9537 = vand.u32 %v8976, 4294901760
    %9538 = vmatpush1.msra.mxu0 %v9537
    %9539 = vmatprep.subr.mxu0 0.0
    %v9540 = vand.u32 %v8975, 4294901760
    %9541 = vmatpush1.msra.mxu0 %v9540
    %9542 = vmatprep.subr.mxu0 0.0
    %v9543 = vand.u32 %v8974, 4294901760
    %9544 = vmatpush1.msra.mxu0 %v9543
    %9545 = vmatprep.subr.mxu0 0.0
    %9546 = vmatpush2.msra.mxu0 0.0
    %9547 = vmatprep.subr.mxu0 0.0
    %9548 = vmatpush2.msra.mxu0 0.0
    %9549 = vmatprep.subr.mxu0 0.0
    %9550 = vmatpush2.msra.mxu0 0.0
    %9551 = vmatprep.subr.mxu0 0.0
    %9552 = vmatpush2.msra.mxu0 0.0
    %9553 = vmatprep.subr.mxu0 0.0
    %9554 = vmatpush2.msra.mxu0 0.0
    %9555 = vmatprep.subr.mxu0 0.0
    %9556 = vmatpush2.msra.mxu0 0.0
    %9557 = vmatprep.subr.mxu0 0.0
    %9558 = vmatpush2.msra.mxu0 0.0
    %9559 = vmatprep.subr.mxu0 0.0
    %9560 = vmatpush2.msra.mxu0 0.0
    %9561 = vmatprep.subr.mxu0 0.0
    %9562 = vmatpush2.msra.mxu0 0.0
    %9563 = vmatprep.subr.mxu0 0.0
    %9564 = vmatpush2.msra.mxu0 0.0
    %9565 = vmatprep.subr.mxu0 0.0
    %9566 = vmatpush2.msra.mxu0 0.0
    %9567 = vmatprep.subr.mxu0 0.0
    %9568 = vmatpush2.msra.mxu0 0.0
    %9569 = vmatprep.subr.mxu0 0.0
    %9570 = vmatpush2.msra.mxu0 0.0
    %9571 = vmatprep.subr.mxu0 0.0
    %9572 = vmatpush2.msra.mxu0 0.0
    %9573 = vmatprep.subr.mxu0 0.0
    %9574 = vmatpush2.msra.mxu0 0.0
    %9575 = vmatprep.subr.mxu0 0.0
    %9576 = vmatpush2.msra.mxu0 0.0
    %9577 = vmatprep.mubr.f32.mxu0 0.0
    %v9578 = vand.u32 %v9039, 4294901760
    %v9579 = vsub.f32 %v9039, %v9578
    %v9580 = vand.u32 %v9579, 4294901760
    %9581 = vmatmul.mubr.f32.gmra.mxu0 %v9580
    %v9582 = vpop.f32.mrf.mxu0
    %v9583 = vadd.f32 %v9453, %v9582
    %v9584 = vpop.f32.mrf.mxu0
    %9585 = vmatprep.mubr.f32.mxu0 0.0
    %v9586 = vand.u32 %v9042, 4294901760
    %v9587 = vsub.f32 %v9042, %v9586
    %v9588 = vand.u32 %v9587, 4294901760
    %9589 = vmatmul.mubr.f32.gmra.mxu0 %v9588
    %v9590 = vpop.f32.mrf.mxu0
    %v9591 = vadd.f32 %v9460, %v9590
    %v9592 = vpop.f32.mrf.mxu0
    %9593 = vmatprep.mubr.f32.mxu0 0.0
    %v9594 = vand.u32 %v9045, 4294901760
    %v9595 = vsub.f32 %v9045, %v9594
    %v9596 = vand.u32 %v9595, 4294901760
    %9597 = vmatmul.mubr.f32.gmra.mxu0 %v9596
    %v9598 = vpop.f32.mrf.mxu0
    %v9599 = vadd.f32 %v9467, %v9598
    %v9600 = vpop.f32.mrf.mxu0
    %9601 = vmatprep.mubr.f32.mxu0 0.0
    %v9602 = vand.u32 %v9048, 4294901760
    %v9603 = vsub.f32 %v9048, %v9602
    %v9604 = vand.u32 %v9603, 4294901760
    %9605 = vmatmul.mubr.f32.gmra.mxu0 %v9604
    %v9606 = vpop.f32.mrf.mxu0
    %v9607 = vadd.f32 %v9474, %v9606
    %v9608 = vpop.f32.mrf.mxu0
    %9609 = vmatprep.mubr.f32.mxu0 0.0
    %v9610 = vand.u32 %v9051, 4294901760
    %v9611 = vsub.f32 %v9051, %v9610
    %v9612 = vand.u32 %v9611, 4294901760
    %9613 = vmatmul.mubr.f32.gmra.mxu0 %v9612
    %v9614 = vpop.f32.mrf.mxu0
    %v9615 = vadd.f32 %v9481, %v9614
    %v9616 = vpop.f32.mrf.mxu0
    %9617 = vmatprep.mubr.f32.mxu0 0.0
    %v9618 = vand.u32 %v9054, 4294901760
    %v9619 = vsub.f32 %v9054, %v9618
    %v9620 = vand.u32 %v9619, 4294901760
    %9621 = vmatmul.mubr.f32.gmra.mxu0 %v9620
    %v9622 = vpop.f32.mrf.mxu0
    %v9623 = vadd.f32 %v9488, %v9622
    %v9624 = vpop.f32.mrf.mxu0
    %9625 = vmatprep.mubr.f32.mxu0 0.0
    %v9626 = vand.u32 %v9057, 4294901760
    %v9627 = vsub.f32 %v9057, %v9626
    %v9628 = vand.u32 %v9627, 4294901760
    %9629 = vmatmul.mubr.f32.gmra.mxu0 %v9628
    %v9630 = vpop.f32.mrf.mxu0
    %v9631 = vadd.f32 %v9495, %v9630
    %v9632 = vpop.f32.mrf.mxu0
    %9633 = vmatprep.mubr.f32.mxu0 0.0
    %v9634 = vand.u32 %v9060, 4294901760
    %v9635 = vsub.f32 %v9060, %v9634
    %v9636 = vand.u32 %v9635, 4294901760
    %9637 = vmatmul.mubr.f32.gmra.mxu0 %v9636
    %v9638 = vpop.f32.mrf.mxu0
    %v9639 = vadd.f32 %v9502, %v9638
    %v9640 = vpop.f32.mrf.mxu0
    %9641 = vdwg.mxu0
    %9642 = vmatprep.subr.mxu0 0.0
    %9643 = vmatpush1.msra.mxu0 0.0
    %9644 = vmatprep.subr.mxu0 0.0
    %9645 = vmatpush1.msra.mxu0 0.0
    %9646 = vmatprep.subr.mxu0 0.0
    %9647 = vmatpush1.msra.mxu0 0.0
    %9648 = vmatprep.subr.mxu0 0.0
    %9649 = vmatpush1.msra.mxu0 0.0
    %9650 = vmatprep.subr.mxu0 0.0
    %9651 = vmatpush1.msra.mxu0 0.0
    %9652 = vmatprep.subr.mxu0 0.0
    %9653 = vmatpush1.msra.mxu0 0.0
    %9654 = vmatprep.subr.mxu0 0.0
    %9655 = vmatpush1.msra.mxu0 0.0
    %9656 = vmatprep.subr.mxu0 0.0
    %9657 = vmatpush1.msra.mxu0 0.0
    %9658 = vmatprep.subr.mxu0 0.0
    %v9659 = vand.u32 %v8981, 4294901760
    %v9660 = vsub.f32 %v8981, %v9659
    %v9661 = vand.u32 %v9660, 4294901760
    %9662 = vmatpush1.msra.mxu0 %v9661
    %9663 = vmatprep.subr.mxu0 0.0
    %v9664 = vand.u32 %v8980, 4294901760
    %v9665 = vsub.f32 %v8980, %v9664
    %v9666 = vand.u32 %v9665, 4294901760
    %9667 = vmatpush1.msra.mxu0 %v9666
    %9668 = vmatprep.subr.mxu0 0.0
    %v9669 = vand.u32 %v8979, 4294901760
    %v9670 = vsub.f32 %v8979, %v9669
    %v9671 = vand.u32 %v9670, 4294901760
    %9672 = vmatpush1.msra.mxu0 %v9671
    %9673 = vmatprep.subr.mxu0 0.0
    %v9674 = vand.u32 %v8978, 4294901760
    %v9675 = vsub.f32 %v8978, %v9674
    %v9676 = vand.u32 %v9675, 4294901760
    %9677 = vmatpush1.msra.mxu0 %v9676
    %9678 = vmatprep.subr.mxu0 0.0
    %v9679 = vand.u32 %v8977, 4294901760
    %v9680 = vsub.f32 %v8977, %v9679
    %v9681 = vand.u32 %v9680, 4294901760
    %9682 = vmatpush1.msra.mxu0 %v9681
    %9683 = vmatprep.subr.mxu0 0.0
    %v9684 = vand.u32 %v8976, 4294901760
    %v9685 = vsub.f32 %v8976, %v9684
    %v9686 = vand.u32 %v9685, 4294901760
    %9687 = vmatpush1.msra.mxu0 %v9686
    %9688 = vmatprep.subr.mxu0 0.0
    %v9689 = vand.u32 %v8975, 4294901760
    %v9690 = vsub.f32 %v8975, %v9689
    %v9691 = vand.u32 %v9690, 4294901760
    %9692 = vmatpush1.msra.mxu0 %v9691
    %9693 = vmatprep.subr.mxu0 0.0
    %v9694 = vand.u32 %v8974, 4294901760
    %v9695 = vsub.f32 %v8974, %v9694
    %v9696 = vand.u32 %v9695, 4294901760
    %9697 = vmatpush1.msra.mxu0 %v9696
    %9698 = vmatprep.subr.mxu0 0.0
    %9699 = vmatpush2.msra.mxu0 0.0
    %9700 = vmatprep.subr.mxu0 0.0
    %9701 = vmatpush2.msra.mxu0 0.0
    %9702 = vmatprep.subr.mxu0 0.0
    %9703 = vmatpush2.msra.mxu0 0.0
    %9704 = vmatprep.subr.mxu0 0.0
    %9705 = vmatpush2.msra.mxu0 0.0
    %9706 = vmatprep.subr.mxu0 0.0
    %9707 = vmatpush2.msra.mxu0 0.0
    %9708 = vmatprep.subr.mxu0 0.0
    %9709 = vmatpush2.msra.mxu0 0.0
    %9710 = vmatprep.subr.mxu0 0.0
    %9711 = vmatpush2.msra.mxu0 0.0
    %9712 = vmatprep.subr.mxu0 0.0
    %9713 = vmatpush2.msra.mxu0 0.0
    %9714 = vmatprep.subr.mxu0 0.0
    %9715 = vmatpush2.msra.mxu0 0.0
    %9716 = vmatprep.subr.mxu0 0.0
    %9717 = vmatpush2.msra.mxu0 0.0
    %9718 = vmatprep.subr.mxu0 0.0
    %9719 = vmatpush2.msra.mxu0 0.0
    %9720 = vmatprep.subr.mxu0 0.0
    %9721 = vmatpush2.msra.mxu0 0.0
    %9722 = vmatprep.subr.mxu0 0.0
    %9723 = vmatpush2.msra.mxu0 0.0
    %9724 = vmatprep.subr.mxu0 0.0
    %9725 = vmatpush2.msra.mxu0 0.0
    %9726 = vmatprep.subr.mxu0 0.0
    %9727 = vmatpush2.msra.mxu0 0.0
    %9728 = vmatprep.subr.mxu0 0.0
    %9729 = vmatpush2.msra.mxu0 0.0
    %9730 = vmatprep.mubr.f32.mxu0 0.0
    %v9731 = vand.u32 %v9039, 4294901760
    %9732 = vmatmul.mubr.f32.gmra.mxu0 %v9731
    %v9733 = vpop.f32.mrf.mxu0
    %v9734 = vadd.f32 %v9583, %v9733
    %v9735 = vpop.f32.mrf.mxu0
    %9736 = vmatprep.mubr.f32.mxu0 0.0
    %v9737 = vand.u32 %v9042, 4294901760
    %9738 = vmatmul.mubr.f32.gmra.mxu0 %v9737
    %v9739 = vpop.f32.mrf.mxu0
    %v9740 = vadd.f32 %v9591, %v9739
    %v9741 = vpop.f32.mrf.mxu0
    %9742 = vmatprep.mubr.f32.mxu0 0.0
    %v9743 = vand.u32 %v9045, 4294901760
    %9744 = vmatmul.mubr.f32.gmra.mxu0 %v9743
    %v9745 = vpop.f32.mrf.mxu0
    %v9746 = vadd.f32 %v9599, %v9745
    %v9747 = vpop.f32.mrf.mxu0
    %9748 = vmatprep.mubr.f32.mxu0 0.0
    %v9749 = vand.u32 %v9048, 4294901760
    %9750 = vmatmul.mubr.f32.gmra.mxu0 %v9749
    %v9751 = vpop.f32.mrf.mxu0
    %v9752 = vadd.f32 %v9607, %v9751
    %v9753 = vpop.f32.mrf.mxu0
    %9754 = vmatprep.mubr.f32.mxu0 0.0
    %v9755 = vand.u32 %v9051, 4294901760
    %9756 = vmatmul.mubr.f32.gmra.mxu0 %v9755
    %v9757 = vpop.f32.mrf.mxu0
    %v9758 = vadd.f32 %v9615, %v9757
    %v9759 = vpop.f32.mrf.mxu0
    %9760 = vmatprep.mubr.f32.mxu0 0.0
    %v9761 = vand.u32 %v9054, 4294901760
    %9762 = vmatmul.mubr.f32.gmra.mxu0 %v9761
    %v9763 = vpop.f32.mrf.mxu0
    %v9764 = vadd.f32 %v9623, %v9763
    %v9765 = vpop.f32.mrf.mxu0
    %9766 = vmatprep.mubr.f32.mxu0 0.0
    %v9767 = vand.u32 %v9057, 4294901760
    %9768 = vmatmul.mubr.f32.gmra.mxu0 %v9767
    %v9769 = vpop.f32.mrf.mxu0
    %v9770 = vadd.f32 %v9631, %v9769
    %v9771 = vpop.f32.mrf.mxu0
    %9772 = vmatprep.mubr.f32.mxu0 0.0
    %v9773 = vand.u32 %v9060, 4294901760
    %9774 = vmatmul.mubr.f32.gmra.mxu0 %v9773
    %v9775 = vpop.f32.mrf.mxu0
    %v9776 = vadd.f32 %v9639, %v9775
    %v9777 = vpop.f32.mrf.mxu0
    %9778 = vdwg.mxu0
    %9779 = vmatprep.subr.mxu0 0.0
    %9780 = vmatpush1.msra.mxu0 0.0
    %9781 = vmatprep.subr.mxu0 0.0
    %9782 = vmatpush1.msra.mxu0 0.0
    %9783 = vmatprep.subr.mxu0 0.0
    %9784 = vmatpush1.msra.mxu0 0.0
    %9785 = vmatprep.subr.mxu0 0.0
    %9786 = vmatpush1.msra.mxu0 0.0
    %9787 = vmatprep.subr.mxu0 0.0
    %9788 = vmatpush1.msra.mxu0 0.0
    %9789 = vmatprep.subr.mxu0 0.0
    %9790 = vmatpush1.msra.mxu0 0.0
    %9791 = vmatprep.subr.mxu0 0.0
    %9792 = vmatpush1.msra.mxu0 0.0
    %9793 = vmatprep.subr.mxu0 0.0
    %9794 = vmatpush1.msra.mxu0 0.0
    %9795 = vmatprep.subr.mxu0 0.0
    %v9796 = vand.u32 %v8981, 4294901760
    %9797 = vmatpush1.msra.mxu0 %v9796
    %9798 = vmatprep.subr.mxu0 0.0
    %v9799 = vand.u32 %v8980, 4294901760
    %9800 = vmatpush1.msra.mxu0 %v9799
    %9801 = vmatprep.subr.mxu0 0.0
    %v9802 = vand.u32 %v8979, 4294901760
    %9803 = vmatpush1.msra.mxu0 %v9802
    %9804 = vmatprep.subr.mxu0 0.0
    %v9805 = vand.u32 %v8978, 4294901760
    %9806 = vmatpush1.msra.mxu0 %v9805
    %9807 = vmatprep.subr.mxu0 0.0
    %v9808 = vand.u32 %v8977, 4294901760
    %9809 = vmatpush1.msra.mxu0 %v9808
    %9810 = vmatprep.subr.mxu0 0.0
    %v9811 = vand.u32 %v8976, 4294901760
    %9812 = vmatpush1.msra.mxu0 %v9811
    %9813 = vmatprep.subr.mxu0 0.0
    %v9814 = vand.u32 %v8975, 4294901760
    %9815 = vmatpush1.msra.mxu0 %v9814
    %9816 = vmatprep.subr.mxu0 0.0
    %v9817 = vand.u32 %v8974, 4294901760
    %9818 = vmatpush1.msra.mxu0 %v9817
    %9819 = vmatprep.subr.mxu0 0.0
    %9820 = vmatpush2.msra.mxu0 0.0
    %9821 = vmatprep.subr.mxu0 0.0
    %9822 = vmatpush2.msra.mxu0 0.0
    %9823 = vmatprep.subr.mxu0 0.0
    %9824 = vmatpush2.msra.mxu0 0.0
    %9825 = vmatprep.subr.mxu0 0.0
    %9826 = vmatpush2.msra.mxu0 0.0
    %9827 = vmatprep.subr.mxu0 0.0
    %9828 = vmatpush2.msra.mxu0 0.0
    %9829 = vmatprep.subr.mxu0 0.0
    %9830 = vmatpush2.msra.mxu0 0.0
    %9831 = vmatprep.subr.mxu0 0.0
    %9832 = vmatpush2.msra.mxu0 0.0
    %9833 = vmatprep.subr.mxu0 0.0
    %9834 = vmatpush2.msra.mxu0 0.0
    %9835 = vmatprep.subr.mxu0 0.0
    %9836 = vmatpush2.msra.mxu0 0.0
    %9837 = vmatprep.subr.mxu0 0.0
    %9838 = vmatpush2.msra.mxu0 0.0
    %9839 = vmatprep.subr.mxu0 0.0
    %9840 = vmatpush2.msra.mxu0 0.0
    %9841 = vmatprep.subr.mxu0 0.0
    %9842 = vmatpush2.msra.mxu0 0.0
    %9843 = vmatprep.subr.mxu0 0.0
    %9844 = vmatpush2.msra.mxu0 0.0
    %9845 = vmatprep.subr.mxu0 0.0
    %9846 = vmatpush2.msra.mxu0 0.0
    %9847 = vmatprep.subr.mxu0 0.0
    %9848 = vmatpush2.msra.mxu0 0.0
    %9849 = vmatprep.subr.mxu0 0.0
    %9850 = vmatpush2.msra.mxu0 0.0
    %9851 = vmatprep.mubr.f32.mxu0 0.0
    %v9852 = vand.u32 %v9039, 4294901760
    %9853 = vmatmul.mubr.f32.gmra.mxu0 %v9852
    %v9854 = vpop.f32.mrf.mxu0
    %v9855 = vadd.f32 %v9734, %v9854
    %v9856 = vpop.f32.mrf.mxu0
    %9857 = vmatprep.mubr.f32.mxu0 0.0
    %v9858 = vand.u32 %v9042, 4294901760
    %9859 = vmatmul.mubr.f32.gmra.mxu0 %v9858
    %v9860 = vpop.f32.mrf.mxu0
    %v9861 = vadd.f32 %v9740, %v9860
    %v9862 = vpop.f32.mrf.mxu0
    %9863 = vmatprep.mubr.f32.mxu0 0.0
    %v9864 = vand.u32 %v9045, 4294901760
    %9865 = vmatmul.mubr.f32.gmra.mxu0 %v9864
    %v9866 = vpop.f32.mrf.mxu0
    %v9867 = vadd.f32 %v9746, %v9866
    %v9868 = vpop.f32.mrf.mxu0
    %9869 = vmatprep.mubr.f32.mxu0 0.0
    %v9870 = vand.u32 %v9048, 4294901760
    %9871 = vmatmul.mubr.f32.gmra.mxu0 %v9870
    %v9872 = vpop.f32.mrf.mxu0
    %v9873 = vadd.f32 %v9752, %v9872
    %v9874 = vpop.f32.mrf.mxu0
    %9875 = vmatprep.mubr.f32.mxu0 0.0
    %v9876 = vand.u32 %v9051, 4294901760
    %9877 = vmatmul.mubr.f32.gmra.mxu0 %v9876
    %v9878 = vpop.f32.mrf.mxu0
    %v9879 = vadd.f32 %v9758, %v9878
    %v9880 = vpop.f32.mrf.mxu0
    %9881 = vmatprep.mubr.f32.mxu0 0.0
    %v9882 = vand.u32 %v9054, 4294901760
    %9883 = vmatmul.mubr.f32.gmra.mxu0 %v9882
    %v9884 = vpop.f32.mrf.mxu0
    %v9885 = vadd.f32 %v9764, %v9884
    %v9886 = vpop.f32.mrf.mxu0
    %9887 = vmatprep.mubr.f32.mxu0 0.0
    %v9888 = vand.u32 %v9057, 4294901760
    %9889 = vmatmul.mubr.f32.gmra.mxu0 %v9888
    %v9890 = vpop.f32.mrf.mxu0
    %v9891 = vadd.f32 %v9770, %v9890
    %v9892 = vpop.f32.mrf.mxu0
    %9893 = vmatprep.mubr.f32.mxu0 0.0
    %v9894 = vand.u32 %v9060, 4294901760
    %9895 = vmatmul.mubr.f32.gmra.mxu0 %v9894
    %v9896 = vpop.f32.mrf.mxu0
    %v9897 = vadd.f32 %v9776, %v9896
    %v9898 = vpop.f32.mrf.mxu0
    %9899 = vdwg.mxu0
    %v9900 = vmax.f32 %v9855, 0.0
    %v9901 = vmax.f32 %v9861, 0.0
    %v9902 = vmax.f32 %v9867, 0.0
    %v9903 = vmax.f32 %v9873, 0.0
    %v9904 = vmax.f32 %v9879, 0.0
    %v9905 = vmax.f32 %v9885, 0.0
    %v9906 = vmax.f32 %v9891, 0.0
    %v9907 = vmax.f32 %v9897, 0.0
    %v9908 = vld [vmem:[%s6] sm:$0x1]
    %s9909 = sld [smem:[#allocation2]]
    %v9910 = vstv %s9909
    %v9912 = vsel %vm8111, %v9908, 0
    %9914 = vmatprep.subr.mxu0 0.0
    %9915 = vmatpush1.msra.mxu0 0.0
    %9916 = vmatprep.subr.mxu0 0.0
    %9917 = vmatpush1.msra.mxu0 0.0
    %9918 = vmatprep.subr.mxu0 0.0
    %9919 = vmatpush1.msra.mxu0 0.0
    %9920 = vmatprep.subr.mxu0 0.0
    %9921 = vmatpush1.msra.mxu0 0.0
    %9922 = vmatprep.subr.mxu0 0.0
    %9923 = vmatpush1.msra.mxu0 0.0
    %9924 = vmatprep.subr.mxu0 0.0
    %9925 = vmatpush1.msra.mxu0 0.0
    %9926 = vmatprep.subr.mxu0 0.0
    %9927 = vmatpush1.msra.mxu0 0.0
    %9928 = vmatprep.subr.mxu0 0.0
    %9929 = vmatpush1.msra.mxu0 0.0
    %9930 = vmatprep.subr.mxu0 0.0
    %v9931 = vand.u32 %v9907, 4294901760
    %9932 = vmatpush1.msra.mxu0 %v9931
    %9933 = vmatprep.subr.mxu0 0.0
    %v9934 = vand.u32 %v9906, 4294901760
    %9935 = vmatpush1.msra.mxu0 %v9934
    %9936 = vmatprep.subr.mxu0 0.0
    %v9937 = vand.u32 %v9905, 4294901760
    %9938 = vmatpush1.msra.mxu0 %v9937
    %9939 = vmatprep.subr.mxu0 0.0
    %v9940 = vand.u32 %v9904, 4294901760
    %9941 = vmatpush1.msra.mxu0 %v9940
    %9942 = vmatprep.subr.mxu0 0.0
    %v9943 = vand.u32 %v9903, 4294901760
    %9944 = vmatpush1.msra.mxu0 %v9943
    %9945 = vmatprep.subr.mxu0 0.0
    %v9946 = vand.u32 %v9902, 4294901760
    %9947 = vmatpush1.msra.mxu0 %v9946
    %9948 = vmatprep.subr.mxu0 0.0
    %v9949 = vand.u32 %v9901, 4294901760
    %9950 = vmatpush1.msra.mxu0 %v9949
    %9951 = vmatprep.subr.mxu0 0.0
    %v9952 = vand.u32 %v9900, 4294901760
    %9953 = vmatpush1.msra.mxu0 %v9952
    %9954 = vmatprep.subr.mxu0 0.0
    %9955 = vmatpush2.msra.mxu0 0.0
    %9956 = vmatprep.subr.mxu0 0.0
    %9957 = vmatpush2.msra.mxu0 0.0
    %9958 = vmatprep.subr.mxu0 0.0
    %9959 = vmatpush2.msra.mxu0 0.0
    %9960 = vmatprep.subr.mxu0 0.0
    %9961 = vmatpush2.msra.mxu0 0.0
    %9962 = vmatprep.subr.mxu0 0.0
    %9963 = vmatpush2.msra.mxu0 0.0
    %9964 = vmatprep.subr.mxu0 0.0
    %9965 = vmatpush2.msra.mxu0 0.0
    %9966 = vmatprep.subr.mxu0 0.0
    %9967 = vmatpush2.msra.mxu0 0.0
    %9968 = vmatprep.subr.mxu0 0.0
    %9969 = vmatpush2.msra.mxu0 0.0
    %9970 = vmatprep.subr.mxu0 0.0
    %9971 = vmatpush2.msra.mxu0 0.0
    %9972 = vmatprep.subr.mxu0 0.0
    %9973 = vmatpush2.msra.mxu0 0.0
    %9974 = vmatprep.subr.mxu0 0.0
    %9975 = vmatpush2.msra.mxu0 0.0
    %9976 = vmatprep.subr.mxu0 0.0
    %9977 = vmatpush2.msra.mxu0 0.0
    %9978 = vmatprep.subr.mxu0 0.0
    %9979 = vmatpush2.msra.mxu0 0.0
    %9980 = vmatprep.subr.mxu0 0.0
    %9981 = vmatpush2.msra.mxu0 0.0
    %9982 = vmatprep.subr.mxu0 0.0
    %9983 = vmatpush2.msra.mxu0 0.0
    %9984 = vmatprep.subr.mxu0 0.0
    %9985 = vmatpush2.msra.mxu0 0.0
    %9986 = vmatprep.mubr.f32.mxu0 0.0
    %v9987 = vand.u32 %v9912, 4294901760
    %v9988 = vsub.f32 %v9912, %v9987
    %v9989 = vand.u32 %v9988, 4294901760
    %v9990 = vsub.f32 %v9988, %v9989
    %v9991 = vand.u32 %v9990, 4294901760
    %9992 = vmatmul.mubr.f32.gmra.mxu0 %v9991
    %v9993 = vpop.f32.mrf.mxu0
    %v9994 = vadd.f32 %v9910, %v9993
    %v9995 = vpop.f32.mrf.mxu0
    %9996 = vdwg.mxu0
    %9997 = vmatprep.subr.mxu0 0.0
    %9998 = vmatpush1.msra.mxu0 0.0
    %9999 = vmatprep.subr.mxu0 0.0
    %10000 = vmatpush1.msra.mxu0 0.0
    %10001 = vmatprep.subr.mxu0 0.0
    %10002 = vmatpush1.msra.mxu0 0.0
    %10003 = vmatprep.subr.mxu0 0.0
    %10004 = vmatpush1.msra.mxu0 0.0
    %10005 = vmatprep.subr.mxu0 0.0
    %10006 = vmatpush1.msra.mxu0 0.0
    %10007 = vmatprep.subr.mxu0 0.0
    %10008 = vmatpush1.msra.mxu0 0.0
    %10009 = vmatprep.subr.mxu0 0.0
    %10010 = vmatpush1.msra.mxu0 0.0
    %10011 = vmatprep.subr.mxu0 0.0
    %10012 = vmatpush1.msra.mxu0 0.0
    %10013 = vmatprep.subr.mxu0 0.0
    %v10014 = vand.u32 %v9907, 4294901760
    %v10015 = vsub.f32 %v9907, %v10014
    %v10016 = vand.u32 %v10015, 4294901760
    %v10017 = vsub.f32 %v10015, %v10016
    %v10018 = vand.u32 %v10017, 4294901760
    %10019 = vmatpush1.msra.mxu0 %v10018
    %10020 = vmatprep.subr.mxu0 0.0
    %v10021 = vand.u32 %v9906, 4294901760
    %v10022 = vsub.f32 %v9906, %v10021
    %v10023 = vand.u32 %v10022, 4294901760
    %v10024 = vsub.f32 %v10022, %v10023
    %v10025 = vand.u32 %v10024, 4294901760
    %10026 = vmatpush1.msra.mxu0 %v10025
    %10027 = vmatprep.subr.mxu0 0.0
    %v10028 = vand.u32 %v9905, 4294901760
    %v10029 = vsub.f32 %v9905, %v10028
    %v10030 = vand.u32 %v10029, 4294901760
    %v10031 = vsub.f32 %v10029, %v10030
    %v10032 = vand.u32 %v10031, 4294901760
    %10033 = vmatpush1.msra.mxu0 %v10032
    %10034 = vmatprep.subr.mxu0 0.0
    %v10035 = vand.u32 %v9904, 4294901760
    %v10036 = vsub.f32 %v9904, %v10035
    %v10037 = vand.u32 %v10036, 4294901760
    %v10038 = vsub.f32 %v10036, %v10037
    %v10039 = vand.u32 %v10038, 4294901760
    %10040 = vmatpush1.msra.mxu0 %v10039
    %10041 = vmatprep.subr.mxu0 0.0
    %v10042 = vand.u32 %v9903, 4294901760
    %v10043 = vsub.f32 %v9903, %v10042
    %v10044 = vand.u32 %v10043, 4294901760
    %v10045 = vsub.f32 %v10043, %v10044
    %v10046 = vand.u32 %v10045, 4294901760
    %10047 = vmatpush1.msra.mxu0 %v10046
    %10048 = vmatprep.subr.mxu0 0.0
    %v10049 = vand.u32 %v9902, 4294901760
    %v10050 = vsub.f32 %v9902, %v10049
    %v10051 = vand.u32 %v10050, 4294901760
    %v10052 = vsub.f32 %v10050, %v10051
    %v10053 = vand.u32 %v10052, 4294901760
    %10054 = vmatpush1.msra.mxu0 %v10053
    %10055 = vmatprep.subr.mxu0 0.0
    %v10056 = vand.u32 %v9901, 4294901760
    %v10057 = vsub.f32 %v9901, %v10056
    %v10058 = vand.u32 %v10057, 4294901760
    %v10059 = vsub.f32 %v10057, %v10058
    %v10060 = vand.u32 %v10059, 4294901760
    %10061 = vmatpush1.msra.mxu0 %v10060
    %10062 = vmatprep.subr.mxu0 0.0
    %v10063 = vand.u32 %v9900, 4294901760
    %v10064 = vsub.f32 %v9900, %v10063
    %v10065 = vand.u32 %v10064, 4294901760
    %v10066 = vsub.f32 %v10064, %v10065
    %v10067 = vand.u32 %v10066, 4294901760
    %10068 = vmatpush1.msra.mxu0 %v10067
    %10069 = vmatprep.subr.mxu0 0.0
    %10070 = vmatpush2.msra.mxu0 0.0
    %10071 = vmatprep.subr.mxu0 0.0
    %10072 = vmatpush2.msra.mxu0 0.0
    %10073 = vmatprep.subr.mxu0 0.0
    %10074 = vmatpush2.msra.mxu0 0.0
    %10075 = vmatprep.subr.mxu0 0.0
    %10076 = vmatpush2.msra.mxu0 0.0
    %10077 = vmatprep.subr.mxu0 0.0
    %10078 = vmatpush2.msra.mxu0 0.0
    %10079 = vmatprep.subr.mxu0 0.0
    %10080 = vmatpush2.msra.mxu0 0.0
    %10081 = vmatprep.subr.mxu0 0.0
    %10082 = vmatpush2.msra.mxu0 0.0
    %10083 = vmatprep.subr.mxu0 0.0
    %10084 = vmatpush2.msra.mxu0 0.0
    %10085 = vmatprep.subr.mxu0 0.0
    %10086 = vmatpush2.msra.mxu0 0.0
    %10087 = vmatprep.subr.mxu0 0.0
    %10088 = vmatpush2.msra.mxu0 0.0
    %10089 = vmatprep.subr.mxu0 0.0
    %10090 = vmatpush2.msra.mxu0 0.0
    %10091 = vmatprep.subr.mxu0 0.0
    %10092 = vmatpush2.msra.mxu0 0.0
    %10093 = vmatprep.subr.mxu0 0.0
    %10094 = vmatpush2.msra.mxu0 0.0
    %10095 = vmatprep.subr.mxu0 0.0
    %10096 = vmatpush2.msra.mxu0 0.0
    %10097 = vmatprep.subr.mxu0 0.0
    %10098 = vmatpush2.msra.mxu0 0.0
    %10099 = vmatprep.subr.mxu0 0.0
    %10100 = vmatpush2.msra.mxu0 0.0
    %10101 = vmatprep.mubr.f32.mxu0 0.0
    %v10102 = vand.u32 %v9912, 4294901760
    %10103 = vmatmul.mubr.f32.gmra.mxu0 %v10102
    %v10104 = vpop.f32.mrf.mxu0
    %v10105 = vadd.f32 %v9994, %v10104
    %v10106 = vpop.f32.mrf.mxu0
    %10107 = vdwg.mxu0
    %10108 = vmatprep.subr.mxu0 0.0
    %10109 = vmatpush1.msra.mxu0 0.0
    %10110 = vmatprep.subr.mxu0 0.0
    %10111 = vmatpush1.msra.mxu0 0.0
    %10112 = vmatprep.subr.mxu0 0.0
    %10113 = vmatpush1.msra.mxu0 0.0
    %10114 = vmatprep.subr.mxu0 0.0
    %10115 = vmatpush1.msra.mxu0 0.0
    %10116 = vmatprep.subr.mxu0 0.0
    %10117 = vmatpush1.msra.mxu0 0.0
    %10118 = vmatprep.subr.mxu0 0.0
    %10119 = vmatpush1.msra.mxu0 0.0
    %10120 = vmatprep.subr.mxu0 0.0
    %10121 = vmatpush1.msra.mxu0 0.0
    %10122 = vmatprep.subr.mxu0 0.0
    %10123 = vmatpush1.msra.mxu0 0.0
    %10124 = vmatprep.subr.mxu0 0.0
    %v10125 = vand.u32 %v9907, 4294901760
    %v10126 = vsub.f32 %v9907, %v10125
    %10127 = vmatpush1.msra.mxu0 %v10126
    %10128 = vmatprep.subr.mxu0 0.0
    %v10129 = vand.u32 %v9906, 4294901760
    %v10130 = vsub.f32 %v9906, %v10129
    %10131 = vmatpush1.msra.mxu0 %v10130
    %10132 = vmatprep.subr.mxu0 0.0
    %v10133 = vand.u32 %v9905, 4294901760
    %v10134 = vsub.f32 %v9905, %v10133
    %10135 = vmatpush1.msra.mxu0 %v10134
    %10136 = vmatprep.subr.mxu0 0.0
    %v10137 = vand.u32 %v9904, 4294901760
    %v10138 = vsub.f32 %v9904, %v10137
    %10139 = vmatpush1.msra.mxu0 %v10138
    %10140 = vmatprep.subr.mxu0 0.0
    %v10141 = vand.u32 %v9903, 4294901760
    %v10142 = vsub.f32 %v9903, %v10141
    %10143 = vmatpush1.msra.mxu0 %v10142
    %10144 = vmatprep.subr.mxu0 0.0
    %v10145 = vand.u32 %v9902, 4294901760
    %v10146 = vsub.f32 %v9902, %v10145
    %10147 = vmatpush1.msra.mxu0 %v10146
    %10148 = vmatprep.subr.mxu0 0.0
    %v10149 = vand.u32 %v9901, 4294901760
    %v10150 = vsub.f32 %v9901, %v10149
    %10151 = vmatpush1.msra.mxu0 %v10150
    %10152 = vmatprep.subr.mxu0 0.0
    %v10153 = vand.u32 %v9900, 4294901760
    %v10154 = vsub.f32 %v9900, %v10153
    %10155 = vmatpush1.msra.mxu0 %v10154
    %10156 = vmatprep.subr.mxu0 0.0
    %10157 = vmatpush2.msra.mxu0 0.0
    %10158 = vmatprep.subr.mxu0 0.0
    %10159 = vmatpush2.msra.mxu0 0.0
    %10160 = vmatprep.subr.mxu0 0.0
    %10161 = vmatpush2.msra.mxu0 0.0
    %10162 = vmatprep.subr.mxu0 0.0
    %10163 = vmatpush2.msra.mxu0 0.0
    %10164 = vmatprep.subr.mxu0 0.0
    %10165 = vmatpush2.msra.mxu0 0.0
    %10166 = vmatprep.subr.mxu0 0.0
    %10167 = vmatpush2.msra.mxu0 0.0
    %10168 = vmatprep.subr.mxu0 0.0
    %10169 = vmatpush2.msra.mxu0 0.0
    %10170 = vmatprep.subr.mxu0 0.0
    %10171 = vmatpush2.msra.mxu0 0.0
    %10172 = vmatprep.subr.mxu0 0.0
    %10173 = vmatpush2.msra.mxu0 0.0
    %10174 = vmatprep.subr.mxu0 0.0
    %10175 = vmatpush2.msra.mxu0 0.0
    %10176 = vmatprep.subr.mxu0 0.0
    %10177 = vmatpush2.msra.mxu0 0.0
    %10178 = vmatprep.subr.mxu0 0.0
    %10179 = vmatpush2.msra.mxu0 0.0
    %10180 = vmatprep.subr.mxu0 0.0
    %10181 = vmatpush2.msra.mxu0 0.0
    %10182 = vmatprep.subr.mxu0 0.0
    %10183 = vmatpush2.msra.mxu0 0.0
    %10184 = vmatprep.subr.mxu0 0.0
    %10185 = vmatpush2.msra.mxu0 0.0
    %10186 = vmatprep.subr.mxu0 0.0
    %10187 = vmatpush2.msra.mxu0 0.0
    %10188 = vmatprep.mubr.f32.mxu0 0.0
    %v10189 = vand.u32 %v9912, 4294901760
    %v10190 = vsub.f32 %v9912, %v10189
    %10191 = vmatmul.mubr.f32.gmra.mxu0 %v10190
    %v10192 = vpop.f32.mrf.mxu0
    %v10193 = vadd.f32 %v10105, %v10192
    %v10194 = vpop.f32.mrf.mxu0
    %10195 = vdwg.mxu0
    %10196 = vmatprep.subr.mxu0 0.0
    %10197 = vmatpush1.msra.mxu0 0.0
    %10198 = vmatprep.subr.mxu0 0.0
    %10199 = vmatpush1.msra.mxu0 0.0
    %10200 = vmatprep.subr.mxu0 0.0
    %10201 = vmatpush1.msra.mxu0 0.0
    %10202 = vmatprep.subr.mxu0 0.0
    %10203 = vmatpush1.msra.mxu0 0.0
    %10204 = vmatprep.subr.mxu0 0.0
    %10205 = vmatpush1.msra.mxu0 0.0
    %10206 = vmatprep.subr.mxu0 0.0
    %10207 = vmatpush1.msra.mxu0 0.0
    %10208 = vmatprep.subr.mxu0 0.0
    %10209 = vmatpush1.msra.mxu0 0.0
    %10210 = vmatprep.subr.mxu0 0.0
    %10211 = vmatpush1.msra.mxu0 0.0
    %10212 = vmatprep.subr.mxu0 0.0
    %v10213 = vand.u32 %v9907, 4294901760
    %10214 = vmatpush1.msra.mxu0 %v10213
    %10215 = vmatprep.subr.mxu0 0.0
    %v10216 = vand.u32 %v9906, 4294901760
    %10217 = vmatpush1.msra.mxu0 %v10216
    %10218 = vmatprep.subr.mxu0 0.0
    %v10219 = vand.u32 %v9905, 4294901760
    %10220 = vmatpush1.msra.mxu0 %v10219
    %10221 = vmatprep.subr.mxu0 0.0
    %v10222 = vand.u32 %v9904, 4294901760
    %10223 = vmatpush1.msra.mxu0 %v10222
    %10224 = vmatprep.subr.mxu0 0.0
    %v10225 = vand.u32 %v9903, 4294901760
    %10226 = vmatpush1.msra.mxu0 %v10225
    %10227 = vmatprep.subr.mxu0 0.0
    %v10228 = vand.u32 %v9902, 4294901760
    %10229 = vmatpush1.msra.mxu0 %v10228
    %10230 = vmatprep.subr.mxu0 0.0
    %v10231 = vand.u32 %v9901, 4294901760
    %10232 = vmatpush1.msra.mxu0 %v10231
    %10233 = vmatprep.subr.mxu0 0.0
    %v10234 = vand.u32 %v9900, 4294901760
    %10235 = vmatpush1.msra.mxu0 %v10234
    %10236 = vmatprep.subr.mxu0 0.0
    %10237 = vmatpush2.msra.mxu0 0.0
    %10238 = vmatprep.subr.mxu0 0.0
    %10239 = vmatpush2.msra.mxu0 0.0
    %10240 = vmatprep.subr.mxu0 0.0
    %10241 = vmatpush2.msra.mxu0 0.0
    %10242 = vmatprep.subr.mxu0 0.0
    %10243 = vmatpush2.msra.mxu0 0.0
    %10244 = vmatprep.subr.mxu0 0.0
    %10245 = vmatpush2.msra.mxu0 0.0
    %10246 = vmatprep.subr.mxu0 0.0
    %10247 = vmatpush2.msra.mxu0 0.0
    %10248 = vmatprep.subr.mxu0 0.0
    %10249 = vmatpush2.msra.mxu0 0.0
    %10250 = vmatprep.subr.mxu0 0.0
    %10251 = vmatpush2.msra.mxu0 0.0
    %10252 = vmatprep.subr.mxu0 0.0
    %10253 = vmatpush2.msra.mxu0 0.0
    %10254 = vmatprep.subr.mxu0 0.0
    %10255 = vmatpush2.msra.mxu0 0.0
    %10256 = vmatprep.subr.mxu0 0.0
    %10257 = vmatpush2.msra.mxu0 0.0
    %10258 = vmatprep.subr.mxu0 0.0
    %10259 = vmatpush2.msra.mxu0 0.0
    %10260 = vmatprep.subr.mxu0 0.0
    %10261 = vmatpush2.msra.mxu0 0.0
    %10262 = vmatprep.subr.mxu0 0.0
    %10263 = vmatpush2.msra.mxu0 0.0
    %10264 = vmatprep.subr.mxu0 0.0
    %10265 = vmatpush2.msra.mxu0 0.0
    %10266 = vmatprep.subr.mxu0 0.0
    %10267 = vmatpush2.msra.mxu0 0.0
    %10268 = vmatprep.mubr.f32.mxu0 0.0
    %v10269 = vand.u32 %v9912, 4294901760
    %v10270 = vsub.f32 %v9912, %v10269
    %v10271 = vand.u32 %v10270, 4294901760
    %10272 = vmatmul.mubr.f32.gmra.mxu0 %v10271
    %v10273 = vpop.f32.mrf.mxu0
    %v10274 = vadd.f32 %v10193, %v10273
    %v10275 = vpop.f32.mrf.mxu0
    %10276 = vdwg.mxu0
    %10277 = vmatprep.subr.mxu0 0.0
    %10278 = vmatpush1.msra.mxu0 0.0
    %10279 = vmatprep.subr.mxu0 0.0
    %10280 = vmatpush1.msra.mxu0 0.0
    %10281 = vmatprep.subr.mxu0 0.0
    %10282 = vmatpush1.msra.mxu0 0.0
    %10283 = vmatprep.subr.mxu0 0.0
    %10284 = vmatpush1.msra.mxu0 0.0
    %10285 = vmatprep.subr.mxu0 0.0
    %10286 = vmatpush1.msra.mxu0 0.0
    %10287 = vmatprep.subr.mxu0 0.0
    %10288 = vmatpush1.msra.mxu0 0.0
    %10289 = vmatprep.subr.mxu0 0.0
    %10290 = vmatpush1.msra.mxu0 0.0
    %10291 = vmatprep.subr.mxu0 0.0
    %10292 = vmatpush1.msra.mxu0 0.0
    %10293 = vmatprep.subr.mxu0 0.0
    %v10294 = vand.u32 %v9907, 4294901760
    %v10295 = vsub.f32 %v9907, %v10294
    %v10296 = vand.u32 %v10295, 4294901760
    %10297 = vmatpush1.msra.mxu0 %v10296
    %10298 = vmatprep.subr.mxu0 0.0
    %v10299 = vand.u32 %v9906, 4294901760
    %v10300 = vsub.f32 %v9906, %v10299
    %v10301 = vand.u32 %v10300, 4294901760
    %10302 = vmatpush1.msra.mxu0 %v10301
    %10303 = vmatprep.subr.mxu0 0.0
    %v10304 = vand.u32 %v9905, 4294901760
    %v10305 = vsub.f32 %v9905, %v10304
    %v10306 = vand.u32 %v10305, 4294901760
    %10307 = vmatpush1.msra.mxu0 %v10306
    %10308 = vmatprep.subr.mxu0 0.0
    %v10309 = vand.u32 %v9904, 4294901760
    %v10310 = vsub.f32 %v9904, %v10309
    %v10311 = vand.u32 %v10310, 4294901760
    %10312 = vmatpush1.msra.mxu0 %v10311
    %10313 = vmatprep.subr.mxu0 0.0
    %v10314 = vand.u32 %v9903, 4294901760
    %v10315 = vsub.f32 %v9903, %v10314
    %v10316 = vand.u32 %v10315, 4294901760
    %10317 = vmatpush1.msra.mxu0 %v10316
    %10318 = vmatprep.subr.mxu0 0.0
    %v10319 = vand.u32 %v9902, 4294901760
    %v10320 = vsub.f32 %v9902, %v10319
    %v10321 = vand.u32 %v10320, 4294901760
    %10322 = vmatpush1.msra.mxu0 %v10321
    %10323 = vmatprep.subr.mxu0 0.0
    %v10324 = vand.u32 %v9901, 4294901760
    %v10325 = vsub.f32 %v9901, %v10324
    %v10326 = vand.u32 %v10325, 4294901760
    %10327 = vmatpush1.msra.mxu0 %v10326
    %10328 = vmatprep.subr.mxu0 0.0
    %v10329 = vand.u32 %v9900, 4294901760
    %v10330 = vsub.f32 %v9900, %v10329
    %v10331 = vand.u32 %v10330, 4294901760
    %10332 = vmatpush1.msra.mxu0 %v10331
    %10333 = vmatprep.subr.mxu0 0.0
    %10334 = vmatpush2.msra.mxu0 0.0
    %10335 = vmatprep.subr.mxu0 0.0
    %10336 = vmatpush2.msra.mxu0 0.0
    %10337 = vmatprep.subr.mxu0 0.0
    %10338 = vmatpush2.msra.mxu0 0.0
    %10339 = vmatprep.subr.mxu0 0.0
    %10340 = vmatpush2.msra.mxu0 0.0
    %10341 = vmatprep.subr.mxu0 0.0
    %10342 = vmatpush2.msra.mxu0 0.0
    %10343 = vmatprep.subr.mxu0 0.0
    %10344 = vmatpush2.msra.mxu0 0.0
    %10345 = vmatprep.subr.mxu0 0.0
    %10346 = vmatpush2.msra.mxu0 0.0
    %10347 = vmatprep.subr.mxu0 0.0
    %10348 = vmatpush2.msra.mxu0 0.0
    %10349 = vmatprep.subr.mxu0 0.0
    %10350 = vmatpush2.msra.mxu0 0.0
    %10351 = vmatprep.subr.mxu0 0.0
    %10352 = vmatpush2.msra.mxu0 0.0
    %10353 = vmatprep.subr.mxu0 0.0
    %10354 = vmatpush2.msra.mxu0 0.0
    %10355 = vmatprep.subr.mxu0 0.0
    %10356 = vmatpush2.msra.mxu0 0.0
    %10357 = vmatprep.subr.mxu0 0.0
    %10358 = vmatpush2.msra.mxu0 0.0
    %10359 = vmatprep.subr.mxu0 0.0
    %10360 = vmatpush2.msra.mxu0 0.0
    %10361 = vmatprep.subr.mxu0 0.0
    %10362 = vmatpush2.msra.mxu0 0.0
    %10363 = vmatprep.subr.mxu0 0.0
    %10364 = vmatpush2.msra.mxu0 0.0
    %10365 = vmatprep.mubr.f32.mxu0 0.0
    %v10366 = vand.u32 %v9912, 4294901760
    %10367 = vmatmul.mubr.f32.gmra.mxu0 %v10366
    %v10368 = vpop.f32.mrf.mxu0
    %v10369 = vadd.f32 %v10274, %v10368
    %v10370 = vpop.f32.mrf.mxu0
    %10371 = vdwg.mxu0
    %10372 = vmatprep.subr.mxu0 0.0
    %10373 = vmatpush1.msra.mxu0 0.0
    %10374 = vmatprep.subr.mxu0 0.0
    %10375 = vmatpush1.msra.mxu0 0.0
    %10376 = vmatprep.subr.mxu0 0.0
    %10377 = vmatpush1.msra.mxu0 0.0
    %10378 = vmatprep.subr.mxu0 0.0
    %10379 = vmatpush1.msra.mxu0 0.0
    %10380 = vmatprep.subr.mxu0 0.0
    %10381 = vmatpush1.msra.mxu0 0.0
    %10382 = vmatprep.subr.mxu0 0.0
    %10383 = vmatpush1.msra.mxu0 0.0
    %10384 = vmatprep.subr.mxu0 0.0
    %10385 = vmatpush1.msra.mxu0 0.0
    %10386 = vmatprep.subr.mxu0 0.0
    %10387 = vmatpush1.msra.mxu0 0.0
    %10388 = vmatprep.subr.mxu0 0.0
    %v10389 = vand.u32 %v9907, 4294901760
    %10390 = vmatpush1.msra.mxu0 %v10389
    %10391 = vmatprep.subr.mxu0 0.0
    %v10392 = vand.u32 %v9906, 4294901760
    %10393 = vmatpush1.msra.mxu0 %v10392
    %10394 = vmatprep.subr.mxu0 0.0
    %v10395 = vand.u32 %v9905, 4294901760
    %10396 = vmatpush1.msra.mxu0 %v10395
    %10397 = vmatprep.subr.mxu0 0.0
    %v10398 = vand.u32 %v9904, 4294901760
    %10399 = vmatpush1.msra.mxu0 %v10398
    %10400 = vmatprep.subr.mxu0 0.0
    %v10401 = vand.u32 %v9903, 4294901760
    %10402 = vmatpush1.msra.mxu0 %v10401
    %10403 = vmatprep.subr.mxu0 0.0
    %v10404 = vand.u32 %v9902, 4294901760
    %10405 = vmatpush1.msra.mxu0 %v10404
    %10406 = vmatprep.subr.mxu0 0.0
    %v10407 = vand.u32 %v9901, 4294901760
    %10408 = vmatpush1.msra.mxu0 %v10407
    %10409 = vmatprep.subr.mxu0 0.0
    %v10410 = vand.u32 %v9900, 4294901760
    %10411 = vmatpush1.msra.mxu0 %v10410
    %10412 = vmatprep.subr.mxu0 0.0
    %10413 = vmatpush2.msra.mxu0 0.0
    %10414 = vmatprep.subr.mxu0 0.0
    %10415 = vmatpush2.msra.mxu0 0.0
    %10416 = vmatprep.subr.mxu0 0.0
    %10417 = vmatpush2.msra.mxu0 0.0
    %10418 = vmatprep.subr.mxu0 0.0
    %10419 = vmatpush2.msra.mxu0 0.0
    %10420 = vmatprep.subr.mxu0 0.0
    %10421 = vmatpush2.msra.mxu0 0.0
    %10422 = vmatprep.subr.mxu0 0.0
    %10423 = vmatpush2.msra.mxu0 0.0
    %10424 = vmatprep.subr.mxu0 0.0
    %10425 = vmatpush2.msra.mxu0 0.0
    %10426 = vmatprep.subr.mxu0 0.0
    %10427 = vmatpush2.msra.mxu0 0.0
    %10428 = vmatprep.subr.mxu0 0.0
    %10429 = vmatpush2.msra.mxu0 0.0
    %10430 = vmatprep.subr.mxu0 0.0
    %10431 = vmatpush2.msra.mxu0 0.0
    %10432 = vmatprep.subr.mxu0 0.0
    %10433 = vmatpush2.msra.mxu0 0.0
    %10434 = vmatprep.subr.mxu0 0.0
    %10435 = vmatpush2.msra.mxu0 0.0
    %10436 = vmatprep.subr.mxu0 0.0
    %10437 = vmatpush2.msra.mxu0 0.0
    %10438 = vmatprep.subr.mxu0 0.0
    %10439 = vmatpush2.msra.mxu0 0.0
    %10440 = vmatprep.subr.mxu0 0.0
    %10441 = vmatpush2.msra.mxu0 0.0
    %10442 = vmatprep.subr.mxu0 0.0
    %10443 = vmatpush2.msra.mxu0 0.0
    %10444 = vmatprep.mubr.f32.mxu0 0.0
    %v10445 = vand.u32 %v9912, 4294901760
    %10446 = vmatmul.mubr.f32.gmra.mxu0 %v10445
    %v10447 = vpop.f32.mrf.mxu0
    %v10448 = vadd.f32 %v10369, %v10447
    %v10449 = vpop.f32.mrf.mxu0
    %10450 = vdwg.mxu0
    %10451 = vst [vmem:[#allocation6] sm:$0x1] %v10448
    // Predicated region
    $region38: #{tpu_custom_call.1} parent=1 // pred_check
      _
    $region39: #{tpu_custom_call.1} parent=1 // pred_check_branch
      %10453 = sbr.rel (0) target = $region41
    $region40: #{tpu_custom_call.1} parent=1 // pred_region
      %s10455 = ssub.s32 16, 16
      %10456 = vsyncadd [#allocation5], %s10455
      %s10458 = sshll.u32 [#allocation6], 4
      %s10459 = int_to_ptr.vmem [resolvable:$true] %s10458
      %10461 = dma.vmem_to_hbm [thread:$0]  %s10459, 16, %s8, [#allocation5]
    $region41: #{tpu_custom_call.1} parent=1 // pred_fallthru
      _
    // Predicated region
    $region42: #{tpu_custom_call.1} parent=1 // pred_check
      _
    $region43: #{tpu_custom_call.1} parent=1 // pred_check_branch
      %10463 = sbr.rel (0) target = $region45
    $region44: #{tpu_custom_call.1} parent=1 // pred_region
      %10464 = dma.done [#allocation5], 16
    $region45: #{tpu_custom_call.1} parent=1 // pred_fallthru
      _
    %10465 = vsyncpa [#allocation4], 1
    %10466 = vsyncpa [#allocation5], 1

</llo_original>
